<compile_context>
chip_gen: v6e
topology: v6e:2x2x1
jax: 0.10.0
libtpu: 0.0.40
codegen_flags: <defaults>
</compile_context>

<pallas_src>
import functools

import numpy as np
import jax
import jax.numpy as jnp
from jax.experimental import pallas as pl
from jax.experimental.pallas import tpu as pltpu

LANES = 128  # lane replication width for the classification output slab


# ---------------------------------------------------------------------------
# Fused UNet kernel: one grid step == 3 images packed along the lane (N) axis
# ---------------------------------------------------------------------------
def _unet_kernel(H, W, G,
                 x_ref,
                 wi1, wi2, wd1, wd2, wu1a, wu1b, wu2, wr, wc,
                 pool_sel, up_sel, avg_sel, mask_f, mask_h,
                 reg_ref, cls_ref):
    HW = H * W
    W2 = W // 2
    N = G * HW                       # packed full-res pixels   (3 * 256 = 768)
    N2 = G * (HW // 4)               # packed half-res pixels   (3 *  64 = 192)

    ones_f = jnp.ones((1, N), jnp.bfloat16)
    ones_h = jnp.ones((1, N2), jnp.bfloat16)

    def im2col(a, mask_ref, Wres, ones_row=None):
        """9 shifted+masked taps of a (C, Nres) f32 map, cast to bf16.

        Per-image boundary masks (precomputed, 0/1) also nullify roll
        wrap-around between the packed images, so a single full-axis roll per
        tap is correct for all G images at once.
        """
        Nres = a.shape[1]
        cols = []
        t = 0
        for oy in (-1, 0, 1):
            for ox in (-1, 0, 1):
                if oy == 0 and ox == 0:
                    cols.append(a.astype(jnp.bfloat16))
                else:
                    sh = (-(oy * Wres + ox)) % Nres
                    rolled = pltpu.roll(a, shift=sh, axis=1)
                    cols.append(
                        (rolled * mask_ref[t:t + 1, :]).astype(jnp.bfloat16))
                t += 1
        if ones_row is not None:               # ones row carries the bias
            cols.append(ones_row)
        return jnp.concatenate(cols, axis=0)

    def conv(a, w_ref, mask_ref, Wres, ones_row):
        acc = jnp.dot(w_ref[...], im2col(a, mask_ref, Wres, ones_row),
                      preferred_element_type=jnp.float32)
        return jnp.maximum(acc, 0.0)           # f32 activation

    x = x_ref[0]                                                 # (Cin, N) f32

    # --- encoder, level 1 (full resolution) ---
    h = conv(x, wi1, mask_f, W, ones_f)
    h1 = conv(h, wi2, mask_f, W, ones_f)                         # (c1, N)

    # --- 2x2 maxpool: anchor-max + MXU even-anchor selection ---
    r1 = pltpu.roll(h1, shift=N - 1, axis=1)                     # h1[p + 1]
    r2 = pltpu.roll(h1, shift=N - W, axis=1)                     # h1[p + W]
    r3 = pltpu.roll(h1, shift=N - W - 1, axis=1)                 # h1[p + W + 1]
    m = jnp.maximum(jnp.maximum(h1, r1),
                    jnp.maximum(r2, r3)).astype(jnp.bfloat16)
    p1 = jnp.dot(m, pool_sel[...],
                 preferred_element_type=jnp.float32)             # (c1, N2)

    # --- encoder, level 2 (half resolution) ---
    h = conv(p1, wd1, mask_h, W2, ones_h)
    h2 = conv(h, wd2, mask_h, W2, ones_h)                        # (c2, N2)

    # --- decoder: nearest 2x upsample (MXU scatter) + split skip conv ---
    up = jnp.dot(h2.astype(jnp.bfloat16), up_sel[...],
                 preferred_element_type=jnp.float32)             # (c2, N)
    acc = (jnp.dot(wu1a[...], im2col(up, mask_f, W),
                   preferred_element_type=jnp.float32)
           + jnp.dot(wu1b[...], im2col(h1, mask_f, W, ones_f),
                     preferred_element_type=jnp.float32))
    d = jnp.maximum(acc, 0.0)
    d = conv(d, wu2, mask_f, W, ones_f)                          # (c1, N)

    # --- heads ---
    d_aug = jnp.concatenate([d.astype(jnp.bfloat16), ones_f], axis=0)  # (c1+1, N)

    # regression head: 1x1 conv (bias folded via ones row), no ReLU
    reg_ref[0] = jnp.dot(wr[...], d_aug,
                         preferred_element_type=jnp.float32)     # (nc, N) f32

    # classification head: per-image global average pool + linear, produced
    # directly as a lane-dense (nc, G*128) slab (logit replicated over lanes).
    pooled = jnp.dot(d_aug, avg_sel[...],
                     preferred_element_type=jnp.float32)         # (c1+1, G*128)
    cls_ref[0] = jnp.dot(wc[...], pooled.astype(jnp.bfloat16),
                         preferred_element_type=jnp.float32)     # (nc, G*128)


# ---------------------------------------------------------------------------
# Wrapper: pack 3 images per grid step, lane-dense layouts, one pallas_call
# ---------------------------------------------------------------------------
def modified_unet_fused(prep, x_imgs, H, W, G=3):
    """x_imgs: (B_total, Cin, H, W) -> (regression (B,nc,H,W), classification (B,nc))."""
    B_total, Cin = x_imgs.shape[0], x_imgs.shape[1]
    assert B_total % G == 0, "total image count must be a multiple of the pack factor"
    Bsteps = B_total // G
    HW = H * W
    N = G * HW

    # (B_total, Cin, H, W) -> (Bsteps, Cin, G*HW): image-major packing on lanes.
    x = (x_imgs.reshape(Bsteps, G, Cin, HW)
               .transpose(0, 2, 1, 3)
               .reshape(Bsteps, Cin, N))

    const_names = ("wi1", "wi2", "wd1", "wd2", "wu1a", "wu1b", "wu2",
                   "wr", "wc", "pool_sel", "up_sel", "avg_sel",
                   "mask_f", "mask_h")
    consts = [prep[k] for k in const_names]
    nc = prep["wr"].shape[0]

    def full_spec(a):
        zeros = (0,) * a.ndim
        return pl.BlockSpec(a.shape, lambda b, _z=zeros: _z)

    reg, cls = pl.pallas_call(
        functools.partial(_unet_kernel, H, W, G),
        out_shape=(jax.ShapeDtypeStruct((Bsteps, nc, N), jnp.float32),
                   jax.ShapeDtypeStruct((Bsteps, nc, G * LANES), jnp.float32)),
        grid=(Bsteps,),
        in_specs=[pl.BlockSpec((1, Cin, N), lambda b: (b, 0, 0))]
                + [full_spec(a) for a in consts],
        out_specs=(pl.BlockSpec((1, nc, N), lambda b: (b, 0, 0)),
                   pl.BlockSpec((1, nc, G * LANES), lambda b: (b, 0, 0))),
        compiler_params=pltpu.CompilerParams(
            dimension_semantics=("parallel",)),
    )(x, *consts)

    regression = (reg.reshape(Bsteps, nc, G, HW)
                     .transpose(0, 2, 1, 3)
                     .reshape(B_total, nc, H, W))
    classification = (cls.reshape(Bsteps, nc, G, LANES)[:, :, :, 0]
                         .transpose(0, 2, 1)
                         .reshape(B_total, nc))
    return regression, classification


# ---------------------------------------------------------------------------
# Parameters (PyTorch-style layouts) and kernel-ready prep
# ---------------------------------------------------------------------------
def init_params(key, n_channels=3, n_classes=3, c1=16, c2=32):
    keys = jax.random.split(key, 8)

    def conv_w(k, cout, cin, K):
        fan_in = K * K * cin
        return (jax.random.normal(k, (cout, cin, K, K), jnp.float32)
                * (2.0 / fan_in) ** 0.5)

    z = lambda c: jnp.zeros((c,), jnp.float32)
    p = {}
    p["inc1_w"] = conv_w(keys[0], c1, n_channels, 3); p["inc1_b"] = z(c1)
    p["inc2_w"] = conv_w(keys[1], c1, c1, 3);         p["inc2_b"] = z(c1)
    p["down1_w"] = conv_w(keys[2], c2, c1, 3);        p["down1_b"] = z(c2)
    p["down2_w"] = conv_w(keys[3], c2, c2, 3);        p["down2_b"] = z(c2)
    p["up1_w"] = conv_w(keys[4], c1, c1 + c2, 3);     p["up1_b"] = z(c1)
    p["up2_w"] = conv_w(keys[5], c1, c1, 3);          p["up2_b"] = z(c1)
    p["reg_w"] = conv_w(keys[6], n_classes, c1, 1);   p["reg_b"] = z(n_classes)
    p["cls_w"] = (jax.random.normal(keys[7], (n_classes, c1), jnp.float32)
                  * (1.0 / c1) ** 0.5)
    p["cls_b"] = z(n_classes)
    return p


def _pool_select_matrix_np(H, W):
    Ho, Wo = H // 2, W // 2
    S = np.zeros((H * W, Ho * Wo), np.float32)
    for ty in range(Ho):
        for tx in range(Wo):
            S[(2 * ty) * W + 2 * tx, ty * Wo + tx] = 1.0
    return S


def _upsample_matrix_np(H, W):
    Ho, Wo = H // 2, W // 2
    U = np.zeros((Ho * Wo, H * W), np.float32)
    for y in range(H):
        for x in range(W):
            U[(y // 2) * Wo + (x // 2), y * W + x] = 1.0
    return U


def _avg_select_matrix_np(H, W, G, lanes=LANES):
    """(G*HW, G*lanes): per-image global average, replicated across `lanes`."""
    HW = H * W
    A = np.zeros((G * HW, G * lanes), np.float32)
    for i in range(G):
        A[i * HW:(i + 1) * HW, i * lanes:(i + 1) * lanes] = 1.0 / HW
    return A


def _tap_masks_np(H, W, G):
    """(9, G*H*W) 0/1 validity masks for the 9 (oy, ox) conv taps."""
    HW = H * W
    q = np.arange(G * HW) % HW
    yy = q // W
    xx = q % W
    rows = []
    for oy in (-1, 0, 1):
        for ox in (-1, 0, 1):
            valid = ((yy + oy >= 0) & (yy + oy < H) &
                     (xx + ox >= 0) & (xx + ox < W))
            rows.append(valid.astype(np.float32))
    return np.stack(rows, axis=0)


def prepare_params(p, H=16, W=16, G=3):
    assert H % 2 == 0 and W % 2 == 0, "roll/mask im2col requires even H and W"

    def conv_mat(w):  # (Cout,Cin,3,3) -> (Cout, 9*Cin), tap-major (dy, dx, cin)
        cout, cin, K, _ = w.shape
        return jnp.transpose(w, (0, 2, 3, 1)).reshape(cout, K * K * cin)

    def aug(mat, b):  # fold the bias in as an extra column (ones-row trick)
        return jnp.concatenate([mat, b.reshape(-1, 1)], axis=1)

    bf = lambda a: a.astype(jnp.bfloat16)
    c2 = p["down1_w"].shape[0]
    eye = np.eye(G, dtype=np.float32)

    return {
        "wi1": bf(aug(conv_mat(p["inc1_w"]), p["inc1_b"])),
        "wi2": bf(aug(conv_mat(p["inc2_w"]), p["inc2_b"])),
        "wd1": bf(aug(conv_mat(p["down1_w"]), p["down1_b"])),
        "wd2": bf(aug(conv_mat(p["down2_w"]), p["down2_b"])),
        # decoder skip conv split: first c2 input channels act on `up`,
        # remaining c1 channels act on the `h1` skip (bias rides on the h1 half)
        "wu1a": bf(conv_mat(p["up1_w"][:, :c2])),
        "wu1b": bf(aug(conv_mat(p["up1_w"][:, c2:]), p["up1_b"])),
        "wu2": bf(aug(conv_mat(p["up2_w"]), p["up2_b"])),
        "wr": bf(aug(p["reg_w"].reshape(p["reg_w"].shape[0], -1), p["reg_b"])),
        "wc": bf(aug(p["cls_w"], p["cls_b"])),
        # block-diagonal (per packed image) selection / averaging matrices
        "pool_sel": bf(jnp.asarray(np.kron(eye, _pool_select_matrix_np(H, W)))),
        "up_sel":   bf(jnp.asarray(np.kron(eye, _upsample_matrix_np(H, W)))),
        "avg_sel":  bf(jnp.asarray(_avg_select_matrix_np(H, W, G))),
        # precomputed per-tap boundary masks (f32 0/1), full and half resolution
        "mask_f": jnp.asarray(_tap_masks_np(H, W, G)),
        "mask_h": jnp.asarray(_tap_masks_np(H // 2, W // 2, G)),
    }


# ---------------------------------------------------------------------------
# MyModel.forward: triplet stacked into one batch -> one fused kernel launch
# ---------------------------------------------------------------------------
@jax.jit
def my_model_forward(prep, anchor, positive, negative):
    n = anchor.shape[0]
    H, W = anchor.shape[2], anchor.shape[3]
    x = jnp.concatenate([anchor, positive, negative], axis=0)    # (3n, C, H, W)
    reg, cls = modified_unet_fused(prep, x, H, W)
    regs = [reg[0:n], reg[n:2 * n], reg[2 * n:3 * n]]
    clss = [cls[0:n], cls[n:2 * n], cls[2 * n:3 * n]]
    return regs, clss


# ---------------------------------------------------------------------------
if __name__ == "__main__":
    key = jax.random.PRNGKey(0)
    k_param, k_a, k_p, k_n = jax.random.split(key, 4)
    params = init_params(k_param)
    prep = prepare_params(params, H=16, W=16, G=3)

    shape = (2, 3, 16, 16)  # NCHW, matching the PyTorch calling convention
    anchor = jax.random.normal(k_a, shape, jnp.float32)
    positive = jax.random.normal(k_p, shape, jnp.float32)
    negative = jax.random.normal(k_n, shape, jnp.float32)

    regs, clss = my_model_forward(prep, anchor, positive, negative)
    jax.block_until_ready((regs, clss))

    assert len(regs) == 3 and len(clss) == 3
    assert regs[0].shape == (2, 3, 16, 16)
    assert clss[0].shape == (2, 3)
    print("KERNEL_OK")
</pallas_src>

<mosaic_0001>
module attributes {stable_mosaic.version = 11 : i64} {
  func.func @_unet_kernel(%arg0: i32, %arg1: memref<1x3x768xf32, #tpu.memory_space<vmem>>, %arg2: memref<16x28xbf16, #tpu.memory_space<vmem>>, %arg3: memref<16x145xbf16, #tpu.memory_space<vmem>>, %arg4: memref<32x145xbf16, #tpu.memory_space<vmem>>, %arg5: memref<32x289xbf16, #tpu.memory_space<vmem>>, %arg6: memref<16x288xbf16, #tpu.memory_space<vmem>>, %arg7: memref<16x145xbf16, #tpu.memory_space<vmem>>, %arg8: memref<16x145xbf16, #tpu.memory_space<vmem>>, %arg9: memref<3x17xbf16, #tpu.memory_space<vmem>>, %arg10: memref<3x17xbf16, #tpu.memory_space<vmem>>, %arg11: memref<768x192xbf16, #tpu.memory_space<vmem>>, %arg12: memref<192x768xbf16, #tpu.memory_space<vmem>>, %arg13: memref<768x384xbf16, #tpu.memory_space<vmem>>, %arg14: memref<9x768xf32, #tpu.memory_space<vmem>>, %arg15: memref<9x192xf32, #tpu.memory_space<vmem>>, %arg16: memref<1x3x768xf32, #tpu.memory_space<vmem>>, %arg17: memref<1x3x384xf32, #tpu.memory_space<vmem>>) attributes {dimension_semantics = [#tpu.dimension_semantics<parallel>], iteration_bounds = array<i64: 2>, scalar_prefetch = 0 : i64, scratch_operands = 0 : i64, tpu.core_type = #tpu.core_type<tc>, window_params = [{transform_indices = @transform_0, window_bounds = array<i64: 1, 3, 768>}, {pipeline_mode = #tpu.pipeline_mode<synchronous>, transform_indices = @transform_1, window_bounds = array<i64: 16, 28>}, {pipeline_mode = #tpu.pipeline_mode<synchronous>, transform_indices = @transform_2, window_bounds = array<i64: 16, 145>}, {pipeline_mode = #tpu.pipeline_mode<synchronous>, transform_indices = @transform_3, window_bounds = array<i64: 32, 145>}, {pipeline_mode = #tpu.pipeline_mode<synchronous>, transform_indices = @transform_4, window_bounds = array<i64: 32, 289>}, {pipeline_mode = #tpu.pipeline_mode<synchronous>, transform_indices = @transform_5, window_bounds = array<i64: 16, 288>}, {pipeline_mode = #tpu.pipeline_mode<synchronous>, transform_indices = @transform_6, window_bounds = array<i64: 16, 145>}, {pipeline_mode = #tpu.pipeline_mode<synchronous>, transform_indices = @transform_7, window_bounds = array<i64: 16, 145>}, {pipeline_mode = #tpu.pipeline_mode<synchronous>, transform_indices = @transform_8, window_bounds = array<i64: 3, 17>}, {pipeline_mode = #tpu.pipeline_mode<synchronous>, transform_indices = @transform_9, window_bounds = array<i64: 3, 17>}, {pipeline_mode = #tpu.pipeline_mode<synchronous>, transform_indices = @transform_10, window_bounds = array<i64: 768, 192>}, {pipeline_mode = #tpu.pipeline_mode<synchronous>, transform_indices = @transform_11, window_bounds = array<i64: 192, 768>}, {pipeline_mode = #tpu.pipeline_mode<synchronous>, transform_indices = @transform_12, window_bounds = array<i64: 768, 384>}, {pipeline_mode = #tpu.pipeline_mode<synchronous>, transform_indices = @transform_13, window_bounds = array<i64: 9, 768>}, {pipeline_mode = #tpu.pipeline_mode<synchronous>, transform_indices = @transform_14, window_bounds = array<i64: 9, 192>}, {transform_indices = @transform_15, window_bounds = array<i64: 1, 3, 768>}, {transform_indices = @transform_16, window_bounds = array<i64: 1, 3, 384>}]} {
    %cst = arith.constant 1.000000e+00 : bf16
    %0 = vector.broadcast %cst : bf16 to vector<1x768xbf16>
    %cst_0 = arith.constant 1.000000e+00 : bf16
    %1 = vector.broadcast %cst_0 : bf16 to vector<1x192xbf16>
    %c0 = arith.constant 0 : index
    %c0_1 = arith.constant 0 : index
    %c0_2 = arith.constant 0 : index
    %2 = vector.load %arg1[%c0, %c0_1, %c0_2] : memref<1x3x768xf32, #tpu.memory_space<vmem>>, vector<1x3x768xf32>
    %3 = vector.shape_cast %2 : vector<1x3x768xf32> to vector<3x768xf32>
    %c0_3 = arith.constant 0 : index
    %c0_4 = arith.constant 0 : index
    %4 = vector.load %arg2[%c0_3, %c0_4] : memref<16x28xbf16, #tpu.memory_space<vmem>>, vector<16x28xbf16>
    %c17_i32 = arith.constant 17 : i32
    %5 = tpu.dynamic_rotate %3 by %c17_i32 dim 1 : vector<3x768xf32>, i32 -> vector<3x768xf32>
    %c0_5 = arith.constant 0 : index
    %c0_6 = arith.constant 0 : index
    %6 = vector.load %arg14[%c0_5, %c0_6] : memref<9x768xf32, #tpu.memory_space<vmem>>, vector<1x768xf32>
    %7 = vector.broadcast %6 : vector<1x768xf32> to vector<3x768xf32>
    %8 = arith.mulf %5, %7 : vector<3x768xf32>
    %9 = arith.truncf %8 : vector<3x768xf32> to vector<3x768xbf16>
    %c16_i32 = arith.constant 16 : i32
    %10 = tpu.dynamic_rotate %3 by %c16_i32 dim 1 : vector<3x768xf32>, i32 -> vector<3x768xf32>
    %c1 = arith.constant 1 : index
    %c0_7 = arith.constant 0 : index
    %11 = vector.load %arg14[%c1, %c0_7] : memref<9x768xf32, #tpu.memory_space<vmem>>, vector<1x768xf32>
    %12 = vector.broadcast %11 : vector<1x768xf32> to vector<3x768xf32>
    %13 = arith.mulf %10, %12 : vector<3x768xf32>
    %14 = arith.truncf %13 : vector<3x768xf32> to vector<3x768xbf16>
    %c15_i32 = arith.constant 15 : i32
    %15 = tpu.dynamic_rotate %3 by %c15_i32 dim 1 : vector<3x768xf32>, i32 -> vector<3x768xf32>
    %c2 = arith.constant 2 : index
    %c0_8 = arith.constant 0 : index
    %16 = vector.load %arg14[%c2, %c0_8] : memref<9x768xf32, #tpu.memory_space<vmem>>, vector<1x768xf32>
    %17 = vector.broadcast %16 : vector<1x768xf32> to vector<3x768xf32>
    %18 = arith.mulf %15, %17 : vector<3x768xf32>
    %19 = arith.truncf %18 : vector<3x768xf32> to vector<3x768xbf16>
    %c1_i32 = arith.constant 1 : i32
    %20 = tpu.dynamic_rotate %3 by %c1_i32 dim 1 : vector<3x768xf32>, i32 -> vector<3x768xf32>
    %c3 = arith.constant 3 : index
    %c0_9 = arith.constant 0 : index
    %21 = vector.load %arg14[%c3, %c0_9] : memref<9x768xf32, #tpu.memory_space<vmem>>, vector<1x768xf32>
    %22 = vector.broadcast %21 : vector<1x768xf32> to vector<3x768xf32>
    %23 = arith.mulf %20, %22 : vector<3x768xf32>
    %24 = arith.truncf %23 : vector<3x768xf32> to vector<3x768xbf16>
    %25 = arith.truncf %3 : vector<3x768xf32> to vector<3x768xbf16>
    %c767_i32 = arith.constant 767 : i32
    %26 = tpu.dynamic_rotate %3 by %c767_i32 dim 1 : vector<3x768xf32>, i32 -> vector<3x768xf32>
    %c5 = arith.constant 5 : index
    %c0_10 = arith.constant 0 : index
    %27 = vector.load %arg14[%c5, %c0_10] : memref<9x768xf32, #tpu.memory_space<vmem>>, vector<1x768xf32>
    %28 = vector.broadcast %27 : vector<1x768xf32> to vector<3x768xf32>
    %29 = arith.mulf %26, %28 : vector<3x768xf32>
    %30 = arith.truncf %29 : vector<3x768xf32> to vector<3x768xbf16>
    %c753_i32 = arith.constant 753 : i32
    %31 = tpu.dynamic_rotate %3 by %c753_i32 dim 1 : vector<3x768xf32>, i32 -> vector<3x768xf32>
    %c6 = arith.constant 6 : index
    %c0_11 = arith.constant 0 : index
    %32 = vector.load %arg14[%c6, %c0_11] : memref<9x768xf32, #tpu.memory_space<vmem>>, vector<1x768xf32>
    %33 = vector.broadcast %32 : vector<1x768xf32> to vector<3x768xf32>
    %34 = arith.mulf %31, %33 : vector<3x768xf32>
    %35 = arith.truncf %34 : vector<3x768xf32> to vector<3x768xbf16>
    %c752_i32 = arith.constant 752 : i32
    %36 = tpu.dynamic_rotate %3 by %c752_i32 dim 1 : vector<3x768xf32>, i32 -> vector<3x768xf32>
    %c7 = arith.constant 7 : index
    %c0_12 = arith.constant 0 : index
    %37 = vector.load %arg14[%c7, %c0_12] : memref<9x768xf32, #tpu.memory_space<vmem>>, vector<1x768xf32>
    %38 = vector.broadcast %37 : vector<1x768xf32> to vector<3x768xf32>
    %39 = arith.mulf %36, %38 : vector<3x768xf32>
    %40 = arith.truncf %39 : vector<3x768xf32> to vector<3x768xbf16>
    %c751_i32 = arith.constant 751 : i32
    %41 = tpu.dynamic_rotate %3 by %c751_i32 dim 1 : vector<3x768xf32>, i32 -> vector<3x768xf32>
    %c8 = arith.constant 8 : index
    %c0_13 = arith.constant 0 : index
    %42 = vector.load %arg14[%c8, %c0_13] : memref<9x768xf32, #tpu.memory_space<vmem>>, vector<1x768xf32>
    %43 = vector.broadcast %42 : vector<1x768xf32> to vector<3x768xf32>
    %44 = arith.mulf %41, %43 : vector<3x768xf32>
    %45 = arith.truncf %44 : vector<3x768xf32> to vector<3x768xbf16>
    %46 = tpu.concatenate %9, %14, %19, %24, %25, %30, %35, %40, %45, %0 in 0 : vector<3x768xbf16>, vector<3x768xbf16>, vector<3x768xbf16>, vector<3x768xbf16>, vector<3x768xbf16>, vector<3x768xbf16>, vector<3x768xbf16>, vector<3x768xbf16>, vector<3x768xbf16>, vector<1x768xbf16> -> vector<28x768xbf16>
    %cst_14 = arith.constant dense<0.000000e+00> : vector<16x768xf32>
    %47 = tpu.matmul %4, %46, %cst_14 {dimension_numbers = #tpu.dot_dimension_numbers<[1], [0], [0], [1], [0, 0, 1, 1], [], []>} : vector<16x28xbf16>, vector<28x768xbf16>, vector<16x768xf32> -> vector<16x768xf32>
    %cst_15 = arith.constant 0.000000e+00 : f32
    %48 = vector.broadcast %cst_15 : f32 to vector<16x768xf32>
    %49 = arith.maximumf %47, %48 : vector<16x768xf32>
    %c0_16 = arith.constant 0 : index
    %c0_17 = arith.constant 0 : index
    %50 = vector.load %arg3[%c0_16, %c0_17] : memref<16x145xbf16, #tpu.memory_space<vmem>>, vector<16x145xbf16>
    %c17_i32_18 = arith.constant 17 : i32
    %51 = tpu.dynamic_rotate %49 by %c17_i32_18 dim 1 : vector<16x768xf32>, i32 -> vector<16x768xf32>
    %c0_19 = arith.constant 0 : index
    %c0_20 = arith.constant 0 : index
    %52 = vector.load %arg14[%c0_19, %c0_20] : memref<9x768xf32, #tpu.memory_space<vmem>>, vector<1x768xf32>
    %53 = vector.broadcast %52 : vector<1x768xf32> to vector<16x768xf32>
    %54 = arith.mulf %51, %53 : vector<16x768xf32>
    %55 = arith.truncf %54 : vector<16x768xf32> to vector<16x768xbf16>
    %c16_i32_21 = arith.constant 16 : i32
    %56 = tpu.dynamic_rotate %49 by %c16_i32_21 dim 1 : vector<16x768xf32>, i32 -> vector<16x768xf32>
    %c1_22 = arith.constant 1 : index
    %c0_23 = arith.constant 0 : index
    %57 = vector.load %arg14[%c1_22, %c0_23] : memref<9x768xf32, #tpu.memory_space<vmem>>, vector<1x768xf32>
    %58 = vector.broadcast %57 : vector<1x768xf32> to vector<16x768xf32>
    %59 = arith.mulf %56, %58 : vector<16x768xf32>
    %60 = arith.truncf %59 : vector<16x768xf32> to vector<16x768xbf16>
    %c15_i32_24 = arith.constant 15 : i32
    %61 = tpu.dynamic_rotate %49 by %c15_i32_24 dim 1 : vector<16x768xf32>, i32 -> vector<16x768xf32>
    %c2_25 = arith.constant 2 : index
    %c0_26 = arith.constant 0 : index
    %62 = vector.load %arg14[%c2_25, %c0_26] : memref<9x768xf32, #tpu.memory_space<vmem>>, vector<1x768xf32>
    %63 = vector.broadcast %62 : vector<1x768xf32> to vector<16x768xf32>
    %64 = arith.mulf %61, %63 : vector<16x768xf32>
    %65 = arith.truncf %64 : vector<16x768xf32> to vector<16x768xbf16>
    %c1_i32_27 = arith.constant 1 : i32
    %66 = tpu.dynamic_rotate %49 by %c1_i32_27 dim 1 : vector<16x768xf32>, i32 -> vector<16x768xf32>
    %c3_28 = arith.constant 3 : index
    %c0_29 = arith.constant 0 : index
    %67 = vector.load %arg14[%c3_28, %c0_29] : memref<9x768xf32, #tpu.memory_space<vmem>>, vector<1x768xf32>
    %68 = vector.broadcast %67 : vector<1x768xf32> to vector<16x768xf32>
    %69 = arith.mulf %66, %68 : vector<16x768xf32>
    %70 = arith.truncf %69 : vector<16x768xf32> to vector<16x768xbf16>
    %71 = arith.truncf %49 : vector<16x768xf32> to vector<16x768xbf16>
    %c767_i32_30 = arith.constant 767 : i32
    %72 = tpu.dynamic_rotate %49 by %c767_i32_30 dim 1 : vector<16x768xf32>, i32 -> vector<16x768xf32>
    %c5_31 = arith.constant 5 : index
    %c0_32 = arith.constant 0 : index
    %73 = vector.load %arg14[%c5_31, %c0_32] : memref<9x768xf32, #tpu.memory_space<vmem>>, vector<1x768xf32>
    %74 = vector.broadcast %73 : vector<1x768xf32> to vector<16x768xf32>
    %75 = arith.mulf %72, %74 : vector<16x768xf32>
    %76 = arith.truncf %75 : vector<16x768xf32> to vector<16x768xbf16>
    %c753_i32_33 = arith.constant 753 : i32
    %77 = tpu.dynamic_rotate %49 by %c753_i32_33 dim 1 : vector<16x768xf32>, i32 -> vector<16x768xf32>
    %c6_34 = arith.constant 6 : index
    %c0_35 = arith.constant 0 : index
    %78 = vector.load %arg14[%c6_34, %c0_35] : memref<9x768xf32, #tpu.memory_space<vmem>>, vector<1x768xf32>
    %79 = vector.broadcast %78 : vector<1x768xf32> to vector<16x768xf32>
    %80 = arith.mulf %77, %79 : vector<16x768xf32>
    %81 = arith.truncf %80 : vector<16x768xf32> to vector<16x768xbf16>
    %c752_i32_36 = arith.constant 752 : i32
    %82 = tpu.dynamic_rotate %49 by %c752_i32_36 dim 1 : vector<16x768xf32>, i32 -> vector<16x768xf32>
    %c7_37 = arith.constant 7 : index
    %c0_38 = arith.constant 0 : index
    %83 = vector.load %arg14[%c7_37, %c0_38] : memref<9x768xf32, #tpu.memory_space<vmem>>, vector<1x768xf32>
    %84 = vector.broadcast %83 : vector<1x768xf32> to vector<16x768xf32>
    %85 = arith.mulf %82, %84 : vector<16x768xf32>
    %86 = arith.truncf %85 : vector<16x768xf32> to vector<16x768xbf16>
    %c751_i32_39 = arith.constant 751 : i32
    %87 = tpu.dynamic_rotate %49 by %c751_i32_39 dim 1 : vector<16x768xf32>, i32 -> vector<16x768xf32>
    %c8_40 = arith.constant 8 : index
    %c0_41 = arith.constant 0 : index
    %88 = vector.load %arg14[%c8_40, %c0_41] : memref<9x768xf32, #tpu.memory_space<vmem>>, vector<1x768xf32>
    %89 = vector.broadcast %88 : vector<1x768xf32> to vector<16x768xf32>
    %90 = arith.mulf %87, %89 : vector<16x768xf32>
    %91 = arith.truncf %90 : vector<16x768xf32> to vector<16x768xbf16>
    %92 = tpu.concatenate %55, %60, %65, %70, %71, %76, %81, %86, %91, %0 in 0 : vector<16x768xbf16>, vector<16x768xbf16>, vector<16x768xbf16>, vector<16x768xbf16>, vector<16x768xbf16>, vector<16x768xbf16>, vector<16x768xbf16>, vector<16x768xbf16>, vector<16x768xbf16>, vector<1x768xbf16> -> vector<145x768xbf16>
    %cst_42 = arith.constant dense<0.000000e+00> : vector<16x768xf32>
    %93 = tpu.matmul %50, %92, %cst_42 {dimension_numbers = #tpu.dot_dimension_numbers<[1], [0], [0], [1], [0, 0, 1, 1], [], []>} : vector<16x145xbf16>, vector<145x768xbf16>, vector<16x768xf32> -> vector<16x768xf32>
    %cst_43 = arith.constant 0.000000e+00 : f32
    %94 = vector.broadcast %cst_43 : f32 to vector<16x768xf32>
    %95 = arith.maximumf %93, %94 : vector<16x768xf32>
    %c767_i32_44 = arith.constant 767 : i32
    %96 = tpu.dynamic_rotate %95 by %c767_i32_44 dim 1 : vector<16x768xf32>, i32 -> vector<16x768xf32>
    %c752_i32_45 = arith.constant 752 : i32
    %97 = tpu.dynamic_rotate %95 by %c752_i32_45 dim 1 : vector<16x768xf32>, i32 -> vector<16x768xf32>
    %c751_i32_46 = arith.constant 751 : i32
    %98 = tpu.dynamic_rotate %95 by %c751_i32_46 dim 1 : vector<16x768xf32>, i32 -> vector<16x768xf32>
    %99 = arith.maximumf %95, %96 : vector<16x768xf32>
    %100 = arith.maximumf %97, %98 : vector<16x768xf32>
    %101 = arith.maximumf %99, %100 : vector<16x768xf32>
    %102 = arith.truncf %101 : vector<16x768xf32> to vector<16x768xbf16>
    %c0_47 = arith.constant 0 : index
    %c0_48 = arith.constant 0 : index
    %103 = vector.load %arg11[%c0_47, %c0_48] : memref<768x192xbf16, #tpu.memory_space<vmem>>, vector<768x192xbf16>
    %cst_49 = arith.constant dense<0.000000e+00> : vector<16x192xf32>
    %104 = tpu.matmul %102, %103, %cst_49 {dimension_numbers = #tpu.dot_dimension_numbers<[1], [0], [0], [1], [0, 0, 1, 1], [], []>} : vector<16x768xbf16>, vector<768x192xbf16>, vector<16x192xf32> -> vector<16x192xf32>
    %c0_50 = arith.constant 0 : index
    %c0_51 = arith.constant 0 : index
    %105 = vector.load %arg4[%c0_50, %c0_51] : memref<32x145xbf16, #tpu.memory_space<vmem>>, vector<32x145xbf16>
    %c9_i32 = arith.constant 9 : i32
    %106 = tpu.dynamic_rotate %104 by %c9_i32 dim 1 : vector<16x192xf32>, i32 -> vector<16x192xf32>
    %c0_52 = arith.constant 0 : index
    %c0_53 = arith.constant 0 : index
    %107 = vector.load %arg15[%c0_52, %c0_53] : memref<9x192xf32, #tpu.memory_space<vmem>>, vector<1x192xf32>
    %108 = vector.broadcast %107 : vector<1x192xf32> to vector<16x192xf32>
    %109 = arith.mulf %106, %108 : vector<16x192xf32>
    %110 = arith.truncf %109 : vector<16x192xf32> to vector<16x192xbf16>
    %c8_i32 = arith.constant 8 : i32
    %111 = tpu.dynamic_rotate %104 by %c8_i32 dim 1 : vector<16x192xf32>, i32 -> vector<16x192xf32>
    %c1_54 = arith.constant 1 : index
    %c0_55 = arith.constant 0 : index
    %112 = vector.load %arg15[%c1_54, %c0_55] : memref<9x192xf32, #tpu.memory_space<vmem>>, vector<1x192xf32>
    %113 = vector.broadcast %112 : vector<1x192xf32> to vector<16x192xf32>
    %114 = arith.mulf %111, %113 : vector<16x192xf32>
    %115 = arith.truncf %114 : vector<16x192xf32> to vector<16x192xbf16>
    %c7_i32 = arith.constant 7 : i32
    %116 = tpu.dynamic_rotate %104 by %c7_i32 dim 1 : vector<16x192xf32>, i32 -> vector<16x192xf32>
    %c2_56 = arith.constant 2 : index
    %c0_57 = arith.constant 0 : index
    %117 = vector.load %arg15[%c2_56, %c0_57] : memref<9x192xf32, #tpu.memory_space<vmem>>, vector<1x192xf32>
    %118 = vector.broadcast %117 : vector<1x192xf32> to vector<16x192xf32>
    %119 = arith.mulf %116, %118 : vector<16x192xf32>
    %120 = arith.truncf %119 : vector<16x192xf32> to vector<16x192xbf16>
    %c1_i32_58 = arith.constant 1 : i32
    %121 = tpu.dynamic_rotate %104 by %c1_i32_58 dim 1 : vector<16x192xf32>, i32 -> vector<16x192xf32>
    %c3_59 = arith.constant 3 : index
    %c0_60 = arith.constant 0 : index
    %122 = vector.load %arg15[%c3_59, %c0_60] : memref<9x192xf32, #tpu.memory_space<vmem>>, vector<1x192xf32>
    %123 = vector.broadcast %122 : vector<1x192xf32> to vector<16x192xf32>
    %124 = arith.mulf %121, %123 : vector<16x192xf32>
    %125 = arith.truncf %124 : vector<16x192xf32> to vector<16x192xbf16>
    %126 = arith.truncf %104 : vector<16x192xf32> to vector<16x192xbf16>
    %c191_i32 = arith.constant 191 : i32
    %127 = tpu.dynamic_rotate %104 by %c191_i32 dim 1 : vector<16x192xf32>, i32 -> vector<16x192xf32>
    %c5_61 = arith.constant 5 : index
    %c0_62 = arith.constant 0 : index
    %128 = vector.load %arg15[%c5_61, %c0_62] : memref<9x192xf32, #tpu.memory_space<vmem>>, vector<1x192xf32>
    %129 = vector.broadcast %128 : vector<1x192xf32> to vector<16x192xf32>
    %130 = arith.mulf %127, %129 : vector<16x192xf32>
    %131 = arith.truncf %130 : vector<16x192xf32> to vector<16x192xbf16>
    %c185_i32 = arith.constant 185 : i32
    %132 = tpu.dynamic_rotate %104 by %c185_i32 dim 1 : vector<16x192xf32>, i32 -> vector<16x192xf32>
    %c6_63 = arith.constant 6 : index
    %c0_64 = arith.constant 0 : index
    %133 = vector.load %arg15[%c6_63, %c0_64] : memref<9x192xf32, #tpu.memory_space<vmem>>, vector<1x192xf32>
    %134 = vector.broadcast %133 : vector<1x192xf32> to vector<16x192xf32>
    %135 = arith.mulf %132, %134 : vector<16x192xf32>
    %136 = arith.truncf %135 : vector<16x192xf32> to vector<16x192xbf16>
    %c184_i32 = arith.constant 184 : i32
    %137 = tpu.dynamic_rotate %104 by %c184_i32 dim 1 : vector<16x192xf32>, i32 -> vector<16x192xf32>
    %c7_65 = arith.constant 7 : index
    %c0_66 = arith.constant 0 : index
    %138 = vector.load %arg15[%c7_65, %c0_66] : memref<9x192xf32, #tpu.memory_space<vmem>>, vector<1x192xf32>
    %139 = vector.broadcast %138 : vector<1x192xf32> to vector<16x192xf32>
    %140 = arith.mulf %137, %139 : vector<16x192xf32>
    %141 = arith.truncf %140 : vector<16x192xf32> to vector<16x192xbf16>
    %c183_i32 = arith.constant 183 : i32
    %142 = tpu.dynamic_rotate %104 by %c183_i32 dim 1 : vector<16x192xf32>, i32 -> vector<16x192xf32>
    %c8_67 = arith.constant 8 : index
    %c0_68 = arith.constant 0 : index
    %143 = vector.load %arg15[%c8_67, %c0_68] : memref<9x192xf32, #tpu.memory_space<vmem>>, vector<1x192xf32>
    %144 = vector.broadcast %143 : vector<1x192xf32> to vector<16x192xf32>
    %145 = arith.mulf %142, %144 : vector<16x192xf32>
    %146 = arith.truncf %145 : vector<16x192xf32> to vector<16x192xbf16>
    %147 = tpu.concatenate %110, %115, %120, %125, %126, %131, %136, %141, %146, %1 in 0 : vector<16x192xbf16>, vector<16x192xbf16>, vector<16x192xbf16>, vector<16x192xbf16>, vector<16x192xbf16>, vector<16x192xbf16>, vector<16x192xbf16>, vector<16x192xbf16>, vector<16x192xbf16>, vector<1x192xbf16> -> vector<145x192xbf16>
    %cst_69 = arith.constant dense<0.000000e+00> : vector<32x192xf32>
    %148 = tpu.matmul %105, %147, %cst_69 {dimension_numbers = #tpu.dot_dimension_numbers<[1], [0], [0], [1], [0, 0, 1, 1], [], []>} : vector<32x145xbf16>, vector<145x192xbf16>, vector<32x192xf32> -> vector<32x192xf32>
    %cst_70 = arith.constant 0.000000e+00 : f32
    %149 = vector.broadcast %cst_70 : f32 to vector<32x192xf32>
    %150 = arith.maximumf %148, %149 : vector<32x192xf32>
    %c0_71 = arith.constant 0 : index
    %c0_72 = arith.constant 0 : index
    %151 = vector.load %arg5[%c0_71, %c0_72] : memref<32x289xbf16, #tpu.memory_space<vmem>>, vector<32x289xbf16>
    %c9_i32_73 = arith.constant 9 : i32
    %152 = tpu.dynamic_rotate %150 by %c9_i32_73 dim 1 : vector<32x192xf32>, i32 -> vector<32x192xf32>
    %c0_74 = arith.constant 0 : index
    %c0_75 = arith.constant 0 : index
    %153 = vector.load %arg15[%c0_74, %c0_75] : memref<9x192xf32, #tpu.memory_space<vmem>>, vector<1x192xf32>
    %154 = vector.broadcast %153 : vector<1x192xf32> to vector<32x192xf32>
    %155 = arith.mulf %152, %154 : vector<32x192xf32>
    %156 = arith.truncf %155 : vector<32x192xf32> to vector<32x192xbf16>
    %c8_i32_76 = arith.constant 8 : i32
    %157 = tpu.dynamic_rotate %150 by %c8_i32_76 dim 1 : vector<32x192xf32>, i32 -> vector<32x192xf32>
    %c1_77 = arith.constant 1 : index
    %c0_78 = arith.constant 0 : index
    %158 = vector.load %arg15[%c1_77, %c0_78] : memref<9x192xf32, #tpu.memory_space<vmem>>, vector<1x192xf32>
    %159 = vector.broadcast %158 : vector<1x192xf32> to vector<32x192xf32>
    %160 = arith.mulf %157, %159 : vector<32x192xf32>
    %161 = arith.truncf %160 : vector<32x192xf32> to vector<32x192xbf16>
    %c7_i32_79 = arith.constant 7 : i32
    %162 = tpu.dynamic_rotate %150 by %c7_i32_79 dim 1 : vector<32x192xf32>, i32 -> vector<32x192xf32>
    %c2_80 = arith.constant 2 : index
    %c0_81 = arith.constant 0 : index
    %163 = vector.load %arg15[%c2_80, %c0_81] : memref<9x192xf32, #tpu.memory_space<vmem>>, vector<1x192xf32>
    %164 = vector.broadcast %163 : vector<1x192xf32> to vector<32x192xf32>
    %165 = arith.mulf %162, %164 : vector<32x192xf32>
    %166 = arith.truncf %165 : vector<32x192xf32> to vector<32x192xbf16>
    %c1_i32_82 = arith.constant 1 : i32
    %167 = tpu.dynamic_rotate %150 by %c1_i32_82 dim 1 : vector<32x192xf32>, i32 -> vector<32x192xf32>
    %c3_83 = arith.constant 3 : index
    %c0_84 = arith.constant 0 : index
    %168 = vector.load %arg15[%c3_83, %c0_84] : memref<9x192xf32, #tpu.memory_space<vmem>>, vector<1x192xf32>
    %169 = vector.broadcast %168 : vector<1x192xf32> to vector<32x192xf32>
    %170 = arith.mulf %167, %169 : vector<32x192xf32>
    %171 = arith.truncf %170 : vector<32x192xf32> to vector<32x192xbf16>
    %172 = arith.truncf %150 : vector<32x192xf32> to vector<32x192xbf16>
    %c191_i32_85 = arith.constant 191 : i32
    %173 = tpu.dynamic_rotate %150 by %c191_i32_85 dim 1 : vector<32x192xf32>, i32 -> vector<32x192xf32>
    %c5_86 = arith.constant 5 : index
    %c0_87 = arith.constant 0 : index
    %174 = vector.load %arg15[%c5_86, %c0_87] : memref<9x192xf32, #tpu.memory_space<vmem>>, vector<1x192xf32>
    %175 = vector.broadcast %174 : vector<1x192xf32> to vector<32x192xf32>
    %176 = arith.mulf %173, %175 : vector<32x192xf32>
    %177 = arith.truncf %176 : vector<32x192xf32> to vector<32x192xbf16>
    %c185_i32_88 = arith.constant 185 : i32
    %178 = tpu.dynamic_rotate %150 by %c185_i32_88 dim 1 : vector<32x192xf32>, i32 -> vector<32x192xf32>
    %c6_89 = arith.constant 6 : index
    %c0_90 = arith.constant 0 : index
    %179 = vector.load %arg15[%c6_89, %c0_90] : memref<9x192xf32, #tpu.memory_space<vmem>>, vector<1x192xf32>
    %180 = vector.broadcast %179 : vector<1x192xf32> to vector<32x192xf32>
    %181 = arith.mulf %178, %180 : vector<32x192xf32>
    %182 = arith.truncf %181 : vector<32x192xf32> to vector<32x192xbf16>
    %c184_i32_91 = arith.constant 184 : i32
    %183 = tpu.dynamic_rotate %150 by %c184_i32_91 dim 1 : vector<32x192xf32>, i32 -> vector<32x192xf32>
    %c7_92 = arith.constant 7 : index
    %c0_93 = arith.constant 0 : index
    %184 = vector.load %arg15[%c7_92, %c0_93] : memref<9x192xf32, #tpu.memory_space<vmem>>, vector<1x192xf32>
    %185 = vector.broadcast %184 : vector<1x192xf32> to vector<32x192xf32>
    %186 = arith.mulf %183, %185 : vector<32x192xf32>
    %187 = arith.truncf %186 : vector<32x192xf32> to vector<32x192xbf16>
    %c183_i32_94 = arith.constant 183 : i32
    %188 = tpu.dynamic_rotate %150 by %c183_i32_94 dim 1 : vector<32x192xf32>, i32 -> vector<32x192xf32>
    %c8_95 = arith.constant 8 : index
    %c0_96 = arith.constant 0 : index
    %189 = vector.load %arg15[%c8_95, %c0_96] : memref<9x192xf32, #tpu.memory_space<vmem>>, vector<1x192xf32>
    %190 = vector.broadcast %189 : vector<1x192xf32> to vector<32x192xf32>
    %191 = arith.mulf %188, %190 : vector<32x192xf32>
    %192 = arith.truncf %191 : vector<32x192xf32> to vector<32x192xbf16>
    %193 = tpu.concatenate %156, %161, %166, %171, %172, %177, %182, %187, %192, %1 in 0 : vector<32x192xbf16>, vector<32x192xbf16>, vector<32x192xbf16>, vector<32x192xbf16>, vector<32x192xbf16>, vector<32x192xbf16>, vector<32x192xbf16>, vector<32x192xbf16>, vector<32x192xbf16>, vector<1x192xbf16> -> vector<289x192xbf16>
    %cst_97 = arith.constant dense<0.000000e+00> : vector<32x192xf32>
    %194 = tpu.matmul %151, %193, %cst_97 {dimension_numbers = #tpu.dot_dimension_numbers<[1], [0], [0], [1], [0, 0, 1, 1], [], []>} : vector<32x289xbf16>, vector<289x192xbf16>, vector<32x192xf32> -> vector<32x192xf32>
    %cst_98 = arith.constant 0.000000e+00 : f32
    %195 = vector.broadcast %cst_98 : f32 to vector<32x192xf32>
    %196 = arith.maximumf %194, %195 : vector<32x192xf32>
    %197 = arith.truncf %196 : vector<32x192xf32> to vector<32x192xbf16>
    %c0_99 = arith.constant 0 : index
    %c0_100 = arith.constant 0 : index
    %198 = vector.load %arg12[%c0_99, %c0_100] : memref<192x768xbf16, #tpu.memory_space<vmem>>, vector<192x768xbf16>
    %cst_101 = arith.constant dense<0.000000e+00> : vector<32x768xf32>
    %199 = tpu.matmul %197, %198, %cst_101 {dimension_numbers = #tpu.dot_dimension_numbers<[1], [0], [0], [1], [0, 0, 1, 1], [], []>} : vector<32x192xbf16>, vector<192x768xbf16>, vector<32x768xf32> -> vector<32x768xf32>
    %c0_102 = arith.constant 0 : index
    %c0_103 = arith.constant 0 : index
    %200 = vector.load %arg6[%c0_102, %c0_103] : memref<16x288xbf16, #tpu.memory_space<vmem>>, vector<16x288xbf16>
    %c17_i32_104 = arith.constant 17 : i32
    %201 = tpu.dynamic_rotate %199 by %c17_i32_104 dim 1 : vector<32x768xf32>, i32 -> vector<32x768xf32>
    %c0_105 = arith.constant 0 : index
    %c0_106 = arith.constant 0 : index
    %202 = vector.load %arg14[%c0_105, %c0_106] : memref<9x768xf32, #tpu.memory_space<vmem>>, vector<1x768xf32>
    %203 = vector.broadcast %202 : vector<1x768xf32> to vector<32x768xf32>
    %204 = arith.mulf %201, %203 : vector<32x768xf32>
    %205 = arith.truncf %204 : vector<32x768xf32> to vector<32x768xbf16>
    %c16_i32_107 = arith.constant 16 : i32
    %206 = tpu.dynamic_rotate %199 by %c16_i32_107 dim 1 : vector<32x768xf32>, i32 -> vector<32x768xf32>
    %c1_108 = arith.constant 1 : index
    %c0_109 = arith.constant 0 : index
    %207 = vector.load %arg14[%c1_108, %c0_109] : memref<9x768xf32, #tpu.memory_space<vmem>>, vector<1x768xf32>
    %208 = vector.broadcast %207 : vector<1x768xf32> to vector<32x768xf32>
    %209 = arith.mulf %206, %208 : vector<32x768xf32>
    %210 = arith.truncf %209 : vector<32x768xf32> to vector<32x768xbf16>
    %c15_i32_110 = arith.constant 15 : i32
    %211 = tpu.dynamic_rotate %199 by %c15_i32_110 dim 1 : vector<32x768xf32>, i32 -> vector<32x768xf32>
    %c2_111 = arith.constant 2 : index
    %c0_112 = arith.constant 0 : index
    %212 = vector.load %arg14[%c2_111, %c0_112] : memref<9x768xf32, #tpu.memory_space<vmem>>, vector<1x768xf32>
    %213 = vector.broadcast %212 : vector<1x768xf32> to vector<32x768xf32>
    %214 = arith.mulf %211, %213 : vector<32x768xf32>
    %215 = arith.truncf %214 : vector<32x768xf32> to vector<32x768xbf16>
    %c1_i32_113 = arith.constant 1 : i32
    %216 = tpu.dynamic_rotate %199 by %c1_i32_113 dim 1 : vector<32x768xf32>, i32 -> vector<32x768xf32>
    %c3_114 = arith.constant 3 : index
    %c0_115 = arith.constant 0 : index
    %217 = vector.load %arg14[%c3_114, %c0_115] : memref<9x768xf32, #tpu.memory_space<vmem>>, vector<1x768xf32>
    %218 = vector.broadcast %217 : vector<1x768xf32> to vector<32x768xf32>
    %219 = arith.mulf %216, %218 : vector<32x768xf32>
    %220 = arith.truncf %219 : vector<32x768xf32> to vector<32x768xbf16>
    %221 = arith.truncf %199 : vector<32x768xf32> to vector<32x768xbf16>
    %c767_i32_116 = arith.constant 767 : i32
    %222 = tpu.dynamic_rotate %199 by %c767_i32_116 dim 1 : vector<32x768xf32>, i32 -> vector<32x768xf32>
    %c5_117 = arith.constant 5 : index
    %c0_118 = arith.constant 0 : index
    %223 = vector.load %arg14[%c5_117, %c0_118] : memref<9x768xf32, #tpu.memory_space<vmem>>, vector<1x768xf32>
    %224 = vector.broadcast %223 : vector<1x768xf32> to vector<32x768xf32>
    %225 = arith.mulf %222, %224 : vector<32x768xf32>
    %226 = arith.truncf %225 : vector<32x768xf32> to vector<32x768xbf16>
    %c753_i32_119 = arith.constant 753 : i32
    %227 = tpu.dynamic_rotate %199 by %c753_i32_119 dim 1 : vector<32x768xf32>, i32 -> vector<32x768xf32>
    %c6_120 = arith.constant 6 : index
    %c0_121 = arith.constant 0 : index
    %228 = vector.load %arg14[%c6_120, %c0_121] : memref<9x768xf32, #tpu.memory_space<vmem>>, vector<1x768xf32>
    %229 = vector.broadcast %228 : vector<1x768xf32> to vector<32x768xf32>
    %230 = arith.mulf %227, %229 : vector<32x768xf32>
    %231 = arith.truncf %230 : vector<32x768xf32> to vector<32x768xbf16>
    %c752_i32_122 = arith.constant 752 : i32
    %232 = tpu.dynamic_rotate %199 by %c752_i32_122 dim 1 : vector<32x768xf32>, i32 -> vector<32x768xf32>
    %c7_123 = arith.constant 7 : index
    %c0_124 = arith.constant 0 : index
    %233 = vector.load %arg14[%c7_123, %c0_124] : memref<9x768xf32, #tpu.memory_space<vmem>>, vector<1x768xf32>
    %234 = vector.broadcast %233 : vector<1x768xf32> to vector<32x768xf32>
    %235 = arith.mulf %232, %234 : vector<32x768xf32>
    %236 = arith.truncf %235 : vector<32x768xf32> to vector<32x768xbf16>
    %c751_i32_125 = arith.constant 751 : i32
    %237 = tpu.dynamic_rotate %199 by %c751_i32_125 dim 1 : vector<32x768xf32>, i32 -> vector<32x768xf32>
    %c8_126 = arith.constant 8 : index
    %c0_127 = arith.constant 0 : index
    %238 = vector.load %arg14[%c8_126, %c0_127] : memref<9x768xf32, #tpu.memory_space<vmem>>, vector<1x768xf32>
    %239 = vector.broadcast %238 : vector<1x768xf32> to vector<32x768xf32>
    %240 = arith.mulf %237, %239 : vector<32x768xf32>
    %241 = arith.truncf %240 : vector<32x768xf32> to vector<32x768xbf16>
    %242 = tpu.concatenate %205, %210, %215, %220, %221, %226, %231, %236, %241 in 0 : vector<32x768xbf16>, vector<32x768xbf16>, vector<32x768xbf16>, vector<32x768xbf16>, vector<32x768xbf16>, vector<32x768xbf16>, vector<32x768xbf16>, vector<32x768xbf16>, vector<32x768xbf16> -> vector<288x768xbf16>
    %cst_128 = arith.constant dense<0.000000e+00> : vector<16x768xf32>
    %243 = tpu.matmul %200, %242, %cst_128 {dimension_numbers = #tpu.dot_dimension_numbers<[1], [0], [0], [1], [0, 0, 1, 1], [], []>} : vector<16x288xbf16>, vector<288x768xbf16>, vector<16x768xf32> -> vector<16x768xf32>
    %c0_129 = arith.constant 0 : index
    %c0_130 = arith.constant 0 : index
    %244 = vector.load %arg7[%c0_129, %c0_130] : memref<16x145xbf16, #tpu.memory_space<vmem>>, vector<16x145xbf16>
    %c17_i32_131 = arith.constant 17 : i32
    %245 = tpu.dynamic_rotate %95 by %c17_i32_131 dim 1 : vector<16x768xf32>, i32 -> vector<16x768xf32>
    %c0_132 = arith.constant 0 : index
    %c0_133 = arith.constant 0 : index
    %246 = vector.load %arg14[%c0_132, %c0_133] : memref<9x768xf32, #tpu.memory_space<vmem>>, vector<1x768xf32>
    %247 = vector.broadcast %246 : vector<1x768xf32> to vector<16x768xf32>
    %248 = arith.mulf %245, %247 : vector<16x768xf32>
    %249 = arith.truncf %248 : vector<16x768xf32> to vector<16x768xbf16>
    %c16_i32_134 = arith.constant 16 : i32
    %250 = tpu.dynamic_rotate %95 by %c16_i32_134 dim 1 : vector<16x768xf32>, i32 -> vector<16x768xf32>
    %c1_135 = arith.constant 1 : index
    %c0_136 = arith.constant 0 : index
    %251 = vector.load %arg14[%c1_135, %c0_136] : memref<9x768xf32, #tpu.memory_space<vmem>>, vector<1x768xf32>
    %252 = vector.broadcast %251 : vector<1x768xf32> to vector<16x768xf32>
    %253 = arith.mulf %250, %252 : vector<16x768xf32>
    %254 = arith.truncf %253 : vector<16x768xf32> to vector<16x768xbf16>
    %c15_i32_137 = arith.constant 15 : i32
    %255 = tpu.dynamic_rotate %95 by %c15_i32_137 dim 1 : vector<16x768xf32>, i32 -> vector<16x768xf32>
    %c2_138 = arith.constant 2 : index
    %c0_139 = arith.constant 0 : index
    %256 = vector.load %arg14[%c2_138, %c0_139] : memref<9x768xf32, #tpu.memory_space<vmem>>, vector<1x768xf32>
    %257 = vector.broadcast %256 : vector<1x768xf32> to vector<16x768xf32>
    %258 = arith.mulf %255, %257 : vector<16x768xf32>
    %259 = arith.truncf %258 : vector<16x768xf32> to vector<16x768xbf16>
    %c1_i32_140 = arith.constant 1 : i32
    %260 = tpu.dynamic_rotate %95 by %c1_i32_140 dim 1 : vector<16x768xf32>, i32 -> vector<16x768xf32>
    %c3_141 = arith.constant 3 : index
    %c0_142 = arith.constant 0 : index
    %261 = vector.load %arg14[%c3_141, %c0_142] : memref<9x768xf32, #tpu.memory_space<vmem>>, vector<1x768xf32>
    %262 = vector.broadcast %261 : vector<1x768xf32> to vector<16x768xf32>
    %263 = arith.mulf %260, %262 : vector<16x768xf32>
    %264 = arith.truncf %263 : vector<16x768xf32> to vector<16x768xbf16>
    %265 = arith.truncf %95 : vector<16x768xf32> to vector<16x768xbf16>
    %c767_i32_143 = arith.constant 767 : i32
    %266 = tpu.dynamic_rotate %95 by %c767_i32_143 dim 1 : vector<16x768xf32>, i32 -> vector<16x768xf32>
    %c5_144 = arith.constant 5 : index
    %c0_145 = arith.constant 0 : index
    %267 = vector.load %arg14[%c5_144, %c0_145] : memref<9x768xf32, #tpu.memory_space<vmem>>, vector<1x768xf32>
    %268 = vector.broadcast %267 : vector<1x768xf32> to vector<16x768xf32>
    %269 = arith.mulf %266, %268 : vector<16x768xf32>
    %270 = arith.truncf %269 : vector<16x768xf32> to vector<16x768xbf16>
    %c753_i32_146 = arith.constant 753 : i32
    %271 = tpu.dynamic_rotate %95 by %c753_i32_146 dim 1 : vector<16x768xf32>, i32 -> vector<16x768xf32>
    %c6_147 = arith.constant 6 : index
    %c0_148 = arith.constant 0 : index
    %272 = vector.load %arg14[%c6_147, %c0_148] : memref<9x768xf32, #tpu.memory_space<vmem>>, vector<1x768xf32>
    %273 = vector.broadcast %272 : vector<1x768xf32> to vector<16x768xf32>
    %274 = arith.mulf %271, %273 : vector<16x768xf32>
    %275 = arith.truncf %274 : vector<16x768xf32> to vector<16x768xbf16>
    %c752_i32_149 = arith.constant 752 : i32
    %276 = tpu.dynamic_rotate %95 by %c752_i32_149 dim 1 : vector<16x768xf32>, i32 -> vector<16x768xf32>
    %c7_150 = arith.constant 7 : index
    %c0_151 = arith.constant 0 : index
    %277 = vector.load %arg14[%c7_150, %c0_151] : memref<9x768xf32, #tpu.memory_space<vmem>>, vector<1x768xf32>
    %278 = vector.broadcast %277 : vector<1x768xf32> to vector<16x768xf32>
    %279 = arith.mulf %276, %278 : vector<16x768xf32>
    %280 = arith.truncf %279 : vector<16x768xf32> to vector<16x768xbf16>
    %c751_i32_152 = arith.constant 751 : i32
    %281 = tpu.dynamic_rotate %95 by %c751_i32_152 dim 1 : vector<16x768xf32>, i32 -> vector<16x768xf32>
    %c8_153 = arith.constant 8 : index
    %c0_154 = arith.constant 0 : index
    %282 = vector.load %arg14[%c8_153, %c0_154] : memref<9x768xf32, #tpu.memory_space<vmem>>, vector<1x768xf32>
    %283 = vector.broadcast %282 : vector<1x768xf32> to vector<16x768xf32>
    %284 = arith.mulf %281, %283 : vector<16x768xf32>
    %285 = arith.truncf %284 : vector<16x768xf32> to vector<16x768xbf16>
    %286 = tpu.concatenate %249, %254, %259, %264, %265, %270, %275, %280, %285, %0 in 0 : vector<16x768xbf16>, vector<16x768xbf16>, vector<16x768xbf16>, vector<16x768xbf16>, vector<16x768xbf16>, vector<16x768xbf16>, vector<16x768xbf16>, vector<16x768xbf16>, vector<16x768xbf16>, vector<1x768xbf16> -> vector<145x768xbf16>
    %cst_155 = arith.constant dense<0.000000e+00> : vector<16x768xf32>
    %287 = tpu.matmul %244, %286, %cst_155 {dimension_numbers = #tpu.dot_dimension_numbers<[1], [0], [0], [1], [0, 0, 1, 1], [], []>} : vector<16x145xbf16>, vector<145x768xbf16>, vector<16x768xf32> -> vector<16x768xf32>
    %288 = arith.addf %243, %287 : vector<16x768xf32>
    %cst_156 = arith.constant 0.000000e+00 : f32
    %289 = vector.broadcast %cst_156 : f32 to vector<16x768xf32>
    %290 = arith.maximumf %288, %289 : vector<16x768xf32>
    %c0_157 = arith.constant 0 : index
    %c0_158 = arith.constant 0 : index
    %291 = vector.load %arg8[%c0_157, %c0_158] : memref<16x145xbf16, #tpu.memory_space<vmem>>, vector<16x145xbf16>
    %c17_i32_159 = arith.constant 17 : i32
    %292 = tpu.dynamic_rotate %290 by %c17_i32_159 dim 1 : vector<16x768xf32>, i32 -> vector<16x768xf32>
    %c0_160 = arith.constant 0 : index
    %c0_161 = arith.constant 0 : index
    %293 = vector.load %arg14[%c0_160, %c0_161] : memref<9x768xf32, #tpu.memory_space<vmem>>, vector<1x768xf32>
    %294 = vector.broadcast %293 : vector<1x768xf32> to vector<16x768xf32>
    %295 = arith.mulf %292, %294 : vector<16x768xf32>
    %296 = arith.truncf %295 : vector<16x768xf32> to vector<16x768xbf16>
    %c16_i32_162 = arith.constant 16 : i32
    %297 = tpu.dynamic_rotate %290 by %c16_i32_162 dim 1 : vector<16x768xf32>, i32 -> vector<16x768xf32>
    %c1_163 = arith.constant 1 : index
    %c0_164 = arith.constant 0 : index
    %298 = vector.load %arg14[%c1_163, %c0_164] : memref<9x768xf32, #tpu.memory_space<vmem>>, vector<1x768xf32>
    %299 = vector.broadcast %298 : vector<1x768xf32> to vector<16x768xf32>
    %300 = arith.mulf %297, %299 : vector<16x768xf32>
    %301 = arith.truncf %300 : vector<16x768xf32> to vector<16x768xbf16>
    %c15_i32_165 = arith.constant 15 : i32
    %302 = tpu.dynamic_rotate %290 by %c15_i32_165 dim 1 : vector<16x768xf32>, i32 -> vector<16x768xf32>
    %c2_166 = arith.constant 2 : index
    %c0_167 = arith.constant 0 : index
    %303 = vector.load %arg14[%c2_166, %c0_167] : memref<9x768xf32, #tpu.memory_space<vmem>>, vector<1x768xf32>
    %304 = vector.broadcast %303 : vector<1x768xf32> to vector<16x768xf32>
    %305 = arith.mulf %302, %304 : vector<16x768xf32>
    %306 = arith.truncf %305 : vector<16x768xf32> to vector<16x768xbf16>
    %c1_i32_168 = arith.constant 1 : i32
    %307 = tpu.dynamic_rotate %290 by %c1_i32_168 dim 1 : vector<16x768xf32>, i32 -> vector<16x768xf32>
    %c3_169 = arith.constant 3 : index
    %c0_170 = arith.constant 0 : index
    %308 = vector.load %arg14[%c3_169, %c0_170] : memref<9x768xf32, #tpu.memory_space<vmem>>, vector<1x768xf32>
    %309 = vector.broadcast %308 : vector<1x768xf32> to vector<16x768xf32>
    %310 = arith.mulf %307, %309 : vector<16x768xf32>
    %311 = arith.truncf %310 : vector<16x768xf32> to vector<16x768xbf16>
    %312 = arith.truncf %290 : vector<16x768xf32> to vector<16x768xbf16>
    %c767_i32_171 = arith.constant 767 : i32
    %313 = tpu.dynamic_rotate %290 by %c767_i32_171 dim 1 : vector<16x768xf32>, i32 -> vector<16x768xf32>
    %c5_172 = arith.constant 5 : index
    %c0_173 = arith.constant 0 : index
    %314 = vector.load %arg14[%c5_172, %c0_173] : memref<9x768xf32, #tpu.memory_space<vmem>>, vector<1x768xf32>
    %315 = vector.broadcast %314 : vector<1x768xf32> to vector<16x768xf32>
    %316 = arith.mulf %313, %315 : vector<16x768xf32>
    %317 = arith.truncf %316 : vector<16x768xf32> to vector<16x768xbf16>
    %c753_i32_174 = arith.constant 753 : i32
    %318 = tpu.dynamic_rotate %290 by %c753_i32_174 dim 1 : vector<16x768xf32>, i32 -> vector<16x768xf32>
    %c6_175 = arith.constant 6 : index
    %c0_176 = arith.constant 0 : index
    %319 = vector.load %arg14[%c6_175, %c0_176] : memref<9x768xf32, #tpu.memory_space<vmem>>, vector<1x768xf32>
    %320 = vector.broadcast %319 : vector<1x768xf32> to vector<16x768xf32>
    %321 = arith.mulf %318, %320 : vector<16x768xf32>
    %322 = arith.truncf %321 : vector<16x768xf32> to vector<16x768xbf16>
    %c752_i32_177 = arith.constant 752 : i32
    %323 = tpu.dynamic_rotate %290 by %c752_i32_177 dim 1 : vector<16x768xf32>, i32 -> vector<16x768xf32>
    %c7_178 = arith.constant 7 : index
    %c0_179 = arith.constant 0 : index
    %324 = vector.load %arg14[%c7_178, %c0_179] : memref<9x768xf32, #tpu.memory_space<vmem>>, vector<1x768xf32>
    %325 = vector.broadcast %324 : vector<1x768xf32> to vector<16x768xf32>
    %326 = arith.mulf %323, %325 : vector<16x768xf32>
    %327 = arith.truncf %326 : vector<16x768xf32> to vector<16x768xbf16>
    %c751_i32_180 = arith.constant 751 : i32
    %328 = tpu.dynamic_rotate %290 by %c751_i32_180 dim 1 : vector<16x768xf32>, i32 -> vector<16x768xf32>
    %c8_181 = arith.constant 8 : index
    %c0_182 = arith.constant 0 : index
    %329 = vector.load %arg14[%c8_181, %c0_182] : memref<9x768xf32, #tpu.memory_space<vmem>>, vector<1x768xf32>
    %330 = vector.broadcast %329 : vector<1x768xf32> to vector<16x768xf32>
    %331 = arith.mulf %328, %330 : vector<16x768xf32>
    %332 = arith.truncf %331 : vector<16x768xf32> to vector<16x768xbf16>
    %333 = tpu.concatenate %296, %301, %306, %311, %312, %317, %322, %327, %332, %0 in 0 : vector<16x768xbf16>, vector<16x768xbf16>, vector<16x768xbf16>, vector<16x768xbf16>, vector<16x768xbf16>, vector<16x768xbf16>, vector<16x768xbf16>, vector<16x768xbf16>, vector<16x768xbf16>, vector<1x768xbf16> -> vector<145x768xbf16>
    %cst_183 = arith.constant dense<0.000000e+00> : vector<16x768xf32>
    %334 = tpu.matmul %291, %333, %cst_183 {dimension_numbers = #tpu.dot_dimension_numbers<[1], [0], [0], [1], [0, 0, 1, 1], [], []>} : vector<16x145xbf16>, vector<145x768xbf16>, vector<16x768xf32> -> vector<16x768xf32>
    %cst_184 = arith.constant 0.000000e+00 : f32
    %335 = vector.broadcast %cst_184 : f32 to vector<16x768xf32>
    %336 = arith.maximumf %334, %335 : vector<16x768xf32>
    %337 = arith.truncf %336 : vector<16x768xf32> to vector<16x768xbf16>
    %338 = tpu.concatenate %337, %0 in 0 : vector<16x768xbf16>, vector<1x768xbf16> -> vector<17x768xbf16>
    %c0_185 = arith.constant 0 : index
    %c0_186 = arith.constant 0 : index
    %339 = vector.load %arg9[%c0_185, %c0_186] : memref<3x17xbf16, #tpu.memory_space<vmem>>, vector<3x17xbf16>
    %cst_187 = arith.constant dense<0.000000e+00> : vector<3x768xf32>
    %340 = tpu.matmul %339, %338, %cst_187 {dimension_numbers = #tpu.dot_dimension_numbers<[1], [0], [0], [1], [0, 0, 1, 1], [], []>} : vector<3x17xbf16>, vector<17x768xbf16>, vector<3x768xf32> -> vector<3x768xf32>
    %c0_188 = arith.constant 0 : index
    %c0_189 = arith.constant 0 : index
    %c0_190 = arith.constant 0 : index
    %341 = vector.load %arg16[%c0_188, %c0_189, %c0_190] : memref<1x3x768xf32, #tpu.memory_space<vmem>>, vector<1x3x768xf32>
    %342 = vector.shape_cast %341 : vector<1x3x768xf32> to vector<3x768xf32>
    %343 = vector.shape_cast %340 : vector<3x768xf32> to vector<1x3x768xf32>
    tpu.vector_store %arg16[%c0_188, %c0_189, %c0_190], %343 {strides = array<i32>} : memref<1x3x768xf32, #tpu.memory_space<vmem>>, vector<1x3x768xf32>,
    %c0_191 = arith.constant 0 : index
    %c0_192 = arith.constant 0 : index
    %344 = vector.load %arg13[%c0_191, %c0_192] : memref<768x384xbf16, #tpu.memory_space<vmem>>, vector<768x384xbf16>
    %cst_193 = arith.constant dense<0.000000e+00> : vector<17x384xf32>
    %345 = tpu.matmul %338, %344, %cst_193 {dimension_numbers = #tpu.dot_dimension_numbers<[1], [0], [0], [1], [0, 0, 1, 1], [], []>} : vector<17x768xbf16>, vector<768x384xbf16>, vector<17x384xf32> -> vector<17x384xf32>
    %c0_194 = arith.constant 0 : index
    %c0_195 = arith.constant 0 : index
    %346 = vector.load %arg10[%c0_194, %c0_195] : memref<3x17xbf16, #tpu.memory_space<vmem>>, vector<3x17xbf16>
    %347 = arith.truncf %345 : vector<17x384xf32> to vector<17x384xbf16>
    %cst_196 = arith.constant dense<0.000000e+00> : vector<3x384xf32>
    %348 = tpu.matmul %346, %347, %cst_196 {dimension_numbers = #tpu.dot_dimension_numbers<[1], [0], [0], [1], [0, 0, 1, 1], [], []>} : vector<3x17xbf16>, vector<17x384xbf16>, vector<3x384xf32> -> vector<3x384xf32>
    %c0_197 = arith.constant 0 : index
    %c0_198 = arith.constant 0 : index
    %c0_199 = arith.constant 0 : index
    %349 = vector.load %arg17[%c0_197, %c0_198, %c0_199] : memref<1x3x384xf32, #tpu.memory_space<vmem>>, vector<1x3x384xf32>
    %350 = vector.shape_cast %349 : vector<1x3x384xf32> to vector<3x384xf32>
    %351 = vector.shape_cast %348 : vector<3x384xf32> to vector<1x3x384xf32>
    tpu.vector_store %arg17[%c0_197, %c0_198, %c0_199], %351 {strides = array<i32>} : memref<1x3x384xf32, #tpu.memory_space<vmem>>, vector<1x3x384xf32>,
    return
  }
  func.func @transform_0(%arg0: i32) -> (i32, i32, i32) {
    %c0_i32 = arith.constant 0 : i32
    %c0_i32_0 = arith.constant 0 : i32
    %c0_i32_1 = arith.constant 0 : i32
    return %arg0, %c0_i32, %c0_i32_0 : i32, i32, i32
  }
  func.func @transform_1(%arg0: i32) -> (i32, i32) {
    %c0_i32 = arith.constant 0 : i32
    %c0_i32_0 = arith.constant 0 : i32
    %c0_i32_1 = arith.constant 0 : i32
    return %c0_i32, %c0_i32_0 : i32, i32
  }
  func.func @transform_2(%arg0: i32) -> (i32, i32) {
    %c0_i32 = arith.constant 0 : i32
    %c0_i32_0 = arith.constant 0 : i32
    %c0_i32_1 = arith.constant 0 : i32
    return %c0_i32, %c0_i32_0 : i32, i32
  }
  func.func @transform_3(%arg0: i32) -> (i32, i32) {
    %c0_i32 = arith.constant 0 : i32
    %c0_i32_0 = arith.constant 0 : i32
    %c0_i32_1 = arith.constant 0 : i32
    return %c0_i32, %c0_i32_0 : i32, i32
  }
  func.func @transform_4(%arg0: i32) -> (i32, i32) {
    %c0_i32 = arith.constant 0 : i32
    %c0_i32_0 = arith.constant 0 : i32
    %c0_i32_1 = arith.constant 0 : i32
    return %c0_i32, %c0_i32_0 : i32, i32
  }
  func.func @transform_5(%arg0: i32) -> (i32, i32) {
    %c0_i32 = arith.constant 0 : i32
    %c0_i32_0 = arith.constant 0 : i32
    %c0_i32_1 = arith.constant 0 : i32
    return %c0_i32, %c0_i32_0 : i32, i32
  }
  func.func @transform_6(%arg0: i32) -> (i32, i32) {
    %c0_i32 = arith.constant 0 : i32
    %c0_i32_0 = arith.constant 0 : i32
    %c0_i32_1 = arith.constant 0 : i32
    return %c0_i32, %c0_i32_0 : i32, i32
  }
  func.func @transform_7(%arg0: i32) -> (i32, i32) {
    %c0_i32 = arith.constant 0 : i32
    %c0_i32_0 = arith.constant 0 : i32
    %c0_i32_1 = arith.constant 0 : i32
    return %c0_i32, %c0_i32_0 : i32, i32
  }
  func.func @transform_8(%arg0: i32) -> (i32, i32) {
    %c0_i32 = arith.constant 0 : i32
    %c0_i32_0 = arith.constant 0 : i32
    %c0_i32_1 = arith.constant 0 : i32
    return %c0_i32, %c0_i32_0 : i32, i32
  }
  func.func @transform_9(%arg0: i32) -> (i32, i32) {
    %c0_i32 = arith.constant 0 : i32
    %c0_i32_0 = arith.constant 0 : i32
    %c0_i32_1 = arith.constant 0 : i32
    return %c0_i32, %c0_i32_0 : i32, i32
  }
  func.func @transform_10(%arg0: i32) -> (i32, i32) {
    %c0_i32 = arith.constant 0 : i32
    %c0_i32_0 = arith.constant 0 : i32
    %c0_i32_1 = arith.constant 0 : i32
    return %c0_i32, %c0_i32_0 : i32, i32
  }
  func.func @transform_11(%arg0: i32) -> (i32, i32) {
    %c0_i32 = arith.constant 0 : i32
    %c0_i32_0 = arith.constant 0 : i32
    %c0_i32_1 = arith.constant 0 : i32
    return %c0_i32, %c0_i32_0 : i32, i32
  }
  func.func @transform_12(%arg0: i32) -> (i32, i32) {
    %c0_i32 = arith.constant 0 : i32
    %c0_i32_0 = arith.constant 0 : i32
    %c0_i32_1 = arith.constant 0 : i32
    return %c0_i32, %c0_i32_0 : i32, i32
  }
  func.func @transform_13(%arg0: i32) -> (i32, i32) {
    %c0_i32 = arith.constant 0 : i32
    %c0_i32_0 = arith.constant 0 : i32
    %c0_i32_1 = arith.constant 0 : i32
    return %c0_i32, %c0_i32_0 : i32, i32
  }
  func.func @transform_14(%arg0: i32) -> (i32, i32) {
    %c0_i32 = arith.constant 0 : i32
    %c0_i32_0 = arith.constant 0 : i32
    %c0_i32_1 = arith.constant 0 : i32
    return %c0_i32, %c0_i32_0 : i32, i32
  }
  func.func @transform_15(%arg0: i32) -> (i32, i32, i32) {
    %c0_i32 = arith.constant 0 : i32
    %c0_i32_0 = arith.constant 0 : i32
    %c0_i32_1 = arith.constant 0 : i32
    return %arg0, %c0_i32, %c0_i32_0 : i32, i32, i32
  }
  func.func @transform_16(%arg0: i32) -> (i32, i32, i32) {
    %c0_i32 = arith.constant 0 : i32
    %c0_i32_0 = arith.constant 0 : i32
    %c0_i32_1 = arith.constant 0 : i32
    return %arg0, %c0_i32, %c0_i32_0 : i32, i32, i32
  }
}

</mosaic_0001>

<llo_original>
// kernel: my_model_forward.1
$region0: #{my_model_forward.1}
  #allocation0 [shape = 'u32[]', space=smem, size = 0x4, offset = 0x4, fixed_abs, tag = 'smem constant byte address 0x4 - core index']
  #allocation1 [shape = 'u32[144,128]{1,0:T(1,128)}', space=vmem, size = 0x12000, scoped, tag = 'internal scratch']
  %s0 = inlined_call_operand.vmem [shape: f32[2,3,768], index: 0, kind: input, shape index: {}]
  %s1 = inlined_call_operand.vmem [shape: bf16[16,28], index: 1, kind: input, shape index: {}]
  %s2 = inlined_call_operand.vmem [shape: bf16[16,145], index: 2, kind: input, shape index: {}]
  %s3 = inlined_call_operand.vmem [shape: bf16[32,145], index: 3, kind: input, shape index: {}]
  %s4 = inlined_call_operand.vmem [shape: bf16[32,289], index: 4, kind: input, shape index: {}]
  %s5 = inlined_call_operand.vmem [shape: bf16[16,288], index: 5, kind: input, shape index: {}]
  %s6 = inlined_call_operand.vmem [shape: bf16[16,145], index: 6, kind: input, shape index: {}]
  %s7 = inlined_call_operand.vmem [shape: bf16[16,145], index: 7, kind: input, shape index: {}]
  %s8 = inlined_call_operand.vmem [shape: bf16[3,17], index: 8, kind: input, shape index: {}]
  %s9 = inlined_call_operand.vmem [shape: bf16[3,17], index: 9, kind: input, shape index: {}]
  %s10 = inlined_call_operand.vmem [shape: bf16[768,192], index: 10, kind: input, shape index: {}]
  %s11 = inlined_call_operand.hbm [shape: bf16[192,768], index: 11, kind: input, shape index: {}]
  %s12 = inlined_call_operand.vmem [shape: bf16[768,384], index: 12, kind: input, shape index: {}]
  %s13 = inlined_call_operand.vmem [shape: f32[9,768], index: 13, kind: input, shape index: {}]
  %s14 = inlined_call_operand.vmem [shape: f32[9,192], index: 14, kind: input, shape index: {}]
  %s15 = inlined_call_operand.vmem [shape: f32[2,3,768], index: 15, kind: output, shape index: {0}]
  %s16 = inlined_call_operand.vmem [shape: f32[2,3,384], index: 16, kind: output, shape index: {1}]
  %17 = xla_tuple %s15, %s16
  %s18 = sld [smem:[#allocation0]]
  $region105: #{my_model_forward.1} parent=0
    _
  %s20 = ssub.s32 1, %s18
  %s21 = scalar_select 0, %s20, %s18
  $region1: #{my_model_forward.1} parent=0
    #allocation2 [shape = 'u8[294912]{0}', space=vmem, size = 0x48000, scoped, tag = 'input window, operand 11, single buffered']
    #allocation3 [shape = 's32[2]{0}', space=sflag, size = 0x8, scoped, tag = 'scoped memory for my_model_forward.1']
    %22 = vsyncpa [#allocation3], 0
    loop: start=0, step=1, limit=4
    $region2: #{my_model_forward.1} parent=1 // loop_pre_header
      _
    $region3: #{my_model_forward.1} parent=1 // loop_header
      %s24 = sphi 0, %s28
      %p25 = scmp.ge.s32.totalorder %s24, 4
      %s34 = sphi 0, %s36
      %s37 = sphi 0, %s34
      %s38 = sphi 0, %s37
      %s54 = sphi 0, %s38
      %s58 = sphi 0, %s58
      %s60 = sphi 0, %s58
      %s61 = sphi 0, %s60
      %s75 = sphi 0, %s61
      %s79 = sphi 0, %s79
      %s81 = sphi 0, %s79
      %s82 = sphi 0, %s81
      %s96 = sphi 0, %s82
      %s100 = sphi 0, %s100
      %s102 = sphi 0, %s100
      %s103 = sphi 0, %s102
      %s117 = sphi 0, %s103
      %s121 = sphi 0, %s121
      %s123 = sphi 0, %s121
      %s124 = sphi 0, %s123
      %s138 = sphi 0, %s124
      %s142 = sphi 0, %s142
      %s144 = sphi 0, %s142
      %s145 = sphi 0, %s144
      %s159 = sphi 0, %s145
      %s163 = sphi 0, %s163
      %s165 = sphi 0, %s163
      %s166 = sphi 0, %s165
      %s180 = sphi 0, %s166
      %s184 = sphi 0, %s184
      %s186 = sphi 0, %s184
      %s187 = sphi 0, %s186
      %s201 = sphi 0, %s187
      %s205 = sphi 0, %s205
      %s207 = sphi 0, %s205
      %s208 = sphi 0, %s207
      %s222 = sphi 0, %s208
      %s226 = sphi 0, %s226
      %s228 = sphi 0, %s226
      %s229 = sphi 0, %s228
      %s243 = sphi 0, %s229
      %s247 = sphi 0, %s247
      %s249 = sphi 0, %s247
      %s250 = sphi 0, %s249
      %s264 = sphi 0, %s250
      %s268 = sphi 0, %s268
      %s270 = sphi 0, %s268
      %s271 = sphi 0, %s270
      %s285 = sphi 0, %s271
      %s289 = sphi 0, %s289
      %s291 = sphi 0, %s289
      %s292 = sphi 0, %s291
      %s306 = sphi 0, %s292
      %s310 = sphi 0, %s310
      %s312 = sphi 0, %s310
      %s313 = sphi 0, %s312
      %s327 = sphi 0, %s313
      %s331 = sphi 0, %s331
      %s333 = sphi 0, %s331
      %s334 = sphi 0, %s333
      %s348 = sphi 0, %s334
      %s354 = sphi 0, %s356
      %s357 = sphi 0, %s354
      %s358 = sphi 0, %s357
      %s374 = sphi 0, %s358
      %s380 = sphi 0, %s382
      %s383 = sphi 0, %s380
      %s384 = sphi 0, %s383
      %s400 = sphi 0, %s384
    $region4: #{my_model_forward.1} parent=1 // loop_header_branch
      %27 = sbr.rel (%p25) target = $region8
    $region5: #{my_model_forward.1} parent=1 // loop_body
      %s29 = ssub.s32 %s24, 1
      %s30 = ssub.s32 %s24, 2
      %s31 = sadd.s32 %s24, 1
      %s32 = ssub.s32 %s24, %s31
      %p33 = scmp.eq.s32.totalorder %s32, 0
      %s35 = sadd.s32 %s34, 1
      %s36 = scalar_select %p33, %s34, %s35
      %p39 = pneg %p33
      %p40 = scmp.eq.s32.totalorder %s24, 1
      %p41 = por %p39, %p40
      %p42 = scmp.ne.s32.totalorder %s34, %s37
      %p43 = scmp.eq.s32.totalorder %s24, 0
      %p44 = por %p42, %p43
      %p45 = scmp.ne.s32.totalorder %s34, %s37
      %p46 = scmp.eq.s32.totalorder %s29, 1
      %p47 = por %p45, %p46
      %p48 = scmp.ne.s32.totalorder %s37, %s38
      %p49 = scmp.eq.s32.totalorder %s29, 0
      %p50 = por %p48, %p49
      %p51 = scmp.ne.s32.totalorder %s37, %s38
      %p52 = scmp.eq.s32.totalorder %s30, 1
      %p53 = por %p51, %p52
      %p55 = scmp.ne.s32.totalorder %s38, %s54
      %p56 = scmp.eq.s32.totalorder %s30, 0
      %p57 = por %p55, %p56
      %s59 = sadd.s32 %s58, 1
      %p62 = scmp.eq.s32.totalorder %s24, 1
      %p63 = scmp.ne.s32.totalorder %s58, %s60
      %p64 = scmp.eq.s32.totalorder %s24, 0
      %p65 = por %p63, %p64
      %p66 = scmp.ne.s32.totalorder %s58, %s60
      %p67 = scmp.eq.s32.totalorder %s29, 1
      %p68 = por %p66, %p67
      %p69 = scmp.ne.s32.totalorder %s60, %s61
      %p70 = scmp.eq.s32.totalorder %s29, 0
      %p71 = por %p69, %p70
      %p72 = scmp.ne.s32.totalorder %s60, %s61
      %p73 = scmp.eq.s32.totalorder %s30, 1
      %p74 = por %p72, %p73
      %p76 = scmp.ne.s32.totalorder %s61, %s75
      %p77 = scmp.eq.s32.totalorder %s30, 0
      %p78 = por %p76, %p77
      %s80 = sadd.s32 %s79, 1
      %p83 = scmp.eq.s32.totalorder %s24, 1
      %p84 = scmp.ne.s32.totalorder %s79, %s81
      %p85 = scmp.eq.s32.totalorder %s24, 0
      %p86 = por %p84, %p85
      %p87 = scmp.ne.s32.totalorder %s79, %s81
      %p88 = scmp.eq.s32.totalorder %s29, 1
      %p89 = por %p87, %p88
      %p90 = scmp.ne.s32.totalorder %s81, %s82
      %p91 = scmp.eq.s32.totalorder %s29, 0
      %p92 = por %p90, %p91
      %p93 = scmp.ne.s32.totalorder %s81, %s82
      %p94 = scmp.eq.s32.totalorder %s30, 1
      %p95 = por %p93, %p94
      %p97 = scmp.ne.s32.totalorder %s82, %s96
      %p98 = scmp.eq.s32.totalorder %s30, 0
      %p99 = por %p97, %p98
      %s101 = sadd.s32 %s100, 1
      %p104 = scmp.eq.s32.totalorder %s24, 1
      %p105 = scmp.ne.s32.totalorder %s100, %s102
      %p106 = scmp.eq.s32.totalorder %s24, 0
      %p107 = por %p105, %p106
      %p108 = scmp.ne.s32.totalorder %s100, %s102
      %p109 = scmp.eq.s32.totalorder %s29, 1
      %p110 = por %p108, %p109
      %p111 = scmp.ne.s32.totalorder %s102, %s103
      %p112 = scmp.eq.s32.totalorder %s29, 0
      %p113 = por %p111, %p112
      %p114 = scmp.ne.s32.totalorder %s102, %s103
      %p115 = scmp.eq.s32.totalorder %s30, 1
      %p116 = por %p114, %p115
      %p118 = scmp.ne.s32.totalorder %s103, %s117
      %p119 = scmp.eq.s32.totalorder %s30, 0
      %p120 = por %p118, %p119
      %s122 = sadd.s32 %s121, 1
      %p125 = scmp.eq.s32.totalorder %s24, 1
      %p126 = scmp.ne.s32.totalorder %s121, %s123
      %p127 = scmp.eq.s32.totalorder %s24, 0
      %p128 = por %p126, %p127
      %p129 = scmp.ne.s32.totalorder %s121, %s123
      %p130 = scmp.eq.s32.totalorder %s29, 1
      %p131 = por %p129, %p130
      %p132 = scmp.ne.s32.totalorder %s123, %s124
      %p133 = scmp.eq.s32.totalorder %s29, 0
      %p134 = por %p132, %p133
      %p135 = scmp.ne.s32.totalorder %s123, %s124
      %p136 = scmp.eq.s32.totalorder %s30, 1
      %p137 = por %p135, %p136
      %p139 = scmp.ne.s32.totalorder %s124, %s138
      %p140 = scmp.eq.s32.totalorder %s30, 0
      %p141 = por %p139, %p140
      %s143 = sadd.s32 %s142, 1
      %p146 = scmp.eq.s32.totalorder %s24, 1
      %p147 = scmp.ne.s32.totalorder %s142, %s144
      %p148 = scmp.eq.s32.totalorder %s24, 0
      %p149 = por %p147, %p148
      %p150 = scmp.ne.s32.totalorder %s142, %s144
      %p151 = scmp.eq.s32.totalorder %s29, 1
      %p152 = por %p150, %p151
      %p153 = scmp.ne.s32.totalorder %s144, %s145
      %p154 = scmp.eq.s32.totalorder %s29, 0
      %p155 = por %p153, %p154
      %p156 = scmp.ne.s32.totalorder %s144, %s145
      %p157 = scmp.eq.s32.totalorder %s30, 1
      %p158 = por %p156, %p157
      %p160 = scmp.ne.s32.totalorder %s145, %s159
      %p161 = scmp.eq.s32.totalorder %s30, 0
      %p162 = por %p160, %p161
      %s164 = sadd.s32 %s163, 1
      %p167 = scmp.eq.s32.totalorder %s24, 1
      %p168 = scmp.ne.s32.totalorder %s163, %s165
      %p169 = scmp.eq.s32.totalorder %s24, 0
      %p170 = por %p168, %p169
      %p171 = scmp.ne.s32.totalorder %s163, %s165
      %p172 = scmp.eq.s32.totalorder %s29, 1
      %p173 = por %p171, %p172
      %p174 = scmp.ne.s32.totalorder %s165, %s166
      %p175 = scmp.eq.s32.totalorder %s29, 0
      %p176 = por %p174, %p175
      %p177 = scmp.ne.s32.totalorder %s165, %s166
      %p178 = scmp.eq.s32.totalorder %s30, 1
      %p179 = por %p177, %p178
      %p181 = scmp.ne.s32.totalorder %s166, %s180
      %p182 = scmp.eq.s32.totalorder %s30, 0
      %p183 = por %p181, %p182
      %s185 = sadd.s32 %s184, 1
      %p188 = scmp.eq.s32.totalorder %s24, 1
      %p189 = scmp.ne.s32.totalorder %s184, %s186
      %p190 = scmp.eq.s32.totalorder %s24, 0
      %p191 = por %p189, %p190
      %p192 = scmp.ne.s32.totalorder %s184, %s186
      %p193 = scmp.eq.s32.totalorder %s29, 1
      %p194 = por %p192, %p193
      %p195 = scmp.ne.s32.totalorder %s186, %s187
      %p196 = scmp.eq.s32.totalorder %s29, 0
      %p197 = por %p195, %p196
      %p198 = scmp.ne.s32.totalorder %s186, %s187
      %p199 = scmp.eq.s32.totalorder %s30, 1
      %p200 = por %p198, %p199
      %p202 = scmp.ne.s32.totalorder %s187, %s201
      %p203 = scmp.eq.s32.totalorder %s30, 0
      %p204 = por %p202, %p203
      %s206 = sadd.s32 %s205, 1
      %p209 = scmp.eq.s32.totalorder %s24, 1
      %p210 = scmp.ne.s32.totalorder %s205, %s207
      %p211 = scmp.eq.s32.totalorder %s24, 0
      %p212 = por %p210, %p211
      %p213 = scmp.ne.s32.totalorder %s205, %s207
      %p214 = scmp.eq.s32.totalorder %s29, 1
      %p215 = por %p213, %p214
      %p216 = scmp.ne.s32.totalorder %s207, %s208
      %p217 = scmp.eq.s32.totalorder %s29, 0
      %p218 = por %p216, %p217
      %p219 = scmp.ne.s32.totalorder %s207, %s208
      %p220 = scmp.eq.s32.totalorder %s30, 1
      %p221 = por %p219, %p220
      %p223 = scmp.ne.s32.totalorder %s208, %s222
      %p224 = scmp.eq.s32.totalorder %s30, 0
      %p225 = por %p223, %p224
      %s227 = sadd.s32 %s226, 1
      %p230 = scmp.eq.s32.totalorder %s24, 1
      %p231 = scmp.ne.s32.totalorder %s226, %s228
      %p232 = scmp.eq.s32.totalorder %s24, 0
      %p233 = por %p231, %p232
      %p234 = scmp.ne.s32.totalorder %s226, %s228
      %p235 = scmp.eq.s32.totalorder %s29, 1
      %p236 = por %p234, %p235
      %p237 = scmp.ne.s32.totalorder %s228, %s229
      %p238 = scmp.eq.s32.totalorder %s29, 0
      %p239 = por %p237, %p238
      %p240 = scmp.ne.s32.totalorder %s228, %s229
      %p241 = scmp.eq.s32.totalorder %s30, 1
      %p242 = por %p240, %p241
      %p244 = scmp.ne.s32.totalorder %s229, %s243
      %p245 = scmp.eq.s32.totalorder %s30, 0
      %p246 = por %p244, %p245
      %s248 = sadd.s32 %s247, 1
      %p251 = scmp.eq.s32.totalorder %s24, 1
      %p252 = scmp.ne.s32.totalorder %s247, %s249
      %p253 = scmp.eq.s32.totalorder %s24, 0
      %p254 = por %p252, %p253
      %p255 = scmp.ne.s32.totalorder %s247, %s249
      %p256 = scmp.eq.s32.totalorder %s29, 1
      %p257 = por %p255, %p256
      %p258 = scmp.ne.s32.totalorder %s249, %s250
      %p259 = scmp.eq.s32.totalorder %s29, 0
      %p260 = por %p258, %p259
      %p261 = scmp.ne.s32.totalorder %s249, %s250
      %p262 = scmp.eq.s32.totalorder %s30, 1
      %p263 = por %p261, %p262
      %p265 = scmp.ne.s32.totalorder %s250, %s264
      %p266 = scmp.eq.s32.totalorder %s30, 0
      %p267 = por %p265, %p266
      %s269 = sadd.s32 %s268, 1
      %p272 = scmp.eq.s32.totalorder %s24, 1
      %p273 = scmp.ne.s32.totalorder %s268, %s270
      %p274 = scmp.eq.s32.totalorder %s24, 0
      %p275 = por %p273, %p274
      %p276 = scmp.ne.s32.totalorder %s268, %s270
      %p277 = scmp.eq.s32.totalorder %s29, 1
      %p278 = por %p276, %p277
      %p279 = scmp.ne.s32.totalorder %s270, %s271
      %p280 = scmp.eq.s32.totalorder %s29, 0
      %p281 = por %p279, %p280
      %p282 = scmp.ne.s32.totalorder %s270, %s271
      %p283 = scmp.eq.s32.totalorder %s30, 1
      %p284 = por %p282, %p283
      %p286 = scmp.ne.s32.totalorder %s271, %s285
      %p287 = scmp.eq.s32.totalorder %s30, 0
      %p288 = por %p286, %p287
      %s290 = sadd.s32 %s289, 1
      %p293 = scmp.eq.s32.totalorder %s24, 1
      %p294 = scmp.ne.s32.totalorder %s289, %s291
      %p295 = scmp.eq.s32.totalorder %s24, 0
      %p296 = por %p294, %p295
      %p297 = scmp.ne.s32.totalorder %s289, %s291
      %p298 = scmp.eq.s32.totalorder %s29, 1
      %p299 = por %p297, %p298
      %p300 = scmp.ne.s32.totalorder %s291, %s292
      %p301 = scmp.eq.s32.totalorder %s29, 0
      %p302 = por %p300, %p301
      %p303 = scmp.ne.s32.totalorder %s291, %s292
      %p304 = scmp.eq.s32.totalorder %s30, 1
      %p305 = por %p303, %p304
      %p307 = scmp.ne.s32.totalorder %s292, %s306
      %p308 = scmp.eq.s32.totalorder %s30, 0
      %p309 = por %p307, %p308
      %s311 = sadd.s32 %s310, 1
      %p314 = scmp.eq.s32.totalorder %s24, 1
      %p315 = scmp.ne.s32.totalorder %s310, %s312
      %p316 = scmp.eq.s32.totalorder %s24, 0
      %p317 = por %p315, %p316
      %p318 = scmp.ne.s32.totalorder %s310, %s312
      %p319 = scmp.eq.s32.totalorder %s29, 1
      %p320 = por %p318, %p319
      %p321 = scmp.ne.s32.totalorder %s312, %s313
      %p322 = scmp.eq.s32.totalorder %s29, 0
      %p323 = por %p321, %p322
      %p324 = scmp.ne.s32.totalorder %s312, %s313
      %p325 = scmp.eq.s32.totalorder %s30, 1
      %p326 = por %p324, %p325
      %p328 = scmp.ne.s32.totalorder %s313, %s327
      %p329 = scmp.eq.s32.totalorder %s30, 0
      %p330 = por %p328, %p329
      %s332 = sadd.s32 %s331, 1
      %p335 = scmp.eq.s32.totalorder %s24, 1
      %p336 = scmp.ne.s32.totalorder %s331, %s333
      %p337 = scmp.eq.s32.totalorder %s24, 0
      %p338 = por %p336, %p337
      %p339 = scmp.ne.s32.totalorder %s331, %s333
      %p340 = scmp.eq.s32.totalorder %s29, 1
      %p341 = por %p339, %p340
      %p342 = scmp.ne.s32.totalorder %s333, %s334
      %p343 = scmp.eq.s32.totalorder %s29, 0
      %p344 = por %p342, %p343
      %p345 = scmp.ne.s32.totalorder %s333, %s334
      %p346 = scmp.eq.s32.totalorder %s30, 1
      %p347 = por %p345, %p346
      %p349 = scmp.ne.s32.totalorder %s334, %s348
      %p350 = scmp.eq.s32.totalorder %s30, 0
      %p351 = por %p349, %p350
      %s352 = ssub.s32 %s24, %s31
      %p353 = scmp.eq.s32.totalorder %s352, 0
      %s355 = sadd.s32 %s354, 1
      %s356 = scalar_select %p353, %s354, %s355
      %p359 = pneg %p353
      %p360 = scmp.eq.s32.totalorder %s24, 1
      %p361 = por %p359, %p360
      %p362 = scmp.ne.s32.totalorder %s354, %s357
      %p363 = scmp.eq.s32.totalorder %s24, 0
      %p364 = por %p362, %p363
      %p365 = scmp.ne.s32.totalorder %s354, %s357
      %p366 = scmp.eq.s32.totalorder %s29, 1
      %p367 = por %p365, %p366
      %p368 = scmp.ne.s32.totalorder %s357, %s358
      %p369 = scmp.eq.s32.totalorder %s29, 0
      %p370 = por %p368, %p369
      %p371 = scmp.ne.s32.totalorder %s357, %s358
      %p372 = scmp.eq.s32.totalorder %s30, 1
      %p373 = por %p371, %p372
      %p375 = scmp.ne.s32.totalorder %s358, %s374
      %p376 = scmp.eq.s32.totalorder %s30, 0
      %p377 = por %p375, %p376
      %s378 = ssub.s32 %s24, %s31
      %p379 = scmp.eq.s32.totalorder %s378, 0
      %s381 = sadd.s32 %s380, 1
      %s382 = scalar_select %p379, %s380, %s381
      %p385 = pneg %p379
      %p386 = scmp.eq.s32.totalorder %s24, 1
      %p387 = por %p385, %p386
      %p388 = scmp.ne.s32.totalorder %s380, %s383
      %p389 = scmp.eq.s32.totalorder %s24, 0
      %p390 = por %p388, %p389
      %p391 = scmp.ne.s32.totalorder %s380, %s383
      %p392 = scmp.eq.s32.totalorder %s29, 1
      %p393 = por %p391, %p392
      %p394 = scmp.ne.s32.totalorder %s383, %s384
      %p395 = scmp.eq.s32.totalorder %s29, 0
      %p396 = por %p394, %p395
      %p397 = scmp.ne.s32.totalorder %s383, %s384
      %p398 = scmp.eq.s32.totalorder %s30, 1
      %p399 = por %p397, %p398
      %p401 = scmp.ne.s32.totalorder %s384, %s400
      %p402 = scmp.eq.s32.totalorder %s30, 0
      %p403 = por %p401, %p402
      %p404 = scmp.le.s32.totalorder 1, %s24
      %p405 = scmp.lt.s32.totalorder %s24, 3
      %p406 = pnand %p404, %p405
      %p407 = pneg %p406
      // Predicated region
      $region9: #{my_model_forward.1} parent=5 // pred_check
        _
      $region10: #{my_model_forward.1} parent=5 // pred_check_branch
        %409 = sbr.rel (%p406) target = $region12
      $region11: #{my_model_forward.1} parent=5 // pred_region
        %s410 = ssub.s32 %s24, 1
        // Predicated region
        $region13: #{my_model_forward.1} parent=11 // pred_check
          %p411 = pneg %p71
        $region14: #{my_model_forward.1} parent=11 // pred_check_branch
          %413 = sbr.rel (%p411) target = $region16
        $region15: #{my_model_forward.1} parent=11 // pred_region
          _
        $region16: #{my_model_forward.1} parent=11 // pred_fallthru
          _
        // Predicated region
        $region17: #{my_model_forward.1} parent=11 // pred_check
          %p414 = pneg %p92
        $region18: #{my_model_forward.1} parent=11 // pred_check_branch
          %416 = sbr.rel (%p414) target = $region20
        $region19: #{my_model_forward.1} parent=11 // pred_region
          _
        $region20: #{my_model_forward.1} parent=11 // pred_fallthru
          _
        // Predicated region
        $region21: #{my_model_forward.1} parent=11 // pred_check
          %p417 = pneg %p113
        $region22: #{my_model_forward.1} parent=11 // pred_check_branch
          %419 = sbr.rel (%p417) target = $region24
        $region23: #{my_model_forward.1} parent=11 // pred_region
          _
        $region24: #{my_model_forward.1} parent=11 // pred_fallthru
          _
        // Predicated region
        $region25: #{my_model_forward.1} parent=11 // pred_check
          %p420 = pneg %p134
        $region26: #{my_model_forward.1} parent=11 // pred_check_branch
          %422 = sbr.rel (%p420) target = $region28
        $region27: #{my_model_forward.1} parent=11 // pred_region
          _
        $region28: #{my_model_forward.1} parent=11 // pred_fallthru
          _
        // Predicated region
        $region29: #{my_model_forward.1} parent=11 // pred_check
          %p423 = pneg %p155
        $region30: #{my_model_forward.1} parent=11 // pred_check_branch
          %425 = sbr.rel (%p423) target = $region32
        $region31: #{my_model_forward.1} parent=11 // pred_region
          _
        $region32: #{my_model_forward.1} parent=11 // pred_fallthru
          _
        // Predicated region
        $region33: #{my_model_forward.1} parent=11 // pred_check
          %p426 = pneg %p176
        $region34: #{my_model_forward.1} parent=11 // pred_check_branch
          %428 = sbr.rel (%p426) target = $region36
        $region35: #{my_model_forward.1} parent=11 // pred_region
          _
        $region36: #{my_model_forward.1} parent=11 // pred_fallthru
          _
        // Predicated region
        $region37: #{my_model_forward.1} parent=11 // pred_check
          %p429 = pneg %p197
        $region38: #{my_model_forward.1} parent=11 // pred_check_branch
          %431 = sbr.rel (%p429) target = $region40
        $region39: #{my_model_forward.1} parent=11 // pred_region
          _
        $region40: #{my_model_forward.1} parent=11 // pred_fallthru
          _
        // Predicated region
        $region41: #{my_model_forward.1} parent=11 // pred_check
          %p432 = pneg %p218
        $region42: #{my_model_forward.1} parent=11 // pred_check_branch
          %434 = sbr.rel (%p432) target = $region44
        $region43: #{my_model_forward.1} parent=11 // pred_region
          _
        $region44: #{my_model_forward.1} parent=11 // pred_fallthru
          _
        // Predicated region
        $region45: #{my_model_forward.1} parent=11 // pred_check
          %p435 = pneg %p239
        $region46: #{my_model_forward.1} parent=11 // pred_check_branch
          %437 = sbr.rel (%p435) target = $region48
        $region47: #{my_model_forward.1} parent=11 // pred_region
          _
        $region48: #{my_model_forward.1} parent=11 // pred_fallthru
          _
        // Predicated region
        $region49: #{my_model_forward.1} parent=11 // pred_check
          %p438 = pneg %p260
        $region50: #{my_model_forward.1} parent=11 // pred_check_branch
          %440 = sbr.rel (%p438) target = $region52
        $region51: #{my_model_forward.1} parent=11 // pred_region
          _
        $region52: #{my_model_forward.1} parent=11 // pred_fallthru
          _
        // Predicated region
        $region53: #{my_model_forward.1} parent=11 // pred_check
          %p441 = pneg %p281
        $region54: #{my_model_forward.1} parent=11 // pred_check_branch
          %443 = sbr.rel (%p441) target = $region56
        $region55: #{my_model_forward.1} parent=11 // pred_region
          %s445 = ssub.s32 9216, 9216
          %446 = vsyncadd [#allocation3], %s445
          %s447 = sshll.u32 [#allocation2], 4
          %s448 = int_to_ptr.vmem [resolvable:$true] %s447
          %453 = dma.hbm_to_vmem [thread:$0]  %s11, 9216, %s448, [#allocation3], 384, 384, 24
        $region56: #{my_model_forward.1} parent=11 // pred_fallthru
          _
        // Predicated region
        $region57: #{my_model_forward.1} parent=11 // pred_check
          %p454 = pneg %p302
        $region58: #{my_model_forward.1} parent=11 // pred_check_branch
          %456 = sbr.rel (%p454) target = $region60
        $region59: #{my_model_forward.1} parent=11 // pred_region
          _
        $region60: #{my_model_forward.1} parent=11 // pred_fallthru
          _
        // Predicated region
        $region61: #{my_model_forward.1} parent=11 // pred_check
          %p457 = pneg %p323
        $region62: #{my_model_forward.1} parent=11 // pred_check_branch
          %459 = sbr.rel (%p457) target = $region64
        $region63: #{my_model_forward.1} parent=11 // pred_region
          _
        $region64: #{my_model_forward.1} parent=11 // pred_fallthru
          _
        // Predicated region
        $region65: #{my_model_forward.1} parent=11 // pred_check
          %p460 = pneg %p344
        $region66: #{my_model_forward.1} parent=11 // pred_check_branch
          %462 = sbr.rel (%p460) target = $region68
        $region67: #{my_model_forward.1} parent=11 // pred_region
          _
        $region68: #{my_model_forward.1} parent=11 // pred_fallthru
          _
      $region12: #{my_model_forward.1} parent=5 // pred_fallthru
        _
      %p463 = scmp.lt.s32.totalorder %s24, 2
      // Predicated region
      $region69: #{my_model_forward.1} parent=5 // pred_check
        %p464 = pneg %p463
      $region70: #{my_model_forward.1} parent=5 // pred_check_branch
        %466 = sbr.rel (%p464) target = $region72
      $region71: #{my_model_forward.1} parent=5 // pred_region
        // Predicated region
        $region73: #{my_model_forward.1} parent=71 // pred_check
          %p467 = pneg %p44
        $region74: #{my_model_forward.1} parent=71 // pred_check_branch
          %469 = sbr.rel (%p467) target = $region76
        $region75: #{my_model_forward.1} parent=71 // pred_region
          %p470 = scmp.lt.s32.totalorder %s24, 1
          %s471 = scalar_select %p470, %s24, 1
          %s472 = smul.addr %s471, 6
          %s473 = smul.addr %s472, 4
          %s474 = scalar_lea.vmem %s0, %s473
        $region76: #{my_model_forward.1} parent=71 // pred_fallthru
          _
      $region72: #{my_model_forward.1} parent=5 // pred_fallthru
        _
      %p475 = scmp.le.s32.totalorder 1, %s24
      %p476 = scmp.lt.s32.totalorder %s24, 3
      %p477 = pnand %p475, %p476
      %p478 = pneg %p477
      // Predicated region
      $region77: #{my_model_forward.1} parent=5 // pred_check
        _
      $region78: #{my_model_forward.1} parent=5 // pred_check_branch
        %480 = sbr.rel (%p477) target = $region80
      $region79: #{my_model_forward.1} parent=5 // pred_region
        %s481 = ssub.s32 %s24, 1
        // Predicated region
        $region81: #{my_model_forward.1} parent=79 // pred_check
          %p482 = pneg %p281
        $region82: #{my_model_forward.1} parent=79 // pred_check_branch
          %484 = sbr.rel (%p482) target = $region84
        $region83: #{my_model_forward.1} parent=79 // pred_region
          %485 = dma.done [#allocation3], 9216
        $region84: #{my_model_forward.1} parent=79 // pred_fallthru
          _
        %p486 = scmp.lt.s32.totalorder %s29, 1
        %s487 = scalar_select %p486, %s29, 1
        %s488 = smul.addr %s487, 6
        %s489 = smul.addr %s488, 4
        %s490 = scalar_lea.vmem %s0, %s489
        %p491 = pneg %p50
        %p492 = pneg %p47
        %p493 = pneg %p71
        %p494 = pneg %p68
        %p495 = pneg %p92
        %p496 = pneg %p89
        %p497 = pneg %p113
        %p498 = pneg %p110
        %p499 = pneg %p134
        %p500 = pneg %p131
        %p501 = pneg %p155
        %p502 = pneg %p152
        %p503 = pneg %p176
        %p504 = pneg %p173
        %p505 = pneg %p197
        %p506 = pneg %p194
        %p507 = pneg %p218
        %p508 = pneg %p215
        %p509 = pneg %p239
        %p510 = pneg %p236
        %p511 = pneg %p260
        %p512 = pneg %p257
        %p513 = pneg %p281
        %p514 = pneg %p278
        %p515 = pneg %p302
        %p516 = pneg %p299
        %p517 = pneg %p323
        %p518 = pneg %p320
        %p519 = pneg %p344
        %p520 = pneg %p341
        %p521 = pneg %p370
        %p522 = pneg %p367
        %p523 = scmp.lt.s32.totalorder %s29, 1
        %s524 = scalar_select %p523, %s29, 1
        %s525 = smul.addr %s524, 6
        %s526 = smul.addr %s525, 4
        %s527 = scalar_lea.vmem %s15, %s526
        %p528 = pneg %p396
        %p529 = pneg %p393
        %p530 = scmp.lt.s32.totalorder %s29, 1
        %s531 = scalar_select %p530, %s29, 1
        %s532 = smul.addr %s531, 3
        %s533 = smul.addr %s532, 4
        %s534 = scalar_lea.vmem %s16, %s533
        %p535 = scmp.lt.s32.totalorder %s29, 1
        %s536 = scalar_select %p535, %s29, 1
        %s537 = smul.addr %s536, 6
        %s538 = smul.addr %s537, 4
        %s539 = scalar_lea.vmem %s0, %s538
        %p540 = scmp.lt.s32.totalorder %s29, 1
        %s541 = scalar_select %p540, %s29, 1
        %s542 = smul.addr %s541, 6
        %s543 = smul.addr %s542, 4
        %s544 = scalar_lea.vmem %s15, %s543
        %p545 = scmp.lt.s32.totalorder %s29, 1
        %s546 = scalar_select %p545, %s29, 1
        %s547 = smul.addr %s546, 3
        %s548 = smul.addr %s547, 4
        %s549 = scalar_lea.vmem %s16, %s548
        %v552 = vld [vmem:[%s539] sm:$0x77]
        %v553 = vld [vmem:[%s539 + $0x8] sm:$0x77]
        %v554 = vld [vmem:[%s539 + $0x10] sm:$0x77]
        %v555 = vld [vmem:[%s1] sm:$0xf]
        %v556 = vld [vmem:[%s1 + $0x4] sm:$0xf]
        %v560 = vcombine.high %v552, %v552
        %v561 = vcombine.high %v553, %v553
        %v562 = vcombine.high %v554, %v554
        %566 = vrot.lane.b32.xlu0 %v552, 17
        %v567 = vpop.permute.xlu0 %566
        %568 = vrot.lane.b32.xlu0 %v560, 17
        %v569 = vpop.permute.xlu0 %568
        %570 = vrot.lane.b32.xlu0 %v553, 17
        %v571 = vpop.permute.xlu0 %570
        %572 = vrot.lane.b32.xlu0 %v561, 17
        %v573 = vpop.permute.xlu0 %572
        %574 = vrot.lane.b32.xlu0 %v554, 17
        %v575 = vpop.permute.xlu0 %574
        %576 = vrot.lane.b32.xlu0 %v562, 17
        %v577 = vpop.permute.xlu0 %576
        %v578 = vlaneseq
        %v579 = vand.u32 %v578, 127
        %vm580 = vcmp.lt.s32.totalorder %v579, 17
        %v581 = vsel %vm580, %v575, %v577
        %v582 = vsel %vm580, %v573, %v575
        %v583 = vsel %vm580, %v571, %v573
        %v584 = vsel %vm580, %v569, %v571
        %v585 = vsel %vm580, %v567, %v569
        %v586 = vsel %vm580, %v577, %v567
        %v587 = vld [vmem:[%s13] ss:$8 sm:$0xf]
        %v588 = vld [vmem:[%s13] ss:$8 sm:$0x30]
        %v589 = vor.u32 %v587, %v588
        %v591 = vlaneseq
        %v592 = vshrl.u32 %v591, 7
        %v593 = vsub.s32 0, %v592
        %v594 = vrot.slane %v589, %v593
        %v595 = vlaneseq
        %v596 = vshrl.u32 %v595, 7
        %v597 = vsub.s32 1, %v596
        %v598 = vrot.slane %v589, %v597
        %v599 = vlaneseq
        %v600 = vshrl.u32 %v599, 7
        %v601 = vsub.s32 2, %v600
        %v602 = vrot.slane %v589, %v601
        %v603 = vlaneseq
        %v604 = vshrl.u32 %v603, 7
        %v605 = vsub.s32 3, %v604
        %v606 = vrot.slane %v589, %v605
        %v607 = vlaneseq
        %v608 = vshrl.u32 %v607, 7
        %v609 = vsub.s32 4, %v608
        %v610 = vrot.slane %v589, %v609
        %v611 = vlaneseq
        %v612 = vshrl.u32 %v611, 7
        %v613 = vsub.s32 5, %v612
        %v614 = vrot.slane %v589, %v613
        %v621 = vmul.f32 %v586, %v594
        %v622 = vmul.f32 %v585, %v598
        %v623 = vmul.f32 %v584, %v602
        %v624 = vmul.f32 %v583, %v606
        %v625 = vmul.f32 %v582, %v610
        %v626 = vmul.f32 %v581, %v614
        %v627 = vpack.c.bf16 %v621, %v621
        %v628 = vpack.c.bf16 %v622, %v622
        %v629 = vpack.c.bf16 %v623, %v623
        %v630 = vpack.c.bf16 %v624, %v624
        %v631 = vpack.c.bf16 %v625, %v625
        %v632 = vpack.c.bf16 %v626, %v626
        %633 = vrot.lane.b32.xlu0 %v552, 16
        %v634 = vpop.permute.xlu0 %633
        %635 = vrot.lane.b32.xlu0 %v560, 16
        %v636 = vpop.permute.xlu0 %635
        %637 = vrot.lane.b32.xlu0 %v553, 16
        %v638 = vpop.permute.xlu0 %637
        %639 = vrot.lane.b32.xlu0 %v561, 16
        %v640 = vpop.permute.xlu0 %639
        %641 = vrot.lane.b32.xlu0 %v554, 16
        %v642 = vpop.permute.xlu0 %641
        %643 = vrot.lane.b32.xlu0 %v562, 16
        %v644 = vpop.permute.xlu0 %643
        %vm645 = vcmp.lt.s32.totalorder %v579, 16
        %v646 = vsel %vm645, %v642, %v644
        %v647 = vsel %vm645, %v640, %v642
        %v648 = vsel %vm645, %v638, %v640
        %v649 = vsel %vm645, %v636, %v638
        %v650 = vsel %vm645, %v634, %v636
        %v651 = vsel %vm645, %v644, %v634
        %s652 = scalar_lea.vmem %s13, 1
        %v653 = vld [vmem:[%s652] ss:$8 sm:$0xf]
        %v654 = vld [vmem:[%s652] ss:$8 sm:$0x30]
        %v655 = vor.u32 %v653, %v654
        %v657 = vlaneseq
        %v658 = vshrl.u32 %v657, 7
        %v659 = vsub.s32 0, %v658
        %v660 = vrot.slane %v655, %v659
        %v661 = vlaneseq
        %v662 = vshrl.u32 %v661, 7
        %v663 = vsub.s32 1, %v662
        %v664 = vrot.slane %v655, %v663
        %v665 = vlaneseq
        %v666 = vshrl.u32 %v665, 7
        %v667 = vsub.s32 2, %v666
        %v668 = vrot.slane %v655, %v667
        %v669 = vlaneseq
        %v670 = vshrl.u32 %v669, 7
        %v671 = vsub.s32 3, %v670
        %v672 = vrot.slane %v655, %v671
        %v673 = vlaneseq
        %v674 = vshrl.u32 %v673, 7
        %v675 = vsub.s32 4, %v674
        %v676 = vrot.slane %v655, %v675
        %v677 = vlaneseq
        %v678 = vshrl.u32 %v677, 7
        %v679 = vsub.s32 5, %v678
        %v680 = vrot.slane %v655, %v679
        %v687 = vmul.f32 %v651, %v660
        %v688 = vmul.f32 %v650, %v664
        %v689 = vmul.f32 %v649, %v668
        %v690 = vmul.f32 %v648, %v672
        %v691 = vmul.f32 %v647, %v676
        %v692 = vmul.f32 %v646, %v680
        %v693 = vpack.c.bf16 %v687, %v687
        %v694 = vpack.c.bf16 %v688, %v688
        %v695 = vpack.c.bf16 %v689, %v689
        %v696 = vpack.c.bf16 %v690, %v690
        %v697 = vpack.c.bf16 %v691, %v691
        %v698 = vpack.c.bf16 %v692, %v692
        %699 = vrot.lane.b32.xlu0 %v552, 15
        %v700 = vpop.permute.xlu0 %699
        %701 = vrot.lane.b32.xlu0 %v560, 15
        %v702 = vpop.permute.xlu0 %701
        %703 = vrot.lane.b32.xlu0 %v553, 15
        %v704 = vpop.permute.xlu0 %703
        %705 = vrot.lane.b32.xlu0 %v561, 15
        %v706 = vpop.permute.xlu0 %705
        %707 = vrot.lane.b32.xlu0 %v554, 15
        %v708 = vpop.permute.xlu0 %707
        %709 = vrot.lane.b32.xlu0 %v562, 15
        %v710 = vpop.permute.xlu0 %709
        %vm711 = vcmp.lt.s32.totalorder %v579, 15
        %v712 = vsel %vm711, %v708, %v710
        %v713 = vsel %vm711, %v706, %v708
        %v714 = vsel %vm711, %v704, %v706
        %v715 = vsel %vm711, %v702, %v704
        %v716 = vsel %vm711, %v700, %v702
        %v717 = vsel %vm711, %v710, %v700
        %s718 = scalar_lea.vmem %s13, 2
        %v719 = vld [vmem:[%s718] ss:$8 sm:$0xf]
        %v720 = vld [vmem:[%s718] ss:$8 sm:$0x30]
        %v721 = vor.u32 %v719, %v720
        %v723 = vlaneseq
        %v724 = vshrl.u32 %v723, 7
        %v725 = vsub.s32 0, %v724
        %v726 = vrot.slane %v721, %v725
        %v727 = vlaneseq
        %v728 = vshrl.u32 %v727, 7
        %v729 = vsub.s32 1, %v728
        %v730 = vrot.slane %v721, %v729
        %v731 = vlaneseq
        %v732 = vshrl.u32 %v731, 7
        %v733 = vsub.s32 2, %v732
        %v734 = vrot.slane %v721, %v733
        %v735 = vlaneseq
        %v736 = vshrl.u32 %v735, 7
        %v737 = vsub.s32 3, %v736
        %v738 = vrot.slane %v721, %v737
        %v739 = vlaneseq
        %v740 = vshrl.u32 %v739, 7
        %v741 = vsub.s32 4, %v740
        %v742 = vrot.slane %v721, %v741
        %v743 = vlaneseq
        %v744 = vshrl.u32 %v743, 7
        %v745 = vsub.s32 5, %v744
        %v746 = vrot.slane %v721, %v745
        %v753 = vmul.f32 %v717, %v726
        %v754 = vmul.f32 %v716, %v730
        %v755 = vmul.f32 %v715, %v734
        %v756 = vmul.f32 %v714, %v738
        %v757 = vmul.f32 %v713, %v742
        %v758 = vmul.f32 %v712, %v746
        %v759 = vpack.c.bf16 %v753, %v753
        %v760 = vpack.c.bf16 %v754, %v754
        %v761 = vpack.c.bf16 %v755, %v755
        %v762 = vpack.c.bf16 %v756, %v756
        %v763 = vpack.c.bf16 %v757, %v757
        %v764 = vpack.c.bf16 %v758, %v758
        %765 = vrot.lane.b32.xlu0 %v552, 1
        %v766 = vpop.permute.xlu0 %765
        %767 = vrot.lane.b32.xlu0 %v560, 1
        %v768 = vpop.permute.xlu0 %767
        %769 = vrot.lane.b32.xlu0 %v553, 1
        %v770 = vpop.permute.xlu0 %769
        %771 = vrot.lane.b32.xlu0 %v561, 1
        %v772 = vpop.permute.xlu0 %771
        %773 = vrot.lane.b32.xlu0 %v554, 1
        %v774 = vpop.permute.xlu0 %773
        %775 = vrot.lane.b32.xlu0 %v562, 1
        %v776 = vpop.permute.xlu0 %775
        %vm777 = vcmp.lt.s32.totalorder %v579, 1
        %v778 = vsel %vm777, %v774, %v776
        %v779 = vsel %vm777, %v772, %v774
        %v780 = vsel %vm777, %v770, %v772
        %v781 = vsel %vm777, %v768, %v770
        %v782 = vsel %vm777, %v766, %v768
        %v783 = vsel %vm777, %v776, %v766
        %s784 = scalar_lea.vmem %s13, 3
        %v785 = vld [vmem:[%s784] ss:$8 sm:$0xf]
        %v786 = vld [vmem:[%s784] ss:$8 sm:$0x30]
        %v787 = vor.u32 %v785, %v786
        %v789 = vlaneseq
        %v790 = vshrl.u32 %v789, 7
        %v791 = vsub.s32 0, %v790
        %v792 = vrot.slane %v787, %v791
        %v793 = vlaneseq
        %v794 = vshrl.u32 %v793, 7
        %v795 = vsub.s32 1, %v794
        %v796 = vrot.slane %v787, %v795
        %v797 = vlaneseq
        %v798 = vshrl.u32 %v797, 7
        %v799 = vsub.s32 2, %v798
        %v800 = vrot.slane %v787, %v799
        %v801 = vlaneseq
        %v802 = vshrl.u32 %v801, 7
        %v803 = vsub.s32 3, %v802
        %v804 = vrot.slane %v787, %v803
        %v805 = vlaneseq
        %v806 = vshrl.u32 %v805, 7
        %v807 = vsub.s32 4, %v806
        %v808 = vrot.slane %v787, %v807
        %v809 = vlaneseq
        %v810 = vshrl.u32 %v809, 7
        %v811 = vsub.s32 5, %v810
        %v812 = vrot.slane %v787, %v811
        %v819 = vmul.f32 %v783, %v792
        %v820 = vmul.f32 %v782, %v796
        %v821 = vmul.f32 %v781, %v800
        %v822 = vmul.f32 %v780, %v804
        %v823 = vmul.f32 %v779, %v808
        %v824 = vmul.f32 %v778, %v812
        %v825 = vpack.c.bf16 %v819, %v819
        %v826 = vpack.c.bf16 %v820, %v820
        %v827 = vpack.c.bf16 %v821, %v821
        %v828 = vpack.c.bf16 %v822, %v822
        %v829 = vpack.c.bf16 %v823, %v823
        %v830 = vpack.c.bf16 %v824, %v824
        %v831 = vpack.c.bf16 %v552, %v552
        %v832 = vpack.c.bf16 %v560, %v560
        %v833 = vpack.c.bf16 %v553, %v553
        %v834 = vpack.c.bf16 %v561, %v561
        %v835 = vpack.c.bf16 %v554, %v554
        %v836 = vpack.c.bf16 %v562, %v562
        %837 = vrot.lane.b32.xlu0 %v552, 127
        %v838 = vpop.permute.xlu0 %837
        %839 = vrot.lane.b32.xlu0 %v560, 127
        %v840 = vpop.permute.xlu0 %839
        %841 = vrot.lane.b32.xlu0 %v553, 127
        %v842 = vpop.permute.xlu0 %841
        %843 = vrot.lane.b32.xlu0 %v561, 127
        %v844 = vpop.permute.xlu0 %843
        %845 = vrot.lane.b32.xlu0 %v554, 127
        %v846 = vpop.permute.xlu0 %845
        %847 = vrot.lane.b32.xlu0 %v562, 127
        %v848 = vpop.permute.xlu0 %847
        %vm849 = vcmp.lt.s32.totalorder %v579, 127
        %v850 = vsel %vm849, %v846, %v848
        %v851 = vsel %vm849, %v844, %v846
        %v852 = vsel %vm849, %v842, %v844
        %v853 = vsel %vm849, %v840, %v842
        %v854 = vsel %vm849, %v838, %v840
        %v855 = vsel %vm849, %v848, %v838
        %s856 = scalar_lea.vmem %s13, 5
        %v857 = vld [vmem:[%s856] ss:$8 sm:$0xf]
        %v858 = vld [vmem:[%s856] ss:$8 sm:$0x30]
        %v859 = vor.u32 %v857, %v858
        %v861 = vlaneseq
        %v862 = vshrl.u32 %v861, 7
        %v863 = vsub.s32 0, %v862
        %v864 = vrot.slane %v859, %v863
        %v865 = vlaneseq
        %v866 = vshrl.u32 %v865, 7
        %v867 = vsub.s32 1, %v866
        %v868 = vrot.slane %v859, %v867
        %v869 = vlaneseq
        %v870 = vshrl.u32 %v869, 7
        %v871 = vsub.s32 2, %v870
        %v872 = vrot.slane %v859, %v871
        %v873 = vlaneseq
        %v874 = vshrl.u32 %v873, 7
        %v875 = vsub.s32 3, %v874
        %v876 = vrot.slane %v859, %v875
        %v877 = vlaneseq
        %v878 = vshrl.u32 %v877, 7
        %v879 = vsub.s32 4, %v878
        %v880 = vrot.slane %v859, %v879
        %v881 = vlaneseq
        %v882 = vshrl.u32 %v881, 7
        %v883 = vsub.s32 5, %v882
        %v884 = vrot.slane %v859, %v883
        %v891 = vmul.f32 %v854, %v864
        %v892 = vmul.f32 %v853, %v868
        %v893 = vmul.f32 %v852, %v872
        %v894 = vmul.f32 %v851, %v876
        %v895 = vmul.f32 %v850, %v880
        %v896 = vmul.f32 %v855, %v884
        %v897 = vpack.c.bf16 %v891, %v891
        %v898 = vpack.c.bf16 %v892, %v892
        %v899 = vpack.c.bf16 %v893, %v893
        %v900 = vpack.c.bf16 %v894, %v894
        %v901 = vpack.c.bf16 %v895, %v895
        %v902 = vpack.c.bf16 %v896, %v896
        %903 = vrot.lane.b32.xlu0 %v552, 113
        %v904 = vpop.permute.xlu0 %903
        %905 = vrot.lane.b32.xlu0 %v560, 113
        %v906 = vpop.permute.xlu0 %905
        %907 = vrot.lane.b32.xlu0 %v553, 113
        %v908 = vpop.permute.xlu0 %907
        %909 = vrot.lane.b32.xlu0 %v561, 113
        %v910 = vpop.permute.xlu0 %909
        %911 = vrot.lane.b32.xlu0 %v554, 113
        %v912 = vpop.permute.xlu0 %911
        %913 = vrot.lane.b32.xlu0 %v562, 113
        %v914 = vpop.permute.xlu0 %913
        %vm915 = vcmp.lt.s32.totalorder %v579, 113
        %v916 = vsel %vm915, %v912, %v914
        %v917 = vsel %vm915, %v910, %v912
        %v918 = vsel %vm915, %v908, %v910
        %v919 = vsel %vm915, %v906, %v908
        %v920 = vsel %vm915, %v904, %v906
        %v921 = vsel %vm915, %v914, %v904
        %s922 = scalar_lea.vmem %s13, 6
        %v923 = vld [vmem:[%s922] ss:$8 sm:$0xf]
        %v924 = vld [vmem:[%s922] ss:$8 sm:$0x30]
        %v925 = vor.u32 %v923, %v924
        %v927 = vlaneseq
        %v928 = vshrl.u32 %v927, 7
        %v929 = vsub.s32 0, %v928
        %v930 = vrot.slane %v925, %v929
        %v931 = vlaneseq
        %v932 = vshrl.u32 %v931, 7
        %v933 = vsub.s32 1, %v932
        %v934 = vrot.slane %v925, %v933
        %v935 = vlaneseq
        %v936 = vshrl.u32 %v935, 7
        %v937 = vsub.s32 2, %v936
        %v938 = vrot.slane %v925, %v937
        %v939 = vlaneseq
        %v940 = vshrl.u32 %v939, 7
        %v941 = vsub.s32 3, %v940
        %v942 = vrot.slane %v925, %v941
        %v943 = vlaneseq
        %v944 = vshrl.u32 %v943, 7
        %v945 = vsub.s32 4, %v944
        %v946 = vrot.slane %v925, %v945
        %v947 = vlaneseq
        %v948 = vshrl.u32 %v947, 7
        %v949 = vsub.s32 5, %v948
        %v950 = vrot.slane %v925, %v949
        %v957 = vmul.f32 %v920, %v930
        %v958 = vmul.f32 %v919, %v934
        %v959 = vmul.f32 %v918, %v938
        %v960 = vmul.f32 %v917, %v942
        %v961 = vmul.f32 %v916, %v946
        %v962 = vmul.f32 %v921, %v950
        %v963 = vpack.c.bf16 %v957, %v957
        %v964 = vpack.c.bf16 %v958, %v958
        %v965 = vpack.c.bf16 %v959, %v959
        %v966 = vpack.c.bf16 %v960, %v960
        %v967 = vpack.c.bf16 %v961, %v961
        %v968 = vpack.c.bf16 %v962, %v962
        %969 = vrot.lane.b32.xlu0 %v552, 112
        %v970 = vpop.permute.xlu0 %969
        %971 = vrot.lane.b32.xlu0 %v560, 112
        %v972 = vpop.permute.xlu0 %971
        %973 = vrot.lane.b32.xlu0 %v553, 112
        %v974 = vpop.permute.xlu0 %973
        %975 = vrot.lane.b32.xlu0 %v561, 112
        %v976 = vpop.permute.xlu0 %975
        %977 = vrot.lane.b32.xlu0 %v554, 112
        %v978 = vpop.permute.xlu0 %977
        %979 = vrot.lane.b32.xlu0 %v562, 112
        %v980 = vpop.permute.xlu0 %979
        %vm981 = vcmp.lt.s32.totalorder %v579, 112
        %v982 = vsel %vm981, %v978, %v980
        %v983 = vsel %vm981, %v976, %v978
        %v984 = vsel %vm981, %v974, %v976
        %v985 = vsel %vm981, %v972, %v974
        %v986 = vsel %vm981, %v970, %v972
        %v987 = vsel %vm981, %v980, %v970
        %s988 = scalar_lea.vmem %s13, 7
        %v989 = vld [vmem:[%s988] ss:$8 sm:$0xf]
        %v990 = vld [vmem:[%s988] ss:$8 sm:$0x30]
        %v991 = vor.u32 %v989, %v990
        %v993 = vlaneseq
        %v994 = vshrl.u32 %v993, 7
        %v995 = vsub.s32 0, %v994
        %v996 = vrot.slane %v991, %v995
        %v997 = vlaneseq
        %v998 = vshrl.u32 %v997, 7
        %v999 = vsub.s32 1, %v998
        %v1000 = vrot.slane %v991, %v999
        %v1001 = vlaneseq
        %v1002 = vshrl.u32 %v1001, 7
        %v1003 = vsub.s32 2, %v1002
        %v1004 = vrot.slane %v991, %v1003
        %v1005 = vlaneseq
        %v1006 = vshrl.u32 %v1005, 7
        %v1007 = vsub.s32 3, %v1006
        %v1008 = vrot.slane %v991, %v1007
        %v1009 = vlaneseq
        %v1010 = vshrl.u32 %v1009, 7
        %v1011 = vsub.s32 4, %v1010
        %v1012 = vrot.slane %v991, %v1011
        %v1013 = vlaneseq
        %v1014 = vshrl.u32 %v1013, 7
        %v1015 = vsub.s32 5, %v1014
        %v1016 = vrot.slane %v991, %v1015
        %v1023 = vmul.f32 %v986, %v996
        %v1024 = vmul.f32 %v985, %v1000
        %v1025 = vmul.f32 %v984, %v1004
        %v1026 = vmul.f32 %v983, %v1008
        %v1027 = vmul.f32 %v982, %v1012
        %v1028 = vmul.f32 %v987, %v1016
        %v1029 = vpack.c.bf16 %v1023, %v1023
        %v1030 = vpack.c.bf16 %v1024, %v1024
        %v1031 = vpack.c.bf16 %v1025, %v1025
        %v1032 = vpack.c.bf16 %v1026, %v1026
        %v1033 = vpack.c.bf16 %v1027, %v1027
        %v1034 = vpack.c.bf16 %v1028, %v1028
        %1035 = vrot.lane.b32.xlu0 %v552, 111
        %v1036 = vpop.permute.xlu0 %1035
        %1037 = vrot.lane.b32.xlu0 %v560, 111
        %v1038 = vpop.permute.xlu0 %1037
        %1039 = vrot.lane.b32.xlu0 %v553, 111
        %v1040 = vpop.permute.xlu0 %1039
        %1041 = vrot.lane.b32.xlu0 %v561, 111
        %v1042 = vpop.permute.xlu0 %1041
        %1043 = vrot.lane.b32.xlu0 %v554, 111
        %v1044 = vpop.permute.xlu0 %1043
        %1045 = vrot.lane.b32.xlu0 %v562, 111
        %v1046 = vpop.permute.xlu0 %1045
        %vm1047 = vcmp.lt.s32.totalorder %v579, 111
        %v1048 = vsel %vm1047, %v1044, %v1046
        %v1049 = vsel %vm1047, %v1042, %v1044
        %v1050 = vsel %vm1047, %v1040, %v1042
        %v1051 = vsel %vm1047, %v1038, %v1040
        %v1052 = vsel %vm1047, %v1036, %v1038
        %v1053 = vsel %vm1047, %v1046, %v1036
        %s1054 = scalar_lea.vmem %s13, 48
        %v1055 = vld [vmem:[%s1054] ss:$8 sm:$0xf]
        %v1056 = vld [vmem:[%s1054] ss:$8 sm:$0x30]
        %v1057 = vor.u32 %v1055, %v1056
        %v1059 = vlaneseq
        %v1060 = vshrl.u32 %v1059, 7
        %v1061 = vsub.s32 0, %v1060
        %v1062 = vrot.slane %v1057, %v1061
        %v1063 = vlaneseq
        %v1064 = vshrl.u32 %v1063, 7
        %v1065 = vsub.s32 1, %v1064
        %v1066 = vrot.slane %v1057, %v1065
        %v1067 = vlaneseq
        %v1068 = vshrl.u32 %v1067, 7
        %v1069 = vsub.s32 2, %v1068
        %v1070 = vrot.slane %v1057, %v1069
        %v1071 = vlaneseq
        %v1072 = vshrl.u32 %v1071, 7
        %v1073 = vsub.s32 3, %v1072
        %v1074 = vrot.slane %v1057, %v1073
        %v1075 = vlaneseq
        %v1076 = vshrl.u32 %v1075, 7
        %v1077 = vsub.s32 4, %v1076
        %v1078 = vrot.slane %v1057, %v1077
        %v1079 = vlaneseq
        %v1080 = vshrl.u32 %v1079, 7
        %v1081 = vsub.s32 5, %v1080
        %v1082 = vrot.slane %v1057, %v1081
        %v1089 = vmul.f32 %v1052, %v1062
        %v1090 = vmul.f32 %v1051, %v1066
        %v1091 = vmul.f32 %v1050, %v1070
        %v1092 = vmul.f32 %v1049, %v1074
        %v1093 = vmul.f32 %v1048, %v1078
        %v1094 = vmul.f32 %v1053, %v1082
        %v1095 = vpack.c.bf16 %v1089, %v1089
        %v1096 = vpack.c.bf16 %v1090, %v1090
        %v1097 = vpack.c.bf16 %v1091, %v1091
        %v1098 = vpack.c.bf16 %v1092, %v1092
        %v1099 = vpack.c.bf16 %v1093, %v1093
        %v1100 = vpack.c.bf16 %v1094, %v1094
        %v1102 = vshrl.u32 %v693, 16
        %v1104 = vrot.slane %v1102, 6
        %v1105 = vshll.u32 %v693, 16
        %v1107 = vrot.slane %v1105, 7
        %v1108 = vor.u32 %v1104, %v1107
        %v1110 = vshrl.u32 %v694, 16
        %v1112 = vrot.slane %v1110, 6
        %v1113 = vshll.u32 %v694, 16
        %v1115 = vrot.slane %v1113, 7
        %v1116 = vor.u32 %v1112, %v1115
        %v1118 = vshrl.u32 %v695, 16
        %v1120 = vrot.slane %v1118, 6
        %v1121 = vshll.u32 %v695, 16
        %v1123 = vrot.slane %v1121, 7
        %v1124 = vor.u32 %v1120, %v1123
        %v1126 = vshrl.u32 %v696, 16
        %v1128 = vrot.slane %v1126, 6
        %v1129 = vshll.u32 %v696, 16
        %v1131 = vrot.slane %v1129, 7
        %v1132 = vor.u32 %v1128, %v1131
        %v1134 = vshrl.u32 %v697, 16
        %v1136 = vrot.slane %v1134, 6
        %v1137 = vshll.u32 %v697, 16
        %v1139 = vrot.slane %v1137, 7
        %v1140 = vor.u32 %v1136, %v1139
        %v1142 = vshrl.u32 %v698, 16
        %v1144 = vrot.slane %v1142, 6
        %v1145 = vshll.u32 %v698, 16
        %v1147 = vrot.slane %v1145, 7
        %v1148 = vor.u32 %v1144, %v1147
        %v1161 = vrot.slane %v759, 5
        %v1162 = vrot.slane %v760, 5
        %v1163 = vrot.slane %v761, 5
        %v1164 = vrot.slane %v762, 5
        %v1165 = vrot.slane %v763, 5
        %v1166 = vrot.slane %v764, 5
        %v1168 = vshrl.u32 %v825, 16
        %v1170 = vrot.slane %v1168, 3
        %v1171 = vshll.u32 %v825, 16
        %v1173 = vrot.slane %v1171, 4
        %v1174 = vor.u32 %v1170, %v1173
        %v1176 = vshrl.u32 %v826, 16
        %v1178 = vrot.slane %v1176, 3
        %v1179 = vshll.u32 %v826, 16
        %v1181 = vrot.slane %v1179, 4
        %v1182 = vor.u32 %v1178, %v1181
        %v1184 = vshrl.u32 %v827, 16
        %v1186 = vrot.slane %v1184, 3
        %v1187 = vshll.u32 %v827, 16
        %v1189 = vrot.slane %v1187, 4
        %v1190 = vor.u32 %v1186, %v1189
        %v1192 = vshrl.u32 %v828, 16
        %v1194 = vrot.slane %v1192, 3
        %v1195 = vshll.u32 %v828, 16
        %v1197 = vrot.slane %v1195, 4
        %v1198 = vor.u32 %v1194, %v1197
        %v1200 = vshrl.u32 %v829, 16
        %v1202 = vrot.slane %v1200, 3
        %v1203 = vshll.u32 %v829, 16
        %v1205 = vrot.slane %v1203, 4
        %v1206 = vor.u32 %v1202, %v1205
        %v1208 = vshrl.u32 %v830, 16
        %v1210 = vrot.slane %v1208, 3
        %v1211 = vshll.u32 %v830, 16
        %v1213 = vrot.slane %v1211, 4
        %v1214 = vor.u32 %v1210, %v1213
        %v1227 = vrot.slane %v831, 2
        %v1228 = vrot.slane %v832, 2
        %v1229 = vrot.slane %v833, 2
        %v1230 = vrot.slane %v834, 2
        %v1231 = vrot.slane %v835, 2
        %v1232 = vrot.slane %v836, 2
        %v1234 = vshll.u32 %v897, 16
        %v1236 = vrot.slane %v1234, 1
        %v1238 = vshll.u32 %v898, 16
        %v1240 = vrot.slane %v1238, 1
        %v1242 = vshll.u32 %v899, 16
        %v1244 = vrot.slane %v1242, 1
        %v1246 = vshll.u32 %v900, 16
        %v1248 = vrot.slane %v1246, 1
        %v1250 = vshll.u32 %v901, 16
        %v1252 = vrot.slane %v1250, 1
        %v1254 = vshll.u32 %v902, 16
        %v1256 = vrot.slane %v1254, 1
        %v1257 = vshrl.u32 %v897, 16
        %v1259 = vor.u32 %v1257, %v1236
        %v1260 = vshrl.u32 %v898, 16
        %v1262 = vor.u32 %v1260, %v1240
        %v1263 = vshrl.u32 %v899, 16
        %v1265 = vor.u32 %v1263, %v1244
        %v1266 = vshrl.u32 %v900, 16
        %v1268 = vor.u32 %v1266, %v1248
        %v1269 = vshrl.u32 %v901, 16
        %v1271 = vor.u32 %v1269, %v1252
        %v1272 = vshrl.u32 %v902, 16
        %v1274 = vor.u32 %v1272, %v1256
        %v1287 = vrot.slane %v963, 7
        %v1288 = vrot.slane %v964, 7
        %v1289 = vrot.slane %v965, 7
        %v1290 = vrot.slane %v966, 7
        %v1291 = vrot.slane %v967, 7
        %v1292 = vrot.slane %v968, 7
        %v1294 = vshrl.u32 %v1029, 16
        %v1296 = vrot.slane %v1294, 5
        %v1297 = vshll.u32 %v1029, 16
        %v1299 = vrot.slane %v1297, 6
        %v1300 = vor.u32 %v1296, %v1299
        %v1302 = vshrl.u32 %v1030, 16
        %v1304 = vrot.slane %v1302, 5
        %v1305 = vshll.u32 %v1030, 16
        %v1307 = vrot.slane %v1305, 6
        %v1308 = vor.u32 %v1304, %v1307
        %v1310 = vshrl.u32 %v1031, 16
        %v1312 = vrot.slane %v1310, 5
        %v1313 = vshll.u32 %v1031, 16
        %v1315 = vrot.slane %v1313, 6
        %v1316 = vor.u32 %v1312, %v1315
        %v1318 = vshrl.u32 %v1032, 16
        %v1320 = vrot.slane %v1318, 5
        %v1321 = vshll.u32 %v1032, 16
        %v1323 = vrot.slane %v1321, 6
        %v1324 = vor.u32 %v1320, %v1323
        %v1326 = vshrl.u32 %v1033, 16
        %v1328 = vrot.slane %v1326, 5
        %v1329 = vshll.u32 %v1033, 16
        %v1331 = vrot.slane %v1329, 6
        %v1332 = vor.u32 %v1328, %v1331
        %v1334 = vshrl.u32 %v1034, 16
        %v1336 = vrot.slane %v1334, 5
        %v1337 = vshll.u32 %v1034, 16
        %v1339 = vrot.slane %v1337, 6
        %v1340 = vor.u32 %v1336, %v1339
        %v1353 = vrot.slane %v1095, 4
        %v1354 = vrot.slane %v1096, 4
        %v1355 = vrot.slane %v1097, 4
        %v1356 = vrot.slane %v1098, 4
        %v1357 = vrot.slane %v1099, 4
        %v1358 = vrot.slane %v1100, 4
        %vm1359 = vcmask 1041408
        %vm1360 = vsmask.f32 1280
        %vm1361 = vmand %vm1359, %vm1360
        %v1362 = vsel %vm1361, %v627, %v1108
        %v1363 = vsel %vm1361, %v628, %v1116
        %v1364 = vsel %vm1361, %v629, %v1124
        %v1365 = vsel %vm1361, %v630, %v1132
        %v1366 = vsel %vm1361, %v631, %v1140
        %v1367 = vsel %vm1361, %v632, %v1148
        %vm1368 = vcmask 1042432
        %v1371 = vsel %vm1368, %v1362, %v1161
        %v1375 = vsel %vm1368, %v1363, %v1162
        %v1379 = vsel %vm1368, %v1364, %v1163
        %v1383 = vsel %vm1368, %v1365, %v1164
        %v1387 = vsel %vm1368, %v1366, %v1165
        %v1391 = vsel %vm1368, %v1367, %v1166
        %vm1393 = vcmask 1044480
        %vm1394 = vsmask.f32 4352
        %vm1395 = vmand %vm1393, %vm1394
        %v1396 = vsel %vm1395, %v1371, %v1174
        %v1397 = vsel %vm1395, %v1375, %v1182
        %v1398 = vsel %vm1395, %v1379, %v1190
        %v1399 = vsel %vm1395, %v1383, %v1198
        %v1400 = vsel %vm1395, %v1387, %v1206
        %v1401 = vsel %vm1395, %v1391, %v1214
        %vm1402 = vcmask 1045504
        %v1405 = vsel %vm1402, %v1396, %v1227
        %v1409 = vsel %vm1402, %v1397, %v1228
        %v1413 = vsel %vm1402, %v1398, %v1229
        %v1417 = vsel %vm1402, %v1399, %v1230
        %v1421 = vsel %vm1402, %v1400, %v1231
        %v1425 = vsel %vm1402, %v1401, %v1232
        %vm1427 = vcmask 1047552
        %vm1428 = vsmask.f32 7424
        %vm1429 = vmand %vm1427, %vm1428
        %v1430 = vsel %vm1429, %v1405, %v1236
        %v1431 = vsel %vm1429, %v1409, %v1240
        %v1432 = vsel %vm1429, %v1413, %v1244
        %v1433 = vsel %vm1429, %v1417, %v1248
        %v1434 = vsel %vm1429, %v1421, %v1252
        %v1435 = vsel %vm1429, %v1425, %v1256
        %vm1436 = vcmask 1040384
        %v1439 = vsel %vm1436, %v1259, %v1287
        %v1443 = vsel %vm1436, %v1262, %v1288
        %v1447 = vsel %vm1436, %v1265, %v1289
        %v1451 = vsel %vm1436, %v1268, %v1290
        %v1455 = vsel %vm1436, %v1271, %v1291
        %v1459 = vsel %vm1436, %v1274, %v1292
        %vm1461 = vcmask 1042432
        %vm1462 = vsmask.f32 2304
        %vm1463 = vmand %vm1461, %vm1462
        %v1464 = vsel %vm1463, %v1439, %v1300
        %v1465 = vsel %vm1463, %v1443, %v1308
        %v1466 = vsel %vm1463, %v1447, %v1316
        %v1467 = vsel %vm1463, %v1451, %v1324
        %v1468 = vsel %vm1463, %v1455, %v1332
        %v1469 = vsel %vm1463, %v1459, %v1340
        %vm1470 = vcmask 1043456
        %v1473 = vsel %vm1470, %v1464, %v1353
        %v1477 = vsel %vm1470, %v1465, %v1354
        %v1481 = vsel %vm1470, %v1466, %v1355
        %v1485 = vsel %vm1470, %v1467, %v1356
        %v1489 = vsel %vm1470, %v1468, %v1357
        %v1493 = vsel %vm1470, %v1469, %v1358
        %vm1495 = vcmask 1045504
        %vm1496 = vsmask.f32 5376
        %vm1497 = vmand %vm1495, %vm1496
        %v1498 = vsel %vm1497, %v1473, 1065369472
        %v1499 = vsel %vm1497, %v1477, 1065369472
        %v1500 = vsel %vm1497, %v1481, 1065369472
        %v1501 = vsel %vm1497, %v1485, 1065369472
        %v1502 = vsel %vm1497, %v1489, 1065369472
        %v1503 = vsel %vm1497, %v1493, 1065369472
        %v1506 = vunpack.c.l.b16 %v555
        %v1507 = vunpack.c.l.b16 %v556
        %v1508 = vpack.c.b16 %v1507, %v1506
        %vm1509 = vcmask 228352
        %v1511 = vsel %vm1509, %v1508, 0
        %v1514 = vsel %vm1402, %v1498, 0
        %v1517 = vsel %vm1402, %v1499, 0
        %v1520 = vsel %vm1402, %v1500, 0
        %v1523 = vsel %vm1402, %v1501, 0
        %v1526 = vsel %vm1402, %v1502, 0
        %v1529 = vsel %vm1402, %v1503, 0
        %1531 = vmatprep.subr.bf16.mxu0 0
        %1532 = vmatpush1.bf16.msra.mxu0 0
        %1533 = vmatprep.subr.bf16.mxu0 0
        %1534 = vmatpush1.bf16.msra.mxu0 0
        %1535 = vmatprep.subr.bf16.mxu0 0
        %1536 = vmatpush1.bf16.msra.mxu0 0
        %1537 = vmatprep.subr.bf16.mxu0 0
        %1538 = vmatpush1.bf16.msra.mxu0 0
        %1539 = vmatprep.subr.bf16.mxu0 0
        %1540 = vmatpush1.bf16.msra.mxu0 0
        %1541 = vmatprep.subr.bf16.mxu0 0
        %1542 = vmatpush1.bf16.msra.mxu0 0
        %1543 = vmatprep.subr.bf16.mxu0 %v1517
        %1544 = vmatpush1.bf16.msra.mxu0 %v1514
        %1545 = vmatprep.subr.bf16.mxu0 %v1431
        %1546 = vmatpush1.bf16.msra.mxu0 %v1430
        %1547 = vmatprep.subr.bf16.mxu0 0
        %1548 = vmatpush2.bf16.msra.mxu0 0
        %1549 = vmatprep.subr.bf16.mxu0 0
        %1550 = vmatpush2.bf16.msra.mxu0 0
        %1551 = vmatprep.subr.bf16.mxu0 0
        %1552 = vmatpush2.bf16.msra.mxu0 0
        %1553 = vmatprep.subr.bf16.mxu0 0
        %1554 = vmatpush2.bf16.msra.mxu0 0
        %1555 = vmatprep.subr.bf16.mxu0 0
        %1556 = vmatpush2.bf16.msra.mxu0 0
        %1557 = vmatprep.subr.bf16.mxu0 0
        %1558 = vmatpush2.bf16.msra.mxu0 0
        %1559 = vmatprep.subr.bf16.mxu0 0
        %1560 = vmatpush2.bf16.msra.mxu0 0
        %1561 = vmatprep.subr.bf16.mxu0 0
        %1562 = vmatpush2.bf16.msra.mxu0 0
        %1563 = vmatprep.mubr.bf16.mxu0 0
        %1564 = vmatmul.mubr.bf16.gmra.mxu0 %v1511
        %v1565 = vpop.f32.mrf.mxu0
        %v1566 = vadd.f32 0.0, %v1565
        %v1567 = vpop.f32.mrf.mxu0
        %v1568 = vadd.f32 0.0, %v1567
        %v1569 = vpop.f32.mrf.mxu0
        %v1570 = vadd.f32 0.0, %v1569
        %v1571 = vpop.f32.mrf.mxu0
        %v1572 = vadd.f32 0.0, %v1571
        %1573 = vdwg.mxu0
        %1574 = vmatprep.subr.bf16.mxu0 0
        %1575 = vmatpush1.bf16.msra.mxu0 0
        %1576 = vmatprep.subr.bf16.mxu0 0
        %1577 = vmatpush1.bf16.msra.mxu0 0
        %1578 = vmatprep.subr.bf16.mxu0 0
        %1579 = vmatpush1.bf16.msra.mxu0 0
        %1580 = vmatprep.subr.bf16.mxu0 0
        %1581 = vmatpush1.bf16.msra.mxu0 0
        %1582 = vmatprep.subr.bf16.mxu0 0
        %1583 = vmatpush1.bf16.msra.mxu0 0
        %1584 = vmatprep.subr.bf16.mxu0 0
        %1585 = vmatpush1.bf16.msra.mxu0 0
        %1586 = vmatprep.subr.bf16.mxu0 %v1523
        %1587 = vmatpush1.bf16.msra.mxu0 %v1520
        %1588 = vmatprep.subr.bf16.mxu0 %v1433
        %1589 = vmatpush1.bf16.msra.mxu0 %v1432
        %1590 = vmatprep.subr.bf16.mxu0 0
        %1591 = vmatpush2.bf16.msra.mxu0 0
        %1592 = vmatprep.subr.bf16.mxu0 0
        %1593 = vmatpush2.bf16.msra.mxu0 0
        %1594 = vmatprep.subr.bf16.mxu0 0
        %1595 = vmatpush2.bf16.msra.mxu0 0
        %1596 = vmatprep.subr.bf16.mxu0 0
        %1597 = vmatpush2.bf16.msra.mxu0 0
        %1598 = vmatprep.subr.bf16.mxu0 0
        %1599 = vmatpush2.bf16.msra.mxu0 0
        %1600 = vmatprep.subr.bf16.mxu0 0
        %1601 = vmatpush2.bf16.msra.mxu0 0
        %1602 = vmatprep.subr.bf16.mxu0 0
        %1603 = vmatpush2.bf16.msra.mxu0 0
        %1604 = vmatprep.subr.bf16.mxu0 0
        %1605 = vmatpush2.bf16.msra.mxu0 0
        %1606 = vmatprep.mubr.bf16.mxu0 0
        %1607 = vmatmul.mubr.bf16.gmra.mxu0 %v1511
        %v1608 = vpop.f32.mrf.mxu0
        %v1609 = vadd.f32 0.0, %v1608
        %v1610 = vpop.f32.mrf.mxu0
        %v1611 = vadd.f32 0.0, %v1610
        %v1612 = vpop.f32.mrf.mxu0
        %v1613 = vadd.f32 0.0, %v1612
        %v1614 = vpop.f32.mrf.mxu0
        %v1615 = vadd.f32 0.0, %v1614
        %1616 = vdwg.mxu0
        %1617 = vmatprep.subr.bf16.mxu0 0
        %1618 = vmatpush1.bf16.msra.mxu0 0
        %1619 = vmatprep.subr.bf16.mxu0 0
        %1620 = vmatpush1.bf16.msra.mxu0 0
        %1621 = vmatprep.subr.bf16.mxu0 0
        %1622 = vmatpush1.bf16.msra.mxu0 0
        %1623 = vmatprep.subr.bf16.mxu0 0
        %1624 = vmatpush1.bf16.msra.mxu0 0
        %1625 = vmatprep.subr.bf16.mxu0 0
        %1626 = vmatpush1.bf16.msra.mxu0 0
        %1627 = vmatprep.subr.bf16.mxu0 0
        %1628 = vmatpush1.bf16.msra.mxu0 0
        %1629 = vmatprep.subr.bf16.mxu0 %v1529
        %1630 = vmatpush1.bf16.msra.mxu0 %v1526
        %1631 = vmatprep.subr.bf16.mxu0 %v1435
        %1632 = vmatpush1.bf16.msra.mxu0 %v1434
        %1633 = vmatprep.subr.bf16.mxu0 0
        %1634 = vmatpush2.bf16.msra.mxu0 0
        %1635 = vmatprep.subr.bf16.mxu0 0
        %1636 = vmatpush2.bf16.msra.mxu0 0
        %1637 = vmatprep.subr.bf16.mxu0 0
        %1638 = vmatpush2.bf16.msra.mxu0 0
        %1639 = vmatprep.subr.bf16.mxu0 0
        %1640 = vmatpush2.bf16.msra.mxu0 0
        %1641 = vmatprep.subr.bf16.mxu0 0
        %1642 = vmatpush2.bf16.msra.mxu0 0
        %1643 = vmatprep.subr.bf16.mxu0 0
        %1644 = vmatpush2.bf16.msra.mxu0 0
        %1645 = vmatprep.subr.bf16.mxu0 0
        %1646 = vmatpush2.bf16.msra.mxu0 0
        %1647 = vmatprep.subr.bf16.mxu0 0
        %1648 = vmatpush2.bf16.msra.mxu0 0
        %1649 = vmatprep.mubr.bf16.mxu0 0
        %1650 = vmatmul.mubr.bf16.gmra.mxu0 %v1511
        %v1651 = vpop.f32.mrf.mxu0
        %v1652 = vadd.f32 0.0, %v1651
        %v1653 = vpop.f32.mrf.mxu0
        %v1654 = vadd.f32 0.0, %v1653
        %v1655 = vpop.f32.mrf.mxu0
        %v1656 = vadd.f32 0.0, %v1655
        %v1657 = vpop.f32.mrf.mxu0
        %v1658 = vadd.f32 0.0, %v1657
        %1659 = vdwg.mxu0
        %v1660 = vmax.f32 %v1566, 0.0
        %v1661 = vmax.f32 %v1568, 0.0
        %v1662 = vmax.f32 %v1609, 0.0
        %v1663 = vmax.f32 %v1611, 0.0
        %v1664 = vmax.f32 %v1652, 0.0
        %v1665 = vmax.f32 %v1654, 0.0
        %v1666 = vmax.f32 %v1570, 0.0
        %v1667 = vmax.f32 %v1572, 0.0
        %v1668 = vmax.f32 %v1613, 0.0
        %v1669 = vmax.f32 %v1615, 0.0
        %v1670 = vmax.f32 %v1656, 0.0
        %v1671 = vmax.f32 %v1658, 0.0
        %v1672 = vld [vmem:[%s2] sm:$0xff]
        %v1673 = vld [vmem:[%s2 + $0x8] sm:$0xff]
        %1674 = vrot.lane.b32.xlu0 %v1660, 17
        %v1675 = vpop.permute.xlu0 %1674
        %1676 = vrot.lane.b32.xlu0 %v1666, 17
        %v1677 = vpop.permute.xlu0 %1676
        %1678 = vrot.lane.b32.xlu0 %v1661, 17
        %v1679 = vpop.permute.xlu0 %1678
        %1680 = vrot.lane.b32.xlu0 %v1667, 17
        %v1681 = vpop.permute.xlu0 %1680
        %1682 = vrot.lane.b32.xlu0 %v1662, 17
        %v1683 = vpop.permute.xlu0 %1682
        %1684 = vrot.lane.b32.xlu0 %v1668, 17
        %v1685 = vpop.permute.xlu0 %1684
        %1686 = vrot.lane.b32.xlu0 %v1663, 17
        %v1687 = vpop.permute.xlu0 %1686
        %1688 = vrot.lane.b32.xlu0 %v1669, 17
        %v1689 = vpop.permute.xlu0 %1688
        %1690 = vrot.lane.b32.xlu0 %v1664, 17
        %v1691 = vpop.permute.xlu0 %1690
        %1692 = vrot.lane.b32.xlu0 %v1670, 17
        %v1693 = vpop.permute.xlu0 %1692
        %1694 = vrot.lane.b32.xlu0 %v1665, 17
        %v1695 = vpop.permute.xlu0 %1694
        %1696 = vrot.lane.b32.xlu0 %v1671, 17
        %v1697 = vpop.permute.xlu0 %1696
        %v1698 = vsel %vm580, %v1691, %v1695
        %v1699 = vsel %vm580, %v1693, %v1697
        %v1700 = vsel %vm580, %v1687, %v1691
        %v1701 = vsel %vm580, %v1689, %v1693
        %v1702 = vsel %vm580, %v1683, %v1687
        %v1703 = vsel %vm580, %v1685, %v1689
        %v1704 = vsel %vm580, %v1679, %v1683
        %v1705 = vsel %vm580, %v1681, %v1685
        %v1706 = vsel %vm580, %v1675, %v1679
        %v1707 = vsel %vm580, %v1677, %v1681
        %v1708 = vsel %vm580, %v1695, %v1675
        %v1709 = vsel %vm580, %v1697, %v1677
        %v1710 = vmul.f32 %v1708, %v594
        %v1711 = vmul.f32 %v1706, %v598
        %v1712 = vmul.f32 %v1704, %v602
        %v1713 = vmul.f32 %v1702, %v606
        %v1714 = vmul.f32 %v1700, %v610
        %v1715 = vmul.f32 %v1698, %v614
        %v1716 = vmul.f32 %v1709, %v594
        %v1717 = vmul.f32 %v1707, %v598
        %v1718 = vmul.f32 %v1705, %v602
        %v1719 = vmul.f32 %v1703, %v606
        %v1720 = vmul.f32 %v1701, %v610
        %v1721 = vmul.f32 %v1699, %v614
        %v1722 = vpack.c.bf16 %v1716, %v1710
        %v1723 = vpack.c.bf16 %v1717, %v1711
        %v1724 = vpack.c.bf16 %v1718, %v1712
        %v1725 = vpack.c.bf16 %v1719, %v1713
        %v1726 = vpack.c.bf16 %v1720, %v1714
        %v1727 = vpack.c.bf16 %v1721, %v1715
        %1728 = vrot.lane.b32.xlu0 %v1660, 16
        %v1729 = vpop.permute.xlu0 %1728
        %1730 = vrot.lane.b32.xlu0 %v1666, 16
        %v1731 = vpop.permute.xlu0 %1730
        %1732 = vrot.lane.b32.xlu0 %v1661, 16
        %v1733 = vpop.permute.xlu0 %1732
        %1734 = vrot.lane.b32.xlu0 %v1667, 16
        %v1735 = vpop.permute.xlu0 %1734
        %1736 = vrot.lane.b32.xlu0 %v1662, 16
        %v1737 = vpop.permute.xlu0 %1736
        %1738 = vrot.lane.b32.xlu0 %v1668, 16
        %v1739 = vpop.permute.xlu0 %1738
        %1740 = vrot.lane.b32.xlu0 %v1663, 16
        %v1741 = vpop.permute.xlu0 %1740
        %1742 = vrot.lane.b32.xlu0 %v1669, 16
        %v1743 = vpop.permute.xlu0 %1742
        %1744 = vrot.lane.b32.xlu0 %v1664, 16
        %v1745 = vpop.permute.xlu0 %1744
        %1746 = vrot.lane.b32.xlu0 %v1670, 16
        %v1747 = vpop.permute.xlu0 %1746
        %1748 = vrot.lane.b32.xlu0 %v1665, 16
        %v1749 = vpop.permute.xlu0 %1748
        %1750 = vrot.lane.b32.xlu0 %v1671, 16
        %v1751 = vpop.permute.xlu0 %1750
        %v1752 = vsel %vm645, %v1745, %v1749
        %v1753 = vsel %vm645, %v1747, %v1751
        %v1754 = vsel %vm645, %v1741, %v1745
        %v1755 = vsel %vm645, %v1743, %v1747
        %v1756 = vsel %vm645, %v1737, %v1741
        %v1757 = vsel %vm645, %v1739, %v1743
        %v1758 = vsel %vm645, %v1733, %v1737
        %v1759 = vsel %vm645, %v1735, %v1739
        %v1760 = vsel %vm645, %v1729, %v1733
        %v1761 = vsel %vm645, %v1731, %v1735
        %v1762 = vsel %vm645, %v1749, %v1729
        %v1763 = vsel %vm645, %v1751, %v1731
        %v1764 = vmul.f32 %v1762, %v660
        %v1765 = vmul.f32 %v1760, %v664
        %v1766 = vmul.f32 %v1758, %v668
        %v1767 = vmul.f32 %v1756, %v672
        %v1768 = vmul.f32 %v1754, %v676
        %v1769 = vmul.f32 %v1752, %v680
        %v1770 = vmul.f32 %v1763, %v660
        %v1771 = vmul.f32 %v1761, %v664
        %v1772 = vmul.f32 %v1759, %v668
        %v1773 = vmul.f32 %v1757, %v672
        %v1774 = vmul.f32 %v1755, %v676
        %v1775 = vmul.f32 %v1753, %v680
        %v1776 = vpack.c.bf16 %v1770, %v1764
        %v1777 = vpack.c.bf16 %v1771, %v1765
        %v1778 = vpack.c.bf16 %v1772, %v1766
        %v1779 = vpack.c.bf16 %v1773, %v1767
        %v1780 = vpack.c.bf16 %v1774, %v1768
        %v1781 = vpack.c.bf16 %v1775, %v1769
        %1782 = vrot.lane.b32.xlu0 %v1660, 15
        %v1783 = vpop.permute.xlu0 %1782
        %1784 = vrot.lane.b32.xlu0 %v1666, 15
        %v1785 = vpop.permute.xlu0 %1784
        %1786 = vrot.lane.b32.xlu0 %v1661, 15
        %v1787 = vpop.permute.xlu0 %1786
        %1788 = vrot.lane.b32.xlu0 %v1667, 15
        %v1789 = vpop.permute.xlu0 %1788
        %1790 = vrot.lane.b32.xlu0 %v1662, 15
        %v1791 = vpop.permute.xlu0 %1790
        %1792 = vrot.lane.b32.xlu0 %v1668, 15
        %v1793 = vpop.permute.xlu0 %1792
        %1794 = vrot.lane.b32.xlu0 %v1663, 15
        %v1795 = vpop.permute.xlu0 %1794
        %1796 = vrot.lane.b32.xlu0 %v1669, 15
        %v1797 = vpop.permute.xlu0 %1796
        %1798 = vrot.lane.b32.xlu0 %v1664, 15
        %v1799 = vpop.permute.xlu0 %1798
        %1800 = vrot.lane.b32.xlu0 %v1670, 15
        %v1801 = vpop.permute.xlu0 %1800
        %1802 = vrot.lane.b32.xlu0 %v1665, 15
        %v1803 = vpop.permute.xlu0 %1802
        %1804 = vrot.lane.b32.xlu0 %v1671, 15
        %v1805 = vpop.permute.xlu0 %1804
        %v1806 = vsel %vm711, %v1799, %v1803
        %v1807 = vsel %vm711, %v1801, %v1805
        %v1808 = vsel %vm711, %v1795, %v1799
        %v1809 = vsel %vm711, %v1797, %v1801
        %v1810 = vsel %vm711, %v1791, %v1795
        %v1811 = vsel %vm711, %v1793, %v1797
        %v1812 = vsel %vm711, %v1787, %v1791
        %v1813 = vsel %vm711, %v1789, %v1793
        %v1814 = vsel %vm711, %v1783, %v1787
        %v1815 = vsel %vm711, %v1785, %v1789
        %v1816 = vsel %vm711, %v1803, %v1783
        %v1817 = vsel %vm711, %v1805, %v1785
        %v1818 = vmul.f32 %v1816, %v726
        %v1819 = vmul.f32 %v1814, %v730
        %v1820 = vmul.f32 %v1812, %v734
        %v1821 = vmul.f32 %v1810, %v738
        %v1822 = vmul.f32 %v1808, %v742
        %v1823 = vmul.f32 %v1806, %v746
        %v1824 = vmul.f32 %v1817, %v726
        %v1825 = vmul.f32 %v1815, %v730
        %v1826 = vmul.f32 %v1813, %v734
        %v1827 = vmul.f32 %v1811, %v738
        %v1828 = vmul.f32 %v1809, %v742
        %v1829 = vmul.f32 %v1807, %v746
        %v1830 = vpack.c.bf16 %v1824, %v1818
        %v1831 = vpack.c.bf16 %v1825, %v1819
        %v1832 = vpack.c.bf16 %v1826, %v1820
        %v1833 = vpack.c.bf16 %v1827, %v1821
        %v1834 = vpack.c.bf16 %v1828, %v1822
        %v1835 = vpack.c.bf16 %v1829, %v1823
        %1836 = vrot.lane.b32.xlu0 %v1660, 1
        %v1837 = vpop.permute.xlu0 %1836
        %1838 = vrot.lane.b32.xlu0 %v1666, 1
        %v1839 = vpop.permute.xlu0 %1838
        %1840 = vrot.lane.b32.xlu0 %v1661, 1
        %v1841 = vpop.permute.xlu0 %1840
        %1842 = vrot.lane.b32.xlu0 %v1667, 1
        %v1843 = vpop.permute.xlu0 %1842
        %1844 = vrot.lane.b32.xlu0 %v1662, 1
        %v1845 = vpop.permute.xlu0 %1844
        %1846 = vrot.lane.b32.xlu0 %v1668, 1
        %v1847 = vpop.permute.xlu0 %1846
        %1848 = vrot.lane.b32.xlu0 %v1663, 1
        %v1849 = vpop.permute.xlu0 %1848
        %1850 = vrot.lane.b32.xlu0 %v1669, 1
        %v1851 = vpop.permute.xlu0 %1850
        %1852 = vrot.lane.b32.xlu0 %v1664, 1
        %v1853 = vpop.permute.xlu0 %1852
        %1854 = vrot.lane.b32.xlu0 %v1670, 1
        %v1855 = vpop.permute.xlu0 %1854
        %1856 = vrot.lane.b32.xlu0 %v1665, 1
        %v1857 = vpop.permute.xlu0 %1856
        %1858 = vrot.lane.b32.xlu0 %v1671, 1
        %v1859 = vpop.permute.xlu0 %1858
        %v1860 = vsel %vm777, %v1853, %v1857
        %v1861 = vsel %vm777, %v1855, %v1859
        %v1862 = vsel %vm777, %v1849, %v1853
        %v1863 = vsel %vm777, %v1851, %v1855
        %v1864 = vsel %vm777, %v1845, %v1849
        %v1865 = vsel %vm777, %v1847, %v1851
        %v1866 = vsel %vm777, %v1841, %v1845
        %v1867 = vsel %vm777, %v1843, %v1847
        %v1868 = vsel %vm777, %v1837, %v1841
        %v1869 = vsel %vm777, %v1839, %v1843
        %v1870 = vsel %vm777, %v1857, %v1837
        %v1871 = vsel %vm777, %v1859, %v1839
        %v1872 = vmul.f32 %v1870, %v792
        %v1873 = vmul.f32 %v1868, %v796
        %v1874 = vmul.f32 %v1866, %v800
        %v1875 = vmul.f32 %v1864, %v804
        %v1876 = vmul.f32 %v1862, %v808
        %v1877 = vmul.f32 %v1860, %v812
        %v1878 = vmul.f32 %v1871, %v792
        %v1879 = vmul.f32 %v1869, %v796
        %v1880 = vmul.f32 %v1867, %v800
        %v1881 = vmul.f32 %v1865, %v804
        %v1882 = vmul.f32 %v1863, %v808
        %v1883 = vmul.f32 %v1861, %v812
        %v1884 = vpack.c.bf16 %v1878, %v1872
        %v1885 = vpack.c.bf16 %v1879, %v1873
        %v1886 = vpack.c.bf16 %v1880, %v1874
        %v1887 = vpack.c.bf16 %v1881, %v1875
        %v1888 = vpack.c.bf16 %v1882, %v1876
        %v1889 = vpack.c.bf16 %v1883, %v1877
        %v1890 = vpack.c.bf16 %v1666, %v1660
        %v1891 = vpack.c.bf16 %v1667, %v1661
        %v1892 = vpack.c.bf16 %v1668, %v1662
        %v1893 = vpack.c.bf16 %v1669, %v1663
        %v1894 = vpack.c.bf16 %v1670, %v1664
        %v1895 = vpack.c.bf16 %v1671, %v1665
        %1896 = vrot.lane.b32.xlu0 %v1660, 127
        %v1897 = vpop.permute.xlu0 %1896
        %1898 = vrot.lane.b32.xlu0 %v1666, 127
        %v1899 = vpop.permute.xlu0 %1898
        %1900 = vrot.lane.b32.xlu0 %v1661, 127
        %v1901 = vpop.permute.xlu0 %1900
        %1902 = vrot.lane.b32.xlu0 %v1667, 127
        %v1903 = vpop.permute.xlu0 %1902
        %1904 = vrot.lane.b32.xlu0 %v1662, 127
        %v1905 = vpop.permute.xlu0 %1904
        %1906 = vrot.lane.b32.xlu0 %v1668, 127
        %v1907 = vpop.permute.xlu0 %1906
        %1908 = vrot.lane.b32.xlu0 %v1663, 127
        %v1909 = vpop.permute.xlu0 %1908
        %1910 = vrot.lane.b32.xlu0 %v1669, 127
        %v1911 = vpop.permute.xlu0 %1910
        %1912 = vrot.lane.b32.xlu0 %v1664, 127
        %v1913 = vpop.permute.xlu0 %1912
        %1914 = vrot.lane.b32.xlu0 %v1670, 127
        %v1915 = vpop.permute.xlu0 %1914
        %1916 = vrot.lane.b32.xlu0 %v1665, 127
        %v1917 = vpop.permute.xlu0 %1916
        %1918 = vrot.lane.b32.xlu0 %v1671, 127
        %v1919 = vpop.permute.xlu0 %1918
        %v1920 = vsel %vm849, %v1913, %v1917
        %v1921 = vsel %vm849, %v1915, %v1919
        %v1922 = vsel %vm849, %v1909, %v1913
        %v1923 = vsel %vm849, %v1911, %v1915
        %v1924 = vsel %vm849, %v1905, %v1909
        %v1925 = vsel %vm849, %v1907, %v1911
        %v1926 = vsel %vm849, %v1901, %v1905
        %v1927 = vsel %vm849, %v1903, %v1907
        %v1928 = vsel %vm849, %v1897, %v1901
        %v1929 = vsel %vm849, %v1899, %v1903
        %v1930 = vsel %vm849, %v1917, %v1897
        %v1931 = vsel %vm849, %v1919, %v1899
        %v1932 = vmul.f32 %v1928, %v864
        %v1933 = vmul.f32 %v1926, %v868
        %v1934 = vmul.f32 %v1924, %v872
        %v1935 = vmul.f32 %v1922, %v876
        %v1936 = vmul.f32 %v1920, %v880
        %v1937 = vmul.f32 %v1930, %v884
        %v1938 = vmul.f32 %v1929, %v864
        %v1939 = vmul.f32 %v1927, %v868
        %v1940 = vmul.f32 %v1925, %v872
        %v1941 = vmul.f32 %v1923, %v876
        %v1942 = vmul.f32 %v1921, %v880
        %v1943 = vmul.f32 %v1931, %v884
        %v1944 = vpack.c.bf16 %v1938, %v1932
        %v1945 = vpack.c.bf16 %v1939, %v1933
        %v1946 = vpack.c.bf16 %v1940, %v1934
        %v1947 = vpack.c.bf16 %v1941, %v1935
        %v1948 = vpack.c.bf16 %v1942, %v1936
        %v1949 = vpack.c.bf16 %v1943, %v1937
        %1950 = vrot.lane.b32.xlu0 %v1660, 113
        %v1951 = vpop.permute.xlu0 %1950
        %1952 = vrot.lane.b32.xlu0 %v1666, 113
        %v1953 = vpop.permute.xlu0 %1952
        %1954 = vrot.lane.b32.xlu0 %v1661, 113
        %v1955 = vpop.permute.xlu0 %1954
        %1956 = vrot.lane.b32.xlu0 %v1667, 113
        %v1957 = vpop.permute.xlu0 %1956
        %1958 = vrot.lane.b32.xlu0 %v1662, 113
        %v1959 = vpop.permute.xlu0 %1958
        %1960 = vrot.lane.b32.xlu0 %v1668, 113
        %v1961 = vpop.permute.xlu0 %1960
        %1962 = vrot.lane.b32.xlu0 %v1663, 113
        %v1963 = vpop.permute.xlu0 %1962
        %1964 = vrot.lane.b32.xlu0 %v1669, 113
        %v1965 = vpop.permute.xlu0 %1964
        %1966 = vrot.lane.b32.xlu0 %v1664, 113
        %v1967 = vpop.permute.xlu0 %1966
        %1968 = vrot.lane.b32.xlu0 %v1670, 113
        %v1969 = vpop.permute.xlu0 %1968
        %1970 = vrot.lane.b32.xlu0 %v1665, 113
        %v1971 = vpop.permute.xlu0 %1970
        %1972 = vrot.lane.b32.xlu0 %v1671, 113
        %v1973 = vpop.permute.xlu0 %1972
        %v1974 = vsel %vm915, %v1967, %v1971
        %v1975 = vsel %vm915, %v1969, %v1973
        %v1976 = vsel %vm915, %v1963, %v1967
        %v1977 = vsel %vm915, %v1965, %v1969
        %v1978 = vsel %vm915, %v1959, %v1963
        %v1979 = vsel %vm915, %v1961, %v1965
        %v1980 = vsel %vm915, %v1955, %v1959
        %v1981 = vsel %vm915, %v1957, %v1961
        %v1982 = vsel %vm915, %v1951, %v1955
        %v1983 = vsel %vm915, %v1953, %v1957
        %v1984 = vsel %vm915, %v1971, %v1951
        %v1985 = vsel %vm915, %v1973, %v1953
        %v1986 = vmul.f32 %v1982, %v930
        %v1987 = vmul.f32 %v1980, %v934
        %v1988 = vmul.f32 %v1978, %v938
        %v1989 = vmul.f32 %v1976, %v942
        %v1990 = vmul.f32 %v1974, %v946
        %v1991 = vmul.f32 %v1984, %v950
        %v1992 = vmul.f32 %v1983, %v930
        %v1993 = vmul.f32 %v1981, %v934
        %v1994 = vmul.f32 %v1979, %v938
        %v1995 = vmul.f32 %v1977, %v942
        %v1996 = vmul.f32 %v1975, %v946
        %v1997 = vmul.f32 %v1985, %v950
        %v1998 = vpack.c.bf16 %v1992, %v1986
        %v1999 = vpack.c.bf16 %v1993, %v1987
        %v2000 = vpack.c.bf16 %v1994, %v1988
        %v2001 = vpack.c.bf16 %v1995, %v1989
        %v2002 = vpack.c.bf16 %v1996, %v1990
        %v2003 = vpack.c.bf16 %v1997, %v1991
        %2004 = vrot.lane.b32.xlu0 %v1660, 112
        %v2005 = vpop.permute.xlu0 %2004
        %2006 = vrot.lane.b32.xlu0 %v1666, 112
        %v2007 = vpop.permute.xlu0 %2006
        %2008 = vrot.lane.b32.xlu0 %v1661, 112
        %v2009 = vpop.permute.xlu0 %2008
        %2010 = vrot.lane.b32.xlu0 %v1667, 112
        %v2011 = vpop.permute.xlu0 %2010
        %2012 = vrot.lane.b32.xlu0 %v1662, 112
        %v2013 = vpop.permute.xlu0 %2012
        %2014 = vrot.lane.b32.xlu0 %v1668, 112
        %v2015 = vpop.permute.xlu0 %2014
        %2016 = vrot.lane.b32.xlu0 %v1663, 112
        %v2017 = vpop.permute.xlu0 %2016
        %2018 = vrot.lane.b32.xlu0 %v1669, 112
        %v2019 = vpop.permute.xlu0 %2018
        %2020 = vrot.lane.b32.xlu0 %v1664, 112
        %v2021 = vpop.permute.xlu0 %2020
        %2022 = vrot.lane.b32.xlu0 %v1670, 112
        %v2023 = vpop.permute.xlu0 %2022
        %2024 = vrot.lane.b32.xlu0 %v1665, 112
        %v2025 = vpop.permute.xlu0 %2024
        %2026 = vrot.lane.b32.xlu0 %v1671, 112
        %v2027 = vpop.permute.xlu0 %2026
        %v2028 = vsel %vm981, %v2021, %v2025
        %v2029 = vsel %vm981, %v2023, %v2027
        %v2030 = vsel %vm981, %v2017, %v2021
        %v2031 = vsel %vm981, %v2019, %v2023
        %v2032 = vsel %vm981, %v2013, %v2017
        %v2033 = vsel %vm981, %v2015, %v2019
        %v2034 = vsel %vm981, %v2009, %v2013
        %v2035 = vsel %vm981, %v2011, %v2015
        %v2036 = vsel %vm981, %v2005, %v2009
        %v2037 = vsel %vm981, %v2007, %v2011
        %v2038 = vsel %vm981, %v2025, %v2005
        %v2039 = vsel %vm981, %v2027, %v2007
        %v2040 = vmul.f32 %v2036, %v996
        %v2041 = vmul.f32 %v2034, %v1000
        %v2042 = vmul.f32 %v2032, %v1004
        %v2043 = vmul.f32 %v2030, %v1008
        %v2044 = vmul.f32 %v2028, %v1012
        %v2045 = vmul.f32 %v2038, %v1016
        %v2046 = vmul.f32 %v2037, %v996
        %v2047 = vmul.f32 %v2035, %v1000
        %v2048 = vmul.f32 %v2033, %v1004
        %v2049 = vmul.f32 %v2031, %v1008
        %v2050 = vmul.f32 %v2029, %v1012
        %v2051 = vmul.f32 %v2039, %v1016
        %v2052 = vpack.c.bf16 %v2046, %v2040
        %v2053 = vpack.c.bf16 %v2047, %v2041
        %v2054 = vpack.c.bf16 %v2048, %v2042
        %v2055 = vpack.c.bf16 %v2049, %v2043
        %v2056 = vpack.c.bf16 %v2050, %v2044
        %v2057 = vpack.c.bf16 %v2051, %v2045
        %2058 = vrot.lane.b32.xlu0 %v1660, 111
        %v2059 = vpop.permute.xlu0 %2058
        %2060 = vrot.lane.b32.xlu0 %v1666, 111
        %v2061 = vpop.permute.xlu0 %2060
        %2062 = vrot.lane.b32.xlu0 %v1661, 111
        %v2063 = vpop.permute.xlu0 %2062
        %2064 = vrot.lane.b32.xlu0 %v1667, 111
        %v2065 = vpop.permute.xlu0 %2064
        %2066 = vrot.lane.b32.xlu0 %v1662, 111
        %v2067 = vpop.permute.xlu0 %2066
        %2068 = vrot.lane.b32.xlu0 %v1668, 111
        %v2069 = vpop.permute.xlu0 %2068
        %2070 = vrot.lane.b32.xlu0 %v1663, 111
        %v2071 = vpop.permute.xlu0 %2070
        %2072 = vrot.lane.b32.xlu0 %v1669, 111
        %v2073 = vpop.permute.xlu0 %2072
        %2074 = vrot.lane.b32.xlu0 %v1664, 111
        %v2075 = vpop.permute.xlu0 %2074
        %2076 = vrot.lane.b32.xlu0 %v1670, 111
        %v2077 = vpop.permute.xlu0 %2076
        %2078 = vrot.lane.b32.xlu0 %v1665, 111
        %v2079 = vpop.permute.xlu0 %2078
        %2080 = vrot.lane.b32.xlu0 %v1671, 111
        %v2081 = vpop.permute.xlu0 %2080
        %v2082 = vsel %vm1047, %v2075, %v2079
        %v2083 = vsel %vm1047, %v2077, %v2081
        %v2084 = vsel %vm1047, %v2071, %v2075
        %v2085 = vsel %vm1047, %v2073, %v2077
        %v2086 = vsel %vm1047, %v2067, %v2071
        %v2087 = vsel %vm1047, %v2069, %v2073
        %v2088 = vsel %vm1047, %v2063, %v2067
        %v2089 = vsel %vm1047, %v2065, %v2069
        %v2090 = vsel %vm1047, %v2059, %v2063
        %v2091 = vsel %vm1047, %v2061, %v2065
        %v2092 = vsel %vm1047, %v2079, %v2059
        %v2093 = vsel %vm1047, %v2081, %v2061
        %v2094 = vmul.f32 %v2090, %v1062
        %v2095 = vmul.f32 %v2088, %v1066
        %v2096 = vmul.f32 %v2086, %v1070
        %v2097 = vmul.f32 %v2084, %v1074
        %v2098 = vmul.f32 %v2082, %v1078
        %v2099 = vmul.f32 %v2092, %v1082
        %v2100 = vmul.f32 %v2091, %v1062
        %v2101 = vmul.f32 %v2089, %v1066
        %v2102 = vmul.f32 %v2087, %v1070
        %v2103 = vmul.f32 %v2085, %v1074
        %v2104 = vmul.f32 %v2083, %v1078
        %v2105 = vmul.f32 %v2093, %v1082
        %v2106 = vpack.c.bf16 %v2100, %v2094
        %v2107 = vpack.c.bf16 %v2101, %v2095
        %v2108 = vpack.c.bf16 %v2102, %v2096
        %v2109 = vpack.c.bf16 %v2103, %v2097
        %v2110 = vpack.c.bf16 %v2104, %v2098
        %v2111 = vpack.c.bf16 %v2105, %v2099
        %v2114 = vunpack.c.l.b16 %v1672
        %v2115 = vunpack.c.h.b16 %v1672
        %v2116 = vunpack.c.l.b16 %v1673
        %v2117 = vunpack.c.h.b16 %v1673
        %v2118 = vpack.c.b16 %v2116, %v2114
        %v2119 = vpack.c.b16 %v2117, %v2115
        %vm2121 = vcmask 138240
        %v2123 = vsel %vm2121, %v2119, 0
        %v2125 = vsel 0, 4294967295, 65535
        %v2126 = vsel %vm1436, %v2125, 0
        %v2128 = vand.u32 1065369472, %v2126
        %2130 = vmatprep.subr.bf16.mxu0 %v2053
        %2131 = vmatpush1.bf16.msra.mxu0 %v2052
        %2132 = vmatprep.subr.bf16.mxu0 %v1999
        %2133 = vmatpush1.bf16.msra.mxu0 %v1998
        %2134 = vmatprep.subr.bf16.mxu0 %v1945
        %2135 = vmatpush1.bf16.msra.mxu0 %v1944
        %2136 = vmatprep.subr.bf16.mxu0 %v1891
        %2137 = vmatpush1.bf16.msra.mxu0 %v1890
        %2138 = vmatprep.subr.bf16.mxu0 %v1885
        %2139 = vmatpush1.bf16.msra.mxu0 %v1884
        %2140 = vmatprep.subr.bf16.mxu0 %v1831
        %2141 = vmatpush1.bf16.msra.mxu0 %v1830
        %2142 = vmatprep.subr.bf16.mxu0 %v1777
        %2143 = vmatpush1.bf16.msra.mxu0 %v1776
        %2144 = vmatprep.subr.bf16.mxu0 %v1723
        %2145 = vmatpush1.bf16.msra.mxu0 %v1722
        %2146 = vmatprep.subr.bf16.mxu0 0
        %2147 = vmatpush2.bf16.msra.mxu0 0
        %2148 = vmatprep.subr.bf16.mxu0 0
        %2149 = vmatpush2.bf16.msra.mxu0 0
        %2150 = vmatprep.subr.bf16.mxu0 0
        %2151 = vmatpush2.bf16.msra.mxu0 0
        %2152 = vmatprep.subr.bf16.mxu0 0
        %2153 = vmatpush2.bf16.msra.mxu0 0
        %2154 = vmatprep.subr.bf16.mxu0 0
        %2155 = vmatpush2.bf16.msra.mxu0 0
        %2156 = vmatprep.subr.bf16.mxu0 0
        %2157 = vmatpush2.bf16.msra.mxu0 0
        %2158 = vmatprep.subr.bf16.mxu0 %v2128
        %2159 = vmatpush2.bf16.msra.mxu0 %v2128
        %2160 = vmatprep.subr.bf16.mxu0 %v2107
        %2161 = vmatpush2.bf16.msra.mxu0 %v2106
        %2162 = vmatprep.mubr.bf16.mxu0 %v2123
        %2163 = vmatmul.mubr.bf16.gmra.mxu0 %v2118
        %v2164 = vpop.f32.mrf.mxu0
        %v2165 = vadd.f32 0.0, %v2164
        %v2166 = vpop.f32.mrf.mxu0
        %v2167 = vadd.f32 0.0, %v2166
        %v2168 = vpop.f32.mrf.mxu0
        %v2169 = vadd.f32 0.0, %v2168
        %v2170 = vpop.f32.mrf.mxu0
        %v2171 = vadd.f32 0.0, %v2170
        %2172 = vdwg.mxu0
        %2173 = vmatprep.subr.bf16.mxu0 %v2055
        %2174 = vmatpush1.bf16.msra.mxu0 %v2054
        %2175 = vmatprep.subr.bf16.mxu0 %v2001
        %2176 = vmatpush1.bf16.msra.mxu0 %v2000
        %2177 = vmatprep.subr.bf16.mxu0 %v1947
        %2178 = vmatpush1.bf16.msra.mxu0 %v1946
        %2179 = vmatprep.subr.bf16.mxu0 %v1893
        %2180 = vmatpush1.bf16.msra.mxu0 %v1892
        %2181 = vmatprep.subr.bf16.mxu0 %v1887
        %2182 = vmatpush1.bf16.msra.mxu0 %v1886
        %2183 = vmatprep.subr.bf16.mxu0 %v1833
        %2184 = vmatpush1.bf16.msra.mxu0 %v1832
        %2185 = vmatprep.subr.bf16.mxu0 %v1779
        %2186 = vmatpush1.bf16.msra.mxu0 %v1778
        %2187 = vmatprep.subr.bf16.mxu0 %v1725
        %2188 = vmatpush1.bf16.msra.mxu0 %v1724
        %2189 = vmatprep.subr.bf16.mxu0 0
        %2190 = vmatpush2.bf16.msra.mxu0 0
        %2191 = vmatprep.subr.bf16.mxu0 0
        %2192 = vmatpush2.bf16.msra.mxu0 0
        %2193 = vmatprep.subr.bf16.mxu0 0
        %2194 = vmatpush2.bf16.msra.mxu0 0
        %2195 = vmatprep.subr.bf16.mxu0 0
        %2196 = vmatpush2.bf16.msra.mxu0 0
        %2197 = vmatprep.subr.bf16.mxu0 0
        %2198 = vmatpush2.bf16.msra.mxu0 0
        %2199 = vmatprep.subr.bf16.mxu0 0
        %2200 = vmatpush2.bf16.msra.mxu0 0
        %2201 = vmatprep.subr.bf16.mxu0 %v2128
        %2202 = vmatpush2.bf16.msra.mxu0 %v2128
        %2203 = vmatprep.subr.bf16.mxu0 %v2109
        %2204 = vmatpush2.bf16.msra.mxu0 %v2108
        %2205 = vmatprep.mubr.bf16.mxu0 %v2123
        %2206 = vmatmul.mubr.bf16.gmra.mxu0 %v2118
        %v2207 = vpop.f32.mrf.mxu0
        %v2208 = vadd.f32 0.0, %v2207
        %v2209 = vpop.f32.mrf.mxu0
        %v2210 = vadd.f32 0.0, %v2209
        %v2211 = vpop.f32.mrf.mxu0
        %v2212 = vadd.f32 0.0, %v2211
        %v2213 = vpop.f32.mrf.mxu0
        %v2214 = vadd.f32 0.0, %v2213
        %2215 = vdwg.mxu0
        %2216 = vmatprep.subr.bf16.mxu0 %v2057
        %2217 = vmatpush1.bf16.msra.mxu0 %v2056
        %2218 = vmatprep.subr.bf16.mxu0 %v2003
        %2219 = vmatpush1.bf16.msra.mxu0 %v2002
        %2220 = vmatprep.subr.bf16.mxu0 %v1949
        %2221 = vmatpush1.bf16.msra.mxu0 %v1948
        %2222 = vmatprep.subr.bf16.mxu0 %v1895
        %2223 = vmatpush1.bf16.msra.mxu0 %v1894
        %2224 = vmatprep.subr.bf16.mxu0 %v1889
        %2225 = vmatpush1.bf16.msra.mxu0 %v1888
        %2226 = vmatprep.subr.bf16.mxu0 %v1835
        %2227 = vmatpush1.bf16.msra.mxu0 %v1834
        %2228 = vmatprep.subr.bf16.mxu0 %v1781
        %2229 = vmatpush1.bf16.msra.mxu0 %v1780
        %2230 = vmatprep.subr.bf16.mxu0 %v1727
        %2231 = vmatpush1.bf16.msra.mxu0 %v1726
        %2232 = vmatprep.subr.bf16.mxu0 0
        %2233 = vmatpush2.bf16.msra.mxu0 0
        %2234 = vmatprep.subr.bf16.mxu0 0
        %2235 = vmatpush2.bf16.msra.mxu0 0
        %2236 = vmatprep.subr.bf16.mxu0 0
        %2237 = vmatpush2.bf16.msra.mxu0 0
        %2238 = vmatprep.subr.bf16.mxu0 0
        %2239 = vmatpush2.bf16.msra.mxu0 0
        %2240 = vmatprep.subr.bf16.mxu0 0
        %2241 = vmatpush2.bf16.msra.mxu0 0
        %2242 = vmatprep.subr.bf16.mxu0 0
        %2243 = vmatpush2.bf16.msra.mxu0 0
        %2244 = vmatprep.subr.bf16.mxu0 %v2128
        %2245 = vmatpush2.bf16.msra.mxu0 %v2128
        %2246 = vmatprep.subr.bf16.mxu0 %v2111
        %2247 = vmatpush2.bf16.msra.mxu0 %v2110
        %2248 = vmatprep.mubr.bf16.mxu0 %v2123
        %2249 = vmatmul.mubr.bf16.gmra.mxu0 %v2118
        %v2250 = vpop.f32.mrf.mxu0
        %v2251 = vadd.f32 0.0, %v2250
        %v2252 = vpop.f32.mrf.mxu0
        %v2253 = vadd.f32 0.0, %v2252
        %v2254 = vpop.f32.mrf.mxu0
        %v2255 = vadd.f32 0.0, %v2254
        %v2256 = vpop.f32.mrf.mxu0
        %v2257 = vadd.f32 0.0, %v2256
        %2258 = vdwg.mxu0
        %v2259 = vmax.f32 %v2165, 0.0
        %v2260 = vmax.f32 %v2167, 0.0
        %v2261 = vmax.f32 %v2208, 0.0
        %v2262 = vmax.f32 %v2210, 0.0
        %v2263 = vmax.f32 %v2251, 0.0
        %v2264 = vmax.f32 %v2253, 0.0
        %v2265 = vmax.f32 %v2169, 0.0
        %v2266 = vmax.f32 %v2171, 0.0
        %v2267 = vmax.f32 %v2212, 0.0
        %v2268 = vmax.f32 %v2214, 0.0
        %v2269 = vmax.f32 %v2255, 0.0
        %v2270 = vmax.f32 %v2257, 0.0
        %2271 = vrot.lane.b32.xlu0 %v2259, 127
        %v2272 = vpop.permute.xlu0 %2271
        %2273 = vrot.lane.b32.xlu0 %v2265, 127
        %v2274 = vpop.permute.xlu0 %2273
        %2275 = vrot.lane.b32.xlu0 %v2260, 127
        %v2276 = vpop.permute.xlu0 %2275
        %2277 = vrot.lane.b32.xlu0 %v2266, 127
        %v2278 = vpop.permute.xlu0 %2277
        %2279 = vrot.lane.b32.xlu0 %v2261, 127
        %v2280 = vpop.permute.xlu0 %2279
        %2281 = vrot.lane.b32.xlu0 %v2267, 127
        %v2282 = vpop.permute.xlu0 %2281
        %2283 = vrot.lane.b32.xlu0 %v2262, 127
        %v2284 = vpop.permute.xlu0 %2283
        %2285 = vrot.lane.b32.xlu0 %v2268, 127
        %v2286 = vpop.permute.xlu0 %2285
        %2287 = vrot.lane.b32.xlu0 %v2263, 127
        %v2288 = vpop.permute.xlu0 %2287
        %2289 = vrot.lane.b32.xlu0 %v2269, 127
        %v2290 = vpop.permute.xlu0 %2289
        %2291 = vrot.lane.b32.xlu0 %v2264, 127
        %v2292 = vpop.permute.xlu0 %2291
        %2293 = vrot.lane.b32.xlu0 %v2270, 127
        %v2294 = vpop.permute.xlu0 %2293
        %v2295 = vsel %vm849, %v2288, %v2292
        %v2296 = vsel %vm849, %v2290, %v2294
        %v2297 = vsel %vm849, %v2284, %v2288
        %v2298 = vsel %vm849, %v2286, %v2290
        %v2299 = vsel %vm849, %v2280, %v2284
        %v2300 = vsel %vm849, %v2282, %v2286
        %v2301 = vsel %vm849, %v2276, %v2280
        %v2302 = vsel %vm849, %v2278, %v2282
        %v2303 = vsel %vm849, %v2272, %v2276
        %v2304 = vsel %vm849, %v2274, %v2278
        %v2305 = vsel %vm849, %v2292, %v2272
        %v2306 = vsel %vm849, %v2294, %v2274
        %2307 = vrot.lane.b32.xlu0 %v2259, 112
        %v2308 = vpop.permute.xlu0 %2307
        %2309 = vrot.lane.b32.xlu0 %v2265, 112
        %v2310 = vpop.permute.xlu0 %2309
        %2311 = vrot.lane.b32.xlu0 %v2260, 112
        %v2312 = vpop.permute.xlu0 %2311
        %2313 = vrot.lane.b32.xlu0 %v2266, 112
        %v2314 = vpop.permute.xlu0 %2313
        %2315 = vrot.lane.b32.xlu0 %v2261, 112
        %v2316 = vpop.permute.xlu0 %2315
        %2317 = vrot.lane.b32.xlu0 %v2267, 112
        %v2318 = vpop.permute.xlu0 %2317
        %2319 = vrot.lane.b32.xlu0 %v2262, 112
        %v2320 = vpop.permute.xlu0 %2319
        %2321 = vrot.lane.b32.xlu0 %v2268, 112
        %v2322 = vpop.permute.xlu0 %2321
        %2323 = vrot.lane.b32.xlu0 %v2263, 112
        %v2324 = vpop.permute.xlu0 %2323
        %2325 = vrot.lane.b32.xlu0 %v2269, 112
        %v2326 = vpop.permute.xlu0 %2325
        %2327 = vrot.lane.b32.xlu0 %v2264, 112
        %v2328 = vpop.permute.xlu0 %2327
        %2329 = vrot.lane.b32.xlu0 %v2270, 112
        %v2330 = vpop.permute.xlu0 %2329
        %v2331 = vsel %vm981, %v2324, %v2328
        %v2332 = vsel %vm981, %v2326, %v2330
        %v2333 = vsel %vm981, %v2320, %v2324
        %v2334 = vsel %vm981, %v2322, %v2326
        %v2335 = vsel %vm981, %v2316, %v2320
        %v2336 = vsel %vm981, %v2318, %v2322
        %v2337 = vsel %vm981, %v2312, %v2316
        %v2338 = vsel %vm981, %v2314, %v2318
        %v2339 = vsel %vm981, %v2308, %v2312
        %v2340 = vsel %vm981, %v2310, %v2314
        %v2341 = vsel %vm981, %v2328, %v2308
        %v2342 = vsel %vm981, %v2330, %v2310
        %2343 = vrot.lane.b32.xlu0 %v2259, 111
        %v2344 = vpop.permute.xlu0 %2343
        %2345 = vrot.lane.b32.xlu0 %v2265, 111
        %v2346 = vpop.permute.xlu0 %2345
        %2347 = vrot.lane.b32.xlu0 %v2260, 111
        %v2348 = vpop.permute.xlu0 %2347
        %2349 = vrot.lane.b32.xlu0 %v2266, 111
        %v2350 = vpop.permute.xlu0 %2349
        %2351 = vrot.lane.b32.xlu0 %v2261, 111
        %v2352 = vpop.permute.xlu0 %2351
        %2353 = vrot.lane.b32.xlu0 %v2267, 111
        %v2354 = vpop.permute.xlu0 %2353
        %2355 = vrot.lane.b32.xlu0 %v2262, 111
        %v2356 = vpop.permute.xlu0 %2355
        %2357 = vrot.lane.b32.xlu0 %v2268, 111
        %v2358 = vpop.permute.xlu0 %2357
        %2359 = vrot.lane.b32.xlu0 %v2263, 111
        %v2360 = vpop.permute.xlu0 %2359
        %2361 = vrot.lane.b32.xlu0 %v2269, 111
        %v2362 = vpop.permute.xlu0 %2361
        %2363 = vrot.lane.b32.xlu0 %v2264, 111
        %v2364 = vpop.permute.xlu0 %2363
        %2365 = vrot.lane.b32.xlu0 %v2270, 111
        %v2366 = vpop.permute.xlu0 %2365
        %v2367 = vsel %vm1047, %v2360, %v2364
        %v2368 = vsel %vm1047, %v2362, %v2366
        %v2369 = vsel %vm1047, %v2356, %v2360
        %v2370 = vsel %vm1047, %v2358, %v2362
        %v2371 = vsel %vm1047, %v2352, %v2356
        %v2372 = vsel %vm1047, %v2354, %v2358
        %v2373 = vsel %vm1047, %v2348, %v2352
        %v2374 = vsel %vm1047, %v2350, %v2354
        %v2375 = vsel %vm1047, %v2344, %v2348
        %v2376 = vsel %vm1047, %v2346, %v2350
        %v2377 = vsel %vm1047, %v2364, %v2344
        %v2378 = vsel %vm1047, %v2366, %v2346
        %v2379 = vmax.f32 %v2259, %v2303
        %v2380 = vmax.f32 %v2260, %v2301
        %v2381 = vmax.f32 %v2261, %v2299
        %v2382 = vmax.f32 %v2262, %v2297
        %v2383 = vmax.f32 %v2263, %v2295
        %v2384 = vmax.f32 %v2264, %v2305
        %v2385 = vmax.f32 %v2265, %v2304
        %v2386 = vmax.f32 %v2266, %v2302
        %v2387 = vmax.f32 %v2267, %v2300
        %v2388 = vmax.f32 %v2268, %v2298
        %v2389 = vmax.f32 %v2269, %v2296
        %v2390 = vmax.f32 %v2270, %v2306
        %v2391 = vmax.f32 %v2339, %v2375
        %v2392 = vmax.f32 %v2337, %v2373
        %v2393 = vmax.f32 %v2335, %v2371
        %v2394 = vmax.f32 %v2333, %v2369
        %v2395 = vmax.f32 %v2331, %v2367
        %v2396 = vmax.f32 %v2341, %v2377
        %v2397 = vmax.f32 %v2340, %v2376
        %v2398 = vmax.f32 %v2338, %v2374
        %v2399 = vmax.f32 %v2336, %v2372
        %v2400 = vmax.f32 %v2334, %v2370
        %v2401 = vmax.f32 %v2332, %v2368
        %v2402 = vmax.f32 %v2342, %v2378
        %v2403 = vmax.f32 %v2379, %v2391
        %v2404 = vmax.f32 %v2380, %v2392
        %v2405 = vmax.f32 %v2381, %v2393
        %v2406 = vmax.f32 %v2382, %v2394
        %v2407 = vmax.f32 %v2383, %v2395
        %v2408 = vmax.f32 %v2384, %v2396
        %v2409 = vmax.f32 %v2385, %v2397
        %v2410 = vmax.f32 %v2386, %v2398
        %v2411 = vmax.f32 %v2387, %v2399
        %v2412 = vmax.f32 %v2388, %v2400
        %v2413 = vmax.f32 %v2389, %v2401
        %v2414 = vmax.f32 %v2390, %v2402
        %v2415 = vpack.c.bf16 %v2409, %v2403
        %v2416 = vpack.c.bf16 %v2410, %v2404
        %v2417 = vpack.c.bf16 %v2411, %v2405
        %v2418 = vpack.c.bf16 %v2412, %v2406
        %v2419 = vpack.c.bf16 %v2413, %v2407
        %v2420 = vpack.c.bf16 %v2414, %v2408
        %v2421 = vld [vmem:[%s10] sm:$0xff]
        %v2422 = vld [vmem:[%s10 + $0x8] sm:$0xff]
        %v2423 = vld [vmem:[%s10 + $0x10] sm:$0xff]
        %v2424 = vld [vmem:[%s10 + $0x18] sm:$0xff]
        %v2425 = vld [vmem:[%s10 + $0x20] sm:$0xff]
        %v2426 = vld [vmem:[%s10 + $0x28] sm:$0xff]
        %v2427 = vld [vmem:[%s10 + $0x30] sm:$0xff]
        %v2428 = vld [vmem:[%s10 + $0x38] sm:$0xff]
        %v2429 = vld [vmem:[%s10 + $0x40] sm:$0xff]
        %v2430 = vld [vmem:[%s10 + $0x48] sm:$0xff]
        %v2431 = vld [vmem:[%s10 + $0x50] sm:$0xff]
        %v2432 = vld [vmem:[%s10 + $0x58] sm:$0xff]
        %v2433 = vld [vmem:[%s10 + $0x60] sm:$0xff]
        %v2434 = vld [vmem:[%s10 + $0x68] sm:$0xff]
        %v2435 = vld [vmem:[%s10 + $0x70] sm:$0xff]
        %v2436 = vld [vmem:[%s10 + $0x78] sm:$0xff]
        %v2437 = vld [vmem:[%s10 + $0x80] sm:$0xff]
        %v2438 = vld [vmem:[%s10 + $0x88] sm:$0xff]
        %v2439 = vld [vmem:[%s10 + $0x90] sm:$0xff]
        %v2440 = vld [vmem:[%s10 + $0x98] sm:$0xff]
        %v2441 = vld [vmem:[%s10 + $0xa0] sm:$0xff]
        %v2442 = vld [vmem:[%s10 + $0xa8] sm:$0xff]
        %v2443 = vld [vmem:[%s10 + $0xb0] sm:$0xff]
        %v2444 = vld [vmem:[%s10 + $0xb8] sm:$0xff]
        %v2445 = vld [vmem:[%s10 + $0xc0] sm:$0xff]
        %v2446 = vld [vmem:[%s10 + $0xc8] sm:$0xff]
        %v2447 = vld [vmem:[%s10 + $0xd0] sm:$0xff]
        %v2448 = vld [vmem:[%s10 + $0xd8] sm:$0xff]
        %v2449 = vld [vmem:[%s10 + $0xe0] sm:$0xff]
        %v2450 = vld [vmem:[%s10 + $0xe8] sm:$0xff]
        %v2451 = vld [vmem:[%s10 + $0xf0] sm:$0xff]
        %v2452 = vld [vmem:[%s10 + $0xf8] sm:$0xff]
        %v2453 = vld [vmem:[%s10 + $0x100] sm:$0xff]
        %v2454 = vld [vmem:[%s10 + $0x108] sm:$0xff]
        %v2455 = vld [vmem:[%s10 + $0x110] sm:$0xff]
        %v2456 = vld [vmem:[%s10 + $0x118] sm:$0xff]
        %v2457 = vld [vmem:[%s10 + $0x120] sm:$0xff]
        %v2458 = vld [vmem:[%s10 + $0x128] sm:$0xff]
        %v2459 = vld [vmem:[%s10 + $0x130] sm:$0xff]
        %v2460 = vld [vmem:[%s10 + $0x138] sm:$0xff]
        %v2461 = vld [vmem:[%s10 + $0x140] sm:$0xff]
        %v2462 = vld [vmem:[%s10 + $0x148] sm:$0xff]
        %v2463 = vld [vmem:[%s10 + $0x150] sm:$0xff]
        %v2464 = vld [vmem:[%s10 + $0x158] sm:$0xff]
        %v2465 = vld [vmem:[%s10 + $0x160] sm:$0xff]
        %v2466 = vld [vmem:[%s10 + $0x168] sm:$0xff]
        %v2467 = vld [vmem:[%s10 + $0x170] sm:$0xff]
        %v2468 = vld [vmem:[%s10 + $0x178] sm:$0xff]
        %v2469 = vld [vmem:[%s10 + $0x180] sm:$0xff]
        %v2470 = vld [vmem:[%s10 + $0x188] sm:$0xff]
        %v2471 = vld [vmem:[%s10 + $0x190] sm:$0xff]
        %v2472 = vld [vmem:[%s10 + $0x198] sm:$0xff]
        %v2473 = vld [vmem:[%s10 + $0x1a0] sm:$0xff]
        %v2474 = vld [vmem:[%s10 + $0x1a8] sm:$0xff]
        %v2475 = vld [vmem:[%s10 + $0x1b0] sm:$0xff]
        %v2476 = vld [vmem:[%s10 + $0x1b8] sm:$0xff]
        %v2477 = vld [vmem:[%s10 + $0x1c0] sm:$0xff]
        %v2478 = vld [vmem:[%s10 + $0x1c8] sm:$0xff]
        %v2479 = vld [vmem:[%s10 + $0x1d0] sm:$0xff]
        %v2480 = vld [vmem:[%s10 + $0x1d8] sm:$0xff]
        %v2481 = vld [vmem:[%s10 + $0x1e0] sm:$0xff]
        %v2482 = vld [vmem:[%s10 + $0x1e8] sm:$0xff]
        %v2483 = vld [vmem:[%s10 + $0x1f0] sm:$0xff]
        %v2484 = vld [vmem:[%s10 + $0x1f8] sm:$0xff]
        %v2485 = vld [vmem:[%s10 + $0x200] sm:$0xff]
        %v2486 = vld [vmem:[%s10 + $0x208] sm:$0xff]
        %v2487 = vld [vmem:[%s10 + $0x210] sm:$0xff]
        %v2488 = vld [vmem:[%s10 + $0x218] sm:$0xff]
        %v2489 = vld [vmem:[%s10 + $0x220] sm:$0xff]
        %v2490 = vld [vmem:[%s10 + $0x228] sm:$0xff]
        %v2491 = vld [vmem:[%s10 + $0x230] sm:$0xff]
        %v2492 = vld [vmem:[%s10 + $0x238] sm:$0xff]
        %v2493 = vld [vmem:[%s10 + $0x240] sm:$0xff]
        %v2494 = vld [vmem:[%s10 + $0x248] sm:$0xff]
        %v2495 = vld [vmem:[%s10 + $0x250] sm:$0xff]
        %v2496 = vld [vmem:[%s10 + $0x258] sm:$0xff]
        %v2497 = vld [vmem:[%s10 + $0x260] sm:$0xff]
        %v2498 = vld [vmem:[%s10 + $0x268] sm:$0xff]
        %v2499 = vld [vmem:[%s10 + $0x270] sm:$0xff]
        %v2500 = vld [vmem:[%s10 + $0x278] sm:$0xff]
        %v2501 = vld [vmem:[%s10 + $0x280] sm:$0xff]
        %v2502 = vld [vmem:[%s10 + $0x288] sm:$0xff]
        %v2503 = vld [vmem:[%s10 + $0x290] sm:$0xff]
        %v2504 = vld [vmem:[%s10 + $0x298] sm:$0xff]
        %v2505 = vld [vmem:[%s10 + $0x2a0] sm:$0xff]
        %v2506 = vld [vmem:[%s10 + $0x2a8] sm:$0xff]
        %v2507 = vld [vmem:[%s10 + $0x2b0] sm:$0xff]
        %v2508 = vld [vmem:[%s10 + $0x2b8] sm:$0xff]
        %v2509 = vld [vmem:[%s10 + $0x2c0] sm:$0xff]
        %v2510 = vld [vmem:[%s10 + $0x2c8] sm:$0xff]
        %v2511 = vld [vmem:[%s10 + $0x2d0] sm:$0xff]
        %v2512 = vld [vmem:[%s10 + $0x2d8] sm:$0xff]
        %v2513 = vld [vmem:[%s10 + $0x2e0] sm:$0xff]
        %v2514 = vld [vmem:[%s10 + $0x2e8] sm:$0xff]
        %v2515 = vld [vmem:[%s10 + $0x2f0] sm:$0xff]
        %v2516 = vld [vmem:[%s10 + $0x2f8] sm:$0xff]
        %v2613 = vunpack.c.l.b16 %v2421
        %v2614 = vunpack.c.h.b16 %v2421
        %v2615 = vunpack.c.l.b16 %v2422
        %v2616 = vunpack.c.h.b16 %v2422
        %v2617 = vunpack.c.l.b16 %v2423
        %v2618 = vunpack.c.h.b16 %v2423
        %v2619 = vunpack.c.l.b16 %v2424
        %v2620 = vunpack.c.h.b16 %v2424
        %v2621 = vunpack.c.l.b16 %v2425
        %v2622 = vunpack.c.h.b16 %v2425
        %v2623 = vunpack.c.l.b16 %v2426
        %v2624 = vunpack.c.h.b16 %v2426
        %v2625 = vunpack.c.l.b16 %v2427
        %v2626 = vunpack.c.h.b16 %v2427
        %v2627 = vunpack.c.l.b16 %v2428
        %v2628 = vunpack.c.h.b16 %v2428
        %v2629 = vunpack.c.l.b16 %v2429
        %v2630 = vunpack.c.h.b16 %v2429
        %v2631 = vunpack.c.l.b16 %v2430
        %v2632 = vunpack.c.h.b16 %v2430
        %v2633 = vunpack.c.l.b16 %v2431
        %v2634 = vunpack.c.h.b16 %v2431
        %v2635 = vunpack.c.l.b16 %v2432
        %v2636 = vunpack.c.h.b16 %v2432
        %v2637 = vunpack.c.l.b16 %v2433
        %v2638 = vunpack.c.h.b16 %v2433
        %v2639 = vunpack.c.l.b16 %v2434
        %v2640 = vunpack.c.h.b16 %v2434
        %v2641 = vunpack.c.l.b16 %v2435
        %v2642 = vunpack.c.h.b16 %v2435
        %v2643 = vunpack.c.l.b16 %v2436
        %v2644 = vunpack.c.h.b16 %v2436
        %v2645 = vunpack.c.l.b16 %v2437
        %v2646 = vunpack.c.h.b16 %v2437
        %v2647 = vunpack.c.l.b16 %v2438
        %v2648 = vunpack.c.h.b16 %v2438
        %v2649 = vunpack.c.l.b16 %v2439
        %v2650 = vunpack.c.h.b16 %v2439
        %v2651 = vunpack.c.l.b16 %v2440
        %v2652 = vunpack.c.h.b16 %v2440
        %v2653 = vunpack.c.l.b16 %v2441
        %v2654 = vunpack.c.h.b16 %v2441
        %v2655 = vunpack.c.l.b16 %v2442
        %v2656 = vunpack.c.h.b16 %v2442
        %v2657 = vunpack.c.l.b16 %v2443
        %v2658 = vunpack.c.h.b16 %v2443
        %v2659 = vunpack.c.l.b16 %v2444
        %v2660 = vunpack.c.h.b16 %v2444
        %v2661 = vunpack.c.l.b16 %v2445
        %v2662 = vunpack.c.h.b16 %v2445
        %v2663 = vunpack.c.l.b16 %v2446
        %v2664 = vunpack.c.h.b16 %v2446
        %v2665 = vunpack.c.l.b16 %v2447
        %v2666 = vunpack.c.h.b16 %v2447
        %v2667 = vunpack.c.l.b16 %v2448
        %v2668 = vunpack.c.h.b16 %v2448
        %v2669 = vunpack.c.l.b16 %v2449
        %v2670 = vunpack.c.h.b16 %v2449
        %v2671 = vunpack.c.l.b16 %v2450
        %v2672 = vunpack.c.h.b16 %v2450
        %v2673 = vunpack.c.l.b16 %v2451
        %v2674 = vunpack.c.h.b16 %v2451
        %v2675 = vunpack.c.l.b16 %v2452
        %v2676 = vunpack.c.h.b16 %v2452
        %v2677 = vunpack.c.l.b16 %v2453
        %v2678 = vunpack.c.h.b16 %v2453
        %v2679 = vunpack.c.l.b16 %v2454
        %v2680 = vunpack.c.h.b16 %v2454
        %v2681 = vunpack.c.l.b16 %v2455
        %v2682 = vunpack.c.h.b16 %v2455
        %v2683 = vunpack.c.l.b16 %v2456
        %v2684 = vunpack.c.h.b16 %v2456
        %v2685 = vunpack.c.l.b16 %v2457
        %v2686 = vunpack.c.h.b16 %v2457
        %v2687 = vunpack.c.l.b16 %v2458
        %v2688 = vunpack.c.h.b16 %v2458
        %v2689 = vunpack.c.l.b16 %v2459
        %v2690 = vunpack.c.h.b16 %v2459
        %v2691 = vunpack.c.l.b16 %v2460
        %v2692 = vunpack.c.h.b16 %v2460
        %v2693 = vunpack.c.l.b16 %v2461
        %v2694 = vunpack.c.h.b16 %v2461
        %v2695 = vunpack.c.l.b16 %v2462
        %v2696 = vunpack.c.h.b16 %v2462
        %v2697 = vunpack.c.l.b16 %v2463
        %v2698 = vunpack.c.h.b16 %v2463
        %v2699 = vunpack.c.l.b16 %v2464
        %v2700 = vunpack.c.h.b16 %v2464
        %v2701 = vunpack.c.l.b16 %v2465
        %v2702 = vunpack.c.h.b16 %v2465
        %v2703 = vunpack.c.l.b16 %v2466
        %v2704 = vunpack.c.h.b16 %v2466
        %v2705 = vunpack.c.l.b16 %v2467
        %v2706 = vunpack.c.h.b16 %v2467
        %v2707 = vunpack.c.l.b16 %v2468
        %v2708 = vunpack.c.h.b16 %v2468
        %v2709 = vunpack.c.l.b16 %v2469
        %v2710 = vunpack.c.h.b16 %v2469
        %v2711 = vunpack.c.l.b16 %v2470
        %v2712 = vunpack.c.h.b16 %v2470
        %v2713 = vunpack.c.l.b16 %v2471
        %v2714 = vunpack.c.h.b16 %v2471
        %v2715 = vunpack.c.l.b16 %v2472
        %v2716 = vunpack.c.h.b16 %v2472
        %v2717 = vunpack.c.l.b16 %v2473
        %v2718 = vunpack.c.h.b16 %v2473
        %v2719 = vunpack.c.l.b16 %v2474
        %v2720 = vunpack.c.h.b16 %v2474
        %v2721 = vunpack.c.l.b16 %v2475
        %v2722 = vunpack.c.h.b16 %v2475
        %v2723 = vunpack.c.l.b16 %v2476
        %v2724 = vunpack.c.h.b16 %v2476
        %v2725 = vunpack.c.l.b16 %v2477
        %v2726 = vunpack.c.h.b16 %v2477
        %v2727 = vunpack.c.l.b16 %v2478
        %v2728 = vunpack.c.h.b16 %v2478
        %v2729 = vunpack.c.l.b16 %v2479
        %v2730 = vunpack.c.h.b16 %v2479
        %v2731 = vunpack.c.l.b16 %v2480
        %v2732 = vunpack.c.h.b16 %v2480
        %v2733 = vunpack.c.l.b16 %v2481
        %v2734 = vunpack.c.h.b16 %v2481
        %v2735 = vunpack.c.l.b16 %v2482
        %v2736 = vunpack.c.h.b16 %v2482
        %v2737 = vunpack.c.l.b16 %v2483
        %v2738 = vunpack.c.h.b16 %v2483
        %v2739 = vunpack.c.l.b16 %v2484
        %v2740 = vunpack.c.h.b16 %v2484
        %v2741 = vunpack.c.l.b16 %v2485
        %v2742 = vunpack.c.h.b16 %v2485
        %v2743 = vunpack.c.l.b16 %v2486
        %v2744 = vunpack.c.h.b16 %v2486
        %v2745 = vunpack.c.l.b16 %v2487
        %v2746 = vunpack.c.h.b16 %v2487
        %v2747 = vunpack.c.l.b16 %v2488
        %v2748 = vunpack.c.h.b16 %v2488
        %v2749 = vunpack.c.l.b16 %v2489
        %v2750 = vunpack.c.h.b16 %v2489
        %v2751 = vunpack.c.l.b16 %v2490
        %v2752 = vunpack.c.h.b16 %v2490
        %v2753 = vunpack.c.l.b16 %v2491
        %v2754 = vunpack.c.h.b16 %v2491
        %v2755 = vunpack.c.l.b16 %v2492
        %v2756 = vunpack.c.h.b16 %v2492
        %v2757 = vunpack.c.l.b16 %v2493
        %v2758 = vunpack.c.h.b16 %v2493
        %v2759 = vunpack.c.l.b16 %v2494
        %v2760 = vunpack.c.h.b16 %v2494
        %v2761 = vunpack.c.l.b16 %v2495
        %v2762 = vunpack.c.h.b16 %v2495
        %v2763 = vunpack.c.l.b16 %v2496
        %v2764 = vunpack.c.h.b16 %v2496
        %v2765 = vunpack.c.l.b16 %v2497
        %v2766 = vunpack.c.h.b16 %v2497
        %v2767 = vunpack.c.l.b16 %v2498
        %v2768 = vunpack.c.h.b16 %v2498
        %v2769 = vunpack.c.l.b16 %v2499
        %v2770 = vunpack.c.h.b16 %v2499
        %v2771 = vunpack.c.l.b16 %v2500
        %v2772 = vunpack.c.h.b16 %v2500
        %v2773 = vunpack.c.l.b16 %v2501
        %v2774 = vunpack.c.h.b16 %v2501
        %v2775 = vunpack.c.l.b16 %v2502
        %v2776 = vunpack.c.h.b16 %v2502
        %v2777 = vunpack.c.l.b16 %v2503
        %v2778 = vunpack.c.h.b16 %v2503
        %v2779 = vunpack.c.l.b16 %v2504
        %v2780 = vunpack.c.h.b16 %v2504
        %v2781 = vunpack.c.l.b16 %v2505
        %v2782 = vunpack.c.h.b16 %v2505
        %v2783 = vunpack.c.l.b16 %v2506
        %v2784 = vunpack.c.h.b16 %v2506
        %v2785 = vunpack.c.l.b16 %v2507
        %v2786 = vunpack.c.h.b16 %v2507
        %v2787 = vunpack.c.l.b16 %v2508
        %v2788 = vunpack.c.h.b16 %v2508
        %v2789 = vunpack.c.l.b16 %v2509
        %v2790 = vunpack.c.h.b16 %v2509
        %v2791 = vunpack.c.l.b16 %v2510
        %v2792 = vunpack.c.h.b16 %v2510
        %v2793 = vunpack.c.l.b16 %v2511
        %v2794 = vunpack.c.h.b16 %v2511
        %v2795 = vunpack.c.l.b16 %v2512
        %v2796 = vunpack.c.h.b16 %v2512
        %v2797 = vunpack.c.l.b16 %v2513
        %v2798 = vunpack.c.h.b16 %v2513
        %v2799 = vunpack.c.l.b16 %v2514
        %v2800 = vunpack.c.h.b16 %v2514
        %v2801 = vunpack.c.l.b16 %v2515
        %v2802 = vunpack.c.h.b16 %v2515
        %v2803 = vunpack.c.l.b16 %v2516
        %v2804 = vunpack.c.h.b16 %v2516
        %v2805 = vpack.c.b16 %v2615, %v2613
        %v2806 = vpack.c.b16 %v2616, %v2614
        %v2807 = vpack.c.b16 %v2619, %v2617
        %v2808 = vpack.c.b16 %v2620, %v2618
        %v2809 = vpack.c.b16 %v2623, %v2621
        %v2810 = vpack.c.b16 %v2624, %v2622
        %v2811 = vpack.c.b16 %v2627, %v2625
        %v2812 = vpack.c.b16 %v2628, %v2626
        %v2813 = vpack.c.b16 %v2631, %v2629
        %v2814 = vpack.c.b16 %v2632, %v2630
        %v2815 = vpack.c.b16 %v2635, %v2633
        %v2816 = vpack.c.b16 %v2636, %v2634
        %v2817 = vpack.c.b16 %v2639, %v2637
        %v2818 = vpack.c.b16 %v2640, %v2638
        %v2819 = vpack.c.b16 %v2643, %v2641
        %v2820 = vpack.c.b16 %v2644, %v2642
        %v2821 = vpack.c.b16 %v2647, %v2645
        %v2822 = vpack.c.b16 %v2648, %v2646
        %v2823 = vpack.c.b16 %v2651, %v2649
        %v2824 = vpack.c.b16 %v2652, %v2650
        %v2825 = vpack.c.b16 %v2655, %v2653
        %v2826 = vpack.c.b16 %v2656, %v2654
        %v2827 = vpack.c.b16 %v2659, %v2657
        %v2828 = vpack.c.b16 %v2660, %v2658
        %v2829 = vpack.c.b16 %v2663, %v2661
        %v2830 = vpack.c.b16 %v2664, %v2662
        %v2831 = vpack.c.b16 %v2667, %v2665
        %v2832 = vpack.c.b16 %v2668, %v2666
        %v2833 = vpack.c.b16 %v2671, %v2669
        %v2834 = vpack.c.b16 %v2672, %v2670
        %v2835 = vpack.c.b16 %v2675, %v2673
        %v2836 = vpack.c.b16 %v2676, %v2674
        %v2837 = vpack.c.b16 %v2679, %v2677
        %v2838 = vpack.c.b16 %v2680, %v2678
        %v2839 = vpack.c.b16 %v2683, %v2681
        %v2840 = vpack.c.b16 %v2684, %v2682
        %v2841 = vpack.c.b16 %v2687, %v2685
        %v2842 = vpack.c.b16 %v2688, %v2686
        %v2843 = vpack.c.b16 %v2691, %v2689
        %v2844 = vpack.c.b16 %v2692, %v2690
        %v2845 = vpack.c.b16 %v2695, %v2693
        %v2846 = vpack.c.b16 %v2696, %v2694
        %v2847 = vpack.c.b16 %v2699, %v2697
        %v2848 = vpack.c.b16 %v2700, %v2698
        %v2849 = vpack.c.b16 %v2703, %v2701
        %v2850 = vpack.c.b16 %v2704, %v2702
        %v2851 = vpack.c.b16 %v2707, %v2705
        %v2852 = vpack.c.b16 %v2708, %v2706
        %v2853 = vpack.c.b16 %v2711, %v2709
        %v2854 = vpack.c.b16 %v2712, %v2710
        %v2855 = vpack.c.b16 %v2715, %v2713
        %v2856 = vpack.c.b16 %v2716, %v2714
        %v2857 = vpack.c.b16 %v2719, %v2717
        %v2858 = vpack.c.b16 %v2720, %v2718
        %v2859 = vpack.c.b16 %v2723, %v2721
        %v2860 = vpack.c.b16 %v2724, %v2722
        %v2861 = vpack.c.b16 %v2727, %v2725
        %v2862 = vpack.c.b16 %v2728, %v2726
        %v2863 = vpack.c.b16 %v2731, %v2729
        %v2864 = vpack.c.b16 %v2732, %v2730
        %v2865 = vpack.c.b16 %v2735, %v2733
        %v2866 = vpack.c.b16 %v2736, %v2734
        %v2867 = vpack.c.b16 %v2739, %v2737
        %v2868 = vpack.c.b16 %v2740, %v2738
        %v2869 = vpack.c.b16 %v2743, %v2741
        %v2870 = vpack.c.b16 %v2744, %v2742
        %v2871 = vpack.c.b16 %v2747, %v2745
        %v2872 = vpack.c.b16 %v2748, %v2746
        %v2873 = vpack.c.b16 %v2751, %v2749
        %v2874 = vpack.c.b16 %v2752, %v2750
        %v2875 = vpack.c.b16 %v2755, %v2753
        %v2876 = vpack.c.b16 %v2756, %v2754
        %v2877 = vpack.c.b16 %v2759, %v2757
        %v2878 = vpack.c.b16 %v2760, %v2758
        %v2879 = vpack.c.b16 %v2763, %v2761
        %v2880 = vpack.c.b16 %v2764, %v2762
        %v2881 = vpack.c.b16 %v2767, %v2765
        %v2882 = vpack.c.b16 %v2768, %v2766
        %v2883 = vpack.c.b16 %v2771, %v2769
        %v2884 = vpack.c.b16 %v2772, %v2770
        %v2885 = vpack.c.b16 %v2775, %v2773
        %v2886 = vpack.c.b16 %v2776, %v2774
        %v2887 = vpack.c.b16 %v2779, %v2777
        %v2888 = vpack.c.b16 %v2780, %v2778
        %v2889 = vpack.c.b16 %v2783, %v2781
        %v2890 = vpack.c.b16 %v2784, %v2782
        %v2891 = vpack.c.b16 %v2787, %v2785
        %v2892 = vpack.c.b16 %v2788, %v2786
        %v2893 = vpack.c.b16 %v2791, %v2789
        %v2894 = vpack.c.b16 %v2792, %v2790
        %v2895 = vpack.c.b16 %v2795, %v2793
        %v2896 = vpack.c.b16 %v2796, %v2794
        %v2897 = vpack.c.b16 %v2799, %v2797
        %v2898 = vpack.c.b16 %v2800, %v2798
        %v2899 = vpack.c.b16 %v2803, %v2801
        %v2900 = vpack.c.b16 %v2804, %v2802
        %2997 = vmatprep.subr.bf16.mxu0 %v2820
        %2998 = vmatpush1.bf16.msra.mxu0 %v2819
        %2999 = vmatprep.subr.bf16.mxu0 %v2818
        %3000 = vmatpush1.bf16.msra.mxu0 %v2817
        %3001 = vmatprep.subr.bf16.mxu0 %v2816
        %3002 = vmatpush1.bf16.msra.mxu0 %v2815
        %3003 = vmatprep.subr.bf16.mxu0 %v2814
        %3004 = vmatpush1.bf16.msra.mxu0 %v2813
        %3005 = vmatprep.subr.bf16.mxu0 %v2812
        %3006 = vmatpush1.bf16.msra.mxu0 %v2811
        %3007 = vmatprep.subr.bf16.mxu0 %v2810
        %3008 = vmatpush1.bf16.msra.mxu0 %v2809
        %3009 = vmatprep.subr.bf16.mxu0 %v2808
        %3010 = vmatpush1.bf16.msra.mxu0 %v2807
        %3011 = vmatprep.subr.bf16.mxu0 %v2806
        %3012 = vmatpush1.bf16.msra.mxu0 %v2805
        %3013 = vmatprep.subr.bf16.mxu0 %v2836
        %3014 = vmatpush2.bf16.msra.mxu0 %v2835
        %3015 = vmatprep.subr.bf16.mxu0 %v2834
        %3016 = vmatpush2.bf16.msra.mxu0 %v2833
        %3017 = vmatprep.subr.bf16.mxu0 %v2832
        %3018 = vmatpush2.bf16.msra.mxu0 %v2831
        %3019 = vmatprep.subr.bf16.mxu0 %v2830
        %3020 = vmatpush2.bf16.msra.mxu0 %v2829
        %3021 = vmatprep.subr.bf16.mxu0 %v2828
        %3022 = vmatpush2.bf16.msra.mxu0 %v2827
        %3023 = vmatprep.subr.bf16.mxu0 %v2826
        %3024 = vmatpush2.bf16.msra.mxu0 %v2825
        %3025 = vmatprep.subr.bf16.mxu0 %v2824
        %3026 = vmatpush2.bf16.msra.mxu0 %v2823
        %3027 = vmatprep.subr.bf16.mxu0 %v2822
        %3028 = vmatpush2.bf16.msra.mxu0 %v2821
        %3029 = vmatprep.mubr.bf16.mxu0 %v2416
        %3030 = vmatmul.mubr.bf16.gmra.mxu0 %v2415
        %v3031 = vpop.f32.mrf.mxu0
        %v3032 = vadd.f32 0.0, %v3031
        %v3033 = vpop.f32.mrf.mxu0
        %v3034 = vadd.f32 0.0, %v3033
        %v3035 = vpop.f32.mrf.mxu0
        %v3036 = vadd.f32 0.0, %v3035
        %v3037 = vpop.f32.mrf.mxu0
        %v3038 = vadd.f32 0.0, %v3037
        %3039 = vdwg.mxu0
        %3040 = vmatprep.subr.bf16.mxu0 %v2852
        %3041 = vmatpush1.bf16.msra.mxu0 %v2851
        %3042 = vmatprep.subr.bf16.mxu0 %v2850
        %3043 = vmatpush1.bf16.msra.mxu0 %v2849
        %3044 = vmatprep.subr.bf16.mxu0 %v2848
        %3045 = vmatpush1.bf16.msra.mxu0 %v2847
        %3046 = vmatprep.subr.bf16.mxu0 %v2846
        %3047 = vmatpush1.bf16.msra.mxu0 %v2845
        %3048 = vmatprep.subr.bf16.mxu0 %v2844
        %3049 = vmatpush1.bf16.msra.mxu0 %v2843
        %3050 = vmatprep.subr.bf16.mxu0 %v2842
        %3051 = vmatpush1.bf16.msra.mxu0 %v2841
        %3052 = vmatprep.subr.bf16.mxu0 %v2840
        %3053 = vmatpush1.bf16.msra.mxu0 %v2839
        %3054 = vmatprep.subr.bf16.mxu0 %v2838
        %3055 = vmatpush1.bf16.msra.mxu0 %v2837
        %3056 = vmatprep.subr.bf16.mxu0 %v2868
        %3057 = vmatpush2.bf16.msra.mxu0 %v2867
        %3058 = vmatprep.subr.bf16.mxu0 %v2866
        %3059 = vmatpush2.bf16.msra.mxu0 %v2865
        %3060 = vmatprep.subr.bf16.mxu0 %v2864
        %3061 = vmatpush2.bf16.msra.mxu0 %v2863
        %3062 = vmatprep.subr.bf16.mxu0 %v2862
        %3063 = vmatpush2.bf16.msra.mxu0 %v2861
        %3064 = vmatprep.subr.bf16.mxu0 %v2860
        %3065 = vmatpush2.bf16.msra.mxu0 %v2859
        %3066 = vmatprep.subr.bf16.mxu0 %v2858
        %3067 = vmatpush2.bf16.msra.mxu0 %v2857
        %3068 = vmatprep.subr.bf16.mxu0 %v2856
        %3069 = vmatpush2.bf16.msra.mxu0 %v2855
        %3070 = vmatprep.subr.bf16.mxu0 %v2854
        %3071 = vmatpush2.bf16.msra.mxu0 %v2853
        %3072 = vmatprep.mubr.bf16.mxu0 %v2418
        %3073 = vmatmul.mubr.bf16.gmra.mxu0 %v2417
        %v3074 = vpop.f32.mrf.mxu0
        %v3075 = vadd.f32 %v3032, %v3074
        %v3076 = vpop.f32.mrf.mxu0
        %v3077 = vadd.f32 %v3034, %v3076
        %v3078 = vpop.f32.mrf.mxu0
        %v3079 = vadd.f32 %v3036, %v3078
        %v3080 = vpop.f32.mrf.mxu0
        %v3081 = vadd.f32 %v3038, %v3080
        %3082 = vdwg.mxu0
        %3083 = vmatprep.subr.bf16.mxu0 %v2884
        %3084 = vmatpush1.bf16.msra.mxu0 %v2883
        %3085 = vmatprep.subr.bf16.mxu0 %v2882
        %3086 = vmatpush1.bf16.msra.mxu0 %v2881
        %3087 = vmatprep.subr.bf16.mxu0 %v2880
        %3088 = vmatpush1.bf16.msra.mxu0 %v2879
        %3089 = vmatprep.subr.bf16.mxu0 %v2878
        %3090 = vmatpush1.bf16.msra.mxu0 %v2877
        %3091 = vmatprep.subr.bf16.mxu0 %v2876
        %3092 = vmatpush1.bf16.msra.mxu0 %v2875
        %3093 = vmatprep.subr.bf16.mxu0 %v2874
        %3094 = vmatpush1.bf16.msra.mxu0 %v2873
        %3095 = vmatprep.subr.bf16.mxu0 %v2872
        %3096 = vmatpush1.bf16.msra.mxu0 %v2871
        %3097 = vmatprep.subr.bf16.mxu0 %v2870
        %3098 = vmatpush1.bf16.msra.mxu0 %v2869
        %3099 = vmatprep.subr.bf16.mxu0 %v2900
        %3100 = vmatpush2.bf16.msra.mxu0 %v2899
        %3101 = vmatprep.subr.bf16.mxu0 %v2898
        %3102 = vmatpush2.bf16.msra.mxu0 %v2897
        %3103 = vmatprep.subr.bf16.mxu0 %v2896
        %3104 = vmatpush2.bf16.msra.mxu0 %v2895
        %3105 = vmatprep.subr.bf16.mxu0 %v2894
        %3106 = vmatpush2.bf16.msra.mxu0 %v2893
        %3107 = vmatprep.subr.bf16.mxu0 %v2892
        %3108 = vmatpush2.bf16.msra.mxu0 %v2891
        %3109 = vmatprep.subr.bf16.mxu0 %v2890
        %3110 = vmatpush2.bf16.msra.mxu0 %v2889
        %3111 = vmatprep.subr.bf16.mxu0 %v2888
        %3112 = vmatpush2.bf16.msra.mxu0 %v2887
        %3113 = vmatprep.subr.bf16.mxu0 %v2886
        %3114 = vmatpush2.bf16.msra.mxu0 %v2885
        %3115 = vmatprep.mubr.bf16.mxu0 %v2420
        %3116 = vmatmul.mubr.bf16.gmra.mxu0 %v2419
        %v3117 = vpop.f32.mrf.mxu0
        %v3118 = vadd.f32 %v3075, %v3117
        %v3119 = vpop.f32.mrf.mxu0
        %v3120 = vadd.f32 %v3077, %v3119
        %v3121 = vpop.f32.mrf.mxu0
        %v3122 = vadd.f32 %v3079, %v3121
        %v3123 = vpop.f32.mrf.mxu0
        %v3124 = vadd.f32 %v3081, %v3123
        %3125 = vdwg.mxu0
        %v3126 = vld [vmem:[%s3] sm:$0xff]
        %v3127 = vld [vmem:[%s3 + $0x8] sm:$0xff]
        %v3128 = vld [vmem:[%s3 + $0x10] sm:$0xff]
        %v3129 = vld [vmem:[%s3 + $0x18] sm:$0xff]
        %vm3130 = vcmask 1048064
        %3131 = vrot.lane.b32.xlu0 %v3118, 64
        %v3132 = vpop.permute.xlu0 %3131
        %v3133 = vsel %vm3130, %v3132, %v3120
        %3134 = vrot.lane.b32.xlu0 %v3122, 64
        %v3135 = vpop.permute.xlu0 %3134
        %v3136 = vsel %vm3130, %v3135, %v3124
        %3137 = vrot.lane.b32.xlu0 %v3133, 64
        %v3138 = vpop.permute.xlu0 %3137
        %3139 = vrot.lane.b32.xlu0 %v3136, 64
        %v3140 = vpop.permute.xlu0 %3139
        %v3141 = vsel %vm3130, %v3138, %v3132
        %v3142 = vsel %vm3130, %v3140, %v3135
        %v3143 = vld [vmem:[%s14] ss:$8 sm:$0x3]
        %v3145 = vlaneseq
        %v3146 = vshrl.u32 %v3145, 7
        %v3147 = vsub.s32 0, %v3146
        %v3148 = vrot.slane %v3143, %v3147
        %v3149 = vlaneseq
        %v3150 = vshrl.u32 %v3149, 7
        %v3151 = vsub.s32 1, %v3150
        %v3152 = vrot.slane %v3143, %v3151
        %3153 = vrot.lane.b32.xlu0 %v3148, 55
        %v3154 = vpop.permute.xlu0 %3153
        %3155 = vrot.lane.b32.xlu0 %v3152, 55
        %v3156 = vpop.permute.xlu0 %3155
        %vm3157 = vcmask 449536
        %v3158 = vsel %vm3157, %v3154, %v3156
        %v3161 = vmul.f32 %v3133, %v3154
        %v3162 = vmul.f32 %v3141, %v3158
        %v3163 = vmul.f32 %v3136, %v3154
        %v3164 = vmul.f32 %v3142, %v3158
        %v3165 = vpack.c.bf16 %v3163, %v3161
        %v3166 = vpack.c.bf16 %v3164, %v3162
        %s3167 = scalar_lea.vmem %s14, 1
        %v3168 = vld [vmem:[%s3167] ss:$8 sm:$0x3]
        %v3170 = vlaneseq
        %v3171 = vshrl.u32 %v3170, 7
        %v3172 = vsub.s32 0, %v3171
        %v3173 = vrot.slane %v3168, %v3172
        %v3174 = vlaneseq
        %v3175 = vshrl.u32 %v3174, 7
        %v3176 = vsub.s32 1, %v3175
        %v3177 = vrot.slane %v3168, %v3176
        %3178 = vrot.lane.b32.xlu0 %v3173, 56
        %v3179 = vpop.permute.xlu0 %3178
        %3180 = vrot.lane.b32.xlu0 %v3177, 56
        %v3181 = vpop.permute.xlu0 %3180
        %vm3182 = vcmask 457728
        %v3183 = vsel %vm3182, %v3179, %v3181
        %v3186 = vmul.f32 %v3133, %v3179
        %v3187 = vmul.f32 %v3141, %v3183
        %v3188 = vmul.f32 %v3136, %v3179
        %v3189 = vmul.f32 %v3142, %v3183
        %v3190 = vpack.c.bf16 %v3188, %v3186
        %v3191 = vpack.c.bf16 %v3189, %v3187
        %s3192 = scalar_lea.vmem %s14, 2
        %v3193 = vld [vmem:[%s3192] ss:$8 sm:$0x3]
        %v3195 = vlaneseq
        %v3196 = vshrl.u32 %v3195, 7
        %v3197 = vsub.s32 0, %v3196
        %v3198 = vrot.slane %v3193, %v3197
        %v3199 = vlaneseq
        %v3200 = vshrl.u32 %v3199, 7
        %v3201 = vsub.s32 1, %v3200
        %v3202 = vrot.slane %v3193, %v3201
        %3203 = vrot.lane.b32.xlu0 %v3198, 57
        %v3204 = vpop.permute.xlu0 %3203
        %3205 = vrot.lane.b32.xlu0 %v3202, 57
        %v3206 = vpop.permute.xlu0 %3205
        %vm3207 = vcmask 465920
        %v3208 = vsel %vm3207, %v3204, %v3206
        %v3211 = vmul.f32 %v3133, %v3204
        %v3212 = vmul.f32 %v3141, %v3208
        %v3213 = vmul.f32 %v3136, %v3204
        %v3214 = vmul.f32 %v3142, %v3208
        %v3215 = vpack.c.bf16 %v3213, %v3211
        %v3216 = vpack.c.bf16 %v3214, %v3212
        %s3217 = scalar_lea.vmem %s14, 3
        %v3218 = vld [vmem:[%s3217] ss:$8 sm:$0x3]
        %v3220 = vlaneseq
        %v3221 = vshrl.u32 %v3220, 7
        %v3222 = vsub.s32 0, %v3221
        %v3223 = vrot.slane %v3218, %v3222
        %v3224 = vlaneseq
        %v3225 = vshrl.u32 %v3224, 7
        %v3226 = vsub.s32 1, %v3225
        %v3227 = vrot.slane %v3218, %v3226
        %3228 = vrot.lane.b32.xlu0 %v3223, 63
        %v3229 = vpop.permute.xlu0 %3228
        %3230 = vrot.lane.b32.xlu0 %v3227, 63
        %v3231 = vpop.permute.xlu0 %3230
        %vm3232 = vcmask 515072
        %v3233 = vsel %vm3232, %v3229, %v3231
        %v3236 = vmul.f32 %v3133, %v3229
        %v3237 = vmul.f32 %v3141, %v3233
        %v3238 = vmul.f32 %v3136, %v3229
        %v3239 = vmul.f32 %v3142, %v3233
        %v3240 = vpack.c.bf16 %v3238, %v3236
        %v3241 = vpack.c.bf16 %v3239, %v3237
        %v3242 = vpack.c.bf16 %v3122, %v3118
        %v3243 = vpack.c.bf16 %v3124, %v3120
        %s3244 = scalar_lea.vmem %s14, 5
        %v3245 = vld [vmem:[%s3244] ss:$8 sm:$0x3]
        %v3247 = vlaneseq
        %v3248 = vshrl.u32 %v3247, 7
        %v3249 = vsub.s32 0, %v3248
        %v3250 = vrot.slane %v3245, %v3249
        %v3251 = vlaneseq
        %v3252 = vshrl.u32 %v3251, 7
        %v3253 = vsub.s32 1, %v3252
        %v3254 = vrot.slane %v3245, %v3253
        %3255 = vrot.lane.b32.xlu0 %v3250, 1
        %v3256 = vpop.permute.xlu0 %3255
        %3257 = vrot.lane.b32.xlu0 %v3254, 1
        %v3258 = vpop.permute.xlu0 %3257
        %vm3259 = vcmask 7168
        %v3260 = vsel %vm3259, %v3256, %v3258
        %v3263 = vmul.f32 %v3118, %v3256
        %v3264 = vmul.f32 %v3133, %v3260
        %v3265 = vmul.f32 %v3122, %v3256
        %v3266 = vmul.f32 %v3136, %v3260
        %v3267 = vpack.c.bf16 %v3265, %v3263
        %v3268 = vpack.c.bf16 %v3266, %v3264
        %s3269 = scalar_lea.vmem %s14, 6
        %v3270 = vld [vmem:[%s3269] ss:$8 sm:$0x3]
        %v3272 = vlaneseq
        %v3273 = vshrl.u32 %v3272, 7
        %v3274 = vsub.s32 0, %v3273
        %v3275 = vrot.slane %v3270, %v3274
        %v3276 = vlaneseq
        %v3277 = vshrl.u32 %v3276, 7
        %v3278 = vsub.s32 1, %v3277
        %v3279 = vrot.slane %v3270, %v3278
        %3280 = vrot.lane.b32.xlu0 %v3275, 7
        %v3281 = vpop.permute.xlu0 %3280
        %3282 = vrot.lane.b32.xlu0 %v3279, 7
        %v3283 = vpop.permute.xlu0 %3282
        %vm3284 = vcmask 56320
        %v3285 = vsel %vm3284, %v3281, %v3283
        %v3288 = vmul.f32 %v3118, %v3281
        %v3289 = vmul.f32 %v3133, %v3285
        %v3290 = vmul.f32 %v3122, %v3281
        %v3291 = vmul.f32 %v3136, %v3285
        %v3292 = vpack.c.bf16 %v3290, %v3288
        %v3293 = vpack.c.bf16 %v3291, %v3289
        %s3294 = scalar_lea.vmem %s14, 7
        %v3295 = vld [vmem:[%s3294] ss:$8 sm:$0x3]
        %v3297 = vlaneseq
        %v3298 = vshrl.u32 %v3297, 7
        %v3299 = vsub.s32 0, %v3298
        %v3300 = vrot.slane %v3295, %v3299
        %v3301 = vlaneseq
        %v3302 = vshrl.u32 %v3301, 7
        %v3303 = vsub.s32 1, %v3302
        %v3304 = vrot.slane %v3295, %v3303
        %3305 = vrot.lane.b32.xlu0 %v3300, 8
        %v3306 = vpop.permute.xlu0 %3305
        %3307 = vrot.lane.b32.xlu0 %v3304, 8
        %v3308 = vpop.permute.xlu0 %3307
        %vm3309 = vcmask 64512
        %v3310 = vsel %vm3309, %v3306, %v3308
        %v3313 = vmul.f32 %v3118, %v3306
        %v3314 = vmul.f32 %v3133, %v3310
        %v3315 = vmul.f32 %v3122, %v3306
        %v3316 = vmul.f32 %v3136, %v3310
        %v3317 = vpack.c.bf16 %v3315, %v3313
        %v3318 = vpack.c.bf16 %v3316, %v3314
        %s3319 = scalar_lea.vmem %s14, 16
        %v3320 = vld [vmem:[%s3319] ss:$8 sm:$0x3]
        %v3322 = vlaneseq
        %v3323 = vshrl.u32 %v3322, 7
        %v3324 = vsub.s32 0, %v3323
        %v3325 = vrot.slane %v3320, %v3324
        %v3326 = vlaneseq
        %v3327 = vshrl.u32 %v3326, 7
        %v3328 = vsub.s32 1, %v3327
        %v3329 = vrot.slane %v3320, %v3328
        %3330 = vrot.lane.b32.xlu0 %v3325, 9
        %v3331 = vpop.permute.xlu0 %3330
        %3332 = vrot.lane.b32.xlu0 %v3329, 9
        %v3333 = vpop.permute.xlu0 %3332
        %vm3334 = vcmask 72704
        %v3335 = vsel %vm3334, %v3331, %v3333
        %v3338 = vmul.f32 %v3118, %v3331
        %v3339 = vmul.f32 %v3133, %v3335
        %v3340 = vmul.f32 %v3122, %v3331
        %v3341 = vmul.f32 %v3136, %v3335
        %v3342 = vpack.c.bf16 %v3340, %v3338
        %v3343 = vpack.c.bf16 %v3341, %v3339
        %3346 = vrot.lane.b32.xlu0 %v3190, 127
        %v3347 = vpop.permute.xlu0 %3346
        %3348 = vrot.lane.b32.xlu0 %v3191, 127
        %v3349 = vpop.permute.xlu0 %3348
        %vm3350 = vcmask 1039360
        %v3351 = vsel %vm3350, %v3347, %v3349
        %3354 = vrot.lane.b32.xlu0 %v3215, 126
        %v3355 = vpop.permute.xlu0 %3354
        %3356 = vrot.lane.b32.xlu0 %v3216, 126
        %v3357 = vpop.permute.xlu0 %3356
        %vm3358 = vcmask 1031168
        %v3359 = vsel %vm3358, %v3355, %v3357
        %3362 = vrot.lane.b32.xlu0 %v3240, 120
        %v3363 = vpop.permute.xlu0 %3362
        %3364 = vrot.lane.b32.xlu0 %v3241, 120
        %v3365 = vpop.permute.xlu0 %3364
        %vm3366 = vcmask 982016
        %v3367 = vsel %vm3366, %v3363, %v3365
        %3370 = vrot.lane.b32.xlu0 %v3242, 55
        %v3371 = vpop.permute.xlu0 %3370
        %3372 = vrot.lane.b32.xlu0 %v3243, 55
        %v3373 = vpop.permute.xlu0 %3372
        %vm3374 = vcmask 449536
        %v3375 = vsel %vm3374, %v3371, %v3373
        %3378 = vrot.lane.b32.xlu0 %v3267, 54
        %v3379 = vpop.permute.xlu0 %3378
        %3380 = vrot.lane.b32.xlu0 %v3268, 54
        %v3381 = vpop.permute.xlu0 %3380
        %vm3382 = vcmask 441344
        %v3383 = vsel %vm3382, %v3379, %v3381
        %3386 = vrot.lane.b32.xlu0 %v3292, 48
        %v3387 = vpop.permute.xlu0 %3386
        %3388 = vrot.lane.b32.xlu0 %v3293, 48
        %v3389 = vpop.permute.xlu0 %3388
        %vm3390 = vcmask 392192
        %v3391 = vsel %vm3390, %v3387, %v3389
        %3394 = vrot.lane.b32.xlu0 %v3317, 47
        %v3395 = vpop.permute.xlu0 %3394
        %3396 = vrot.lane.b32.xlu0 %v3318, 47
        %v3397 = vpop.permute.xlu0 %3396
        %vm3398 = vcmask 384000
        %v3399 = vsel %vm3398, %v3395, %v3397
        %3402 = vrot.lane.b32.xlu0 %v3342, 46
        %v3403 = vpop.permute.xlu0 %3402
        %3404 = vrot.lane.b32.xlu0 %v3343, 46
        %v3405 = vpop.permute.xlu0 %3404
        %vm3406 = vcmask 375808
        %v3407 = vsel %vm3406, %v3403, %v3405
        %v3412 = vunpack.c.l.b16 %v3126
        %v3413 = vunpack.c.h.b16 %v3126
        %v3414 = vunpack.c.l.b16 %v3127
        %v3415 = vunpack.c.h.b16 %v3127
        %v3416 = vunpack.c.l.b16 %v3128
        %v3417 = vunpack.c.h.b16 %v3128
        %v3418 = vunpack.c.l.b16 %v3129
        %v3419 = vunpack.c.h.b16 %v3129
        %v3420 = vpack.c.b16 %v3414, %v3412
        %v3421 = vpack.c.b16 %v3415, %v3413
        %v3422 = vpack.c.b16 %v3418, %v3416
        %v3423 = vpack.c.b16 %v3419, %v3417
        %3429 = vrot.lane.b32.xlu0 %v3165, 73
        %v3430 = vpop.permute.xlu0 %3429
        %3431 = vrot.lane.b32.xlu0 %v3166, 73
        %v3432 = vpop.permute.xlu0 %3431
        %3433 = vrot.lane.b32.xlu0 %v3351, 73
        %v3434 = vpop.permute.xlu0 %3433
        %3435 = vrot.lane.b32.xlu0 %v3349, 73
        %v3436 = vpop.permute.xlu0 %3435
        %3437 = vrot.lane.b32.xlu0 %v3359, 73
        %v3438 = vpop.permute.xlu0 %3437
        %3439 = vrot.lane.b32.xlu0 %v3357, 73
        %v3440 = vpop.permute.xlu0 %3439
        %3441 = vrot.lane.b32.xlu0 %v3367, 73
        %v3442 = vpop.permute.xlu0 %3441
        %3443 = vrot.lane.b32.xlu0 %v3365, 73
        %v3444 = vpop.permute.xlu0 %3443
        %3445 = vrot.lane.b32.xlu0 %v3371, 73
        %v3446 = vpop.permute.xlu0 %3445
        %3447 = vrot.lane.b32.xlu0 %v3375, 73
        %v3448 = vpop.permute.xlu0 %3447
        %3449 = vrot.lane.b32.xlu0 %v3379, 73
        %v3450 = vpop.permute.xlu0 %3449
        %3451 = vrot.lane.b32.xlu0 %v3383, 73
        %v3452 = vpop.permute.xlu0 %3451
        %3453 = vrot.lane.b32.xlu0 %v3387, 73
        %v3454 = vpop.permute.xlu0 %3453
        %3455 = vrot.lane.b32.xlu0 %v3391, 73
        %v3456 = vpop.permute.xlu0 %3455
        %3457 = vrot.lane.b32.xlu0 %v3395, 73
        %v3458 = vpop.permute.xlu0 %3457
        %3459 = vrot.lane.b32.xlu0 %v3399, 73
        %v3460 = vpop.permute.xlu0 %3459
        %3461 = vrot.lane.b32.xlu0 %v3403, 73
        %v3462 = vpop.permute.xlu0 %3461
        %3463 = vrot.lane.b32.xlu0 %v3407, 73
        %v3464 = vpop.permute.xlu0 %3463
        %3465 = vrot.lane.b32.xlu0 1065369472, 73
        %v3466 = vpop.permute.xlu0 %3465
        %vm3467 = vcmask 596992
        %v3468 = vsel %vm3467, %v3430, %v3432
        %v3469 = vsel %vm3467, %v3434, %v3436
        %v3470 = vsel %vm3467, %v3438, %v3440
        %v3471 = vsel %vm3467, %v3442, %v3444
        %v3472 = vsel %vm3467, %v3446, %v3448
        %v3473 = vsel %vm3467, %v3450, %v3452
        %v3474 = vsel %vm3467, %v3454, %v3456
        %v3475 = vsel %vm3467, %v3458, %v3460
        %v3476 = vsel %vm3467, %v3462, %v3464
        %v3496 = vsel %vm2121, %v3421, 0
        %v3499 = vsel %vm2121, %v3423, 0
        %v3502 = vand.u32 %v3466, %v2126
        %3504 = vmatprep.subr.bf16.mxu0 %v3460
        %3505 = vmatpush1.bf16.msra.mxu0 %v3475
        %3506 = vmatprep.subr.bf16.mxu0 %v3456
        %3507 = vmatpush1.bf16.msra.mxu0 %v3474
        %3508 = vmatprep.subr.bf16.mxu0 %v3452
        %3509 = vmatpush1.bf16.msra.mxu0 %v3473
        %3510 = vmatprep.subr.bf16.mxu0 %v3448
        %3511 = vmatpush1.bf16.msra.mxu0 %v3472
        %3512 = vmatprep.subr.bf16.mxu0 %v3444
        %3513 = vmatpush1.bf16.msra.mxu0 %v3471
        %3514 = vmatprep.subr.bf16.mxu0 %v3440
        %3515 = vmatpush1.bf16.msra.mxu0 %v3470
        %3516 = vmatprep.subr.bf16.mxu0 %v3436
        %3517 = vmatpush1.bf16.msra.mxu0 %v3469
        %3518 = vmatprep.subr.bf16.mxu0 %v3432
        %3519 = vmatpush1.bf16.msra.mxu0 %v3468
        %3520 = vmatprep.subr.bf16.mxu0 0
        %3521 = vmatpush2.bf16.msra.mxu0 0
        %3522 = vmatprep.subr.bf16.mxu0 0
        %3523 = vmatpush2.bf16.msra.mxu0 0
        %3524 = vmatprep.subr.bf16.mxu0 0
        %3525 = vmatpush2.bf16.msra.mxu0 0
        %3526 = vmatprep.subr.bf16.mxu0 0
        %3527 = vmatpush2.bf16.msra.mxu0 0
        %3528 = vmatprep.subr.bf16.mxu0 0
        %3529 = vmatpush2.bf16.msra.mxu0 0
        %3530 = vmatprep.subr.bf16.mxu0 0
        %3531 = vmatpush2.bf16.msra.mxu0 0
        %3532 = vmatprep.subr.bf16.mxu0 %v3502
        %3533 = vmatpush2.bf16.msra.mxu0 %v3502
        %3534 = vmatprep.subr.bf16.mxu0 %v3464
        %3535 = vmatpush2.bf16.msra.mxu0 %v3476
        %3536 = vmatprep.mubr.bf16.mxu0 %v3496
        %3537 = vmatmul.mubr.bf16.gmra.mxu0 %v3420
        %v3538 = vpop.f32.mrf.mxu0
        %v3539 = vadd.f32 0.0, %v3538
        %v3540 = vpop.f32.mrf.mxu0
        %v3541 = vadd.f32 0.0, %v3540
        %v3542 = vpop.f32.mrf.mxu0
        %v3543 = vadd.f32 0.0, %v3542
        %v3544 = vpop.f32.mrf.mxu0
        %v3545 = vadd.f32 0.0, %v3544
        %3546 = vmatprep.mubr.bf16.mxu0 %v3499
        %3547 = vmatmul.mubr.bf16.gmra.mxu0 %v3422
        %v3548 = vpop.f32.mrf.mxu0
        %v3549 = vadd.f32 0.0, %v3548
        %v3550 = vpop.f32.mrf.mxu0
        %v3551 = vadd.f32 0.0, %v3550
        %v3552 = vpop.f32.mrf.mxu0
        %v3553 = vadd.f32 0.0, %v3552
        %v3554 = vpop.f32.mrf.mxu0
        %v3555 = vadd.f32 0.0, %v3554
        %3556 = vdwg.mxu0
        %v3557 = vmax.f32 %v3539, 0.0
        %v3558 = vmax.f32 %v3541, 0.0
        %v3559 = vmax.f32 %v3543, 0.0
        %v3560 = vmax.f32 %v3545, 0.0
        %v3561 = vmax.f32 %v3549, 0.0
        %v3562 = vmax.f32 %v3551, 0.0
        %v3563 = vmax.f32 %v3553, 0.0
        %v3564 = vmax.f32 %v3555, 0.0
        %v3565 = vld [vmem:[%s4] sm:$0xff]
        %v3566 = vld [vmem:[%s4 + $0x8] sm:$0xf]
        %v3567 = vld [vmem:[%s4 + $0xc] sm:$0xff]
        %v3568 = vld [vmem:[%s4 + $0x14] sm:$0xf]
        %v3569 = vld [vmem:[%s4 + $0x18] sm:$0xff]
        %v3570 = vld [vmem:[%s4 + $0x20] sm:$0xf]
        %v3571 = vld [vmem:[%s4 + $0x24] sm:$0xff]
        %v3572 = vld [vmem:[%s4 + $0x2c] sm:$0xf]
        %3573 = vrot.lane.b32.xlu0 %v3557, 64
        %v3574 = vpop.permute.xlu0 %3573
        %v3575 = vsel %vm3130, %v3574, %v3558
        %3576 = vrot.lane.b32.xlu0 %v3559, 64
        %v3577 = vpop.permute.xlu0 %3576
        %v3578 = vsel %vm3130, %v3577, %v3560
        %3579 = vrot.lane.b32.xlu0 %v3561, 64
        %v3580 = vpop.permute.xlu0 %3579
        %v3581 = vsel %vm3130, %v3580, %v3562
        %3582 = vrot.lane.b32.xlu0 %v3563, 64
        %v3583 = vpop.permute.xlu0 %3582
        %v3584 = vsel %vm3130, %v3583, %v3564
        %3585 = vrot.lane.b32.xlu0 %v3575, 64
        %v3586 = vpop.permute.xlu0 %3585
        %3587 = vrot.lane.b32.xlu0 %v3578, 64
        %v3588 = vpop.permute.xlu0 %3587
        %3589 = vrot.lane.b32.xlu0 %v3581, 64
        %v3590 = vpop.permute.xlu0 %3589
        %3591 = vrot.lane.b32.xlu0 %v3584, 64
        %v3592 = vpop.permute.xlu0 %3591
        %v3593 = vsel %vm3130, %v3586, %v3574
        %v3594 = vsel %vm3130, %v3588, %v3577
        %v3595 = vsel %vm3130, %v3590, %v3580
        %v3596 = vsel %vm3130, %v3592, %v3583
        %v3597 = vmul.f32 %v3575, %v3154
        %v3598 = vmul.f32 %v3593, %v3158
        %v3599 = vmul.f32 %v3578, %v3154
        %v3600 = vmul.f32 %v3594, %v3158
        %v3601 = vmul.f32 %v3581, %v3154
        %v3602 = vmul.f32 %v3595, %v3158
        %v3603 = vmul.f32 %v3584, %v3154
        %v3604 = vmul.f32 %v3596, %v3158
        %v3605 = vpack.c.bf16 %v3599, %v3597
        %v3606 = vpack.c.bf16 %v3600, %v3598
        %v3607 = vpack.c.bf16 %v3603, %v3601
        %v3608 = vpack.c.bf16 %v3604, %v3602
        %v3609 = vmul.f32 %v3575, %v3179
        %v3610 = vmul.f32 %v3593, %v3183
        %v3611 = vmul.f32 %v3578, %v3179
        %v3612 = vmul.f32 %v3594, %v3183
        %v3613 = vmul.f32 %v3581, %v3179
        %v3614 = vmul.f32 %v3595, %v3183
        %v3615 = vmul.f32 %v3584, %v3179
        %v3616 = vmul.f32 %v3596, %v3183
        %v3617 = vpack.c.bf16 %v3611, %v3609
        %v3618 = vpack.c.bf16 %v3612, %v3610
        %v3619 = vpack.c.bf16 %v3615, %v3613
        %v3620 = vpack.c.bf16 %v3616, %v3614
        %v3621 = vmul.f32 %v3575, %v3204
        %v3622 = vmul.f32 %v3593, %v3208
        %v3623 = vmul.f32 %v3578, %v3204
        %v3624 = vmul.f32 %v3594, %v3208
        %v3625 = vmul.f32 %v3581, %v3204
        %v3626 = vmul.f32 %v3595, %v3208
        %v3627 = vmul.f32 %v3584, %v3204
        %v3628 = vmul.f32 %v3596, %v3208
        %v3629 = vpack.c.bf16 %v3623, %v3621
        %v3630 = vpack.c.bf16 %v3624, %v3622
        %v3631 = vpack.c.bf16 %v3627, %v3625
        %v3632 = vpack.c.bf16 %v3628, %v3626
        %v3633 = vmul.f32 %v3575, %v3229
        %v3634 = vmul.f32 %v3593, %v3233
        %v3635 = vmul.f32 %v3578, %v3229
        %v3636 = vmul.f32 %v3594, %v3233
        %v3637 = vmul.f32 %v3581, %v3229
        %v3638 = vmul.f32 %v3595, %v3233
        %v3639 = vmul.f32 %v3584, %v3229
        %v3640 = vmul.f32 %v3596, %v3233
        %v3641 = vpack.c.bf16 %v3635, %v3633
        %v3642 = vpack.c.bf16 %v3636, %v3634
        %v3643 = vpack.c.bf16 %v3639, %v3637
        %v3644 = vpack.c.bf16 %v3640, %v3638
        %v3645 = vpack.c.bf16 %v3559, %v3557
        %v3646 = vpack.c.bf16 %v3560, %v3558
        %v3647 = vpack.c.bf16 %v3563, %v3561
        %v3648 = vpack.c.bf16 %v3564, %v3562
        %v3649 = vmul.f32 %v3557, %v3256
        %v3650 = vmul.f32 %v3575, %v3260
        %v3651 = vmul.f32 %v3559, %v3256
        %v3652 = vmul.f32 %v3578, %v3260
        %v3653 = vmul.f32 %v3561, %v3256
        %v3654 = vmul.f32 %v3581, %v3260
        %v3655 = vmul.f32 %v3563, %v3256
        %v3656 = vmul.f32 %v3584, %v3260
        %v3657 = vpack.c.bf16 %v3651, %v3649
        %v3658 = vpack.c.bf16 %v3652, %v3650
        %v3659 = vpack.c.bf16 %v3655, %v3653
        %v3660 = vpack.c.bf16 %v3656, %v3654
        %v3661 = vmul.f32 %v3557, %v3281
        %v3662 = vmul.f32 %v3575, %v3285
        %v3663 = vmul.f32 %v3559, %v3281
        %v3664 = vmul.f32 %v3578, %v3285
        %v3665 = vmul.f32 %v3561, %v3281
        %v3666 = vmul.f32 %v3581, %v3285
        %v3667 = vmul.f32 %v3563, %v3281
        %v3668 = vmul.f32 %v3584, %v3285
        %v3669 = vpack.c.bf16 %v3663, %v3661
        %v3670 = vpack.c.bf16 %v3664, %v3662
        %v3671 = vpack.c.bf16 %v3667, %v3665
        %v3672 = vpack.c.bf16 %v3668, %v3666
        %v3673 = vmul.f32 %v3557, %v3306
        %v3674 = vmul.f32 %v3575, %v3310
        %v3675 = vmul.f32 %v3559, %v3306
        %v3676 = vmul.f32 %v3578, %v3310
        %v3677 = vmul.f32 %v3561, %v3306
        %v3678 = vmul.f32 %v3581, %v3310
        %v3679 = vmul.f32 %v3563, %v3306
        %v3680 = vmul.f32 %v3584, %v3310
        %v3681 = vpack.c.bf16 %v3675, %v3673
        %v3682 = vpack.c.bf16 %v3676, %v3674
        %v3683 = vpack.c.bf16 %v3679, %v3677
        %v3684 = vpack.c.bf16 %v3680, %v3678
        %v3685 = vmul.f32 %v3557, %v3331
        %v3686 = vmul.f32 %v3575, %v3335
        %v3687 = vmul.f32 %v3559, %v3331
        %v3688 = vmul.f32 %v3578, %v3335
        %v3689 = vmul.f32 %v3561, %v3331
        %v3690 = vmul.f32 %v3581, %v3335
        %v3691 = vmul.f32 %v3563, %v3331
        %v3692 = vmul.f32 %v3584, %v3335
        %v3693 = vpack.c.bf16 %v3687, %v3685
        %v3694 = vpack.c.bf16 %v3688, %v3686
        %v3695 = vpack.c.bf16 %v3691, %v3689
        %v3696 = vpack.c.bf16 %v3692, %v3690
        %3701 = vrot.lane.b32.xlu0 %v3617, 127
        %v3702 = vpop.permute.xlu0 %3701
        %3703 = vrot.lane.b32.xlu0 %v3618, 127
        %v3704 = vpop.permute.xlu0 %3703
        %3705 = vrot.lane.b32.xlu0 %v3619, 127
        %v3706 = vpop.permute.xlu0 %3705
        %3707 = vrot.lane.b32.xlu0 %v3620, 127
        %v3708 = vpop.permute.xlu0 %3707
        %v3709 = vsel %vm3350, %v3702, %v3704
        %v3710 = vsel %vm3350, %v3706, %v3708
        %3715 = vrot.lane.b32.xlu0 %v3629, 126
        %v3716 = vpop.permute.xlu0 %3715
        %3717 = vrot.lane.b32.xlu0 %v3630, 126
        %v3718 = vpop.permute.xlu0 %3717
        %3719 = vrot.lane.b32.xlu0 %v3631, 126
        %v3720 = vpop.permute.xlu0 %3719
        %3721 = vrot.lane.b32.xlu0 %v3632, 126
        %v3722 = vpop.permute.xlu0 %3721
        %v3723 = vsel %vm3358, %v3716, %v3718
        %v3724 = vsel %vm3358, %v3720, %v3722
        %3729 = vrot.lane.b32.xlu0 %v3641, 120
        %v3730 = vpop.permute.xlu0 %3729
        %3731 = vrot.lane.b32.xlu0 %v3642, 120
        %v3732 = vpop.permute.xlu0 %3731
        %3733 = vrot.lane.b32.xlu0 %v3643, 120
        %v3734 = vpop.permute.xlu0 %3733
        %3735 = vrot.lane.b32.xlu0 %v3644, 120
        %v3736 = vpop.permute.xlu0 %3735
        %v3737 = vsel %vm3366, %v3730, %v3732
        %v3738 = vsel %vm3366, %v3734, %v3736
        %3743 = vrot.lane.b32.xlu0 %v3645, 55
        %v3744 = vpop.permute.xlu0 %3743
        %3745 = vrot.lane.b32.xlu0 %v3646, 55
        %v3746 = vpop.permute.xlu0 %3745
        %3747 = vrot.lane.b32.xlu0 %v3647, 55
        %v3748 = vpop.permute.xlu0 %3747
        %3749 = vrot.lane.b32.xlu0 %v3648, 55
        %v3750 = vpop.permute.xlu0 %3749
        %v3751 = vsel %vm3374, %v3744, %v3746
        %v3752 = vsel %vm3374, %v3748, %v3750
        %3757 = vrot.lane.b32.xlu0 %v3657, 54
        %v3758 = vpop.permute.xlu0 %3757
        %3759 = vrot.lane.b32.xlu0 %v3658, 54
        %v3760 = vpop.permute.xlu0 %3759
        %3761 = vrot.lane.b32.xlu0 %v3659, 54
        %v3762 = vpop.permute.xlu0 %3761
        %3763 = vrot.lane.b32.xlu0 %v3660, 54
        %v3764 = vpop.permute.xlu0 %3763
        %v3765 = vsel %vm3382, %v3758, %v3760
        %v3766 = vsel %vm3382, %v3762, %v3764
        %3771 = vrot.lane.b32.xlu0 %v3669, 48
        %v3772 = vpop.permute.xlu0 %3771
        %3773 = vrot.lane.b32.xlu0 %v3670, 48
        %v3774 = vpop.permute.xlu0 %3773
        %3775 = vrot.lane.b32.xlu0 %v3671, 48
        %v3776 = vpop.permute.xlu0 %3775
        %3777 = vrot.lane.b32.xlu0 %v3672, 48
        %v3778 = vpop.permute.xlu0 %3777
        %v3779 = vsel %vm3390, %v3772, %v3774
        %v3780 = vsel %vm3390, %v3776, %v3778
        %3785 = vrot.lane.b32.xlu0 %v3681, 47
        %v3786 = vpop.permute.xlu0 %3785
        %3787 = vrot.lane.b32.xlu0 %v3682, 47
        %v3788 = vpop.permute.xlu0 %3787
        %3789 = vrot.lane.b32.xlu0 %v3683, 47
        %v3790 = vpop.permute.xlu0 %3789
        %3791 = vrot.lane.b32.xlu0 %v3684, 47
        %v3792 = vpop.permute.xlu0 %3791
        %v3793 = vsel %vm3398, %v3786, %v3788
        %v3794 = vsel %vm3398, %v3790, %v3792
        %3799 = vrot.lane.b32.xlu0 %v3693, 46
        %v3800 = vpop.permute.xlu0 %3799
        %3801 = vrot.lane.b32.xlu0 %v3694, 46
        %v3802 = vpop.permute.xlu0 %3801
        %3803 = vrot.lane.b32.xlu0 %v3695, 46
        %v3804 = vpop.permute.xlu0 %3803
        %3805 = vrot.lane.b32.xlu0 %v3696, 46
        %v3806 = vpop.permute.xlu0 %3805
        %v3807 = vsel %vm3406, %v3800, %v3802
        %v3808 = vsel %vm3406, %v3804, %v3806
        %v3817 = vunpack.c.l.b16 %v3565
        %v3818 = vunpack.c.h.b16 %v3565
        %v3819 = vunpack.c.l.b16 %v3566
        %v3820 = vunpack.c.l.b16 %v3567
        %v3821 = vunpack.c.h.b16 %v3567
        %v3822 = vunpack.c.l.b16 %v3568
        %v3823 = vunpack.c.l.b16 %v3569
        %v3824 = vunpack.c.h.b16 %v3569
        %v3825 = vunpack.c.l.b16 %v3570
        %v3826 = vunpack.c.l.b16 %v3571
        %v3827 = vunpack.c.h.b16 %v3571
        %v3828 = vunpack.c.l.b16 %v3572
        %v3829 = vpack.c.b16 %v3820, %v3817
        %v3830 = vpack.c.b16 %v3821, %v3818
        %v3831 = vpack.c.b16 %v3822, %v3819
        %v3832 = vpack.c.b16 %v3826, %v3823
        %v3833 = vpack.c.b16 %v3827, %v3824
        %v3834 = vpack.c.b16 %v3828, %v3825
        %3843 = vrot.lane.b32.xlu0 %v3605, 73
        %v3844 = vpop.permute.xlu0 %3843
        %3845 = vrot.lane.b32.xlu0 %v3606, 73
        %v3846 = vpop.permute.xlu0 %3845
        %3847 = vrot.lane.b32.xlu0 %v3607, 73
        %v3848 = vpop.permute.xlu0 %3847
        %3849 = vrot.lane.b32.xlu0 %v3608, 73
        %v3850 = vpop.permute.xlu0 %3849
        %3851 = vrot.lane.b32.xlu0 %v3709, 73
        %v3852 = vpop.permute.xlu0 %3851
        %3853 = vrot.lane.b32.xlu0 %v3704, 73
        %v3854 = vpop.permute.xlu0 %3853
        %3855 = vrot.lane.b32.xlu0 %v3710, 73
        %v3856 = vpop.permute.xlu0 %3855
        %3857 = vrot.lane.b32.xlu0 %v3708, 73
        %v3858 = vpop.permute.xlu0 %3857
        %3859 = vrot.lane.b32.xlu0 %v3723, 73
        %v3860 = vpop.permute.xlu0 %3859
        %3861 = vrot.lane.b32.xlu0 %v3718, 73
        %v3862 = vpop.permute.xlu0 %3861
        %3863 = vrot.lane.b32.xlu0 %v3724, 73
        %v3864 = vpop.permute.xlu0 %3863
        %3865 = vrot.lane.b32.xlu0 %v3722, 73
        %v3866 = vpop.permute.xlu0 %3865
        %3867 = vrot.lane.b32.xlu0 %v3737, 73
        %v3868 = vpop.permute.xlu0 %3867
        %3869 = vrot.lane.b32.xlu0 %v3732, 73
        %v3870 = vpop.permute.xlu0 %3869
        %3871 = vrot.lane.b32.xlu0 %v3738, 73
        %v3872 = vpop.permute.xlu0 %3871
        %3873 = vrot.lane.b32.xlu0 %v3736, 73
        %v3874 = vpop.permute.xlu0 %3873
        %3875 = vrot.lane.b32.xlu0 %v3744, 73
        %v3876 = vpop.permute.xlu0 %3875
        %3877 = vrot.lane.b32.xlu0 %v3751, 73
        %v3878 = vpop.permute.xlu0 %3877
        %3879 = vrot.lane.b32.xlu0 %v3748, 73
        %v3880 = vpop.permute.xlu0 %3879
        %3881 = vrot.lane.b32.xlu0 %v3752, 73
        %v3882 = vpop.permute.xlu0 %3881
        %3883 = vrot.lane.b32.xlu0 %v3758, 73
        %v3884 = vpop.permute.xlu0 %3883
        %3885 = vrot.lane.b32.xlu0 %v3765, 73
        %v3886 = vpop.permute.xlu0 %3885
        %3887 = vrot.lane.b32.xlu0 %v3762, 73
        %v3888 = vpop.permute.xlu0 %3887
        %3889 = vrot.lane.b32.xlu0 %v3766, 73
        %v3890 = vpop.permute.xlu0 %3889
        %3891 = vrot.lane.b32.xlu0 %v3772, 73
        %v3892 = vpop.permute.xlu0 %3891
        %3893 = vrot.lane.b32.xlu0 %v3779, 73
        %v3894 = vpop.permute.xlu0 %3893
        %3895 = vrot.lane.b32.xlu0 %v3776, 73
        %v3896 = vpop.permute.xlu0 %3895
        %3897 = vrot.lane.b32.xlu0 %v3780, 73
        %v3898 = vpop.permute.xlu0 %3897
        %3899 = vrot.lane.b32.xlu0 %v3786, 73
        %v3900 = vpop.permute.xlu0 %3899
        %3901 = vrot.lane.b32.xlu0 %v3793, 73
        %v3902 = vpop.permute.xlu0 %3901
        %3903 = vrot.lane.b32.xlu0 %v3790, 73
        %v3904 = vpop.permute.xlu0 %3903
        %3905 = vrot.lane.b32.xlu0 %v3794, 73
        %v3906 = vpop.permute.xlu0 %3905
        %3907 = vrot.lane.b32.xlu0 %v3800, 73
        %v3908 = vpop.permute.xlu0 %3907
        %3909 = vrot.lane.b32.xlu0 %v3807, 73
        %v3910 = vpop.permute.xlu0 %3909
        %3911 = vrot.lane.b32.xlu0 %v3804, 73
        %v3912 = vpop.permute.xlu0 %3911
        %3913 = vrot.lane.b32.xlu0 %v3808, 73
        %v3914 = vpop.permute.xlu0 %3913
        %v3915 = vsel %vm3467, %v3844, %v3846
        %v3916 = vsel %vm3467, %v3848, %v3850
        %v3917 = vsel %vm3467, %v3852, %v3854
        %v3918 = vsel %vm3467, %v3856, %v3858
        %v3919 = vsel %vm3467, %v3860, %v3862
        %v3920 = vsel %vm3467, %v3864, %v3866
        %v3921 = vsel %vm3467, %v3868, %v3870
        %v3922 = vsel %vm3467, %v3872, %v3874
        %v3923 = vsel %vm3467, %v3876, %v3878
        %v3924 = vsel %vm3467, %v3880, %v3882
        %v3925 = vsel %vm3467, %v3884, %v3886
        %v3926 = vsel %vm3467, %v3888, %v3890
        %v3927 = vsel %vm3467, %v3892, %v3894
        %v3928 = vsel %vm3467, %v3896, %v3898
        %v3929 = vsel %vm3467, %v3900, %v3902
        %v3930 = vsel %vm3467, %v3904, %v3906
        %v3931 = vsel %vm3467, %v3908, %v3910
        %v3932 = vsel %vm3467, %v3912, %v3914
        %vm3969 = vcmask 269312
        %v3971 = vsel %vm3969, %v3831, 0
        %v3974 = vsel %vm3969, %v3834, 0
        %3976 = vmatprep.subr.bf16.mxu0 %v3874
        %3977 = vmatpush1.bf16.msra.mxu0 %v3922
        %3978 = vmatprep.subr.bf16.mxu0 %v3870
        %3979 = vmatpush1.bf16.msra.mxu0 %v3921
        %3980 = vmatprep.subr.bf16.mxu0 %v3866
        %3981 = vmatpush1.bf16.msra.mxu0 %v3920
        %3982 = vmatprep.subr.bf16.mxu0 %v3862
        %3983 = vmatpush1.bf16.msra.mxu0 %v3919
        %3984 = vmatprep.subr.bf16.mxu0 %v3858
        %3985 = vmatpush1.bf16.msra.mxu0 %v3918
        %3986 = vmatprep.subr.bf16.mxu0 %v3854
        %3987 = vmatpush1.bf16.msra.mxu0 %v3917
        %3988 = vmatprep.subr.bf16.mxu0 %v3850
        %3989 = vmatpush1.bf16.msra.mxu0 %v3916
        %3990 = vmatprep.subr.bf16.mxu0 %v3846
        %3991 = vmatpush1.bf16.msra.mxu0 %v3915
        %3992 = vmatprep.subr.bf16.mxu0 %v3906
        %3993 = vmatpush2.bf16.msra.mxu0 %v3930
        %3994 = vmatprep.subr.bf16.mxu0 %v3902
        %3995 = vmatpush2.bf16.msra.mxu0 %v3929
        %3996 = vmatprep.subr.bf16.mxu0 %v3898
        %3997 = vmatpush2.bf16.msra.mxu0 %v3928
        %3998 = vmatprep.subr.bf16.mxu0 %v3894
        %3999 = vmatpush2.bf16.msra.mxu0 %v3927
        %4000 = vmatprep.subr.bf16.mxu0 %v3890
        %4001 = vmatpush2.bf16.msra.mxu0 %v3926
        %4002 = vmatprep.subr.bf16.mxu0 %v3886
        %4003 = vmatpush2.bf16.msra.mxu0 %v3925
        %4004 = vmatprep.subr.bf16.mxu0 %v3882
        %4005 = vmatpush2.bf16.msra.mxu0 %v3924
        %4006 = vmatprep.subr.bf16.mxu0 %v3878
        %4007 = vmatpush2.bf16.msra.mxu0 %v3923
        %4008 = vmatprep.mubr.bf16.mxu0 %v3830
        %4009 = vmatmul.mubr.bf16.gmra.mxu0 %v3829
        %v4010 = vpop.f32.mrf.mxu0
        %v4011 = vadd.f32 0.0, %v4010
        %v4012 = vpop.f32.mrf.mxu0
        %v4013 = vadd.f32 0.0, %v4012
        %v4014 = vpop.f32.mrf.mxu0
        %v4015 = vadd.f32 0.0, %v4014
        %v4016 = vpop.f32.mrf.mxu0
        %v4017 = vadd.f32 0.0, %v4016
        %4018 = vmatprep.mubr.bf16.mxu0 %v3833
        %4019 = vmatmul.mubr.bf16.gmra.mxu0 %v3832
        %v4020 = vpop.f32.mrf.mxu0
        %v4021 = vadd.f32 0.0, %v4020
        %v4022 = vpop.f32.mrf.mxu0
        %v4023 = vadd.f32 0.0, %v4022
        %v4024 = vpop.f32.mrf.mxu0
        %v4025 = vadd.f32 0.0, %v4024
        %v4026 = vpop.f32.mrf.mxu0
        %v4027 = vadd.f32 0.0, %v4026
        %4028 = vdwg.mxu0
        %4029 = vmatprep.subr.bf16.mxu0 0
        %4030 = vmatpush1.bf16.msra.mxu0 0
        %4031 = vmatprep.subr.bf16.mxu0 0
        %4032 = vmatpush1.bf16.msra.mxu0 0
        %4033 = vmatprep.subr.bf16.mxu0 0
        %4034 = vmatpush1.bf16.msra.mxu0 0
        %4035 = vmatprep.subr.bf16.mxu0 0
        %4036 = vmatpush1.bf16.msra.mxu0 0
        %4037 = vmatprep.subr.bf16.mxu0 0
        %4038 = vmatpush1.bf16.msra.mxu0 0
        %4039 = vmatprep.subr.bf16.mxu0 %v3502
        %4040 = vmatpush1.bf16.msra.mxu0 %v3502
        %4041 = vmatprep.subr.bf16.mxu0 %v3914
        %4042 = vmatpush1.bf16.msra.mxu0 %v3932
        %4043 = vmatprep.subr.bf16.mxu0 %v3910
        %4044 = vmatpush1.bf16.msra.mxu0 %v3931
        %4045 = vmatprep.subr.bf16.mxu0 0
        %4046 = vmatpush2.bf16.msra.mxu0 0
        %4047 = vmatprep.subr.bf16.mxu0 0
        %4048 = vmatpush2.bf16.msra.mxu0 0
        %4049 = vmatprep.subr.bf16.mxu0 0
        %4050 = vmatpush2.bf16.msra.mxu0 0
        %4051 = vmatprep.subr.bf16.mxu0 0
        %4052 = vmatpush2.bf16.msra.mxu0 0
        %4053 = vmatprep.subr.bf16.mxu0 0
        %4054 = vmatpush2.bf16.msra.mxu0 0
        %4055 = vmatprep.subr.bf16.mxu0 0
        %4056 = vmatpush2.bf16.msra.mxu0 0
        %4057 = vmatprep.subr.bf16.mxu0 0
        %4058 = vmatpush2.bf16.msra.mxu0 0
        %4059 = vmatprep.subr.bf16.mxu0 0
        %4060 = vmatpush2.bf16.msra.mxu0 0
        %4061 = vmatprep.mubr.bf16.mxu0 0
        %4062 = vmatmul.mubr.bf16.gmra.mxu0 %v3971
        %v4063 = vpop.f32.mrf.mxu0
        %v4064 = vadd.f32 %v4011, %v4063
        %v4065 = vpop.f32.mrf.mxu0
        %v4066 = vadd.f32 %v4013, %v4065
        %v4067 = vpop.f32.mrf.mxu0
        %v4068 = vadd.f32 %v4015, %v4067
        %v4069 = vpop.f32.mrf.mxu0
        %v4070 = vadd.f32 %v4017, %v4069
        %4071 = vmatprep.mubr.bf16.mxu0 0
        %4072 = vmatmul.mubr.bf16.gmra.mxu0 %v3974
        %v4073 = vpop.f32.mrf.mxu0
        %v4074 = vadd.f32 %v4021, %v4073
        %v4075 = vpop.f32.mrf.mxu0
        %v4076 = vadd.f32 %v4023, %v4075
        %v4077 = vpop.f32.mrf.mxu0
        %v4078 = vadd.f32 %v4025, %v4077
        %v4079 = vpop.f32.mrf.mxu0
        %v4080 = vadd.f32 %v4027, %v4079
        %4081 = vdwg.mxu0
        %v4082 = vmax.f32 %v4064, 0.0
        %v4083 = vmax.f32 %v4066, 0.0
        %v4084 = vmax.f32 %v4068, 0.0
        %v4085 = vmax.f32 %v4070, 0.0
        %v4086 = vmax.f32 %v4074, 0.0
        %v4087 = vmax.f32 %v4076, 0.0
        %v4088 = vmax.f32 %v4078, 0.0
        %v4089 = vmax.f32 %v4080, 0.0
        %v4090 = vpack.c.bf16 %v4084, %v4082
        %v4091 = vpack.c.bf16 %v4085, %v4083
        %v4092 = vpack.c.bf16 %v4088, %v4086
        %v4093 = vpack.c.bf16 %v4089, %v4087
        %v4094 = vld [vmem:[#allocation2] sm:$0xff]
        %v4095 = vld [vmem:[#allocation2 + $0x8] sm:$0xff]
        %v4096 = vld [vmem:[#allocation2 + $0x10] sm:$0xff]
        %v4097 = vld [vmem:[#allocation2 + $0x18] sm:$0xff]
        %v4098 = vld [vmem:[#allocation2 + $0x20] sm:$0xff]
        %v4099 = vld [vmem:[#allocation2 + $0x28] sm:$0xff]
        %v4100 = vld [vmem:[#allocation2 + $0x30] sm:$0xff]
        %v4101 = vld [vmem:[#allocation2 + $0x38] sm:$0xff]
        %v4102 = vld [vmem:[#allocation2 + $0x40] sm:$0xff]
        %v4103 = vld [vmem:[#allocation2 + $0x48] sm:$0xff]
        %v4104 = vld [vmem:[#allocation2 + $0x50] sm:$0xff]
        %v4105 = vld [vmem:[#allocation2 + $0x58] sm:$0xff]
        %v4106 = vld [vmem:[#allocation2 + $0x60] sm:$0xff]
        %v4107 = vld [vmem:[#allocation2 + $0x68] sm:$0xff]
        %v4108 = vld [vmem:[#allocation2 + $0x70] sm:$0xff]
        %v4109 = vld [vmem:[#allocation2 + $0x78] sm:$0xff]
        %v4110 = vld [vmem:[#allocation2 + $0x80] sm:$0xff]
        %v4111 = vld [vmem:[#allocation2 + $0x88] sm:$0xff]
        %v4112 = vld [vmem:[#allocation2 + $0x90] sm:$0xff]
        %v4113 = vld [vmem:[#allocation2 + $0x98] sm:$0xff]
        %v4114 = vld [vmem:[#allocation2 + $0xa0] sm:$0xff]
        %v4115 = vld [vmem:[#allocation2 + $0xa8] sm:$0xff]
        %v4116 = vld [vmem:[#allocation2 + $0xb0] sm:$0xff]
        %v4117 = vld [vmem:[#allocation2 + $0xb8] sm:$0xff]
        %v4118 = vld [vmem:[#allocation2 + $0xc0] sm:$0xff]
        %v4119 = vld [vmem:[#allocation2 + $0xc8] sm:$0xff]
        %v4120 = vld [vmem:[#allocation2 + $0xd0] sm:$0xff]
        %v4121 = vld [vmem:[#allocation2 + $0xd8] sm:$0xff]
        %v4122 = vld [vmem:[#allocation2 + $0xe0] sm:$0xff]
        %v4123 = vld [vmem:[#allocation2 + $0xe8] sm:$0xff]
        %v4124 = vld [vmem:[#allocation2 + $0xf0] sm:$0xff]
        %v4125 = vld [vmem:[#allocation2 + $0xf8] sm:$0xff]
        %v4126 = vld [vmem:[#allocation2 + $0x100] sm:$0xff]
        %v4127 = vld [vmem:[#allocation2 + $0x108] sm:$0xff]
        %v4128 = vld [vmem:[#allocation2 + $0x110] sm:$0xff]
        %v4129 = vld [vmem:[#allocation2 + $0x118] sm:$0xff]
        %v4130 = vld [vmem:[#allocation2 + $0x120] sm:$0xff]
        %v4131 = vld [vmem:[#allocation2 + $0x128] sm:$0xff]
        %v4132 = vld [vmem:[#allocation2 + $0x130] sm:$0xff]
        %v4133 = vld [vmem:[#allocation2 + $0x138] sm:$0xff]
        %v4134 = vld [vmem:[#allocation2 + $0x140] sm:$0xff]
        %v4135 = vld [vmem:[#allocation2 + $0x148] sm:$0xff]
        %v4136 = vld [vmem:[#allocation2 + $0x150] sm:$0xff]
        %v4137 = vld [vmem:[#allocation2 + $0x158] sm:$0xff]
        %v4138 = vld [vmem:[#allocation2 + $0x160] sm:$0xff]
        %v4139 = vld [vmem:[#allocation2 + $0x168] sm:$0xff]
        %v4140 = vld [vmem:[#allocation2 + $0x170] sm:$0xff]
        %v4141 = vld [vmem:[#allocation2 + $0x178] sm:$0xff]
        %v4142 = vld [vmem:[#allocation2 + $0x180] sm:$0xff]
        %v4143 = vld [vmem:[#allocation2 + $0x188] sm:$0xff]
        %v4144 = vld [vmem:[#allocation2 + $0x190] sm:$0xff]
        %v4145 = vld [vmem:[#allocation2 + $0x198] sm:$0xff]
        %v4146 = vld [vmem:[#allocation2 + $0x1a0] sm:$0xff]
        %v4147 = vld [vmem:[#allocation2 + $0x1a8] sm:$0xff]
        %v4148 = vld [vmem:[#allocation2 + $0x1b0] sm:$0xff]
        %v4149 = vld [vmem:[#allocation2 + $0x1b8] sm:$0xff]
        %v4150 = vld [vmem:[#allocation2 + $0x1c0] sm:$0xff]
        %v4151 = vld [vmem:[#allocation2 + $0x1c8] sm:$0xff]
        %v4152 = vld [vmem:[#allocation2 + $0x1d0] sm:$0xff]
        %v4153 = vld [vmem:[#allocation2 + $0x1d8] sm:$0xff]
        %v4154 = vld [vmem:[#allocation2 + $0x1e0] sm:$0xff]
        %v4155 = vld [vmem:[#allocation2 + $0x1e8] sm:$0xff]
        %v4156 = vld [vmem:[#allocation2 + $0x1f0] sm:$0xff]
        %v4157 = vld [vmem:[#allocation2 + $0x1f8] sm:$0xff]
        %v4158 = vld [vmem:[#allocation2 + $0x200] sm:$0xff]
        %v4159 = vld [vmem:[#allocation2 + $0x208] sm:$0xff]
        %v4160 = vld [vmem:[#allocation2 + $0x210] sm:$0xff]
        %v4161 = vld [vmem:[#allocation2 + $0x218] sm:$0xff]
        %v4162 = vld [vmem:[#allocation2 + $0x220] sm:$0xff]
        %v4163 = vld [vmem:[#allocation2 + $0x228] sm:$0xff]
        %v4164 = vld [vmem:[#allocation2 + $0x230] sm:$0xff]
        %v4165 = vld [vmem:[#allocation2 + $0x238] sm:$0xff]
        %v4238 = vunpack.c.l.b16 %v4094
        %v4239 = vunpack.c.h.b16 %v4094
        %v4240 = vunpack.c.l.b16 %v4095
        %v4241 = vunpack.c.h.b16 %v4095
        %v4242 = vunpack.c.l.b16 %v4096
        %v4243 = vunpack.c.h.b16 %v4096
        %v4244 = vunpack.c.l.b16 %v4097
        %v4245 = vunpack.c.h.b16 %v4097
        %v4246 = vunpack.c.l.b16 %v4098
        %v4247 = vunpack.c.h.b16 %v4098
        %v4248 = vunpack.c.l.b16 %v4099
        %v4249 = vunpack.c.h.b16 %v4099
        %v4250 = vunpack.c.l.b16 %v4100
        %v4251 = vunpack.c.h.b16 %v4100
        %v4252 = vunpack.c.l.b16 %v4101
        %v4253 = vunpack.c.h.b16 %v4101
        %v4254 = vunpack.c.l.b16 %v4102
        %v4255 = vunpack.c.h.b16 %v4102
        %v4256 = vunpack.c.l.b16 %v4103
        %v4257 = vunpack.c.h.b16 %v4103
        %v4258 = vunpack.c.l.b16 %v4104
        %v4259 = vunpack.c.h.b16 %v4104
        %v4260 = vunpack.c.l.b16 %v4105
        %v4261 = vunpack.c.h.b16 %v4105
        %v4262 = vunpack.c.l.b16 %v4106
        %v4263 = vunpack.c.h.b16 %v4106
        %v4264 = vunpack.c.l.b16 %v4107
        %v4265 = vunpack.c.h.b16 %v4107
        %v4266 = vunpack.c.l.b16 %v4108
        %v4267 = vunpack.c.h.b16 %v4108
        %v4268 = vunpack.c.l.b16 %v4109
        %v4269 = vunpack.c.h.b16 %v4109
        %v4270 = vunpack.c.l.b16 %v4110
        %v4271 = vunpack.c.h.b16 %v4110
        %v4272 = vunpack.c.l.b16 %v4111
        %v4273 = vunpack.c.h.b16 %v4111
        %v4274 = vunpack.c.l.b16 %v4112
        %v4275 = vunpack.c.h.b16 %v4112
        %v4276 = vunpack.c.l.b16 %v4113
        %v4277 = vunpack.c.h.b16 %v4113
        %v4278 = vunpack.c.l.b16 %v4114
        %v4279 = vunpack.c.h.b16 %v4114
        %v4280 = vunpack.c.l.b16 %v4115
        %v4281 = vunpack.c.h.b16 %v4115
        %v4282 = vunpack.c.l.b16 %v4116
        %v4283 = vunpack.c.h.b16 %v4116
        %v4284 = vunpack.c.l.b16 %v4117
        %v4285 = vunpack.c.h.b16 %v4117
        %v4286 = vunpack.c.l.b16 %v4118
        %v4287 = vunpack.c.h.b16 %v4118
        %v4288 = vunpack.c.l.b16 %v4119
        %v4289 = vunpack.c.h.b16 %v4119
        %v4290 = vunpack.c.l.b16 %v4120
        %v4291 = vunpack.c.h.b16 %v4120
        %v4292 = vunpack.c.l.b16 %v4121
        %v4293 = vunpack.c.h.b16 %v4121
        %v4294 = vunpack.c.l.b16 %v4122
        %v4295 = vunpack.c.h.b16 %v4122
        %v4296 = vunpack.c.l.b16 %v4123
        %v4297 = vunpack.c.h.b16 %v4123
        %v4298 = vunpack.c.l.b16 %v4124
        %v4299 = vunpack.c.h.b16 %v4124
        %v4300 = vunpack.c.l.b16 %v4125
        %v4301 = vunpack.c.h.b16 %v4125
        %v4302 = vunpack.c.l.b16 %v4126
        %v4303 = vunpack.c.h.b16 %v4126
        %v4304 = vunpack.c.l.b16 %v4127
        %v4305 = vunpack.c.h.b16 %v4127
        %v4306 = vunpack.c.l.b16 %v4128
        %v4307 = vunpack.c.h.b16 %v4128
        %v4308 = vunpack.c.l.b16 %v4129
        %v4309 = vunpack.c.h.b16 %v4129
        %v4310 = vunpack.c.l.b16 %v4130
        %v4311 = vunpack.c.h.b16 %v4130
        %v4312 = vunpack.c.l.b16 %v4131
        %v4313 = vunpack.c.h.b16 %v4131
        %v4314 = vunpack.c.l.b16 %v4132
        %v4315 = vunpack.c.h.b16 %v4132
        %v4316 = vunpack.c.l.b16 %v4133
        %v4317 = vunpack.c.h.b16 %v4133
        %v4318 = vunpack.c.l.b16 %v4134
        %v4319 = vunpack.c.h.b16 %v4134
        %v4320 = vunpack.c.l.b16 %v4135
        %v4321 = vunpack.c.h.b16 %v4135
        %v4322 = vunpack.c.l.b16 %v4136
        %v4323 = vunpack.c.h.b16 %v4136
        %v4324 = vunpack.c.l.b16 %v4137
        %v4325 = vunpack.c.h.b16 %v4137
        %v4326 = vunpack.c.l.b16 %v4138
        %v4327 = vunpack.c.h.b16 %v4138
        %v4328 = vunpack.c.l.b16 %v4139
        %v4329 = vunpack.c.h.b16 %v4139
        %v4330 = vunpack.c.l.b16 %v4140
        %v4331 = vunpack.c.h.b16 %v4140
        %v4332 = vunpack.c.l.b16 %v4141
        %v4333 = vunpack.c.h.b16 %v4141
        %v4334 = vunpack.c.l.b16 %v4142
        %v4335 = vunpack.c.h.b16 %v4142
        %v4336 = vunpack.c.l.b16 %v4143
        %v4337 = vunpack.c.h.b16 %v4143
        %v4338 = vunpack.c.l.b16 %v4144
        %v4339 = vunpack.c.h.b16 %v4144
        %v4340 = vunpack.c.l.b16 %v4145
        %v4341 = vunpack.c.h.b16 %v4145
        %v4342 = vunpack.c.l.b16 %v4146
        %v4343 = vunpack.c.h.b16 %v4146
        %v4344 = vunpack.c.l.b16 %v4147
        %v4345 = vunpack.c.h.b16 %v4147
        %v4346 = vunpack.c.l.b16 %v4148
        %v4347 = vunpack.c.h.b16 %v4148
        %v4348 = vunpack.c.l.b16 %v4149
        %v4349 = vunpack.c.h.b16 %v4149
        %v4350 = vunpack.c.l.b16 %v4150
        %v4351 = vunpack.c.h.b16 %v4150
        %v4352 = vunpack.c.l.b16 %v4151
        %v4353 = vunpack.c.h.b16 %v4151
        %v4354 = vunpack.c.l.b16 %v4152
        %v4355 = vunpack.c.h.b16 %v4152
        %v4356 = vunpack.c.l.b16 %v4153
        %v4357 = vunpack.c.h.b16 %v4153
        %v4358 = vunpack.c.l.b16 %v4154
        %v4359 = vunpack.c.h.b16 %v4154
        %v4360 = vunpack.c.l.b16 %v4155
        %v4361 = vunpack.c.h.b16 %v4155
        %v4362 = vunpack.c.l.b16 %v4156
        %v4363 = vunpack.c.h.b16 %v4156
        %v4364 = vunpack.c.l.b16 %v4157
        %v4365 = vunpack.c.h.b16 %v4157
        %v4366 = vunpack.c.l.b16 %v4158
        %v4367 = vunpack.c.h.b16 %v4158
        %v4368 = vunpack.c.l.b16 %v4159
        %v4369 = vunpack.c.h.b16 %v4159
        %v4370 = vunpack.c.l.b16 %v4160
        %v4371 = vunpack.c.h.b16 %v4160
        %v4372 = vunpack.c.l.b16 %v4161
        %v4373 = vunpack.c.h.b16 %v4161
        %v4374 = vunpack.c.l.b16 %v4162
        %v4375 = vunpack.c.h.b16 %v4162
        %v4376 = vunpack.c.l.b16 %v4163
        %v4377 = vunpack.c.h.b16 %v4163
        %v4378 = vunpack.c.l.b16 %v4164
        %v4379 = vunpack.c.h.b16 %v4164
        %v4380 = vunpack.c.l.b16 %v4165
        %v4381 = vunpack.c.h.b16 %v4165
        %v4382 = vpack.c.b16 %v4244, %v4238
        %v4383 = vpack.c.b16 %v4245, %v4239
        %v4384 = vpack.c.b16 %v4246, %v4240
        %v4385 = vpack.c.b16 %v4247, %v4241
        %v4386 = vpack.c.b16 %v4248, %v4242
        %v4387 = vpack.c.b16 %v4249, %v4243
        %v4388 = vpack.c.b16 %v4256, %v4250
        %v4389 = vpack.c.b16 %v4257, %v4251
        %v4390 = vpack.c.b16 %v4258, %v4252
        %v4391 = vpack.c.b16 %v4259, %v4253
        %v4392 = vpack.c.b16 %v4260, %v4254
        %v4393 = vpack.c.b16 %v4261, %v4255
        %v4394 = vpack.c.b16 %v4268, %v4262
        %v4395 = vpack.c.b16 %v4269, %v4263
        %v4396 = vpack.c.b16 %v4270, %v4264
        %v4397 = vpack.c.b16 %v4271, %v4265
        %v4398 = vpack.c.b16 %v4272, %v4266
        %v4399 = vpack.c.b16 %v4273, %v4267
        %v4400 = vpack.c.b16 %v4280, %v4274
        %v4401 = vpack.c.b16 %v4281, %v4275
        %v4402 = vpack.c.b16 %v4282, %v4276
        %v4403 = vpack.c.b16 %v4283, %v4277
        %v4404 = vpack.c.b16 %v4284, %v4278
        %v4405 = vpack.c.b16 %v4285, %v4279
        %v4406 = vpack.c.b16 %v4292, %v4286
        %v4407 = vpack.c.b16 %v4293, %v4287
        %v4408 = vpack.c.b16 %v4294, %v4288
        %v4409 = vpack.c.b16 %v4295, %v4289
        %v4410 = vpack.c.b16 %v4296, %v4290
        %v4411 = vpack.c.b16 %v4297, %v4291
        %v4412 = vpack.c.b16 %v4304, %v4298
        %v4413 = vpack.c.b16 %v4305, %v4299
        %v4414 = vpack.c.b16 %v4306, %v4300
        %v4415 = vpack.c.b16 %v4307, %v4301
        %v4416 = vpack.c.b16 %v4308, %v4302
        %v4417 = vpack.c.b16 %v4309, %v4303
        %v4418 = vpack.c.b16 %v4316, %v4310
        %v4419 = vpack.c.b16 %v4317, %v4311
        %v4420 = vpack.c.b16 %v4318, %v4312
        %v4421 = vpack.c.b16 %v4319, %v4313
        %v4422 = vpack.c.b16 %v4320, %v4314
        %v4423 = vpack.c.b16 %v4321, %v4315
        %v4424 = vpack.c.b16 %v4328, %v4322
        %v4425 = vpack.c.b16 %v4329, %v4323
        %v4426 = vpack.c.b16 %v4330, %v4324
        %v4427 = vpack.c.b16 %v4331, %v4325
        %v4428 = vpack.c.b16 %v4332, %v4326
        %v4429 = vpack.c.b16 %v4333, %v4327
        %v4430 = vpack.c.b16 %v4340, %v4334
        %v4431 = vpack.c.b16 %v4341, %v4335
        %v4432 = vpack.c.b16 %v4342, %v4336
        %v4433 = vpack.c.b16 %v4343, %v4337
        %v4434 = vpack.c.b16 %v4344, %v4338
        %v4435 = vpack.c.b16 %v4345, %v4339
        %v4436 = vpack.c.b16 %v4352, %v4346
        %v4437 = vpack.c.b16 %v4353, %v4347
        %v4438 = vpack.c.b16 %v4354, %v4348
        %v4439 = vpack.c.b16 %v4355, %v4349
        %v4440 = vpack.c.b16 %v4356, %v4350
        %v4441 = vpack.c.b16 %v4357, %v4351
        %v4442 = vpack.c.b16 %v4364, %v4358
        %v4443 = vpack.c.b16 %v4365, %v4359
        %v4444 = vpack.c.b16 %v4366, %v4360
        %v4445 = vpack.c.b16 %v4367, %v4361
        %v4446 = vpack.c.b16 %v4368, %v4362
        %v4447 = vpack.c.b16 %v4369, %v4363
        %v4448 = vpack.c.b16 %v4376, %v4370
        %v4449 = vpack.c.b16 %v4377, %v4371
        %v4450 = vpack.c.b16 %v4378, %v4372
        %v4451 = vpack.c.b16 %v4379, %v4373
        %v4452 = vpack.c.b16 %v4380, %v4374
        %v4453 = vpack.c.b16 %v4381, %v4375
        %vm4526 = vcmask 523264
        %v4528 = vsel %vm4526, %v4091, 0
        %v4531 = vsel %vm4526, %v4093, 0
        %4533 = vmatprep.subr.bf16.mxu0 %v4425
        %4534 = vmatpush1.bf16.msra.mxu0 %v4424
        %4535 = vmatprep.subr.bf16.mxu0 %v4419
        %4536 = vmatpush1.bf16.msra.mxu0 %v4418
        %4537 = vmatprep.subr.bf16.mxu0 %v4413
        %4538 = vmatpush1.bf16.msra.mxu0 %v4412
        %4539 = vmatprep.subr.bf16.mxu0 %v4407
        %4540 = vmatpush1.bf16.msra.mxu0 %v4406
        %4541 = vmatprep.subr.bf16.mxu0 %v4401
        %4542 = vmatpush1.bf16.msra.mxu0 %v4400
        %4543 = vmatprep.subr.bf16.mxu0 %v4395
        %4544 = vmatpush1.bf16.msra.mxu0 %v4394
        %4545 = vmatprep.subr.bf16.mxu0 %v4389
        %4546 = vmatpush1.bf16.msra.mxu0 %v4388
        %4547 = vmatprep.subr.bf16.mxu0 %v4383
        %4548 = vmatpush1.bf16.msra.mxu0 %v4382
        %4549 = vmatprep.subr.bf16.mxu0 0
        %4550 = vmatpush2.bf16.msra.mxu0 0
        %4551 = vmatprep.subr.bf16.mxu0 0
        %4552 = vmatpush2.bf16.msra.mxu0 0
        %4553 = vmatprep.subr.bf16.mxu0 0
        %4554 = vmatpush2.bf16.msra.mxu0 0
        %4555 = vmatprep.subr.bf16.mxu0 0
        %4556 = vmatpush2.bf16.msra.mxu0 0
        %4557 = vmatprep.subr.bf16.mxu0 %v4449
        %4558 = vmatpush2.bf16.msra.mxu0 %v4448
        %4559 = vmatprep.subr.bf16.mxu0 %v4443
        %4560 = vmatpush2.bf16.msra.mxu0 %v4442
        %4561 = vmatprep.subr.bf16.mxu0 %v4437
        %4562 = vmatpush2.bf16.msra.mxu0 %v4436
        %4563 = vmatprep.subr.bf16.mxu0 %v4431
        %4564 = vmatpush2.bf16.msra.mxu0 %v4430
        %4565 = vmatprep.mubr.bf16.mxu0 %v4528
        %4566 = vmatmul.mubr.bf16.gmra.mxu0 %v4090
        %v4567 = vpop.f32.mrf.mxu0
        %v4568 = vadd.f32 0.0, %v4567
        %v4569 = vpop.f32.mrf.mxu0
        %v4570 = vadd.f32 0.0, %v4569
        %v4571 = vpop.f32.mrf.mxu0
        %v4572 = vadd.f32 0.0, %v4571
        %v4573 = vpop.f32.mrf.mxu0
        %v4574 = vadd.f32 0.0, %v4573
        %4575 = vmatprep.mubr.bf16.mxu0 %v4531
        %4576 = vmatmul.mubr.bf16.gmra.mxu0 %v4092
        %v4577 = vpop.f32.mrf.mxu0
        %v4578 = vadd.f32 0.0, %v4577
        %v4579 = vpop.f32.mrf.mxu0
        %v4580 = vadd.f32 0.0, %v4579
        %v4581 = vpop.f32.mrf.mxu0
        %v4582 = vadd.f32 0.0, %v4581
        %v4583 = vpop.f32.mrf.mxu0
        %v4584 = vadd.f32 0.0, %v4583
        %4585 = vdwg.mxu0
        %4586 = vmatprep.subr.bf16.mxu0 %v4427
        %4587 = vmatpush1.bf16.msra.mxu0 %v4426
        %4588 = vmatprep.subr.bf16.mxu0 %v4421
        %4589 = vmatpush1.bf16.msra.mxu0 %v4420
        %4590 = vmatprep.subr.bf16.mxu0 %v4415
        %4591 = vmatpush1.bf16.msra.mxu0 %v4414
        %4592 = vmatprep.subr.bf16.mxu0 %v4409
        %4593 = vmatpush1.bf16.msra.mxu0 %v4408
        %4594 = vmatprep.subr.bf16.mxu0 %v4403
        %4595 = vmatpush1.bf16.msra.mxu0 %v4402
        %4596 = vmatprep.subr.bf16.mxu0 %v4397
        %4597 = vmatpush1.bf16.msra.mxu0 %v4396
        %4598 = vmatprep.subr.bf16.mxu0 %v4391
        %4599 = vmatpush1.bf16.msra.mxu0 %v4390
        %4600 = vmatprep.subr.bf16.mxu0 %v4385
        %4601 = vmatpush1.bf16.msra.mxu0 %v4384
        %4602 = vmatprep.subr.bf16.mxu0 0
        %4603 = vmatpush2.bf16.msra.mxu0 0
        %4604 = vmatprep.subr.bf16.mxu0 0
        %4605 = vmatpush2.bf16.msra.mxu0 0
        %4606 = vmatprep.subr.bf16.mxu0 0
        %4607 = vmatpush2.bf16.msra.mxu0 0
        %4608 = vmatprep.subr.bf16.mxu0 0
        %4609 = vmatpush2.bf16.msra.mxu0 0
        %4610 = vmatprep.subr.bf16.mxu0 %v4451
        %4611 = vmatpush2.bf16.msra.mxu0 %v4450
        %4612 = vmatprep.subr.bf16.mxu0 %v4445
        %4613 = vmatpush2.bf16.msra.mxu0 %v4444
        %4614 = vmatprep.subr.bf16.mxu0 %v4439
        %4615 = vmatpush2.bf16.msra.mxu0 %v4438
        %4616 = vmatprep.subr.bf16.mxu0 %v4433
        %4617 = vmatpush2.bf16.msra.mxu0 %v4432
        %4618 = vmatprep.mubr.bf16.mxu0 %v4528
        %4619 = vmatmul.mubr.bf16.gmra.mxu0 %v4090
        %v4620 = vpop.f32.mrf.mxu0
        %v4621 = vadd.f32 0.0, %v4620
        %v4622 = vpop.f32.mrf.mxu0
        %v4623 = vadd.f32 0.0, %v4622
        %v4624 = vpop.f32.mrf.mxu0
        %v4625 = vadd.f32 0.0, %v4624
        %v4626 = vpop.f32.mrf.mxu0
        %v4627 = vadd.f32 0.0, %v4626
        %4628 = vmatprep.mubr.bf16.mxu0 %v4531
        %4629 = vmatmul.mubr.bf16.gmra.mxu0 %v4092
        %v4630 = vpop.f32.mrf.mxu0
        %v4631 = vadd.f32 0.0, %v4630
        %v4632 = vpop.f32.mrf.mxu0
        %v4633 = vadd.f32 0.0, %v4632
        %v4634 = vpop.f32.mrf.mxu0
        %v4635 = vadd.f32 0.0, %v4634
        %v4636 = vpop.f32.mrf.mxu0
        %v4637 = vadd.f32 0.0, %v4636
        %4638 = vdwg.mxu0
        %4639 = vmatprep.subr.bf16.mxu0 %v4429
        %4640 = vmatpush1.bf16.msra.mxu0 %v4428
        %4641 = vmatprep.subr.bf16.mxu0 %v4423
        %4642 = vmatpush1.bf16.msra.mxu0 %v4422
        %4643 = vmatprep.subr.bf16.mxu0 %v4417
        %4644 = vmatpush1.bf16.msra.mxu0 %v4416
        %4645 = vmatprep.subr.bf16.mxu0 %v4411
        %4646 = vmatpush1.bf16.msra.mxu0 %v4410
        %4647 = vmatprep.subr.bf16.mxu0 %v4405
        %4648 = vmatpush1.bf16.msra.mxu0 %v4404
        %4649 = vmatprep.subr.bf16.mxu0 %v4399
        %4650 = vmatpush1.bf16.msra.mxu0 %v4398
        %4651 = vmatprep.subr.bf16.mxu0 %v4393
        %4652 = vmatpush1.bf16.msra.mxu0 %v4392
        %4653 = vmatprep.subr.bf16.mxu0 %v4387
        %4654 = vmatpush1.bf16.msra.mxu0 %v4386
        %4655 = vmatprep.subr.bf16.mxu0 0
        %4656 = vmatpush2.bf16.msra.mxu0 0
        %4657 = vmatprep.subr.bf16.mxu0 0
        %4658 = vmatpush2.bf16.msra.mxu0 0
        %4659 = vmatprep.subr.bf16.mxu0 0
        %4660 = vmatpush2.bf16.msra.mxu0 0
        %4661 = vmatprep.subr.bf16.mxu0 0
        %4662 = vmatpush2.bf16.msra.mxu0 0
        %4663 = vmatprep.subr.bf16.mxu0 %v4453
        %4664 = vmatpush2.bf16.msra.mxu0 %v4452
        %4665 = vmatprep.subr.bf16.mxu0 %v4447
        %4666 = vmatpush2.bf16.msra.mxu0 %v4446
        %4667 = vmatprep.subr.bf16.mxu0 %v4441
        %4668 = vmatpush2.bf16.msra.mxu0 %v4440
        %4669 = vmatprep.subr.bf16.mxu0 %v4435
        %4670 = vmatpush2.bf16.msra.mxu0 %v4434
        %4671 = vmatprep.mubr.bf16.mxu0 %v4528
        %4672 = vmatmul.mubr.bf16.gmra.mxu0 %v4090
        %v4673 = vpop.f32.mrf.mxu0
        %v4674 = vadd.f32 0.0, %v4673
        %v4675 = vpop.f32.mrf.mxu0
        %v4676 = vadd.f32 0.0, %v4675
        %v4677 = vpop.f32.mrf.mxu0
        %v4678 = vadd.f32 0.0, %v4677
        %v4679 = vpop.f32.mrf.mxu0
        %v4680 = vadd.f32 0.0, %v4679
        %4681 = vmatprep.mubr.bf16.mxu0 %v4531
        %4682 = vmatmul.mubr.bf16.gmra.mxu0 %v4092
        %v4683 = vpop.f32.mrf.mxu0
        %v4684 = vadd.f32 0.0, %v4683
        %v4685 = vpop.f32.mrf.mxu0
        %v4686 = vadd.f32 0.0, %v4685
        %v4687 = vpop.f32.mrf.mxu0
        %v4688 = vadd.f32 0.0, %v4687
        %v4689 = vpop.f32.mrf.mxu0
        %v4690 = vadd.f32 0.0, %v4689
        %4691 = vdwg.mxu0
        %v4692 = vld [vmem:[%s5] sm:$0xff]
        %v4693 = vld [vmem:[%s5 + $0x8] sm:$0xf]
        %v4694 = vld [vmem:[%s5 + $0xc] sm:$0xff]
        %v4695 = vld [vmem:[%s5 + $0x14] sm:$0xf]
        %4696 = vrot.lane.b32.xlu0 %v4568, 17
        %v4697 = vpop.permute.xlu0 %4696
        %4698 = vrot.lane.b32.xlu0 %v4572, 17
        %v4699 = vpop.permute.xlu0 %4698
        %4700 = vrot.lane.b32.xlu0 %v4578, 17
        %v4701 = vpop.permute.xlu0 %4700
        %4702 = vrot.lane.b32.xlu0 %v4582, 17
        %v4703 = vpop.permute.xlu0 %4702
        %4704 = vrot.lane.b32.xlu0 %v4570, 17
        %v4705 = vpop.permute.xlu0 %4704
        %4706 = vrot.lane.b32.xlu0 %v4574, 17
        %v4707 = vpop.permute.xlu0 %4706
        %4708 = vrot.lane.b32.xlu0 %v4580, 17
        %v4709 = vpop.permute.xlu0 %4708
        %4710 = vrot.lane.b32.xlu0 %v4584, 17
        %v4711 = vpop.permute.xlu0 %4710
        %4712 = vrot.lane.b32.xlu0 %v4621, 17
        %v4713 = vpop.permute.xlu0 %4712
        %4714 = vrot.lane.b32.xlu0 %v4625, 17
        %v4715 = vpop.permute.xlu0 %4714
        %4716 = vrot.lane.b32.xlu0 %v4631, 17
        %v4717 = vpop.permute.xlu0 %4716
        %4718 = vrot.lane.b32.xlu0 %v4635, 17
        %v4719 = vpop.permute.xlu0 %4718
        %4720 = vrot.lane.b32.xlu0 %v4623, 17
        %v4721 = vpop.permute.xlu0 %4720
        %4722 = vrot.lane.b32.xlu0 %v4627, 17
        %v4723 = vpop.permute.xlu0 %4722
        %4724 = vrot.lane.b32.xlu0 %v4633, 17
        %v4725 = vpop.permute.xlu0 %4724
        %4726 = vrot.lane.b32.xlu0 %v4637, 17
        %v4727 = vpop.permute.xlu0 %4726
        %4728 = vrot.lane.b32.xlu0 %v4674, 17
        %v4729 = vpop.permute.xlu0 %4728
        %4730 = vrot.lane.b32.xlu0 %v4678, 17
        %v4731 = vpop.permute.xlu0 %4730
        %4732 = vrot.lane.b32.xlu0 %v4684, 17
        %v4733 = vpop.permute.xlu0 %4732
        %4734 = vrot.lane.b32.xlu0 %v4688, 17
        %v4735 = vpop.permute.xlu0 %4734
        %4736 = vrot.lane.b32.xlu0 %v4676, 17
        %v4737 = vpop.permute.xlu0 %4736
        %4738 = vrot.lane.b32.xlu0 %v4680, 17
        %v4739 = vpop.permute.xlu0 %4738
        %4740 = vrot.lane.b32.xlu0 %v4686, 17
        %v4741 = vpop.permute.xlu0 %4740
        %4742 = vrot.lane.b32.xlu0 %v4690, 17
        %v4743 = vpop.permute.xlu0 %4742
        %v4744 = vsel %vm580, %v4729, %v4737
        %v4745 = vsel %vm580, %v4731, %v4739
        %v4746 = vsel %vm580, %v4733, %v4741
        %v4747 = vsel %vm580, %v4735, %v4743
        %v4748 = vsel %vm580, %v4721, %v4729
        %v4749 = vsel %vm580, %v4723, %v4731
        %v4750 = vsel %vm580, %v4725, %v4733
        %v4751 = vsel %vm580, %v4727, %v4735
        %v4752 = vsel %vm580, %v4713, %v4721
        %v4753 = vsel %vm580, %v4715, %v4723
        %v4754 = vsel %vm580, %v4717, %v4725
        %v4755 = vsel %vm580, %v4719, %v4727
        %v4756 = vsel %vm580, %v4705, %v4713
        %v4757 = vsel %vm580, %v4707, %v4715
        %v4758 = vsel %vm580, %v4709, %v4717
        %v4759 = vsel %vm580, %v4711, %v4719
        %v4760 = vsel %vm580, %v4697, %v4705
        %v4761 = vsel %vm580, %v4699, %v4707
        %v4762 = vsel %vm580, %v4701, %v4709
        %v4763 = vsel %vm580, %v4703, %v4711
        %v4764 = vsel %vm580, %v4737, %v4697
        %v4765 = vsel %vm580, %v4739, %v4699
        %v4766 = vsel %vm580, %v4741, %v4701
        %v4767 = vsel %vm580, %v4743, %v4703
        %v4768 = vmul.f32 %v4764, %v594
        %v4769 = vmul.f32 %v4760, %v598
        %v4770 = vmul.f32 %v4756, %v602
        %v4771 = vmul.f32 %v4752, %v606
        %v4772 = vmul.f32 %v4748, %v610
        %v4773 = vmul.f32 %v4744, %v614
        %v4774 = vmul.f32 %v4765, %v594
        %v4775 = vmul.f32 %v4761, %v598
        %v4776 = vmul.f32 %v4757, %v602
        %v4777 = vmul.f32 %v4753, %v606
        %v4778 = vmul.f32 %v4749, %v610
        %v4779 = vmul.f32 %v4745, %v614
        %v4780 = vmul.f32 %v4766, %v594
        %v4781 = vmul.f32 %v4762, %v598
        %v4782 = vmul.f32 %v4758, %v602
        %v4783 = vmul.f32 %v4754, %v606
        %v4784 = vmul.f32 %v4750, %v610
        %v4785 = vmul.f32 %v4746, %v614
        %v4786 = vmul.f32 %v4767, %v594
        %v4787 = vmul.f32 %v4763, %v598
        %v4788 = vmul.f32 %v4759, %v602
        %v4789 = vmul.f32 %v4755, %v606
        %v4790 = vmul.f32 %v4751, %v610
        %v4791 = vmul.f32 %v4747, %v614
        %v4792 = vpack.c.bf16 %v4774, %v4768
        %v4793 = vpack.c.bf16 %v4775, %v4769
        %v4794 = vpack.c.bf16 %v4776, %v4770
        %v4795 = vpack.c.bf16 %v4777, %v4771
        %v4796 = vpack.c.bf16 %v4778, %v4772
        %v4797 = vpack.c.bf16 %v4779, %v4773
        %v4798 = vpack.c.bf16 %v4786, %v4780
        %v4799 = vpack.c.bf16 %v4787, %v4781
        %v4800 = vpack.c.bf16 %v4788, %v4782
        %v4801 = vpack.c.bf16 %v4789, %v4783
        %v4802 = vpack.c.bf16 %v4790, %v4784
        %v4803 = vpack.c.bf16 %v4791, %v4785
        %4804 = vrot.lane.b32.xlu0 %v4568, 16
        %v4805 = vpop.permute.xlu0 %4804
        %4806 = vrot.lane.b32.xlu0 %v4572, 16
        %v4807 = vpop.permute.xlu0 %4806
        %4808 = vrot.lane.b32.xlu0 %v4578, 16
        %v4809 = vpop.permute.xlu0 %4808
        %4810 = vrot.lane.b32.xlu0 %v4582, 16
        %v4811 = vpop.permute.xlu0 %4810
        %4812 = vrot.lane.b32.xlu0 %v4570, 16
        %v4813 = vpop.permute.xlu0 %4812
        %4814 = vrot.lane.b32.xlu0 %v4574, 16
        %v4815 = vpop.permute.xlu0 %4814
        %4816 = vrot.lane.b32.xlu0 %v4580, 16
        %v4817 = vpop.permute.xlu0 %4816
        %4818 = vrot.lane.b32.xlu0 %v4584, 16
        %v4819 = vpop.permute.xlu0 %4818
        %4820 = vrot.lane.b32.xlu0 %v4621, 16
        %v4821 = vpop.permute.xlu0 %4820
        %4822 = vrot.lane.b32.xlu0 %v4625, 16
        %v4823 = vpop.permute.xlu0 %4822
        %4824 = vrot.lane.b32.xlu0 %v4631, 16
        %v4825 = vpop.permute.xlu0 %4824
        %4826 = vrot.lane.b32.xlu0 %v4635, 16
        %v4827 = vpop.permute.xlu0 %4826
        %4828 = vrot.lane.b32.xlu0 %v4623, 16
        %v4829 = vpop.permute.xlu0 %4828
        %4830 = vrot.lane.b32.xlu0 %v4627, 16
        %v4831 = vpop.permute.xlu0 %4830
        %4832 = vrot.lane.b32.xlu0 %v4633, 16
        %v4833 = vpop.permute.xlu0 %4832
        %4834 = vrot.lane.b32.xlu0 %v4637, 16
        %v4835 = vpop.permute.xlu0 %4834
        %4836 = vrot.lane.b32.xlu0 %v4674, 16
        %v4837 = vpop.permute.xlu0 %4836
        %4838 = vrot.lane.b32.xlu0 %v4678, 16
        %v4839 = vpop.permute.xlu0 %4838
        %4840 = vrot.lane.b32.xlu0 %v4684, 16
        %v4841 = vpop.permute.xlu0 %4840
        %4842 = vrot.lane.b32.xlu0 %v4688, 16
        %v4843 = vpop.permute.xlu0 %4842
        %4844 = vrot.lane.b32.xlu0 %v4676, 16
        %v4845 = vpop.permute.xlu0 %4844
        %4846 = vrot.lane.b32.xlu0 %v4680, 16
        %v4847 = vpop.permute.xlu0 %4846
        %4848 = vrot.lane.b32.xlu0 %v4686, 16
        %v4849 = vpop.permute.xlu0 %4848
        %4850 = vrot.lane.b32.xlu0 %v4690, 16
        %v4851 = vpop.permute.xlu0 %4850
        %v4852 = vsel %vm645, %v4837, %v4845
        %v4853 = vsel %vm645, %v4839, %v4847
        %v4854 = vsel %vm645, %v4841, %v4849
        %v4855 = vsel %vm645, %v4843, %v4851
        %v4856 = vsel %vm645, %v4829, %v4837
        %v4857 = vsel %vm645, %v4831, %v4839
        %v4858 = vsel %vm645, %v4833, %v4841
        %v4859 = vsel %vm645, %v4835, %v4843
        %v4860 = vsel %vm645, %v4821, %v4829
        %v4861 = vsel %vm645, %v4823, %v4831
        %v4862 = vsel %vm645, %v4825, %v4833
        %v4863 = vsel %vm645, %v4827, %v4835
        %v4864 = vsel %vm645, %v4813, %v4821
        %v4865 = vsel %vm645, %v4815, %v4823
        %v4866 = vsel %vm645, %v4817, %v4825
        %v4867 = vsel %vm645, %v4819, %v4827
        %v4868 = vsel %vm645, %v4805, %v4813
        %v4869 = vsel %vm645, %v4807, %v4815
        %v4870 = vsel %vm645, %v4809, %v4817
        %v4871 = vsel %vm645, %v4811, %v4819
        %v4872 = vsel %vm645, %v4845, %v4805
        %v4873 = vsel %vm645, %v4847, %v4807
        %v4874 = vsel %vm645, %v4849, %v4809
        %v4875 = vsel %vm645, %v4851, %v4811
        %v4876 = vmul.f32 %v4872, %v660
        %v4877 = vmul.f32 %v4868, %v664
        %v4878 = vmul.f32 %v4864, %v668
        %v4879 = vmul.f32 %v4860, %v672
        %v4880 = vmul.f32 %v4856, %v676
        %v4881 = vmul.f32 %v4852, %v680
        %v4882 = vmul.f32 %v4873, %v660
        %v4883 = vmul.f32 %v4869, %v664
        %v4884 = vmul.f32 %v4865, %v668
        %v4885 = vmul.f32 %v4861, %v672
        %v4886 = vmul.f32 %v4857, %v676
        %v4887 = vmul.f32 %v4853, %v680
        %v4888 = vmul.f32 %v4874, %v660
        %v4889 = vmul.f32 %v4870, %v664
        %v4890 = vmul.f32 %v4866, %v668
        %v4891 = vmul.f32 %v4862, %v672
        %v4892 = vmul.f32 %v4858, %v676
        %v4893 = vmul.f32 %v4854, %v680
        %v4894 = vmul.f32 %v4875, %v660
        %v4895 = vmul.f32 %v4871, %v664
        %v4896 = vmul.f32 %v4867, %v668
        %v4897 = vmul.f32 %v4863, %v672
        %v4898 = vmul.f32 %v4859, %v676
        %v4899 = vmul.f32 %v4855, %v680
        %v4900 = vpack.c.bf16 %v4882, %v4876
        %v4901 = vpack.c.bf16 %v4883, %v4877
        %v4902 = vpack.c.bf16 %v4884, %v4878
        %v4903 = vpack.c.bf16 %v4885, %v4879
        %v4904 = vpack.c.bf16 %v4886, %v4880
        %v4905 = vpack.c.bf16 %v4887, %v4881
        %v4906 = vpack.c.bf16 %v4894, %v4888
        %v4907 = vpack.c.bf16 %v4895, %v4889
        %v4908 = vpack.c.bf16 %v4896, %v4890
        %v4909 = vpack.c.bf16 %v4897, %v4891
        %v4910 = vpack.c.bf16 %v4898, %v4892
        %v4911 = vpack.c.bf16 %v4899, %v4893
        %4912 = vrot.lane.b32.xlu0 %v4568, 15
        %v4913 = vpop.permute.xlu0 %4912
        %4914 = vrot.lane.b32.xlu0 %v4572, 15
        %v4915 = vpop.permute.xlu0 %4914
        %4916 = vrot.lane.b32.xlu0 %v4578, 15
        %v4917 = vpop.permute.xlu0 %4916
        %4918 = vrot.lane.b32.xlu0 %v4582, 15
        %v4919 = vpop.permute.xlu0 %4918
        %4920 = vrot.lane.b32.xlu0 %v4570, 15
        %v4921 = vpop.permute.xlu0 %4920
        %4922 = vrot.lane.b32.xlu0 %v4574, 15
        %v4923 = vpop.permute.xlu0 %4922
        %4924 = vrot.lane.b32.xlu0 %v4580, 15
        %v4925 = vpop.permute.xlu0 %4924
        %4926 = vrot.lane.b32.xlu0 %v4584, 15
        %v4927 = vpop.permute.xlu0 %4926
        %4928 = vrot.lane.b32.xlu0 %v4621, 15
        %v4929 = vpop.permute.xlu0 %4928
        %4930 = vrot.lane.b32.xlu0 %v4625, 15
        %v4931 = vpop.permute.xlu0 %4930
        %4932 = vrot.lane.b32.xlu0 %v4631, 15
        %v4933 = vpop.permute.xlu0 %4932
        %4934 = vrot.lane.b32.xlu0 %v4635, 15
        %v4935 = vpop.permute.xlu0 %4934
        %4936 = vrot.lane.b32.xlu0 %v4623, 15
        %v4937 = vpop.permute.xlu0 %4936
        %4938 = vrot.lane.b32.xlu0 %v4627, 15
        %v4939 = vpop.permute.xlu0 %4938
        %4940 = vrot.lane.b32.xlu0 %v4633, 15
        %v4941 = vpop.permute.xlu0 %4940
        %4942 = vrot.lane.b32.xlu0 %v4637, 15
        %v4943 = vpop.permute.xlu0 %4942
        %4944 = vrot.lane.b32.xlu0 %v4674, 15
        %v4945 = vpop.permute.xlu0 %4944
        %4946 = vrot.lane.b32.xlu0 %v4678, 15
        %v4947 = vpop.permute.xlu0 %4946
        %4948 = vrot.lane.b32.xlu0 %v4684, 15
        %v4949 = vpop.permute.xlu0 %4948
        %4950 = vrot.lane.b32.xlu0 %v4688, 15
        %v4951 = vpop.permute.xlu0 %4950
        %4952 = vrot.lane.b32.xlu0 %v4676, 15
        %v4953 = vpop.permute.xlu0 %4952
        %4954 = vrot.lane.b32.xlu0 %v4680, 15
        %v4955 = vpop.permute.xlu0 %4954
        %4956 = vrot.lane.b32.xlu0 %v4686, 15
        %v4957 = vpop.permute.xlu0 %4956
        %4958 = vrot.lane.b32.xlu0 %v4690, 15
        %v4959 = vpop.permute.xlu0 %4958
        %v4960 = vsel %vm711, %v4945, %v4953
        %v4961 = vsel %vm711, %v4947, %v4955
        %v4962 = vsel %vm711, %v4949, %v4957
        %v4963 = vsel %vm711, %v4951, %v4959
        %v4964 = vsel %vm711, %v4937, %v4945
        %v4965 = vsel %vm711, %v4939, %v4947
        %v4966 = vsel %vm711, %v4941, %v4949
        %v4967 = vsel %vm711, %v4943, %v4951
        %v4968 = vsel %vm711, %v4929, %v4937
        %v4969 = vsel %vm711, %v4931, %v4939
        %v4970 = vsel %vm711, %v4933, %v4941
        %v4971 = vsel %vm711, %v4935, %v4943
        %v4972 = vsel %vm711, %v4921, %v4929
        %v4973 = vsel %vm711, %v4923, %v4931
        %v4974 = vsel %vm711, %v4925, %v4933
        %v4975 = vsel %vm711, %v4927, %v4935
        %v4976 = vsel %vm711, %v4913, %v4921
        %v4977 = vsel %vm711, %v4915, %v4923
        %v4978 = vsel %vm711, %v4917, %v4925
        %v4979 = vsel %vm711, %v4919, %v4927
        %v4980 = vsel %vm711, %v4953, %v4913
        %v4981 = vsel %vm711, %v4955, %v4915
        %v4982 = vsel %vm711, %v4957, %v4917
        %v4983 = vsel %vm711, %v4959, %v4919
        %v4984 = vmul.f32 %v4980, %v726
        %v4985 = vmul.f32 %v4976, %v730
        %v4986 = vmul.f32 %v4972, %v734
        %v4987 = vmul.f32 %v4968, %v738
        %v4988 = vmul.f32 %v4964, %v742
        %v4989 = vmul.f32 %v4960, %v746
        %v4990 = vmul.f32 %v4981, %v726
        %v4991 = vmul.f32 %v4977, %v730
        %v4992 = vmul.f32 %v4973, %v734
        %v4993 = vmul.f32 %v4969, %v738
        %v4994 = vmul.f32 %v4965, %v742
        %v4995 = vmul.f32 %v4961, %v746
        %v4996 = vmul.f32 %v4982, %v726
        %v4997 = vmul.f32 %v4978, %v730
        %v4998 = vmul.f32 %v4974, %v734
        %v4999 = vmul.f32 %v4970, %v738
        %v5000 = vmul.f32 %v4966, %v742
        %v5001 = vmul.f32 %v4962, %v746
        %v5002 = vmul.f32 %v4983, %v726
        %v5003 = vmul.f32 %v4979, %v730
        %v5004 = vmul.f32 %v4975, %v734
        %v5005 = vmul.f32 %v4971, %v738
        %v5006 = vmul.f32 %v4967, %v742
        %v5007 = vmul.f32 %v4963, %v746
        %v5008 = vpack.c.bf16 %v4990, %v4984
        %v5009 = vpack.c.bf16 %v4991, %v4985
        %v5010 = vpack.c.bf16 %v4992, %v4986
        %v5011 = vpack.c.bf16 %v4993, %v4987
        %v5012 = vpack.c.bf16 %v4994, %v4988
        %v5013 = vpack.c.bf16 %v4995, %v4989
        %v5014 = vpack.c.bf16 %v5002, %v4996
        %v5015 = vpack.c.bf16 %v5003, %v4997
        %v5016 = vpack.c.bf16 %v5004, %v4998
        %v5017 = vpack.c.bf16 %v5005, %v4999
        %v5018 = vpack.c.bf16 %v5006, %v5000
        %v5019 = vpack.c.bf16 %v5007, %v5001
        %5020 = vrot.lane.b32.xlu0 %v4568, 1
        %v5021 = vpop.permute.xlu0 %5020
        %5022 = vrot.lane.b32.xlu0 %v4572, 1
        %v5023 = vpop.permute.xlu0 %5022
        %5024 = vrot.lane.b32.xlu0 %v4578, 1
        %v5025 = vpop.permute.xlu0 %5024
        %5026 = vrot.lane.b32.xlu0 %v4582, 1
        %v5027 = vpop.permute.xlu0 %5026
        %5028 = vrot.lane.b32.xlu0 %v4570, 1
        %v5029 = vpop.permute.xlu0 %5028
        %5030 = vrot.lane.b32.xlu0 %v4574, 1
        %v5031 = vpop.permute.xlu0 %5030
        %5032 = vrot.lane.b32.xlu0 %v4580, 1
        %v5033 = vpop.permute.xlu0 %5032
        %5034 = vrot.lane.b32.xlu0 %v4584, 1
        %v5035 = vpop.permute.xlu0 %5034
        %5036 = vrot.lane.b32.xlu0 %v4621, 1
        %v5037 = vpop.permute.xlu0 %5036
        %5038 = vrot.lane.b32.xlu0 %v4625, 1
        %v5039 = vpop.permute.xlu0 %5038
        %5040 = vrot.lane.b32.xlu0 %v4631, 1
        %v5041 = vpop.permute.xlu0 %5040
        %5042 = vrot.lane.b32.xlu0 %v4635, 1
        %v5043 = vpop.permute.xlu0 %5042
        %5044 = vrot.lane.b32.xlu0 %v4623, 1
        %v5045 = vpop.permute.xlu0 %5044
        %5046 = vrot.lane.b32.xlu0 %v4627, 1
        %v5047 = vpop.permute.xlu0 %5046
        %5048 = vrot.lane.b32.xlu0 %v4633, 1
        %v5049 = vpop.permute.xlu0 %5048
        %5050 = vrot.lane.b32.xlu0 %v4637, 1
        %v5051 = vpop.permute.xlu0 %5050
        %5052 = vrot.lane.b32.xlu0 %v4674, 1
        %v5053 = vpop.permute.xlu0 %5052
        %5054 = vrot.lane.b32.xlu0 %v4678, 1
        %v5055 = vpop.permute.xlu0 %5054
        %5056 = vrot.lane.b32.xlu0 %v4684, 1
        %v5057 = vpop.permute.xlu0 %5056
        %5058 = vrot.lane.b32.xlu0 %v4688, 1
        %v5059 = vpop.permute.xlu0 %5058
        %5060 = vrot.lane.b32.xlu0 %v4676, 1
        %v5061 = vpop.permute.xlu0 %5060
        %5062 = vrot.lane.b32.xlu0 %v4680, 1
        %v5063 = vpop.permute.xlu0 %5062
        %5064 = vrot.lane.b32.xlu0 %v4686, 1
        %v5065 = vpop.permute.xlu0 %5064
        %5066 = vrot.lane.b32.xlu0 %v4690, 1
        %v5067 = vpop.permute.xlu0 %5066
        %v5068 = vsel %vm777, %v5053, %v5061
        %v5069 = vsel %vm777, %v5055, %v5063
        %v5070 = vsel %vm777, %v5057, %v5065
        %v5071 = vsel %vm777, %v5059, %v5067
        %v5072 = vsel %vm777, %v5045, %v5053
        %v5073 = vsel %vm777, %v5047, %v5055
        %v5074 = vsel %vm777, %v5049, %v5057
        %v5075 = vsel %vm777, %v5051, %v5059
        %v5076 = vsel %vm777, %v5037, %v5045
        %v5077 = vsel %vm777, %v5039, %v5047
        %v5078 = vsel %vm777, %v5041, %v5049
        %v5079 = vsel %vm777, %v5043, %v5051
        %v5080 = vsel %vm777, %v5029, %v5037
        %v5081 = vsel %vm777, %v5031, %v5039
        %v5082 = vsel %vm777, %v5033, %v5041
        %v5083 = vsel %vm777, %v5035, %v5043
        %v5084 = vsel %vm777, %v5021, %v5029
        %v5085 = vsel %vm777, %v5023, %v5031
        %v5086 = vsel %vm777, %v5025, %v5033
        %v5087 = vsel %vm777, %v5027, %v5035
        %v5088 = vsel %vm777, %v5061, %v5021
        %v5089 = vsel %vm777, %v5063, %v5023
        %v5090 = vsel %vm777, %v5065, %v5025
        %v5091 = vsel %vm777, %v5067, %v5027
        %v5092 = vmul.f32 %v5088, %v792
        %v5093 = vmul.f32 %v5084, %v796
        %v5094 = vmul.f32 %v5080, %v800
        %v5095 = vmul.f32 %v5076, %v804
        %v5096 = vmul.f32 %v5072, %v808
        %v5097 = vmul.f32 %v5068, %v812
        %v5098 = vmul.f32 %v5089, %v792
        %v5099 = vmul.f32 %v5085, %v796
        %v5100 = vmul.f32 %v5081, %v800
        %v5101 = vmul.f32 %v5077, %v804
        %v5102 = vmul.f32 %v5073, %v808
        %v5103 = vmul.f32 %v5069, %v812
        %v5104 = vmul.f32 %v5090, %v792
        %v5105 = vmul.f32 %v5086, %v796
        %v5106 = vmul.f32 %v5082, %v800
        %v5107 = vmul.f32 %v5078, %v804
        %v5108 = vmul.f32 %v5074, %v808
        %v5109 = vmul.f32 %v5070, %v812
        %v5110 = vmul.f32 %v5091, %v792
        %v5111 = vmul.f32 %v5087, %v796
        %v5112 = vmul.f32 %v5083, %v800
        %v5113 = vmul.f32 %v5079, %v804
        %v5114 = vmul.f32 %v5075, %v808
        %v5115 = vmul.f32 %v5071, %v812
        %v5116 = vpack.c.bf16 %v5098, %v5092
        %v5117 = vpack.c.bf16 %v5099, %v5093
        %v5118 = vpack.c.bf16 %v5100, %v5094
        %v5119 = vpack.c.bf16 %v5101, %v5095
        %v5120 = vpack.c.bf16 %v5102, %v5096
        %v5121 = vpack.c.bf16 %v5103, %v5097
        %v5122 = vpack.c.bf16 %v5110, %v5104
        %v5123 = vpack.c.bf16 %v5111, %v5105
        %v5124 = vpack.c.bf16 %v5112, %v5106
        %v5125 = vpack.c.bf16 %v5113, %v5107
        %v5126 = vpack.c.bf16 %v5114, %v5108
        %v5127 = vpack.c.bf16 %v5115, %v5109
        %v5128 = vpack.c.bf16 %v4572, %v4568
        %v5129 = vpack.c.bf16 %v4574, %v4570
        %v5130 = vpack.c.bf16 %v4625, %v4621
        %v5131 = vpack.c.bf16 %v4627, %v4623
        %v5132 = vpack.c.bf16 %v4678, %v4674
        %v5133 = vpack.c.bf16 %v4680, %v4676
        %v5134 = vpack.c.bf16 %v4582, %v4578
        %v5135 = vpack.c.bf16 %v4584, %v4580
        %v5136 = vpack.c.bf16 %v4635, %v4631
        %v5137 = vpack.c.bf16 %v4637, %v4633
        %v5138 = vpack.c.bf16 %v4688, %v4684
        %v5139 = vpack.c.bf16 %v4690, %v4686
        %5140 = vrot.lane.b32.xlu0 %v4568, 127
        %v5141 = vpop.permute.xlu0 %5140
        %5142 = vrot.lane.b32.xlu0 %v4572, 127
        %v5143 = vpop.permute.xlu0 %5142
        %5144 = vrot.lane.b32.xlu0 %v4578, 127
        %v5145 = vpop.permute.xlu0 %5144
        %5146 = vrot.lane.b32.xlu0 %v4582, 127
        %v5147 = vpop.permute.xlu0 %5146
        %5148 = vrot.lane.b32.xlu0 %v4570, 127
        %v5149 = vpop.permute.xlu0 %5148
        %5150 = vrot.lane.b32.xlu0 %v4574, 127
        %v5151 = vpop.permute.xlu0 %5150
        %5152 = vrot.lane.b32.xlu0 %v4580, 127
        %v5153 = vpop.permute.xlu0 %5152
        %5154 = vrot.lane.b32.xlu0 %v4584, 127
        %v5155 = vpop.permute.xlu0 %5154
        %5156 = vrot.lane.b32.xlu0 %v4621, 127
        %v5157 = vpop.permute.xlu0 %5156
        %5158 = vrot.lane.b32.xlu0 %v4625, 127
        %v5159 = vpop.permute.xlu0 %5158
        %5160 = vrot.lane.b32.xlu0 %v4631, 127
        %v5161 = vpop.permute.xlu0 %5160
        %5162 = vrot.lane.b32.xlu0 %v4635, 127
        %v5163 = vpop.permute.xlu0 %5162
        %5164 = vrot.lane.b32.xlu0 %v4623, 127
        %v5165 = vpop.permute.xlu0 %5164
        %5166 = vrot.lane.b32.xlu0 %v4627, 127
        %v5167 = vpop.permute.xlu0 %5166
        %5168 = vrot.lane.b32.xlu0 %v4633, 127
        %v5169 = vpop.permute.xlu0 %5168
        %5170 = vrot.lane.b32.xlu0 %v4637, 127
        %v5171 = vpop.permute.xlu0 %5170
        %5172 = vrot.lane.b32.xlu0 %v4674, 127
        %v5173 = vpop.permute.xlu0 %5172
        %5174 = vrot.lane.b32.xlu0 %v4678, 127
        %v5175 = vpop.permute.xlu0 %5174
        %5176 = vrot.lane.b32.xlu0 %v4684, 127
        %v5177 = vpop.permute.xlu0 %5176
        %5178 = vrot.lane.b32.xlu0 %v4688, 127
        %v5179 = vpop.permute.xlu0 %5178
        %5180 = vrot.lane.b32.xlu0 %v4676, 127
        %v5181 = vpop.permute.xlu0 %5180
        %5182 = vrot.lane.b32.xlu0 %v4680, 127
        %v5183 = vpop.permute.xlu0 %5182
        %5184 = vrot.lane.b32.xlu0 %v4686, 127
        %v5185 = vpop.permute.xlu0 %5184
        %5186 = vrot.lane.b32.xlu0 %v4690, 127
        %v5187 = vpop.permute.xlu0 %5186
        %v5188 = vsel %vm849, %v5173, %v5181
        %v5189 = vsel %vm849, %v5175, %v5183
        %v5190 = vsel %vm849, %v5177, %v5185
        %v5191 = vsel %vm849, %v5179, %v5187
        %v5192 = vsel %vm849, %v5165, %v5173
        %v5193 = vsel %vm849, %v5167, %v5175
        %v5194 = vsel %vm849, %v5169, %v5177
        %v5195 = vsel %vm849, %v5171, %v5179
        %v5196 = vsel %vm849, %v5157, %v5165
        %v5197 = vsel %vm849, %v5159, %v5167
        %v5198 = vsel %vm849, %v5161, %v5169
        %v5199 = vsel %vm849, %v5163, %v5171
        %v5200 = vsel %vm849, %v5149, %v5157
        %v5201 = vsel %vm849, %v5151, %v5159
        %v5202 = vsel %vm849, %v5153, %v5161
        %v5203 = vsel %vm849, %v5155, %v5163
        %v5204 = vsel %vm849, %v5141, %v5149
        %v5205 = vsel %vm849, %v5143, %v5151
        %v5206 = vsel %vm849, %v5145, %v5153
        %v5207 = vsel %vm849, %v5147, %v5155
        %v5208 = vsel %vm849, %v5181, %v5141
        %v5209 = vsel %vm849, %v5183, %v5143
        %v5210 = vsel %vm849, %v5185, %v5145
        %v5211 = vsel %vm849, %v5187, %v5147
        %v5212 = vmul.f32 %v5204, %v864
        %v5213 = vmul.f32 %v5200, %v868
        %v5214 = vmul.f32 %v5196, %v872
        %v5215 = vmul.f32 %v5192, %v876
        %v5216 = vmul.f32 %v5188, %v880
        %v5217 = vmul.f32 %v5208, %v884
        %v5218 = vmul.f32 %v5205, %v864
        %v5219 = vmul.f32 %v5201, %v868
        %v5220 = vmul.f32 %v5197, %v872
        %v5221 = vmul.f32 %v5193, %v876
        %v5222 = vmul.f32 %v5189, %v880
        %v5223 = vmul.f32 %v5209, %v884
        %v5224 = vmul.f32 %v5206, %v864
        %v5225 = vmul.f32 %v5202, %v868
        %v5226 = vmul.f32 %v5198, %v872
        %v5227 = vmul.f32 %v5194, %v876
        %v5228 = vmul.f32 %v5190, %v880
        %v5229 = vmul.f32 %v5210, %v884
        %v5230 = vmul.f32 %v5207, %v864
        %v5231 = vmul.f32 %v5203, %v868
        %v5232 = vmul.f32 %v5199, %v872
        %v5233 = vmul.f32 %v5195, %v876
        %v5234 = vmul.f32 %v5191, %v880
        %v5235 = vmul.f32 %v5211, %v884
        %v5236 = vpack.c.bf16 %v5218, %v5212
        %v5237 = vpack.c.bf16 %v5219, %v5213
        %v5238 = vpack.c.bf16 %v5220, %v5214
        %v5239 = vpack.c.bf16 %v5221, %v5215
        %v5240 = vpack.c.bf16 %v5222, %v5216
        %v5241 = vpack.c.bf16 %v5223, %v5217
        %v5242 = vpack.c.bf16 %v5230, %v5224
        %v5243 = vpack.c.bf16 %v5231, %v5225
        %v5244 = vpack.c.bf16 %v5232, %v5226
        %v5245 = vpack.c.bf16 %v5233, %v5227
        %v5246 = vpack.c.bf16 %v5234, %v5228
        %v5247 = vpack.c.bf16 %v5235, %v5229
        %5248 = vrot.lane.b32.xlu0 %v4568, 113
        %v5249 = vpop.permute.xlu0 %5248
        %5250 = vrot.lane.b32.xlu0 %v4572, 113
        %v5251 = vpop.permute.xlu0 %5250
        %5252 = vrot.lane.b32.xlu0 %v4578, 113
        %v5253 = vpop.permute.xlu0 %5252
        %5254 = vrot.lane.b32.xlu0 %v4582, 113
        %v5255 = vpop.permute.xlu0 %5254
        %5256 = vrot.lane.b32.xlu0 %v4570, 113
        %v5257 = vpop.permute.xlu0 %5256
        %5258 = vrot.lane.b32.xlu0 %v4574, 113
        %v5259 = vpop.permute.xlu0 %5258
        %5260 = vrot.lane.b32.xlu0 %v4580, 113
        %v5261 = vpop.permute.xlu0 %5260
        %5262 = vrot.lane.b32.xlu0 %v4584, 113
        %v5263 = vpop.permute.xlu0 %5262
        %5264 = vrot.lane.b32.xlu0 %v4621, 113
        %v5265 = vpop.permute.xlu0 %5264
        %5266 = vrot.lane.b32.xlu0 %v4625, 113
        %v5267 = vpop.permute.xlu0 %5266
        %5268 = vrot.lane.b32.xlu0 %v4631, 113
        %v5269 = vpop.permute.xlu0 %5268
        %5270 = vrot.lane.b32.xlu0 %v4635, 113
        %v5271 = vpop.permute.xlu0 %5270
        %5272 = vrot.lane.b32.xlu0 %v4623, 113
        %v5273 = vpop.permute.xlu0 %5272
        %5274 = vrot.lane.b32.xlu0 %v4627, 113
        %v5275 = vpop.permute.xlu0 %5274
        %5276 = vrot.lane.b32.xlu0 %v4633, 113
        %v5277 = vpop.permute.xlu0 %5276
        %5278 = vrot.lane.b32.xlu0 %v4637, 113
        %v5279 = vpop.permute.xlu0 %5278
        %5280 = vrot.lane.b32.xlu0 %v4674, 113
        %v5281 = vpop.permute.xlu0 %5280
        %5282 = vrot.lane.b32.xlu0 %v4678, 113
        %v5283 = vpop.permute.xlu0 %5282
        %5284 = vrot.lane.b32.xlu0 %v4684, 113
        %v5285 = vpop.permute.xlu0 %5284
        %5286 = vrot.lane.b32.xlu0 %v4688, 113
        %v5287 = vpop.permute.xlu0 %5286
        %5288 = vrot.lane.b32.xlu0 %v4676, 113
        %v5289 = vpop.permute.xlu0 %5288
        %5290 = vrot.lane.b32.xlu0 %v4680, 113
        %v5291 = vpop.permute.xlu0 %5290
        %5292 = vrot.lane.b32.xlu0 %v4686, 113
        %v5293 = vpop.permute.xlu0 %5292
        %5294 = vrot.lane.b32.xlu0 %v4690, 113
        %v5295 = vpop.permute.xlu0 %5294
        %v5296 = vsel %vm915, %v5281, %v5289
        %v5297 = vsel %vm915, %v5283, %v5291
        %v5298 = vsel %vm915, %v5285, %v5293
        %v5299 = vsel %vm915, %v5287, %v5295
        %v5300 = vsel %vm915, %v5273, %v5281
        %v5301 = vsel %vm915, %v5275, %v5283
        %v5302 = vsel %vm915, %v5277, %v5285
        %v5303 = vsel %vm915, %v5279, %v5287
        %v5304 = vsel %vm915, %v5265, %v5273
        %v5305 = vsel %vm915, %v5267, %v5275
        %v5306 = vsel %vm915, %v5269, %v5277
        %v5307 = vsel %vm915, %v5271, %v5279
        %v5308 = vsel %vm915, %v5257, %v5265
        %v5309 = vsel %vm915, %v5259, %v5267
        %v5310 = vsel %vm915, %v5261, %v5269
        %v5311 = vsel %vm915, %v5263, %v5271
        %v5312 = vsel %vm915, %v5249, %v5257
        %v5313 = vsel %vm915, %v5251, %v5259
        %v5314 = vsel %vm915, %v5253, %v5261
        %v5315 = vsel %vm915, %v5255, %v5263
        %v5316 = vsel %vm915, %v5289, %v5249
        %v5317 = vsel %vm915, %v5291, %v5251
        %v5318 = vsel %vm915, %v5293, %v5253
        %v5319 = vsel %vm915, %v5295, %v5255
        %v5320 = vmul.f32 %v5312, %v930
        %v5321 = vmul.f32 %v5308, %v934
        %v5322 = vmul.f32 %v5304, %v938
        %v5323 = vmul.f32 %v5300, %v942
        %v5324 = vmul.f32 %v5296, %v946
        %v5325 = vmul.f32 %v5316, %v950
        %v5326 = vmul.f32 %v5313, %v930
        %v5327 = vmul.f32 %v5309, %v934
        %v5328 = vmul.f32 %v5305, %v938
        %v5329 = vmul.f32 %v5301, %v942
        %v5330 = vmul.f32 %v5297, %v946
        %v5331 = vmul.f32 %v5317, %v950
        %v5332 = vmul.f32 %v5314, %v930
        %v5333 = vmul.f32 %v5310, %v934
        %v5334 = vmul.f32 %v5306, %v938
        %v5335 = vmul.f32 %v5302, %v942
        %v5336 = vmul.f32 %v5298, %v946
        %v5337 = vmul.f32 %v5318, %v950
        %v5338 = vmul.f32 %v5315, %v930
        %v5339 = vmul.f32 %v5311, %v934
        %v5340 = vmul.f32 %v5307, %v938
        %v5341 = vmul.f32 %v5303, %v942
        %v5342 = vmul.f32 %v5299, %v946
        %v5343 = vmul.f32 %v5319, %v950
        %v5344 = vpack.c.bf16 %v5326, %v5320
        %v5345 = vpack.c.bf16 %v5327, %v5321
        %v5346 = vpack.c.bf16 %v5328, %v5322
        %v5347 = vpack.c.bf16 %v5329, %v5323
        %v5348 = vpack.c.bf16 %v5330, %v5324
        %v5349 = vpack.c.bf16 %v5331, %v5325
        %v5350 = vpack.c.bf16 %v5338, %v5332
        %v5351 = vpack.c.bf16 %v5339, %v5333
        %v5352 = vpack.c.bf16 %v5340, %v5334
        %v5353 = vpack.c.bf16 %v5341, %v5335
        %v5354 = vpack.c.bf16 %v5342, %v5336
        %v5355 = vpack.c.bf16 %v5343, %v5337
        %5356 = vrot.lane.b32.xlu0 %v4568, 112
        %v5357 = vpop.permute.xlu0 %5356
        %5358 = vrot.lane.b32.xlu0 %v4572, 112
        %v5359 = vpop.permute.xlu0 %5358
        %5360 = vrot.lane.b32.xlu0 %v4578, 112
        %v5361 = vpop.permute.xlu0 %5360
        %5362 = vrot.lane.b32.xlu0 %v4582, 112
        %v5363 = vpop.permute.xlu0 %5362
        %5364 = vrot.lane.b32.xlu0 %v4570, 112
        %v5365 = vpop.permute.xlu0 %5364
        %5366 = vrot.lane.b32.xlu0 %v4574, 112
        %v5367 = vpop.permute.xlu0 %5366
        %5368 = vrot.lane.b32.xlu0 %v4580, 112
        %v5369 = vpop.permute.xlu0 %5368
        %5370 = vrot.lane.b32.xlu0 %v4584, 112
        %v5371 = vpop.permute.xlu0 %5370
        %5372 = vrot.lane.b32.xlu0 %v4621, 112
        %v5373 = vpop.permute.xlu0 %5372
        %5374 = vrot.lane.b32.xlu0 %v4625, 112
        %v5375 = vpop.permute.xlu0 %5374
        %5376 = vrot.lane.b32.xlu0 %v4631, 112
        %v5377 = vpop.permute.xlu0 %5376
        %5378 = vrot.lane.b32.xlu0 %v4635, 112
        %v5379 = vpop.permute.xlu0 %5378
        %5380 = vrot.lane.b32.xlu0 %v4623, 112
        %v5381 = vpop.permute.xlu0 %5380
        %5382 = vrot.lane.b32.xlu0 %v4627, 112
        %v5383 = vpop.permute.xlu0 %5382
        %5384 = vrot.lane.b32.xlu0 %v4633, 112
        %v5385 = vpop.permute.xlu0 %5384
        %5386 = vrot.lane.b32.xlu0 %v4637, 112
        %v5387 = vpop.permute.xlu0 %5386
        %5388 = vrot.lane.b32.xlu0 %v4674, 112
        %v5389 = vpop.permute.xlu0 %5388
        %5390 = vrot.lane.b32.xlu0 %v4678, 112
        %v5391 = vpop.permute.xlu0 %5390
        %5392 = vrot.lane.b32.xlu0 %v4684, 112
        %v5393 = vpop.permute.xlu0 %5392
        %5394 = vrot.lane.b32.xlu0 %v4688, 112
        %v5395 = vpop.permute.xlu0 %5394
        %5396 = vrot.lane.b32.xlu0 %v4676, 112
        %v5397 = vpop.permute.xlu0 %5396
        %5398 = vrot.lane.b32.xlu0 %v4680, 112
        %v5399 = vpop.permute.xlu0 %5398
        %5400 = vrot.lane.b32.xlu0 %v4686, 112
        %v5401 = vpop.permute.xlu0 %5400
        %5402 = vrot.lane.b32.xlu0 %v4690, 112
        %v5403 = vpop.permute.xlu0 %5402
        %v5404 = vsel %vm981, %v5389, %v5397
        %v5405 = vsel %vm981, %v5391, %v5399
        %v5406 = vsel %vm981, %v5393, %v5401
        %v5407 = vsel %vm981, %v5395, %v5403
        %v5408 = vsel %vm981, %v5381, %v5389
        %v5409 = vsel %vm981, %v5383, %v5391
        %v5410 = vsel %vm981, %v5385, %v5393
        %v5411 = vsel %vm981, %v5387, %v5395
        %v5412 = vsel %vm981, %v5373, %v5381
        %v5413 = vsel %vm981, %v5375, %v5383
        %v5414 = vsel %vm981, %v5377, %v5385
        %v5415 = vsel %vm981, %v5379, %v5387
        %v5416 = vsel %vm981, %v5365, %v5373
        %v5417 = vsel %vm981, %v5367, %v5375
        %v5418 = vsel %vm981, %v5369, %v5377
        %v5419 = vsel %vm981, %v5371, %v5379
        %v5420 = vsel %vm981, %v5357, %v5365
        %v5421 = vsel %vm981, %v5359, %v5367
        %v5422 = vsel %vm981, %v5361, %v5369
        %v5423 = vsel %vm981, %v5363, %v5371
        %v5424 = vsel %vm981, %v5397, %v5357
        %v5425 = vsel %vm981, %v5399, %v5359
        %v5426 = vsel %vm981, %v5401, %v5361
        %v5427 = vsel %vm981, %v5403, %v5363
        %v5428 = vmul.f32 %v5420, %v996
        %v5429 = vmul.f32 %v5416, %v1000
        %v5430 = vmul.f32 %v5412, %v1004
        %v5431 = vmul.f32 %v5408, %v1008
        %v5432 = vmul.f32 %v5404, %v1012
        %v5433 = vmul.f32 %v5424, %v1016
        %v5434 = vmul.f32 %v5421, %v996
        %v5435 = vmul.f32 %v5417, %v1000
        %v5436 = vmul.f32 %v5413, %v1004
        %v5437 = vmul.f32 %v5409, %v1008
        %v5438 = vmul.f32 %v5405, %v1012
        %v5439 = vmul.f32 %v5425, %v1016
        %v5440 = vmul.f32 %v5422, %v996
        %v5441 = vmul.f32 %v5418, %v1000
        %v5442 = vmul.f32 %v5414, %v1004
        %v5443 = vmul.f32 %v5410, %v1008
        %v5444 = vmul.f32 %v5406, %v1012
        %v5445 = vmul.f32 %v5426, %v1016
        %v5446 = vmul.f32 %v5423, %v996
        %v5447 = vmul.f32 %v5419, %v1000
        %v5448 = vmul.f32 %v5415, %v1004
        %v5449 = vmul.f32 %v5411, %v1008
        %v5450 = vmul.f32 %v5407, %v1012
        %v5451 = vmul.f32 %v5427, %v1016
        %v5452 = vpack.c.bf16 %v5434, %v5428
        %v5453 = vpack.c.bf16 %v5435, %v5429
        %v5454 = vpack.c.bf16 %v5436, %v5430
        %v5455 = vpack.c.bf16 %v5437, %v5431
        %v5456 = vpack.c.bf16 %v5438, %v5432
        %v5457 = vpack.c.bf16 %v5439, %v5433
        %v5458 = vpack.c.bf16 %v5446, %v5440
        %v5459 = vpack.c.bf16 %v5447, %v5441
        %v5460 = vpack.c.bf16 %v5448, %v5442
        %v5461 = vpack.c.bf16 %v5449, %v5443
        %v5462 = vpack.c.bf16 %v5450, %v5444
        %v5463 = vpack.c.bf16 %v5451, %v5445
        %5464 = vrot.lane.b32.xlu0 %v4568, 111
        %v5465 = vpop.permute.xlu0 %5464
        %5466 = vrot.lane.b32.xlu0 %v4572, 111
        %v5467 = vpop.permute.xlu0 %5466
        %5468 = vrot.lane.b32.xlu0 %v4578, 111
        %v5469 = vpop.permute.xlu0 %5468
        %5470 = vrot.lane.b32.xlu0 %v4582, 111
        %v5471 = vpop.permute.xlu0 %5470
        %5472 = vrot.lane.b32.xlu0 %v4570, 111
        %v5473 = vpop.permute.xlu0 %5472
        %5474 = vrot.lane.b32.xlu0 %v4574, 111
        %v5475 = vpop.permute.xlu0 %5474
        %5476 = vrot.lane.b32.xlu0 %v4580, 111
        %v5477 = vpop.permute.xlu0 %5476
        %5478 = vrot.lane.b32.xlu0 %v4584, 111
        %v5479 = vpop.permute.xlu0 %5478
        %5480 = vrot.lane.b32.xlu0 %v4621, 111
        %v5481 = vpop.permute.xlu0 %5480
        %5482 = vrot.lane.b32.xlu0 %v4625, 111
        %v5483 = vpop.permute.xlu0 %5482
        %5484 = vrot.lane.b32.xlu0 %v4631, 111
        %v5485 = vpop.permute.xlu0 %5484
        %5486 = vrot.lane.b32.xlu0 %v4635, 111
        %v5487 = vpop.permute.xlu0 %5486
        %5488 = vrot.lane.b32.xlu0 %v4623, 111
        %v5489 = vpop.permute.xlu0 %5488
        %5490 = vrot.lane.b32.xlu0 %v4627, 111
        %v5491 = vpop.permute.xlu0 %5490
        %5492 = vrot.lane.b32.xlu0 %v4633, 111
        %v5493 = vpop.permute.xlu0 %5492
        %5494 = vrot.lane.b32.xlu0 %v4637, 111
        %v5495 = vpop.permute.xlu0 %5494
        %5496 = vrot.lane.b32.xlu0 %v4674, 111
        %v5497 = vpop.permute.xlu0 %5496
        %5498 = vrot.lane.b32.xlu0 %v4678, 111
        %v5499 = vpop.permute.xlu0 %5498
        %5500 = vrot.lane.b32.xlu0 %v4684, 111
        %v5501 = vpop.permute.xlu0 %5500
        %5502 = vrot.lane.b32.xlu0 %v4688, 111
        %v5503 = vpop.permute.xlu0 %5502
        %5504 = vrot.lane.b32.xlu0 %v4676, 111
        %v5505 = vpop.permute.xlu0 %5504
        %5506 = vrot.lane.b32.xlu0 %v4680, 111
        %v5507 = vpop.permute.xlu0 %5506
        %5508 = vrot.lane.b32.xlu0 %v4686, 111
        %v5509 = vpop.permute.xlu0 %5508
        %5510 = vrot.lane.b32.xlu0 %v4690, 111
        %v5511 = vpop.permute.xlu0 %5510
        %v5512 = vsel %vm1047, %v5497, %v5505
        %v5513 = vsel %vm1047, %v5499, %v5507
        %v5514 = vsel %vm1047, %v5501, %v5509
        %v5515 = vsel %vm1047, %v5503, %v5511
        %v5516 = vsel %vm1047, %v5489, %v5497
        %v5517 = vsel %vm1047, %v5491, %v5499
        %v5518 = vsel %vm1047, %v5493, %v5501
        %v5519 = vsel %vm1047, %v5495, %v5503
        %v5520 = vsel %vm1047, %v5481, %v5489
        %v5521 = vsel %vm1047, %v5483, %v5491
        %v5522 = vsel %vm1047, %v5485, %v5493
        %v5523 = vsel %vm1047, %v5487, %v5495
        %v5524 = vsel %vm1047, %v5473, %v5481
        %v5525 = vsel %vm1047, %v5475, %v5483
        %v5526 = vsel %vm1047, %v5477, %v5485
        %v5527 = vsel %vm1047, %v5479, %v5487
        %v5528 = vsel %vm1047, %v5465, %v5473
        %v5529 = vsel %vm1047, %v5467, %v5475
        %v5530 = vsel %vm1047, %v5469, %v5477
        %v5531 = vsel %vm1047, %v5471, %v5479
        %v5532 = vsel %vm1047, %v5505, %v5465
        %v5533 = vsel %vm1047, %v5507, %v5467
        %v5534 = vsel %vm1047, %v5509, %v5469
        %v5535 = vsel %vm1047, %v5511, %v5471
        %v5536 = vmul.f32 %v5528, %v1062
        %v5537 = vmul.f32 %v5524, %v1066
        %v5538 = vmul.f32 %v5520, %v1070
        %v5539 = vmul.f32 %v5516, %v1074
        %v5540 = vmul.f32 %v5512, %v1078
        %v5541 = vmul.f32 %v5532, %v1082
        %v5542 = vmul.f32 %v5529, %v1062
        %v5543 = vmul.f32 %v5525, %v1066
        %v5544 = vmul.f32 %v5521, %v1070
        %v5545 = vmul.f32 %v5517, %v1074
        %v5546 = vmul.f32 %v5513, %v1078
        %v5547 = vmul.f32 %v5533, %v1082
        %v5548 = vmul.f32 %v5530, %v1062
        %v5549 = vmul.f32 %v5526, %v1066
        %v5550 = vmul.f32 %v5522, %v1070
        %v5551 = vmul.f32 %v5518, %v1074
        %v5552 = vmul.f32 %v5514, %v1078
        %v5553 = vmul.f32 %v5534, %v1082
        %v5554 = vmul.f32 %v5531, %v1062
        %v5555 = vmul.f32 %v5527, %v1066
        %v5556 = vmul.f32 %v5523, %v1070
        %v5557 = vmul.f32 %v5519, %v1074
        %v5558 = vmul.f32 %v5515, %v1078
        %v5559 = vmul.f32 %v5535, %v1082
        %v5560 = vpack.c.bf16 %v5542, %v5536
        %v5561 = vpack.c.bf16 %v5543, %v5537
        %v5562 = vpack.c.bf16 %v5544, %v5538
        %v5563 = vpack.c.bf16 %v5545, %v5539
        %v5564 = vpack.c.bf16 %v5546, %v5540
        %v5565 = vpack.c.bf16 %v5547, %v5541
        %v5566 = vpack.c.bf16 %v5554, %v5548
        %v5567 = vpack.c.bf16 %v5555, %v5549
        %v5568 = vpack.c.bf16 %v5556, %v5550
        %v5569 = vpack.c.bf16 %v5557, %v5551
        %v5570 = vpack.c.bf16 %v5558, %v5552
        %v5571 = vpack.c.bf16 %v5559, %v5553
        %v5572 = vld [vmem:[%s6] sm:$0xff]
        %v5573 = vld [vmem:[%s6 + $0x8] sm:$0xff]
        %5574 = vrot.lane.b32.xlu0 %v2259, 17
        %v5575 = vpop.permute.xlu0 %5574
        %5576 = vrot.lane.b32.xlu0 %v2265, 17
        %v5577 = vpop.permute.xlu0 %5576
        %5578 = vrot.lane.b32.xlu0 %v2260, 17
        %v5579 = vpop.permute.xlu0 %5578
        %5580 = vrot.lane.b32.xlu0 %v2266, 17
        %v5581 = vpop.permute.xlu0 %5580
        %5582 = vrot.lane.b32.xlu0 %v2261, 17
        %v5583 = vpop.permute.xlu0 %5582
        %5584 = vrot.lane.b32.xlu0 %v2267, 17
        %v5585 = vpop.permute.xlu0 %5584
        %5586 = vrot.lane.b32.xlu0 %v2262, 17
        %v5587 = vpop.permute.xlu0 %5586
        %5588 = vrot.lane.b32.xlu0 %v2268, 17
        %v5589 = vpop.permute.xlu0 %5588
        %5590 = vrot.lane.b32.xlu0 %v2263, 17
        %v5591 = vpop.permute.xlu0 %5590
        %5592 = vrot.lane.b32.xlu0 %v2269, 17
        %v5593 = vpop.permute.xlu0 %5592
        %5594 = vrot.lane.b32.xlu0 %v2264, 17
        %v5595 = vpop.permute.xlu0 %5594
        %5596 = vrot.lane.b32.xlu0 %v2270, 17
        %v5597 = vpop.permute.xlu0 %5596
        %v5598 = vsel %vm580, %v5591, %v5595
        %v5599 = vsel %vm580, %v5593, %v5597
        %v5600 = vsel %vm580, %v5587, %v5591
        %v5601 = vsel %vm580, %v5589, %v5593
        %v5602 = vsel %vm580, %v5583, %v5587
        %v5603 = vsel %vm580, %v5585, %v5589
        %v5604 = vsel %vm580, %v5579, %v5583
        %v5605 = vsel %vm580, %v5581, %v5585
        %v5606 = vsel %vm580, %v5575, %v5579
        %v5607 = vsel %vm580, %v5577, %v5581
        %v5608 = vsel %vm580, %v5595, %v5575
        %v5609 = vsel %vm580, %v5597, %v5577
        %v5610 = vmul.f32 %v5608, %v594
        %v5611 = vmul.f32 %v5606, %v598
        %v5612 = vmul.f32 %v5604, %v602
        %v5613 = vmul.f32 %v5602, %v606
        %v5614 = vmul.f32 %v5600, %v610
        %v5615 = vmul.f32 %v5598, %v614
        %v5616 = vmul.f32 %v5609, %v594
        %v5617 = vmul.f32 %v5607, %v598
        %v5618 = vmul.f32 %v5605, %v602
        %v5619 = vmul.f32 %v5603, %v606
        %v5620 = vmul.f32 %v5601, %v610
        %v5621 = vmul.f32 %v5599, %v614
        %v5622 = vpack.c.bf16 %v5616, %v5610
        %v5623 = vpack.c.bf16 %v5617, %v5611
        %v5624 = vpack.c.bf16 %v5618, %v5612
        %v5625 = vpack.c.bf16 %v5619, %v5613
        %v5626 = vpack.c.bf16 %v5620, %v5614
        %v5627 = vpack.c.bf16 %v5621, %v5615
        %5628 = vrot.lane.b32.xlu0 %v2259, 16
        %v5629 = vpop.permute.xlu0 %5628
        %5630 = vrot.lane.b32.xlu0 %v2265, 16
        %v5631 = vpop.permute.xlu0 %5630
        %5632 = vrot.lane.b32.xlu0 %v2260, 16
        %v5633 = vpop.permute.xlu0 %5632
        %5634 = vrot.lane.b32.xlu0 %v2266, 16
        %v5635 = vpop.permute.xlu0 %5634
        %5636 = vrot.lane.b32.xlu0 %v2261, 16
        %v5637 = vpop.permute.xlu0 %5636
        %5638 = vrot.lane.b32.xlu0 %v2267, 16
        %v5639 = vpop.permute.xlu0 %5638
        %5640 = vrot.lane.b32.xlu0 %v2262, 16
        %v5641 = vpop.permute.xlu0 %5640
        %5642 = vrot.lane.b32.xlu0 %v2268, 16
        %v5643 = vpop.permute.xlu0 %5642
        %5644 = vrot.lane.b32.xlu0 %v2263, 16
        %v5645 = vpop.permute.xlu0 %5644
        %5646 = vrot.lane.b32.xlu0 %v2269, 16
        %v5647 = vpop.permute.xlu0 %5646
        %5648 = vrot.lane.b32.xlu0 %v2264, 16
        %v5649 = vpop.permute.xlu0 %5648
        %5650 = vrot.lane.b32.xlu0 %v2270, 16
        %v5651 = vpop.permute.xlu0 %5650
        %v5652 = vsel %vm645, %v5645, %v5649
        %v5653 = vsel %vm645, %v5647, %v5651
        %v5654 = vsel %vm645, %v5641, %v5645
        %v5655 = vsel %vm645, %v5643, %v5647
        %v5656 = vsel %vm645, %v5637, %v5641
        %v5657 = vsel %vm645, %v5639, %v5643
        %v5658 = vsel %vm645, %v5633, %v5637
        %v5659 = vsel %vm645, %v5635, %v5639
        %v5660 = vsel %vm645, %v5629, %v5633
        %v5661 = vsel %vm645, %v5631, %v5635
        %v5662 = vsel %vm645, %v5649, %v5629
        %v5663 = vsel %vm645, %v5651, %v5631
        %v5664 = vmul.f32 %v5662, %v660
        %v5665 = vmul.f32 %v5660, %v664
        %v5666 = vmul.f32 %v5658, %v668
        %v5667 = vmul.f32 %v5656, %v672
        %v5668 = vmul.f32 %v5654, %v676
        %v5669 = vmul.f32 %v5652, %v680
        %v5670 = vmul.f32 %v5663, %v660
        %v5671 = vmul.f32 %v5661, %v664
        %v5672 = vmul.f32 %v5659, %v668
        %v5673 = vmul.f32 %v5657, %v672
        %v5674 = vmul.f32 %v5655, %v676
        %v5675 = vmul.f32 %v5653, %v680
        %v5676 = vpack.c.bf16 %v5670, %v5664
        %v5677 = vpack.c.bf16 %v5671, %v5665
        %v5678 = vpack.c.bf16 %v5672, %v5666
        %v5679 = vpack.c.bf16 %v5673, %v5667
        %v5680 = vpack.c.bf16 %v5674, %v5668
        %v5681 = vpack.c.bf16 %v5675, %v5669
        %5682 = vrot.lane.b32.xlu0 %v2259, 15
        %v5683 = vpop.permute.xlu0 %5682
        %5684 = vrot.lane.b32.xlu0 %v2265, 15
        %v5685 = vpop.permute.xlu0 %5684
        %5686 = vrot.lane.b32.xlu0 %v2260, 15
        %v5687 = vpop.permute.xlu0 %5686
        %5688 = vrot.lane.b32.xlu0 %v2266, 15
        %v5689 = vpop.permute.xlu0 %5688
        %5690 = vrot.lane.b32.xlu0 %v2261, 15
        %v5691 = vpop.permute.xlu0 %5690
        %5692 = vrot.lane.b32.xlu0 %v2267, 15
        %v5693 = vpop.permute.xlu0 %5692
        %5694 = vrot.lane.b32.xlu0 %v2262, 15
        %v5695 = vpop.permute.xlu0 %5694
        %5696 = vrot.lane.b32.xlu0 %v2268, 15
        %v5697 = vpop.permute.xlu0 %5696
        %5698 = vrot.lane.b32.xlu0 %v2263, 15
        %v5699 = vpop.permute.xlu0 %5698
        %5700 = vrot.lane.b32.xlu0 %v2269, 15
        %v5701 = vpop.permute.xlu0 %5700
        %5702 = vrot.lane.b32.xlu0 %v2264, 15
        %v5703 = vpop.permute.xlu0 %5702
        %5704 = vrot.lane.b32.xlu0 %v2270, 15
        %v5705 = vpop.permute.xlu0 %5704
        %v5706 = vsel %vm711, %v5699, %v5703
        %v5707 = vsel %vm711, %v5701, %v5705
        %v5708 = vsel %vm711, %v5695, %v5699
        %v5709 = vsel %vm711, %v5697, %v5701
        %v5710 = vsel %vm711, %v5691, %v5695
        %v5711 = vsel %vm711, %v5693, %v5697
        %v5712 = vsel %vm711, %v5687, %v5691
        %v5713 = vsel %vm711, %v5689, %v5693
        %v5714 = vsel %vm711, %v5683, %v5687
        %v5715 = vsel %vm711, %v5685, %v5689
        %v5716 = vsel %vm711, %v5703, %v5683
        %v5717 = vsel %vm711, %v5705, %v5685
        %v5718 = vmul.f32 %v5716, %v726
        %v5719 = vmul.f32 %v5714, %v730
        %v5720 = vmul.f32 %v5712, %v734
        %v5721 = vmul.f32 %v5710, %v738
        %v5722 = vmul.f32 %v5708, %v742
        %v5723 = vmul.f32 %v5706, %v746
        %v5724 = vmul.f32 %v5717, %v726
        %v5725 = vmul.f32 %v5715, %v730
        %v5726 = vmul.f32 %v5713, %v734
        %v5727 = vmul.f32 %v5711, %v738
        %v5728 = vmul.f32 %v5709, %v742
        %v5729 = vmul.f32 %v5707, %v746
        %v5730 = vpack.c.bf16 %v5724, %v5718
        %v5731 = vpack.c.bf16 %v5725, %v5719
        %v5732 = vpack.c.bf16 %v5726, %v5720
        %v5733 = vpack.c.bf16 %v5727, %v5721
        %v5734 = vpack.c.bf16 %v5728, %v5722
        %v5735 = vpack.c.bf16 %v5729, %v5723
        %5736 = vrot.lane.b32.xlu0 %v2259, 1
        %v5737 = vpop.permute.xlu0 %5736
        %5738 = vrot.lane.b32.xlu0 %v2265, 1
        %v5739 = vpop.permute.xlu0 %5738
        %5740 = vrot.lane.b32.xlu0 %v2260, 1
        %v5741 = vpop.permute.xlu0 %5740
        %5742 = vrot.lane.b32.xlu0 %v2266, 1
        %v5743 = vpop.permute.xlu0 %5742
        %5744 = vrot.lane.b32.xlu0 %v2261, 1
        %v5745 = vpop.permute.xlu0 %5744
        %5746 = vrot.lane.b32.xlu0 %v2267, 1
        %v5747 = vpop.permute.xlu0 %5746
        %5748 = vrot.lane.b32.xlu0 %v2262, 1
        %v5749 = vpop.permute.xlu0 %5748
        %5750 = vrot.lane.b32.xlu0 %v2268, 1
        %v5751 = vpop.permute.xlu0 %5750
        %5752 = vrot.lane.b32.xlu0 %v2263, 1
        %v5753 = vpop.permute.xlu0 %5752
        %5754 = vrot.lane.b32.xlu0 %v2269, 1
        %v5755 = vpop.permute.xlu0 %5754
        %5756 = vrot.lane.b32.xlu0 %v2264, 1
        %v5757 = vpop.permute.xlu0 %5756
        %5758 = vrot.lane.b32.xlu0 %v2270, 1
        %v5759 = vpop.permute.xlu0 %5758
        %v5760 = vsel %vm777, %v5753, %v5757
        %v5761 = vsel %vm777, %v5755, %v5759
        %v5762 = vsel %vm777, %v5749, %v5753
        %v5763 = vsel %vm777, %v5751, %v5755
        %v5764 = vsel %vm777, %v5745, %v5749
        %v5765 = vsel %vm777, %v5747, %v5751
        %v5766 = vsel %vm777, %v5741, %v5745
        %v5767 = vsel %vm777, %v5743, %v5747
        %v5768 = vsel %vm777, %v5737, %v5741
        %v5769 = vsel %vm777, %v5739, %v5743
        %v5770 = vsel %vm777, %v5757, %v5737
        %v5771 = vsel %vm777, %v5759, %v5739
        %v5772 = vmul.f32 %v5770, %v792
        %v5773 = vmul.f32 %v5768, %v796
        %v5774 = vmul.f32 %v5766, %v800
        %v5775 = vmul.f32 %v5764, %v804
        %v5776 = vmul.f32 %v5762, %v808
        %v5777 = vmul.f32 %v5760, %v812
        %v5778 = vmul.f32 %v5771, %v792
        %v5779 = vmul.f32 %v5769, %v796
        %v5780 = vmul.f32 %v5767, %v800
        %v5781 = vmul.f32 %v5765, %v804
        %v5782 = vmul.f32 %v5763, %v808
        %v5783 = vmul.f32 %v5761, %v812
        %v5784 = vpack.c.bf16 %v5778, %v5772
        %v5785 = vpack.c.bf16 %v5779, %v5773
        %v5786 = vpack.c.bf16 %v5780, %v5774
        %v5787 = vpack.c.bf16 %v5781, %v5775
        %v5788 = vpack.c.bf16 %v5782, %v5776
        %v5789 = vpack.c.bf16 %v5783, %v5777
        %v5790 = vpack.c.bf16 %v2265, %v2259
        %v5791 = vpack.c.bf16 %v2266, %v2260
        %v5792 = vpack.c.bf16 %v2267, %v2261
        %v5793 = vpack.c.bf16 %v2268, %v2262
        %v5794 = vpack.c.bf16 %v2269, %v2263
        %v5795 = vpack.c.bf16 %v2270, %v2264
        %v5796 = vmul.f32 %v2303, %v864
        %v5797 = vmul.f32 %v2301, %v868
        %v5798 = vmul.f32 %v2299, %v872
        %v5799 = vmul.f32 %v2297, %v876
        %v5800 = vmul.f32 %v2295, %v880
        %v5801 = vmul.f32 %v2305, %v884
        %v5802 = vmul.f32 %v2304, %v864
        %v5803 = vmul.f32 %v2302, %v868
        %v5804 = vmul.f32 %v2300, %v872
        %v5805 = vmul.f32 %v2298, %v876
        %v5806 = vmul.f32 %v2296, %v880
        %v5807 = vmul.f32 %v2306, %v884
        %v5808 = vpack.c.bf16 %v5802, %v5796
        %v5809 = vpack.c.bf16 %v5803, %v5797
        %v5810 = vpack.c.bf16 %v5804, %v5798
        %v5811 = vpack.c.bf16 %v5805, %v5799
        %v5812 = vpack.c.bf16 %v5806, %v5800
        %v5813 = vpack.c.bf16 %v5807, %v5801
        %5814 = vrot.lane.b32.xlu0 %v2259, 113
        %v5815 = vpop.permute.xlu0 %5814
        %5816 = vrot.lane.b32.xlu0 %v2265, 113
        %v5817 = vpop.permute.xlu0 %5816
        %5818 = vrot.lane.b32.xlu0 %v2260, 113
        %v5819 = vpop.permute.xlu0 %5818
        %5820 = vrot.lane.b32.xlu0 %v2266, 113
        %v5821 = vpop.permute.xlu0 %5820
        %5822 = vrot.lane.b32.xlu0 %v2261, 113
        %v5823 = vpop.permute.xlu0 %5822
        %5824 = vrot.lane.b32.xlu0 %v2267, 113
        %v5825 = vpop.permute.xlu0 %5824
        %5826 = vrot.lane.b32.xlu0 %v2262, 113
        %v5827 = vpop.permute.xlu0 %5826
        %5828 = vrot.lane.b32.xlu0 %v2268, 113
        %v5829 = vpop.permute.xlu0 %5828
        %5830 = vrot.lane.b32.xlu0 %v2263, 113
        %v5831 = vpop.permute.xlu0 %5830
        %5832 = vrot.lane.b32.xlu0 %v2269, 113
        %v5833 = vpop.permute.xlu0 %5832
        %5834 = vrot.lane.b32.xlu0 %v2264, 113
        %v5835 = vpop.permute.xlu0 %5834
        %5836 = vrot.lane.b32.xlu0 %v2270, 113
        %v5837 = vpop.permute.xlu0 %5836
        %v5838 = vsel %vm915, %v5831, %v5835
        %v5839 = vsel %vm915, %v5833, %v5837
        %v5840 = vsel %vm915, %v5827, %v5831
        %v5841 = vsel %vm915, %v5829, %v5833
        %v5842 = vsel %vm915, %v5823, %v5827
        %v5843 = vsel %vm915, %v5825, %v5829
        %v5844 = vsel %vm915, %v5819, %v5823
        %v5845 = vsel %vm915, %v5821, %v5825
        %v5846 = vsel %vm915, %v5815, %v5819
        %v5847 = vsel %vm915, %v5817, %v5821
        %v5848 = vsel %vm915, %v5835, %v5815
        %v5849 = vsel %vm915, %v5837, %v5817
        %v5850 = vmul.f32 %v5846, %v930
        %v5851 = vmul.f32 %v5844, %v934
        %v5852 = vmul.f32 %v5842, %v938
        %v5853 = vmul.f32 %v5840, %v942
        %v5854 = vmul.f32 %v5838, %v946
        %v5855 = vmul.f32 %v5848, %v950
        %v5856 = vmul.f32 %v5847, %v930
        %v5857 = vmul.f32 %v5845, %v934
        %v5858 = vmul.f32 %v5843, %v938
        %v5859 = vmul.f32 %v5841, %v942
        %v5860 = vmul.f32 %v5839, %v946
        %v5861 = vmul.f32 %v5849, %v950
        %v5862 = vpack.c.bf16 %v5856, %v5850
        %v5863 = vpack.c.bf16 %v5857, %v5851
        %v5864 = vpack.c.bf16 %v5858, %v5852
        %v5865 = vpack.c.bf16 %v5859, %v5853
        %v5866 = vpack.c.bf16 %v5860, %v5854
        %v5867 = vpack.c.bf16 %v5861, %v5855
        %v5868 = vmul.f32 %v2339, %v996
        %v5869 = vmul.f32 %v2337, %v1000
        %v5870 = vmul.f32 %v2335, %v1004
        %v5871 = vmul.f32 %v2333, %v1008
        %v5872 = vmul.f32 %v2331, %v1012
        %v5873 = vmul.f32 %v2341, %v1016
        %v5874 = vmul.f32 %v2340, %v996
        %v5875 = vmul.f32 %v2338, %v1000
        %v5876 = vmul.f32 %v2336, %v1004
        %v5877 = vmul.f32 %v2334, %v1008
        %v5878 = vmul.f32 %v2332, %v1012
        %v5879 = vmul.f32 %v2342, %v1016
        %v5880 = vpack.c.bf16 %v5874, %v5868
        %v5881 = vpack.c.bf16 %v5875, %v5869
        %v5882 = vpack.c.bf16 %v5876, %v5870
        %v5883 = vpack.c.bf16 %v5877, %v5871
        %v5884 = vpack.c.bf16 %v5878, %v5872
        %v5885 = vpack.c.bf16 %v5879, %v5873
        %v5886 = vmul.f32 %v2375, %v1062
        %v5887 = vmul.f32 %v2373, %v1066
        %v5888 = vmul.f32 %v2371, %v1070
        %v5889 = vmul.f32 %v2369, %v1074
        %v5890 = vmul.f32 %v2367, %v1078
        %v5891 = vmul.f32 %v2377, %v1082
        %v5892 = vmul.f32 %v2376, %v1062
        %v5893 = vmul.f32 %v2374, %v1066
        %v5894 = vmul.f32 %v2372, %v1070
        %v5895 = vmul.f32 %v2370, %v1074
        %v5896 = vmul.f32 %v2368, %v1078
        %v5897 = vmul.f32 %v2378, %v1082
        %v5898 = vpack.c.bf16 %v5892, %v5886
        %v5899 = vpack.c.bf16 %v5893, %v5887
        %v5900 = vpack.c.bf16 %v5894, %v5888
        %v5901 = vpack.c.bf16 %v5895, %v5889
        %v5902 = vpack.c.bf16 %v5896, %v5890
        %v5903 = vpack.c.bf16 %v5897, %v5891
        %v5906 = vunpack.c.l.b16 %v5572
        %v5907 = vunpack.c.h.b16 %v5572
        %v5908 = vunpack.c.l.b16 %v5573
        %v5909 = vunpack.c.h.b16 %v5573
        %v5910 = vpack.c.b16 %v5908, %v5906
        %v5911 = vpack.c.b16 %v5909, %v5907
        %v5914 = vsel %vm2121, %v5911, 0
        %5916 = vmatprep.subr.bf16.mxu0 %v5881
        %5917 = vmatpush1.bf16.msra.mxu0 %v5880
        %5918 = vmatprep.subr.bf16.mxu0 %v5863
        %5919 = vmatpush1.bf16.msra.mxu0 %v5862
        %5920 = vmatprep.subr.bf16.mxu0 %v5809
        %5921 = vmatpush1.bf16.msra.mxu0 %v5808
        %5922 = vmatprep.subr.bf16.mxu0 %v5791
        %5923 = vmatpush1.bf16.msra.mxu0 %v5790
        %5924 = vmatprep.subr.bf16.mxu0 %v5785
        %5925 = vmatpush1.bf16.msra.mxu0 %v5784
        %5926 = vmatprep.subr.bf16.mxu0 %v5731
        %5927 = vmatpush1.bf16.msra.mxu0 %v5730
        %5928 = vmatprep.subr.bf16.mxu0 %v5677
        %5929 = vmatpush1.bf16.msra.mxu0 %v5676
        %5930 = vmatprep.subr.bf16.mxu0 %v5623
        %5931 = vmatpush1.bf16.msra.mxu0 %v5622
        %5932 = vmatprep.subr.bf16.mxu0 0
        %5933 = vmatpush2.bf16.msra.mxu0 0
        %5934 = vmatprep.subr.bf16.mxu0 0
        %5935 = vmatpush2.bf16.msra.mxu0 0
        %5936 = vmatprep.subr.bf16.mxu0 0
        %5937 = vmatpush2.bf16.msra.mxu0 0
        %5938 = vmatprep.subr.bf16.mxu0 0
        %5939 = vmatpush2.bf16.msra.mxu0 0
        %5940 = vmatprep.subr.bf16.mxu0 0
        %5941 = vmatpush2.bf16.msra.mxu0 0
        %5942 = vmatprep.subr.bf16.mxu0 0
        %5943 = vmatpush2.bf16.msra.mxu0 0
        %5944 = vmatprep.subr.bf16.mxu0 %v2128
        %5945 = vmatpush2.bf16.msra.mxu0 %v2128
        %5946 = vmatprep.subr.bf16.mxu0 %v5899
        %5947 = vmatpush2.bf16.msra.mxu0 %v5898
        %5948 = vmatprep.mubr.bf16.mxu0 %v5914
        %5949 = vmatmul.mubr.bf16.gmra.mxu0 %v5910
        %v5950 = vpop.f32.mrf.mxu0
        %v5951 = vadd.f32 0.0, %v5950
        %v5952 = vpop.f32.mrf.mxu0
        %v5953 = vadd.f32 0.0, %v5952
        %v5954 = vpop.f32.mrf.mxu0
        %v5955 = vadd.f32 0.0, %v5954
        %v5956 = vpop.f32.mrf.mxu0
        %v5957 = vadd.f32 0.0, %v5956
        %5958 = vdwg.mxu0
        %5959 = vmatprep.subr.bf16.mxu0 %v5883
        %5960 = vmatpush1.bf16.msra.mxu0 %v5882
        %5961 = vmatprep.subr.bf16.mxu0 %v5865
        %5962 = vmatpush1.bf16.msra.mxu0 %v5864
        %5963 = vmatprep.subr.bf16.mxu0 %v5811
        %5964 = vmatpush1.bf16.msra.mxu0 %v5810
        %5965 = vmatprep.subr.bf16.mxu0 %v5793
        %5966 = vmatpush1.bf16.msra.mxu0 %v5792
        %5967 = vmatprep.subr.bf16.mxu0 %v5787
        %5968 = vmatpush1.bf16.msra.mxu0 %v5786
        %5969 = vmatprep.subr.bf16.mxu0 %v5733
        %5970 = vmatpush1.bf16.msra.mxu0 %v5732
        %5971 = vmatprep.subr.bf16.mxu0 %v5679
        %5972 = vmatpush1.bf16.msra.mxu0 %v5678
        %5973 = vmatprep.subr.bf16.mxu0 %v5625
        %5974 = vmatpush1.bf16.msra.mxu0 %v5624
        %5975 = vmatprep.subr.bf16.mxu0 0
        %5976 = vmatpush2.bf16.msra.mxu0 0
        %5977 = vmatprep.subr.bf16.mxu0 0
        %5978 = vmatpush2.bf16.msra.mxu0 0
        %5979 = vmatprep.subr.bf16.mxu0 0
        %5980 = vmatpush2.bf16.msra.mxu0 0
        %5981 = vmatprep.subr.bf16.mxu0 0
        %5982 = vmatpush2.bf16.msra.mxu0 0
        %5983 = vmatprep.subr.bf16.mxu0 0
        %5984 = vmatpush2.bf16.msra.mxu0 0
        %5985 = vmatprep.subr.bf16.mxu0 0
        %5986 = vmatpush2.bf16.msra.mxu0 0
        %5987 = vmatprep.subr.bf16.mxu0 %v2128
        %5988 = vmatpush2.bf16.msra.mxu0 %v2128
        %5989 = vmatprep.subr.bf16.mxu0 %v5901
        %5990 = vmatpush2.bf16.msra.mxu0 %v5900
        %5991 = vmatprep.mubr.bf16.mxu0 %v5914
        %5992 = vmatmul.mubr.bf16.gmra.mxu0 %v5910
        %v5993 = vpop.f32.mrf.mxu0
        %v5994 = vadd.f32 0.0, %v5993
        %v5995 = vpop.f32.mrf.mxu0
        %v5996 = vadd.f32 0.0, %v5995
        %v5997 = vpop.f32.mrf.mxu0
        %v5998 = vadd.f32 0.0, %v5997
        %v5999 = vpop.f32.mrf.mxu0
        %v6000 = vadd.f32 0.0, %v5999
        %6001 = vdwg.mxu0
        %6002 = vmatprep.subr.bf16.mxu0 %v5885
        %6003 = vmatpush1.bf16.msra.mxu0 %v5884
        %6004 = vmatprep.subr.bf16.mxu0 %v5867
        %6005 = vmatpush1.bf16.msra.mxu0 %v5866
        %6006 = vmatprep.subr.bf16.mxu0 %v5813
        %6007 = vmatpush1.bf16.msra.mxu0 %v5812
        %6008 = vmatprep.subr.bf16.mxu0 %v5795
        %6009 = vmatpush1.bf16.msra.mxu0 %v5794
        %6010 = vmatprep.subr.bf16.mxu0 %v5789
        %6011 = vmatpush1.bf16.msra.mxu0 %v5788
        %6012 = vmatprep.subr.bf16.mxu0 %v5735
        %6013 = vmatpush1.bf16.msra.mxu0 %v5734
        %6014 = vmatprep.subr.bf16.mxu0 %v5681
        %6015 = vmatpush1.bf16.msra.mxu0 %v5680
        %6016 = vmatprep.subr.bf16.mxu0 %v5627
        %6017 = vmatpush1.bf16.msra.mxu0 %v5626
        %6018 = vmatprep.subr.bf16.mxu0 0
        %6019 = vmatpush2.bf16.msra.mxu0 0
        %6020 = vmatprep.subr.bf16.mxu0 0
        %6021 = vmatpush2.bf16.msra.mxu0 0
        %6022 = vmatprep.subr.bf16.mxu0 0
        %6023 = vmatpush2.bf16.msra.mxu0 0
        %6024 = vmatprep.subr.bf16.mxu0 0
        %6025 = vmatpush2.bf16.msra.mxu0 0
        %6026 = vmatprep.subr.bf16.mxu0 0
        %6027 = vmatpush2.bf16.msra.mxu0 0
        %6028 = vmatprep.subr.bf16.mxu0 0
        %6029 = vmatpush2.bf16.msra.mxu0 0
        %6030 = vmatprep.subr.bf16.mxu0 %v2128
        %6031 = vmatpush2.bf16.msra.mxu0 %v2128
        %6032 = vmatprep.subr.bf16.mxu0 %v5903
        %6033 = vmatpush2.bf16.msra.mxu0 %v5902
        %6034 = vmatprep.mubr.bf16.mxu0 %v5914
        %6035 = vmatmul.mubr.bf16.gmra.mxu0 %v5910
        %v6036 = vpop.f32.mrf.mxu0
        %v6037 = vadd.f32 0.0, %v6036
        %v6038 = vpop.f32.mrf.mxu0
        %v6039 = vadd.f32 0.0, %v6038
        %v6040 = vpop.f32.mrf.mxu0
        %v6041 = vadd.f32 0.0, %v6040
        %v6042 = vpop.f32.mrf.mxu0
        %v6043 = vadd.f32 0.0, %v6042
        %6044 = vdwg.mxu0
        %v6049 = vunpack.c.l.b16 %v4692
        %v6050 = vunpack.c.h.b16 %v4692
        %v6051 = vunpack.c.l.b16 %v4693
        %v6052 = vunpack.c.l.b16 %v4694
        %v6053 = vunpack.c.h.b16 %v4694
        %v6054 = vunpack.c.l.b16 %v4695
        %v6055 = vpack.c.b16 %v6052, %v6049
        %v6056 = vpack.c.b16 %v6053, %v6050
        %v6057 = vpack.c.b16 %v6054, %v6051
        %vm6060 = vcmask 261120
        %v6062 = vsel %vm6060, %v6057, 0
        %6064 = vmatprep.subr.bf16.mxu0 %v5123
        %6065 = vmatpush1.bf16.msra.mxu0 %v5122
        %6066 = vmatprep.subr.bf16.mxu0 %v5117
        %6067 = vmatpush1.bf16.msra.mxu0 %v5116
        %6068 = vmatprep.subr.bf16.mxu0 %v5015
        %6069 = vmatpush1.bf16.msra.mxu0 %v5014
        %6070 = vmatprep.subr.bf16.mxu0 %v5009
        %6071 = vmatpush1.bf16.msra.mxu0 %v5008
        %6072 = vmatprep.subr.bf16.mxu0 %v4907
        %6073 = vmatpush1.bf16.msra.mxu0 %v4906
        %6074 = vmatprep.subr.bf16.mxu0 %v4901
        %6075 = vmatpush1.bf16.msra.mxu0 %v4900
        %6076 = vmatprep.subr.bf16.mxu0 %v4799
        %6077 = vmatpush1.bf16.msra.mxu0 %v4798
        %6078 = vmatprep.subr.bf16.mxu0 %v4793
        %6079 = vmatpush1.bf16.msra.mxu0 %v4792
        %6080 = vmatprep.subr.bf16.mxu0 %v5459
        %6081 = vmatpush2.bf16.msra.mxu0 %v5458
        %6082 = vmatprep.subr.bf16.mxu0 %v5453
        %6083 = vmatpush2.bf16.msra.mxu0 %v5452
        %6084 = vmatprep.subr.bf16.mxu0 %v5351
        %6085 = vmatpush2.bf16.msra.mxu0 %v5350
        %6086 = vmatprep.subr.bf16.mxu0 %v5345
        %6087 = vmatpush2.bf16.msra.mxu0 %v5344
        %6088 = vmatprep.subr.bf16.mxu0 %v5243
        %6089 = vmatpush2.bf16.msra.mxu0 %v5242
        %6090 = vmatprep.subr.bf16.mxu0 %v5237
        %6091 = vmatpush2.bf16.msra.mxu0 %v5236
        %6092 = vmatprep.subr.bf16.mxu0 %v5135
        %6093 = vmatpush2.bf16.msra.mxu0 %v5134
        %6094 = vmatprep.subr.bf16.mxu0 %v5129
        %6095 = vmatpush2.bf16.msra.mxu0 %v5128
        %6096 = vmatprep.mubr.bf16.mxu0 %v6056
        %6097 = vmatmul.mubr.bf16.gmra.mxu0 %v6055
        %v6098 = vpop.f32.mrf.mxu0
        %v6099 = vadd.f32 %v5951, %v6098
        %v6100 = vpop.f32.mrf.mxu0
        %v6101 = vadd.f32 %v5953, %v6100
        %v6102 = vpop.f32.mrf.mxu0
        %v6103 = vadd.f32 %v5955, %v6102
        %v6104 = vpop.f32.mrf.mxu0
        %v6105 = vadd.f32 %v5957, %v6104
        %6106 = vdwg.mxu0
        %6107 = vmatprep.subr.bf16.mxu0 0
        %6108 = vmatpush1.bf16.msra.mxu0 0
        %6109 = vmatprep.subr.bf16.mxu0 0
        %6110 = vmatpush1.bf16.msra.mxu0 0
        %6111 = vmatprep.subr.bf16.mxu0 0
        %6112 = vmatpush1.bf16.msra.mxu0 0
        %6113 = vmatprep.subr.bf16.mxu0 0
        %6114 = vmatpush1.bf16.msra.mxu0 0
        %6115 = vmatprep.subr.bf16.mxu0 0
        %6116 = vmatpush1.bf16.msra.mxu0 0
        %6117 = vmatprep.subr.bf16.mxu0 0
        %6118 = vmatpush1.bf16.msra.mxu0 0
        %6119 = vmatprep.subr.bf16.mxu0 %v5567
        %6120 = vmatpush1.bf16.msra.mxu0 %v5566
        %6121 = vmatprep.subr.bf16.mxu0 %v5561
        %6122 = vmatpush1.bf16.msra.mxu0 %v5560
        %6123 = vmatprep.subr.bf16.mxu0 0
        %6124 = vmatpush2.bf16.msra.mxu0 0
        %6125 = vmatprep.subr.bf16.mxu0 0
        %6126 = vmatpush2.bf16.msra.mxu0 0
        %6127 = vmatprep.subr.bf16.mxu0 0
        %6128 = vmatpush2.bf16.msra.mxu0 0
        %6129 = vmatprep.subr.bf16.mxu0 0
        %6130 = vmatpush2.bf16.msra.mxu0 0
        %6131 = vmatprep.subr.bf16.mxu0 0
        %6132 = vmatpush2.bf16.msra.mxu0 0
        %6133 = vmatprep.subr.bf16.mxu0 0
        %6134 = vmatpush2.bf16.msra.mxu0 0
        %6135 = vmatprep.subr.bf16.mxu0 0
        %6136 = vmatpush2.bf16.msra.mxu0 0
        %6137 = vmatprep.subr.bf16.mxu0 0
        %6138 = vmatpush2.bf16.msra.mxu0 0
        %6139 = vmatprep.mubr.bf16.mxu0 0
        %6140 = vmatmul.mubr.bf16.gmra.mxu0 %v6062
        %v6141 = vpop.f32.mrf.mxu0
        %v6142 = vadd.f32 %v6099, %v6141
        %v6143 = vpop.f32.mrf.mxu0
        %v6144 = vadd.f32 %v6101, %v6143
        %v6145 = vpop.f32.mrf.mxu0
        %v6146 = vadd.f32 %v6103, %v6145
        %v6147 = vpop.f32.mrf.mxu0
        %v6148 = vadd.f32 %v6105, %v6147
        %6149 = vdwg.mxu0
        %6150 = vmatprep.subr.bf16.mxu0 %v5125
        %6151 = vmatpush1.bf16.msra.mxu0 %v5124
        %6152 = vmatprep.subr.bf16.mxu0 %v5119
        %6153 = vmatpush1.bf16.msra.mxu0 %v5118
        %6154 = vmatprep.subr.bf16.mxu0 %v5017
        %6155 = vmatpush1.bf16.msra.mxu0 %v5016
        %6156 = vmatprep.subr.bf16.mxu0 %v5011
        %6157 = vmatpush1.bf16.msra.mxu0 %v5010
        %6158 = vmatprep.subr.bf16.mxu0 %v4909
        %6159 = vmatpush1.bf16.msra.mxu0 %v4908
        %6160 = vmatprep.subr.bf16.mxu0 %v4903
        %6161 = vmatpush1.bf16.msra.mxu0 %v4902
        %6162 = vmatprep.subr.bf16.mxu0 %v4801
        %6163 = vmatpush1.bf16.msra.mxu0 %v4800
        %6164 = vmatprep.subr.bf16.mxu0 %v4795
        %6165 = vmatpush1.bf16.msra.mxu0 %v4794
        %6166 = vmatprep.subr.bf16.mxu0 %v5461
        %6167 = vmatpush2.bf16.msra.mxu0 %v5460
        %6168 = vmatprep.subr.bf16.mxu0 %v5455
        %6169 = vmatpush2.bf16.msra.mxu0 %v5454
        %6170 = vmatprep.subr.bf16.mxu0 %v5353
        %6171 = vmatpush2.bf16.msra.mxu0 %v5352
        %6172 = vmatprep.subr.bf16.mxu0 %v5347
        %6173 = vmatpush2.bf16.msra.mxu0 %v5346
        %6174 = vmatprep.subr.bf16.mxu0 %v5245
        %6175 = vmatpush2.bf16.msra.mxu0 %v5244
        %6176 = vmatprep.subr.bf16.mxu0 %v5239
        %6177 = vmatpush2.bf16.msra.mxu0 %v5238
        %6178 = vmatprep.subr.bf16.mxu0 %v5137
        %6179 = vmatpush2.bf16.msra.mxu0 %v5136
        %6180 = vmatprep.subr.bf16.mxu0 %v5131
        %6181 = vmatpush2.bf16.msra.mxu0 %v5130
        %6182 = vmatprep.mubr.bf16.mxu0 %v6056
        %6183 = vmatmul.mubr.bf16.gmra.mxu0 %v6055
        %v6184 = vpop.f32.mrf.mxu0
        %v6185 = vadd.f32 %v5994, %v6184
        %v6186 = vpop.f32.mrf.mxu0
        %v6187 = vadd.f32 %v5996, %v6186
        %v6188 = vpop.f32.mrf.mxu0
        %v6189 = vadd.f32 %v5998, %v6188
        %v6190 = vpop.f32.mrf.mxu0
        %v6191 = vadd.f32 %v6000, %v6190
        %6192 = vdwg.mxu0
        %6193 = vmatprep.subr.bf16.mxu0 0
        %6194 = vmatpush1.bf16.msra.mxu0 0
        %6195 = vmatprep.subr.bf16.mxu0 0
        %6196 = vmatpush1.bf16.msra.mxu0 0
        %6197 = vmatprep.subr.bf16.mxu0 0
        %6198 = vmatpush1.bf16.msra.mxu0 0
        %6199 = vmatprep.subr.bf16.mxu0 0
        %6200 = vmatpush1.bf16.msra.mxu0 0
        %6201 = vmatprep.subr.bf16.mxu0 0
        %6202 = vmatpush1.bf16.msra.mxu0 0
        %6203 = vmatprep.subr.bf16.mxu0 0
        %6204 = vmatpush1.bf16.msra.mxu0 0
        %6205 = vmatprep.subr.bf16.mxu0 %v5569
        %6206 = vmatpush1.bf16.msra.mxu0 %v5568
        %6207 = vmatprep.subr.bf16.mxu0 %v5563
        %6208 = vmatpush1.bf16.msra.mxu0 %v5562
        %6209 = vmatprep.subr.bf16.mxu0 0
        %6210 = vmatpush2.bf16.msra.mxu0 0
        %6211 = vmatprep.subr.bf16.mxu0 0
        %6212 = vmatpush2.bf16.msra.mxu0 0
        %6213 = vmatprep.subr.bf16.mxu0 0
        %6214 = vmatpush2.bf16.msra.mxu0 0
        %6215 = vmatprep.subr.bf16.mxu0 0
        %6216 = vmatpush2.bf16.msra.mxu0 0
        %6217 = vmatprep.subr.bf16.mxu0 0
        %6218 = vmatpush2.bf16.msra.mxu0 0
        %6219 = vmatprep.subr.bf16.mxu0 0
        %6220 = vmatpush2.bf16.msra.mxu0 0
        %6221 = vmatprep.subr.bf16.mxu0 0
        %6222 = vmatpush2.bf16.msra.mxu0 0
        %6223 = vmatprep.subr.bf16.mxu0 0
        %6224 = vmatpush2.bf16.msra.mxu0 0
        %6225 = vmatprep.mubr.bf16.mxu0 0
        %6226 = vmatmul.mubr.bf16.gmra.mxu0 %v6062
        %v6227 = vpop.f32.mrf.mxu0
        %v6228 = vadd.f32 %v6185, %v6227
        %v6229 = vpop.f32.mrf.mxu0
        %v6230 = vadd.f32 %v6187, %v6229
        %v6231 = vpop.f32.mrf.mxu0
        %v6232 = vadd.f32 %v6189, %v6231
        %v6233 = vpop.f32.mrf.mxu0
        %v6234 = vadd.f32 %v6191, %v6233
        %6235 = vdwg.mxu0
        %6236 = vmatprep.subr.bf16.mxu0 %v5127
        %6237 = vmatpush1.bf16.msra.mxu0 %v5126
        %6238 = vmatprep.subr.bf16.mxu0 %v5121
        %6239 = vmatpush1.bf16.msra.mxu0 %v5120
        %6240 = vmatprep.subr.bf16.mxu0 %v5019
        %6241 = vmatpush1.bf16.msra.mxu0 %v5018
        %6242 = vmatprep.subr.bf16.mxu0 %v5013
        %6243 = vmatpush1.bf16.msra.mxu0 %v5012
        %6244 = vmatprep.subr.bf16.mxu0 %v4911
        %6245 = vmatpush1.bf16.msra.mxu0 %v4910
        %6246 = vmatprep.subr.bf16.mxu0 %v4905
        %6247 = vmatpush1.bf16.msra.mxu0 %v4904
        %6248 = vmatprep.subr.bf16.mxu0 %v4803
        %6249 = vmatpush1.bf16.msra.mxu0 %v4802
        %6250 = vmatprep.subr.bf16.mxu0 %v4797
        %6251 = vmatpush1.bf16.msra.mxu0 %v4796
        %6252 = vmatprep.subr.bf16.mxu0 %v5463
        %6253 = vmatpush2.bf16.msra.mxu0 %v5462
        %6254 = vmatprep.subr.bf16.mxu0 %v5457
        %6255 = vmatpush2.bf16.msra.mxu0 %v5456
        %6256 = vmatprep.subr.bf16.mxu0 %v5355
        %6257 = vmatpush2.bf16.msra.mxu0 %v5354
        %6258 = vmatprep.subr.bf16.mxu0 %v5349
        %6259 = vmatpush2.bf16.msra.mxu0 %v5348
        %6260 = vmatprep.subr.bf16.mxu0 %v5247
        %6261 = vmatpush2.bf16.msra.mxu0 %v5246
        %6262 = vmatprep.subr.bf16.mxu0 %v5241
        %6263 = vmatpush2.bf16.msra.mxu0 %v5240
        %6264 = vmatprep.subr.bf16.mxu0 %v5139
        %6265 = vmatpush2.bf16.msra.mxu0 %v5138
        %6266 = vmatprep.subr.bf16.mxu0 %v5133
        %6267 = vmatpush2.bf16.msra.mxu0 %v5132
        %6268 = vmatprep.mubr.bf16.mxu0 %v6056
        %6269 = vmatmul.mubr.bf16.gmra.mxu0 %v6055
        %v6270 = vpop.f32.mrf.mxu0
        %v6271 = vadd.f32 %v6037, %v6270
        %v6272 = vpop.f32.mrf.mxu0
        %v6273 = vadd.f32 %v6039, %v6272
        %v6274 = vpop.f32.mrf.mxu0
        %v6275 = vadd.f32 %v6041, %v6274
        %v6276 = vpop.f32.mrf.mxu0
        %v6277 = vadd.f32 %v6043, %v6276
        %6278 = vdwg.mxu0
        %6279 = vmatprep.subr.bf16.mxu0 0
        %6280 = vmatpush1.bf16.msra.mxu0 0
        %6281 = vmatprep.subr.bf16.mxu0 0
        %6282 = vmatpush1.bf16.msra.mxu0 0
        %6283 = vmatprep.subr.bf16.mxu0 0
        %6284 = vmatpush1.bf16.msra.mxu0 0
        %6285 = vmatprep.subr.bf16.mxu0 0
        %6286 = vmatpush1.bf16.msra.mxu0 0
        %6287 = vmatprep.subr.bf16.mxu0 0
        %6288 = vmatpush1.bf16.msra.mxu0 0
        %6289 = vmatprep.subr.bf16.mxu0 0
        %6290 = vmatpush1.bf16.msra.mxu0 0
        %6291 = vmatprep.subr.bf16.mxu0 %v5571
        %6292 = vmatpush1.bf16.msra.mxu0 %v5570
        %6293 = vmatprep.subr.bf16.mxu0 %v5565
        %6294 = vmatpush1.bf16.msra.mxu0 %v5564
        %6295 = vmatprep.subr.bf16.mxu0 0
        %6296 = vmatpush2.bf16.msra.mxu0 0
        %6297 = vmatprep.subr.bf16.mxu0 0
        %6298 = vmatpush2.bf16.msra.mxu0 0
        %6299 = vmatprep.subr.bf16.mxu0 0
        %6300 = vmatpush2.bf16.msra.mxu0 0
        %6301 = vmatprep.subr.bf16.mxu0 0
        %6302 = vmatpush2.bf16.msra.mxu0 0
        %6303 = vmatprep.subr.bf16.mxu0 0
        %6304 = vmatpush2.bf16.msra.mxu0 0
        %6305 = vmatprep.subr.bf16.mxu0 0
        %6306 = vmatpush2.bf16.msra.mxu0 0
        %6307 = vmatprep.subr.bf16.mxu0 0
        %6308 = vmatpush2.bf16.msra.mxu0 0
        %6309 = vmatprep.subr.bf16.mxu0 0
        %6310 = vmatpush2.bf16.msra.mxu0 0
        %6311 = vmatprep.mubr.bf16.mxu0 0
        %6312 = vmatmul.mubr.bf16.gmra.mxu0 %v6062
        %v6313 = vpop.f32.mrf.mxu0
        %v6314 = vadd.f32 %v6271, %v6313
        %v6315 = vpop.f32.mrf.mxu0
        %v6316 = vadd.f32 %v6273, %v6315
        %v6317 = vpop.f32.mrf.mxu0
        %v6318 = vadd.f32 %v6275, %v6317
        %v6319 = vpop.f32.mrf.mxu0
        %v6320 = vadd.f32 %v6277, %v6319
        %6321 = vdwg.mxu0
        %v6322 = vmax.f32 %v6142, 0.0
        %v6323 = vmax.f32 %v6144, 0.0
        %v6324 = vmax.f32 %v6228, 0.0
        %v6325 = vmax.f32 %v6230, 0.0
        %v6326 = vmax.f32 %v6314, 0.0
        %v6327 = vmax.f32 %v6316, 0.0
        %v6328 = vmax.f32 %v6146, 0.0
        %v6329 = vmax.f32 %v6148, 0.0
        %v6330 = vmax.f32 %v6232, 0.0
        %v6331 = vmax.f32 %v6234, 0.0
        %v6332 = vmax.f32 %v6318, 0.0
        %v6333 = vmax.f32 %v6320, 0.0
        %v6334 = vld [vmem:[%s7] sm:$0xff]
        %v6335 = vld [vmem:[%s7 + $0x8] sm:$0xff]
        %6336 = vrot.lane.b32.xlu0 %v6322, 17
        %v6337 = vpop.permute.xlu0 %6336
        %6338 = vrot.lane.b32.xlu0 %v6328, 17
        %v6339 = vpop.permute.xlu0 %6338
        %6340 = vrot.lane.b32.xlu0 %v6323, 17
        %v6341 = vpop.permute.xlu0 %6340
        %6342 = vrot.lane.b32.xlu0 %v6329, 17
        %v6343 = vpop.permute.xlu0 %6342
        %6344 = vrot.lane.b32.xlu0 %v6324, 17
        %v6345 = vpop.permute.xlu0 %6344
        %6346 = vrot.lane.b32.xlu0 %v6330, 17
        %v6347 = vpop.permute.xlu0 %6346
        %6348 = vrot.lane.b32.xlu0 %v6325, 17
        %v6349 = vpop.permute.xlu0 %6348
        %6350 = vrot.lane.b32.xlu0 %v6331, 17
        %v6351 = vpop.permute.xlu0 %6350
        %6352 = vrot.lane.b32.xlu0 %v6326, 17
        %v6353 = vpop.permute.xlu0 %6352
        %6354 = vrot.lane.b32.xlu0 %v6332, 17
        %v6355 = vpop.permute.xlu0 %6354
        %6356 = vrot.lane.b32.xlu0 %v6327, 17
        %v6357 = vpop.permute.xlu0 %6356
        %6358 = vrot.lane.b32.xlu0 %v6333, 17
        %v6359 = vpop.permute.xlu0 %6358
        %v6360 = vsel %vm580, %v6353, %v6357
        %v6361 = vsel %vm580, %v6355, %v6359
        %v6362 = vsel %vm580, %v6349, %v6353
        %v6363 = vsel %vm580, %v6351, %v6355
        %v6364 = vsel %vm580, %v6345, %v6349
        %v6365 = vsel %vm580, %v6347, %v6351
        %v6366 = vsel %vm580, %v6341, %v6345
        %v6367 = vsel %vm580, %v6343, %v6347
        %v6368 = vsel %vm580, %v6337, %v6341
        %v6369 = vsel %vm580, %v6339, %v6343
        %v6370 = vsel %vm580, %v6357, %v6337
        %v6371 = vsel %vm580, %v6359, %v6339
        %v6372 = vmul.f32 %v6370, %v594
        %v6373 = vmul.f32 %v6368, %v598
        %v6374 = vmul.f32 %v6366, %v602
        %v6375 = vmul.f32 %v6364, %v606
        %v6376 = vmul.f32 %v6362, %v610
        %v6377 = vmul.f32 %v6360, %v614
        %v6378 = vmul.f32 %v6371, %v594
        %v6379 = vmul.f32 %v6369, %v598
        %v6380 = vmul.f32 %v6367, %v602
        %v6381 = vmul.f32 %v6365, %v606
        %v6382 = vmul.f32 %v6363, %v610
        %v6383 = vmul.f32 %v6361, %v614
        %v6384 = vpack.c.bf16 %v6378, %v6372
        %v6385 = vpack.c.bf16 %v6379, %v6373
        %v6386 = vpack.c.bf16 %v6380, %v6374
        %v6387 = vpack.c.bf16 %v6381, %v6375
        %v6388 = vpack.c.bf16 %v6382, %v6376
        %v6389 = vpack.c.bf16 %v6383, %v6377
        %6390 = vrot.lane.b32.xlu0 %v6322, 16
        %v6391 = vpop.permute.xlu0 %6390
        %6392 = vrot.lane.b32.xlu0 %v6328, 16
        %v6393 = vpop.permute.xlu0 %6392
        %6394 = vrot.lane.b32.xlu0 %v6323, 16
        %v6395 = vpop.permute.xlu0 %6394
        %6396 = vrot.lane.b32.xlu0 %v6329, 16
        %v6397 = vpop.permute.xlu0 %6396
        %6398 = vrot.lane.b32.xlu0 %v6324, 16
        %v6399 = vpop.permute.xlu0 %6398
        %6400 = vrot.lane.b32.xlu0 %v6330, 16
        %v6401 = vpop.permute.xlu0 %6400
        %6402 = vrot.lane.b32.xlu0 %v6325, 16
        %v6403 = vpop.permute.xlu0 %6402
        %6404 = vrot.lane.b32.xlu0 %v6331, 16
        %v6405 = vpop.permute.xlu0 %6404
        %6406 = vrot.lane.b32.xlu0 %v6326, 16
        %v6407 = vpop.permute.xlu0 %6406
        %6408 = vrot.lane.b32.xlu0 %v6332, 16
        %v6409 = vpop.permute.xlu0 %6408
        %6410 = vrot.lane.b32.xlu0 %v6327, 16
        %v6411 = vpop.permute.xlu0 %6410
        %6412 = vrot.lane.b32.xlu0 %v6333, 16
        %v6413 = vpop.permute.xlu0 %6412
        %v6414 = vsel %vm645, %v6407, %v6411
        %v6415 = vsel %vm645, %v6409, %v6413
        %v6416 = vsel %vm645, %v6403, %v6407
        %v6417 = vsel %vm645, %v6405, %v6409
        %v6418 = vsel %vm645, %v6399, %v6403
        %v6419 = vsel %vm645, %v6401, %v6405
        %v6420 = vsel %vm645, %v6395, %v6399
        %v6421 = vsel %vm645, %v6397, %v6401
        %v6422 = vsel %vm645, %v6391, %v6395
        %v6423 = vsel %vm645, %v6393, %v6397
        %v6424 = vsel %vm645, %v6411, %v6391
        %v6425 = vsel %vm645, %v6413, %v6393
        %v6426 = vmul.f32 %v6424, %v660
        %v6427 = vmul.f32 %v6422, %v664
        %v6428 = vmul.f32 %v6420, %v668
        %v6429 = vmul.f32 %v6418, %v672
        %v6430 = vmul.f32 %v6416, %v676
        %v6431 = vmul.f32 %v6414, %v680
        %v6432 = vmul.f32 %v6425, %v660
        %v6433 = vmul.f32 %v6423, %v664
        %v6434 = vmul.f32 %v6421, %v668
        %v6435 = vmul.f32 %v6419, %v672
        %v6436 = vmul.f32 %v6417, %v676
        %v6437 = vmul.f32 %v6415, %v680
        %v6438 = vpack.c.bf16 %v6432, %v6426
        %v6439 = vpack.c.bf16 %v6433, %v6427
        %v6440 = vpack.c.bf16 %v6434, %v6428
        %v6441 = vpack.c.bf16 %v6435, %v6429
        %v6442 = vpack.c.bf16 %v6436, %v6430
        %v6443 = vpack.c.bf16 %v6437, %v6431
        %6444 = vrot.lane.b32.xlu0 %v6322, 15
        %v6445 = vpop.permute.xlu0 %6444
        %6446 = vrot.lane.b32.xlu0 %v6328, 15
        %v6447 = vpop.permute.xlu0 %6446
        %6448 = vrot.lane.b32.xlu0 %v6323, 15
        %v6449 = vpop.permute.xlu0 %6448
        %6450 = vrot.lane.b32.xlu0 %v6329, 15
        %v6451 = vpop.permute.xlu0 %6450
        %6452 = vrot.lane.b32.xlu0 %v6324, 15
        %v6453 = vpop.permute.xlu0 %6452
        %6454 = vrot.lane.b32.xlu0 %v6330, 15
        %v6455 = vpop.permute.xlu0 %6454
        %6456 = vrot.lane.b32.xlu0 %v6325, 15
        %v6457 = vpop.permute.xlu0 %6456
        %6458 = vrot.lane.b32.xlu0 %v6331, 15
        %v6459 = vpop.permute.xlu0 %6458
        %6460 = vrot.lane.b32.xlu0 %v6326, 15
        %v6461 = vpop.permute.xlu0 %6460
        %6462 = vrot.lane.b32.xlu0 %v6332, 15
        %v6463 = vpop.permute.xlu0 %6462
        %6464 = vrot.lane.b32.xlu0 %v6327, 15
        %v6465 = vpop.permute.xlu0 %6464
        %6466 = vrot.lane.b32.xlu0 %v6333, 15
        %v6467 = vpop.permute.xlu0 %6466
        %v6468 = vsel %vm711, %v6461, %v6465
        %v6469 = vsel %vm711, %v6463, %v6467
        %v6470 = vsel %vm711, %v6457, %v6461
        %v6471 = vsel %vm711, %v6459, %v6463
        %v6472 = vsel %vm711, %v6453, %v6457
        %v6473 = vsel %vm711, %v6455, %v6459
        %v6474 = vsel %vm711, %v6449, %v6453
        %v6475 = vsel %vm711, %v6451, %v6455
        %v6476 = vsel %vm711, %v6445, %v6449
        %v6477 = vsel %vm711, %v6447, %v6451
        %v6478 = vsel %vm711, %v6465, %v6445
        %v6479 = vsel %vm711, %v6467, %v6447
        %v6480 = vmul.f32 %v6478, %v726
        %v6481 = vmul.f32 %v6476, %v730
        %v6482 = vmul.f32 %v6474, %v734
        %v6483 = vmul.f32 %v6472, %v738
        %v6484 = vmul.f32 %v6470, %v742
        %v6485 = vmul.f32 %v6468, %v746
        %v6486 = vmul.f32 %v6479, %v726
        %v6487 = vmul.f32 %v6477, %v730
        %v6488 = vmul.f32 %v6475, %v734
        %v6489 = vmul.f32 %v6473, %v738
        %v6490 = vmul.f32 %v6471, %v742
        %v6491 = vmul.f32 %v6469, %v746
        %v6492 = vpack.c.bf16 %v6486, %v6480
        %v6493 = vpack.c.bf16 %v6487, %v6481
        %v6494 = vpack.c.bf16 %v6488, %v6482
        %v6495 = vpack.c.bf16 %v6489, %v6483
        %v6496 = vpack.c.bf16 %v6490, %v6484
        %v6497 = vpack.c.bf16 %v6491, %v6485
        %6498 = vrot.lane.b32.xlu0 %v6322, 1
        %v6499 = vpop.permute.xlu0 %6498
        %6500 = vrot.lane.b32.xlu0 %v6328, 1
        %v6501 = vpop.permute.xlu0 %6500
        %6502 = vrot.lane.b32.xlu0 %v6323, 1
        %v6503 = vpop.permute.xlu0 %6502
        %6504 = vrot.lane.b32.xlu0 %v6329, 1
        %v6505 = vpop.permute.xlu0 %6504
        %6506 = vrot.lane.b32.xlu0 %v6324, 1
        %v6507 = vpop.permute.xlu0 %6506
        %6508 = vrot.lane.b32.xlu0 %v6330, 1
        %v6509 = vpop.permute.xlu0 %6508
        %6510 = vrot.lane.b32.xlu0 %v6325, 1
        %v6511 = vpop.permute.xlu0 %6510
        %6512 = vrot.lane.b32.xlu0 %v6331, 1
        %v6513 = vpop.permute.xlu0 %6512
        %6514 = vrot.lane.b32.xlu0 %v6326, 1
        %v6515 = vpop.permute.xlu0 %6514
        %6516 = vrot.lane.b32.xlu0 %v6332, 1
        %v6517 = vpop.permute.xlu0 %6516
        %6518 = vrot.lane.b32.xlu0 %v6327, 1
        %v6519 = vpop.permute.xlu0 %6518
        %6520 = vrot.lane.b32.xlu0 %v6333, 1
        %v6521 = vpop.permute.xlu0 %6520
        %v6522 = vsel %vm777, %v6515, %v6519
        %v6523 = vsel %vm777, %v6517, %v6521
        %v6524 = vsel %vm777, %v6511, %v6515
        %v6525 = vsel %vm777, %v6513, %v6517
        %v6526 = vsel %vm777, %v6507, %v6511
        %v6527 = vsel %vm777, %v6509, %v6513
        %v6528 = vsel %vm777, %v6503, %v6507
        %v6529 = vsel %vm777, %v6505, %v6509
        %v6530 = vsel %vm777, %v6499, %v6503
        %v6531 = vsel %vm777, %v6501, %v6505
        %v6532 = vsel %vm777, %v6519, %v6499
        %v6533 = vsel %vm777, %v6521, %v6501
        %v6534 = vmul.f32 %v6532, %v792
        %v6535 = vmul.f32 %v6530, %v796
        %v6536 = vmul.f32 %v6528, %v800
        %v6537 = vmul.f32 %v6526, %v804
        %v6538 = vmul.f32 %v6524, %v808
        %v6539 = vmul.f32 %v6522, %v812
        %v6540 = vmul.f32 %v6533, %v792
        %v6541 = vmul.f32 %v6531, %v796
        %v6542 = vmul.f32 %v6529, %v800
        %v6543 = vmul.f32 %v6527, %v804
        %v6544 = vmul.f32 %v6525, %v808
        %v6545 = vmul.f32 %v6523, %v812
        %v6546 = vpack.c.bf16 %v6540, %v6534
        %v6547 = vpack.c.bf16 %v6541, %v6535
        %v6548 = vpack.c.bf16 %v6542, %v6536
        %v6549 = vpack.c.bf16 %v6543, %v6537
        %v6550 = vpack.c.bf16 %v6544, %v6538
        %v6551 = vpack.c.bf16 %v6545, %v6539
        %v6552 = vpack.c.bf16 %v6328, %v6322
        %v6553 = vpack.c.bf16 %v6329, %v6323
        %v6554 = vpack.c.bf16 %v6330, %v6324
        %v6555 = vpack.c.bf16 %v6331, %v6325
        %v6556 = vpack.c.bf16 %v6332, %v6326
        %v6557 = vpack.c.bf16 %v6333, %v6327
        %6558 = vrot.lane.b32.xlu0 %v6322, 127
        %v6559 = vpop.permute.xlu0 %6558
        %6560 = vrot.lane.b32.xlu0 %v6328, 127
        %v6561 = vpop.permute.xlu0 %6560
        %6562 = vrot.lane.b32.xlu0 %v6323, 127
        %v6563 = vpop.permute.xlu0 %6562
        %6564 = vrot.lane.b32.xlu0 %v6329, 127
        %v6565 = vpop.permute.xlu0 %6564
        %6566 = vrot.lane.b32.xlu0 %v6324, 127
        %v6567 = vpop.permute.xlu0 %6566
        %6568 = vrot.lane.b32.xlu0 %v6330, 127
        %v6569 = vpop.permute.xlu0 %6568
        %6570 = vrot.lane.b32.xlu0 %v6325, 127
        %v6571 = vpop.permute.xlu0 %6570
        %6572 = vrot.lane.b32.xlu0 %v6331, 127
        %v6573 = vpop.permute.xlu0 %6572
        %6574 = vrot.lane.b32.xlu0 %v6326, 127
        %v6575 = vpop.permute.xlu0 %6574
        %6576 = vrot.lane.b32.xlu0 %v6332, 127
        %v6577 = vpop.permute.xlu0 %6576
        %6578 = vrot.lane.b32.xlu0 %v6327, 127
        %v6579 = vpop.permute.xlu0 %6578
        %6580 = vrot.lane.b32.xlu0 %v6333, 127
        %v6581 = vpop.permute.xlu0 %6580
        %v6582 = vsel %vm849, %v6575, %v6579
        %v6583 = vsel %vm849, %v6577, %v6581
        %v6584 = vsel %vm849, %v6571, %v6575
        %v6585 = vsel %vm849, %v6573, %v6577
        %v6586 = vsel %vm849, %v6567, %v6571
        %v6587 = vsel %vm849, %v6569, %v6573
        %v6588 = vsel %vm849, %v6563, %v6567
        %v6589 = vsel %vm849, %v6565, %v6569
        %v6590 = vsel %vm849, %v6559, %v6563
        %v6591 = vsel %vm849, %v6561, %v6565
        %v6592 = vsel %vm849, %v6579, %v6559
        %v6593 = vsel %vm849, %v6581, %v6561
        %v6594 = vmul.f32 %v6590, %v864
        %v6595 = vmul.f32 %v6588, %v868
        %v6596 = vmul.f32 %v6586, %v872
        %v6597 = vmul.f32 %v6584, %v876
        %v6598 = vmul.f32 %v6582, %v880
        %v6599 = vmul.f32 %v6592, %v884
        %v6600 = vmul.f32 %v6591, %v864
        %v6601 = vmul.f32 %v6589, %v868
        %v6602 = vmul.f32 %v6587, %v872
        %v6603 = vmul.f32 %v6585, %v876
        %v6604 = vmul.f32 %v6583, %v880
        %v6605 = vmul.f32 %v6593, %v884
        %v6606 = vpack.c.bf16 %v6600, %v6594
        %v6607 = vpack.c.bf16 %v6601, %v6595
        %v6608 = vpack.c.bf16 %v6602, %v6596
        %v6609 = vpack.c.bf16 %v6603, %v6597
        %v6610 = vpack.c.bf16 %v6604, %v6598
        %v6611 = vpack.c.bf16 %v6605, %v6599
        %6612 = vrot.lane.b32.xlu0 %v6322, 113
        %v6613 = vpop.permute.xlu0 %6612
        %6614 = vrot.lane.b32.xlu0 %v6328, 113
        %v6615 = vpop.permute.xlu0 %6614
        %6616 = vrot.lane.b32.xlu0 %v6323, 113
        %v6617 = vpop.permute.xlu0 %6616
        %6618 = vrot.lane.b32.xlu0 %v6329, 113
        %v6619 = vpop.permute.xlu0 %6618
        %6620 = vrot.lane.b32.xlu0 %v6324, 113
        %v6621 = vpop.permute.xlu0 %6620
        %6622 = vrot.lane.b32.xlu0 %v6330, 113
        %v6623 = vpop.permute.xlu0 %6622
        %6624 = vrot.lane.b32.xlu0 %v6325, 113
        %v6625 = vpop.permute.xlu0 %6624
        %6626 = vrot.lane.b32.xlu0 %v6331, 113
        %v6627 = vpop.permute.xlu0 %6626
        %6628 = vrot.lane.b32.xlu0 %v6326, 113
        %v6629 = vpop.permute.xlu0 %6628
        %6630 = vrot.lane.b32.xlu0 %v6332, 113
        %v6631 = vpop.permute.xlu0 %6630
        %6632 = vrot.lane.b32.xlu0 %v6327, 113
        %v6633 = vpop.permute.xlu0 %6632
        %6634 = vrot.lane.b32.xlu0 %v6333, 113
        %v6635 = vpop.permute.xlu0 %6634
        %v6636 = vsel %vm915, %v6629, %v6633
        %v6637 = vsel %vm915, %v6631, %v6635
        %v6638 = vsel %vm915, %v6625, %v6629
        %v6639 = vsel %vm915, %v6627, %v6631
        %v6640 = vsel %vm915, %v6621, %v6625
        %v6641 = vsel %vm915, %v6623, %v6627
        %v6642 = vsel %vm915, %v6617, %v6621
        %v6643 = vsel %vm915, %v6619, %v6623
        %v6644 = vsel %vm915, %v6613, %v6617
        %v6645 = vsel %vm915, %v6615, %v6619
        %v6646 = vsel %vm915, %v6633, %v6613
        %v6647 = vsel %vm915, %v6635, %v6615
        %v6648 = vmul.f32 %v6644, %v930
        %v6649 = vmul.f32 %v6642, %v934
        %v6650 = vmul.f32 %v6640, %v938
        %v6651 = vmul.f32 %v6638, %v942
        %v6652 = vmul.f32 %v6636, %v946
        %v6653 = vmul.f32 %v6646, %v950
        %v6654 = vmul.f32 %v6645, %v930
        %v6655 = vmul.f32 %v6643, %v934
        %v6656 = vmul.f32 %v6641, %v938
        %v6657 = vmul.f32 %v6639, %v942
        %v6658 = vmul.f32 %v6637, %v946
        %v6659 = vmul.f32 %v6647, %v950
        %v6660 = vpack.c.bf16 %v6654, %v6648
        %v6661 = vpack.c.bf16 %v6655, %v6649
        %v6662 = vpack.c.bf16 %v6656, %v6650
        %v6663 = vpack.c.bf16 %v6657, %v6651
        %v6664 = vpack.c.bf16 %v6658, %v6652
        %v6665 = vpack.c.bf16 %v6659, %v6653
        %6666 = vrot.lane.b32.xlu0 %v6322, 112
        %v6667 = vpop.permute.xlu0 %6666
        %6668 = vrot.lane.b32.xlu0 %v6328, 112
        %v6669 = vpop.permute.xlu0 %6668
        %6670 = vrot.lane.b32.xlu0 %v6323, 112
        %v6671 = vpop.permute.xlu0 %6670
        %6672 = vrot.lane.b32.xlu0 %v6329, 112
        %v6673 = vpop.permute.xlu0 %6672
        %6674 = vrot.lane.b32.xlu0 %v6324, 112
        %v6675 = vpop.permute.xlu0 %6674
        %6676 = vrot.lane.b32.xlu0 %v6330, 112
        %v6677 = vpop.permute.xlu0 %6676
        %6678 = vrot.lane.b32.xlu0 %v6325, 112
        %v6679 = vpop.permute.xlu0 %6678
        %6680 = vrot.lane.b32.xlu0 %v6331, 112
        %v6681 = vpop.permute.xlu0 %6680
        %6682 = vrot.lane.b32.xlu0 %v6326, 112
        %v6683 = vpop.permute.xlu0 %6682
        %6684 = vrot.lane.b32.xlu0 %v6332, 112
        %v6685 = vpop.permute.xlu0 %6684
        %6686 = vrot.lane.b32.xlu0 %v6327, 112
        %v6687 = vpop.permute.xlu0 %6686
        %6688 = vrot.lane.b32.xlu0 %v6333, 112
        %v6689 = vpop.permute.xlu0 %6688
        %v6690 = vsel %vm981, %v6683, %v6687
        %v6691 = vsel %vm981, %v6685, %v6689
        %v6692 = vsel %vm981, %v6679, %v6683
        %v6693 = vsel %vm981, %v6681, %v6685
        %v6694 = vsel %vm981, %v6675, %v6679
        %v6695 = vsel %vm981, %v6677, %v6681
        %v6696 = vsel %vm981, %v6671, %v6675
        %v6697 = vsel %vm981, %v6673, %v6677
        %v6698 = vsel %vm981, %v6667, %v6671
        %v6699 = vsel %vm981, %v6669, %v6673
        %v6700 = vsel %vm981, %v6687, %v6667
        %v6701 = vsel %vm981, %v6689, %v6669
        %v6702 = vmul.f32 %v6698, %v996
        %v6703 = vmul.f32 %v6696, %v1000
        %v6704 = vmul.f32 %v6694, %v1004
        %v6705 = vmul.f32 %v6692, %v1008
        %v6706 = vmul.f32 %v6690, %v1012
        %v6707 = vmul.f32 %v6700, %v1016
        %v6708 = vmul.f32 %v6699, %v996
        %v6709 = vmul.f32 %v6697, %v1000
        %v6710 = vmul.f32 %v6695, %v1004
        %v6711 = vmul.f32 %v6693, %v1008
        %v6712 = vmul.f32 %v6691, %v1012
        %v6713 = vmul.f32 %v6701, %v1016
        %v6714 = vpack.c.bf16 %v6708, %v6702
        %v6715 = vpack.c.bf16 %v6709, %v6703
        %v6716 = vpack.c.bf16 %v6710, %v6704
        %v6717 = vpack.c.bf16 %v6711, %v6705
        %v6718 = vpack.c.bf16 %v6712, %v6706
        %v6719 = vpack.c.bf16 %v6713, %v6707
        %6720 = vrot.lane.b32.xlu0 %v6322, 111
        %v6721 = vpop.permute.xlu0 %6720
        %6722 = vrot.lane.b32.xlu0 %v6328, 111
        %v6723 = vpop.permute.xlu0 %6722
        %6724 = vrot.lane.b32.xlu0 %v6323, 111
        %v6725 = vpop.permute.xlu0 %6724
        %6726 = vrot.lane.b32.xlu0 %v6329, 111
        %v6727 = vpop.permute.xlu0 %6726
        %6728 = vrot.lane.b32.xlu0 %v6324, 111
        %v6729 = vpop.permute.xlu0 %6728
        %6730 = vrot.lane.b32.xlu0 %v6330, 111
        %v6731 = vpop.permute.xlu0 %6730
        %6732 = vrot.lane.b32.xlu0 %v6325, 111
        %v6733 = vpop.permute.xlu0 %6732
        %6734 = vrot.lane.b32.xlu0 %v6331, 111
        %v6735 = vpop.permute.xlu0 %6734
        %6736 = vrot.lane.b32.xlu0 %v6326, 111
        %v6737 = vpop.permute.xlu0 %6736
        %6738 = vrot.lane.b32.xlu0 %v6332, 111
        %v6739 = vpop.permute.xlu0 %6738
        %6740 = vrot.lane.b32.xlu0 %v6327, 111
        %v6741 = vpop.permute.xlu0 %6740
        %6742 = vrot.lane.b32.xlu0 %v6333, 111
        %v6743 = vpop.permute.xlu0 %6742
        %v6744 = vsel %vm1047, %v6737, %v6741
        %v6745 = vsel %vm1047, %v6739, %v6743
        %v6746 = vsel %vm1047, %v6733, %v6737
        %v6747 = vsel %vm1047, %v6735, %v6739
        %v6748 = vsel %vm1047, %v6729, %v6733
        %v6749 = vsel %vm1047, %v6731, %v6735
        %v6750 = vsel %vm1047, %v6725, %v6729
        %v6751 = vsel %vm1047, %v6727, %v6731
        %v6752 = vsel %vm1047, %v6721, %v6725
        %v6753 = vsel %vm1047, %v6723, %v6727
        %v6754 = vsel %vm1047, %v6741, %v6721
        %v6755 = vsel %vm1047, %v6743, %v6723
        %v6756 = vmul.f32 %v6752, %v1062
        %v6757 = vmul.f32 %v6750, %v1066
        %v6758 = vmul.f32 %v6748, %v1070
        %v6759 = vmul.f32 %v6746, %v1074
        %v6760 = vmul.f32 %v6744, %v1078
        %v6761 = vmul.f32 %v6754, %v1082
        %v6762 = vmul.f32 %v6753, %v1062
        %v6763 = vmul.f32 %v6751, %v1066
        %v6764 = vmul.f32 %v6749, %v1070
        %v6765 = vmul.f32 %v6747, %v1074
        %v6766 = vmul.f32 %v6745, %v1078
        %v6767 = vmul.f32 %v6755, %v1082
        %v6768 = vpack.c.bf16 %v6762, %v6756
        %v6769 = vpack.c.bf16 %v6763, %v6757
        %v6770 = vpack.c.bf16 %v6764, %v6758
        %v6771 = vpack.c.bf16 %v6765, %v6759
        %v6772 = vpack.c.bf16 %v6766, %v6760
        %v6773 = vpack.c.bf16 %v6767, %v6761
        %v6776 = vunpack.c.l.b16 %v6334
        %v6777 = vunpack.c.h.b16 %v6334
        %v6778 = vunpack.c.l.b16 %v6335
        %v6779 = vunpack.c.h.b16 %v6335
        %v6780 = vpack.c.b16 %v6778, %v6776
        %v6781 = vpack.c.b16 %v6779, %v6777
        %v6784 = vsel %vm2121, %v6781, 0
        %6786 = vmatprep.subr.bf16.mxu0 %v6715
        %6787 = vmatpush1.bf16.msra.mxu0 %v6714
        %6788 = vmatprep.subr.bf16.mxu0 %v6661
        %6789 = vmatpush1.bf16.msra.mxu0 %v6660
        %6790 = vmatprep.subr.bf16.mxu0 %v6607
        %6791 = vmatpush1.bf16.msra.mxu0 %v6606
        %6792 = vmatprep.subr.bf16.mxu0 %v6553
        %6793 = vmatpush1.bf16.msra.mxu0 %v6552
        %6794 = vmatprep.subr.bf16.mxu0 %v6547
        %6795 = vmatpush1.bf16.msra.mxu0 %v6546
        %6796 = vmatprep.subr.bf16.mxu0 %v6493
        %6797 = vmatpush1.bf16.msra.mxu0 %v6492
        %6798 = vmatprep.subr.bf16.mxu0 %v6439
        %6799 = vmatpush1.bf16.msra.mxu0 %v6438
        %6800 = vmatprep.subr.bf16.mxu0 %v6385
        %6801 = vmatpush1.bf16.msra.mxu0 %v6384
        %6802 = vmatprep.subr.bf16.mxu0 0
        %6803 = vmatpush2.bf16.msra.mxu0 0
        %6804 = vmatprep.subr.bf16.mxu0 0
        %6805 = vmatpush2.bf16.msra.mxu0 0
        %6806 = vmatprep.subr.bf16.mxu0 0
        %6807 = vmatpush2.bf16.msra.mxu0 0
        %6808 = vmatprep.subr.bf16.mxu0 0
        %6809 = vmatpush2.bf16.msra.mxu0 0
        %6810 = vmatprep.subr.bf16.mxu0 0
        %6811 = vmatpush2.bf16.msra.mxu0 0
        %6812 = vmatprep.subr.bf16.mxu0 0
        %6813 = vmatpush2.bf16.msra.mxu0 0
        %6814 = vmatprep.subr.bf16.mxu0 %v2128
        %6815 = vmatpush2.bf16.msra.mxu0 %v2128
        %6816 = vmatprep.subr.bf16.mxu0 %v6769
        %6817 = vmatpush2.bf16.msra.mxu0 %v6768
        %6818 = vmatprep.mubr.bf16.mxu0 %v6784
        %6819 = vmatmul.mubr.bf16.gmra.mxu0 %v6780
        %v6820 = vpop.f32.mrf.mxu0
        %v6821 = vadd.f32 0.0, %v6820
        %v6822 = vpop.f32.mrf.mxu0
        %v6823 = vadd.f32 0.0, %v6822
        %v6824 = vpop.f32.mrf.mxu0
        %v6825 = vadd.f32 0.0, %v6824
        %v6826 = vpop.f32.mrf.mxu0
        %v6827 = vadd.f32 0.0, %v6826
        %6828 = vdwg.mxu0
        %6829 = vmatprep.subr.bf16.mxu0 %v6717
        %6830 = vmatpush1.bf16.msra.mxu0 %v6716
        %6831 = vmatprep.subr.bf16.mxu0 %v6663
        %6832 = vmatpush1.bf16.msra.mxu0 %v6662
        %6833 = vmatprep.subr.bf16.mxu0 %v6609
        %6834 = vmatpush1.bf16.msra.mxu0 %v6608
        %6835 = vmatprep.subr.bf16.mxu0 %v6555
        %6836 = vmatpush1.bf16.msra.mxu0 %v6554
        %6837 = vmatprep.subr.bf16.mxu0 %v6549
        %6838 = vmatpush1.bf16.msra.mxu0 %v6548
        %6839 = vmatprep.subr.bf16.mxu0 %v6495
        %6840 = vmatpush1.bf16.msra.mxu0 %v6494
        %6841 = vmatprep.subr.bf16.mxu0 %v6441
        %6842 = vmatpush1.bf16.msra.mxu0 %v6440
        %6843 = vmatprep.subr.bf16.mxu0 %v6387
        %6844 = vmatpush1.bf16.msra.mxu0 %v6386
        %6845 = vmatprep.subr.bf16.mxu0 0
        %6846 = vmatpush2.bf16.msra.mxu0 0
        %6847 = vmatprep.subr.bf16.mxu0 0
        %6848 = vmatpush2.bf16.msra.mxu0 0
        %6849 = vmatprep.subr.bf16.mxu0 0
        %6850 = vmatpush2.bf16.msra.mxu0 0
        %6851 = vmatprep.subr.bf16.mxu0 0
        %6852 = vmatpush2.bf16.msra.mxu0 0
        %6853 = vmatprep.subr.bf16.mxu0 0
        %6854 = vmatpush2.bf16.msra.mxu0 0
        %6855 = vmatprep.subr.bf16.mxu0 0
        %6856 = vmatpush2.bf16.msra.mxu0 0
        %6857 = vmatprep.subr.bf16.mxu0 %v2128
        %6858 = vmatpush2.bf16.msra.mxu0 %v2128
        %6859 = vmatprep.subr.bf16.mxu0 %v6771
        %6860 = vmatpush2.bf16.msra.mxu0 %v6770
        %6861 = vmatprep.mubr.bf16.mxu0 %v6784
        %6862 = vmatmul.mubr.bf16.gmra.mxu0 %v6780
        %v6863 = vpop.f32.mrf.mxu0
        %v6864 = vadd.f32 0.0, %v6863
        %v6865 = vpop.f32.mrf.mxu0
        %v6866 = vadd.f32 0.0, %v6865
        %v6867 = vpop.f32.mrf.mxu0
        %v6868 = vadd.f32 0.0, %v6867
        %v6869 = vpop.f32.mrf.mxu0
        %v6870 = vadd.f32 0.0, %v6869
        %6871 = vdwg.mxu0
        %6872 = vmatprep.subr.bf16.mxu0 %v6719
        %6873 = vmatpush1.bf16.msra.mxu0 %v6718
        %6874 = vmatprep.subr.bf16.mxu0 %v6665
        %6875 = vmatpush1.bf16.msra.mxu0 %v6664
        %6876 = vmatprep.subr.bf16.mxu0 %v6611
        %6877 = vmatpush1.bf16.msra.mxu0 %v6610
        %6878 = vmatprep.subr.bf16.mxu0 %v6557
        %6879 = vmatpush1.bf16.msra.mxu0 %v6556
        %6880 = vmatprep.subr.bf16.mxu0 %v6551
        %6881 = vmatpush1.bf16.msra.mxu0 %v6550
        %6882 = vmatprep.subr.bf16.mxu0 %v6497
        %6883 = vmatpush1.bf16.msra.mxu0 %v6496
        %6884 = vmatprep.subr.bf16.mxu0 %v6443
        %6885 = vmatpush1.bf16.msra.mxu0 %v6442
        %6886 = vmatprep.subr.bf16.mxu0 %v6389
        %6887 = vmatpush1.bf16.msra.mxu0 %v6388
        %6888 = vmatprep.subr.bf16.mxu0 0
        %6889 = vmatpush2.bf16.msra.mxu0 0
        %6890 = vmatprep.subr.bf16.mxu0 0
        %6891 = vmatpush2.bf16.msra.mxu0 0
        %6892 = vmatprep.subr.bf16.mxu0 0
        %6893 = vmatpush2.bf16.msra.mxu0 0
        %6894 = vmatprep.subr.bf16.mxu0 0
        %6895 = vmatpush2.bf16.msra.mxu0 0
        %6896 = vmatprep.subr.bf16.mxu0 0
        %6897 = vmatpush2.bf16.msra.mxu0 0
        %6898 = vmatprep.subr.bf16.mxu0 0
        %6899 = vmatpush2.bf16.msra.mxu0 0
        %6900 = vmatprep.subr.bf16.mxu0 %v2128
        %6901 = vmatpush2.bf16.msra.mxu0 %v2128
        %6902 = vmatprep.subr.bf16.mxu0 %v6773
        %6903 = vmatpush2.bf16.msra.mxu0 %v6772
        %6904 = vmatprep.mubr.bf16.mxu0 %v6784
        %6905 = vmatmul.mubr.bf16.gmra.mxu0 %v6780
        %v6906 = vpop.f32.mrf.mxu0
        %v6907 = vadd.f32 0.0, %v6906
        %v6908 = vpop.f32.mrf.mxu0
        %v6909 = vadd.f32 0.0, %v6908
        %v6910 = vpop.f32.mrf.mxu0
        %v6911 = vadd.f32 0.0, %v6910
        %v6912 = vpop.f32.mrf.mxu0
        %v6913 = vadd.f32 0.0, %v6912
        %6914 = vdwg.mxu0
        %v6915 = vmax.f32 %v6821, 0.0
        %v6916 = vmax.f32 %v6823, 0.0
        %v6917 = vmax.f32 %v6864, 0.0
        %v6918 = vmax.f32 %v6866, 0.0
        %v6919 = vmax.f32 %v6907, 0.0
        %v6920 = vmax.f32 %v6909, 0.0
        %v6921 = vmax.f32 %v6825, 0.0
        %v6922 = vmax.f32 %v6827, 0.0
        %v6923 = vmax.f32 %v6868, 0.0
        %v6924 = vmax.f32 %v6870, 0.0
        %v6925 = vmax.f32 %v6911, 0.0
        %v6926 = vmax.f32 %v6913, 0.0
        %v6927 = vpack.c.bf16 %v6921, %v6915
        %v6928 = vpack.c.bf16 %v6922, %v6916
        %v6929 = vpack.c.bf16 %v6923, %v6917
        %v6930 = vpack.c.bf16 %v6924, %v6918
        %v6931 = vpack.c.bf16 %v6925, %v6919
        %v6932 = vpack.c.bf16 %v6926, %v6920
        %v6933 = vld [vmem:[%s8] sm:$0x3]
        %v6935 = vsel %vm2121, %v6933, 0
        %6937 = vmatprep.subr.bf16.mxu0 0
        %6938 = vmatpush1.bf16.msra.mxu0 0
        %6939 = vmatprep.subr.bf16.mxu0 0
        %6940 = vmatpush1.bf16.msra.mxu0 0
        %6941 = vmatprep.subr.bf16.mxu0 0
        %6942 = vmatpush1.bf16.msra.mxu0 0
        %6943 = vmatprep.subr.bf16.mxu0 0
        %6944 = vmatpush1.bf16.msra.mxu0 0
        %6945 = vmatprep.subr.bf16.mxu0 0
        %6946 = vmatpush1.bf16.msra.mxu0 0
        %6947 = vmatprep.subr.bf16.mxu0 0
        %6948 = vmatpush1.bf16.msra.mxu0 0
        %6949 = vmatprep.subr.bf16.mxu0 %v2128
        %6950 = vmatpush1.bf16.msra.mxu0 %v2128
        %6951 = vmatprep.subr.bf16.mxu0 %v6928
        %6952 = vmatpush1.bf16.msra.mxu0 %v6927
        %6953 = vmatprep.subr.bf16.mxu0 0
        %6954 = vmatpush2.bf16.msra.mxu0 0
        %6955 = vmatprep.subr.bf16.mxu0 0
        %6956 = vmatpush2.bf16.msra.mxu0 0
        %6957 = vmatprep.subr.bf16.mxu0 0
        %6958 = vmatpush2.bf16.msra.mxu0 0
        %6959 = vmatprep.subr.bf16.mxu0 0
        %6960 = vmatpush2.bf16.msra.mxu0 0
        %6961 = vmatprep.subr.bf16.mxu0 0
        %6962 = vmatpush2.bf16.msra.mxu0 0
        %6963 = vmatprep.subr.bf16.mxu0 0
        %6964 = vmatpush2.bf16.msra.mxu0 0
        %6965 = vmatprep.subr.bf16.mxu0 0
        %6966 = vmatpush2.bf16.msra.mxu0 0
        %6967 = vmatprep.subr.bf16.mxu0 0
        %6968 = vmatpush2.bf16.msra.mxu0 0
        %6969 = vmatprep.mubr.bf16.mxu0 0
        %6970 = vmatmul.mubr.bf16.gmra.mxu0 %v6935
        %v6971 = vpop.f32.mrf.mxu0
        %v6972 = vadd.f32 0.0, %v6971
        %v6973 = vpop.f32.mrf.mxu0
        %v6974 = vadd.f32 0.0, %v6973
        %v6975 = vpop.f32.mrf.mxu0
        %v6976 = vpop.f32.mrf.mxu0
        %6977 = vdwg.mxu0
        %6978 = vmatprep.subr.bf16.mxu0 0
        %6979 = vmatpush1.bf16.msra.mxu0 0
        %6980 = vmatprep.subr.bf16.mxu0 0
        %6981 = vmatpush1.bf16.msra.mxu0 0
        %6982 = vmatprep.subr.bf16.mxu0 0
        %6983 = vmatpush1.bf16.msra.mxu0 0
        %6984 = vmatprep.subr.bf16.mxu0 0
        %6985 = vmatpush1.bf16.msra.mxu0 0
        %6986 = vmatprep.subr.bf16.mxu0 0
        %6987 = vmatpush1.bf16.msra.mxu0 0
        %6988 = vmatprep.subr.bf16.mxu0 0
        %6989 = vmatpush1.bf16.msra.mxu0 0
        %6990 = vmatprep.subr.bf16.mxu0 %v2128
        %6991 = vmatpush1.bf16.msra.mxu0 %v2128
        %6992 = vmatprep.subr.bf16.mxu0 %v6930
        %6993 = vmatpush1.bf16.msra.mxu0 %v6929
        %6994 = vmatprep.subr.bf16.mxu0 0
        %6995 = vmatpush2.bf16.msra.mxu0 0
        %6996 = vmatprep.subr.bf16.mxu0 0
        %6997 = vmatpush2.bf16.msra.mxu0 0
        %6998 = vmatprep.subr.bf16.mxu0 0
        %6999 = vmatpush2.bf16.msra.mxu0 0
        %7000 = vmatprep.subr.bf16.mxu0 0
        %7001 = vmatpush2.bf16.msra.mxu0 0
        %7002 = vmatprep.subr.bf16.mxu0 0
        %7003 = vmatpush2.bf16.msra.mxu0 0
        %7004 = vmatprep.subr.bf16.mxu0 0
        %7005 = vmatpush2.bf16.msra.mxu0 0
        %7006 = vmatprep.subr.bf16.mxu0 0
        %7007 = vmatpush2.bf16.msra.mxu0 0
        %7008 = vmatprep.subr.bf16.mxu0 0
        %7009 = vmatpush2.bf16.msra.mxu0 0
        %7010 = vmatprep.mubr.bf16.mxu0 0
        %7011 = vmatmul.mubr.bf16.gmra.mxu0 %v6935
        %v7012 = vpop.f32.mrf.mxu0
        %v7013 = vadd.f32 0.0, %v7012
        %v7014 = vpop.f32.mrf.mxu0
        %v7015 = vadd.f32 0.0, %v7014
        %v7016 = vpop.f32.mrf.mxu0
        %v7017 = vpop.f32.mrf.mxu0
        %7018 = vdwg.mxu0
        %7019 = vmatprep.subr.bf16.mxu0 0
        %7020 = vmatpush1.bf16.msra.mxu0 0
        %7021 = vmatprep.subr.bf16.mxu0 0
        %7022 = vmatpush1.bf16.msra.mxu0 0
        %7023 = vmatprep.subr.bf16.mxu0 0
        %7024 = vmatpush1.bf16.msra.mxu0 0
        %7025 = vmatprep.subr.bf16.mxu0 0
        %7026 = vmatpush1.bf16.msra.mxu0 0
        %7027 = vmatprep.subr.bf16.mxu0 0
        %7028 = vmatpush1.bf16.msra.mxu0 0
        %7029 = vmatprep.subr.bf16.mxu0 0
        %7030 = vmatpush1.bf16.msra.mxu0 0
        %7031 = vmatprep.subr.bf16.mxu0 %v2128
        %7032 = vmatpush1.bf16.msra.mxu0 %v2128
        %7033 = vmatprep.subr.bf16.mxu0 %v6932
        %7034 = vmatpush1.bf16.msra.mxu0 %v6931
        %7035 = vmatprep.subr.bf16.mxu0 0
        %7036 = vmatpush2.bf16.msra.mxu0 0
        %7037 = vmatprep.subr.bf16.mxu0 0
        %7038 = vmatpush2.bf16.msra.mxu0 0
        %7039 = vmatprep.subr.bf16.mxu0 0
        %7040 = vmatpush2.bf16.msra.mxu0 0
        %7041 = vmatprep.subr.bf16.mxu0 0
        %7042 = vmatpush2.bf16.msra.mxu0 0
        %7043 = vmatprep.subr.bf16.mxu0 0
        %7044 = vmatpush2.bf16.msra.mxu0 0
        %7045 = vmatprep.subr.bf16.mxu0 0
        %7046 = vmatpush2.bf16.msra.mxu0 0
        %7047 = vmatprep.subr.bf16.mxu0 0
        %7048 = vmatpush2.bf16.msra.mxu0 0
        %7049 = vmatprep.subr.bf16.mxu0 0
        %7050 = vmatpush2.bf16.msra.mxu0 0
        %7051 = vmatprep.mubr.bf16.mxu0 0
        %7052 = vmatmul.mubr.bf16.gmra.mxu0 %v6935
        %v7053 = vpop.f32.mrf.mxu0
        %v7054 = vadd.f32 0.0, %v7053
        %v7055 = vpop.f32.mrf.mxu0
        %v7056 = vadd.f32 0.0, %v7055
        %v7057 = vpop.f32.mrf.mxu0
        %v7058 = vpop.f32.mrf.mxu0
        %7059 = vdwg.mxu0
        %v7066 = vcombine.low %v6972, %v6974
        %v7067 = vcombine.low %v7013, %v7015
        %v7068 = vcombine.low %v7054, %v7056
        %7072 = vst [vmem:[%s544] sm:$0x77] %v7066
        %7073 = vst [vmem:[%s544 + $0x8] sm:$0x77] %v7067
        %7074 = vst [vmem:[%s544 + $0x10] sm:$0x77] %v7068
        %v7075 = vld [vmem:[%s12] sm:$0xff]
        %v7076 = vld [vmem:[%s12 + $0x8] sm:$0xf]
        %v7077 = vld [vmem:[%s12 + $0xc] sm:$0xff]
        %v7078 = vld [vmem:[%s12 + $0x14] sm:$0xf]
        %v7079 = vld [vmem:[%s12 + $0x18] sm:$0xff]
        %v7080 = vld [vmem:[%s12 + $0x20] sm:$0xf]
        %v7081 = vld [vmem:[%s12 + $0x24] sm:$0xff]
        %v7082 = vld [vmem:[%s12 + $0x2c] sm:$0xf]
        %v7083 = vld [vmem:[%s12 + $0x30] sm:$0xff]
        %v7084 = vld [vmem:[%s12 + $0x38] sm:$0xf]
        %v7085 = vld [vmem:[%s12 + $0x3c] sm:$0xff]
        %v7086 = vld [vmem:[%s12 + $0x44] sm:$0xf]
        %v7087 = vld [vmem:[%s12 + $0x48] sm:$0xff]
        %v7088 = vld [vmem:[%s12 + $0x50] sm:$0xf]
        %v7089 = vld [vmem:[%s12 + $0x54] sm:$0xff]
        %v7090 = vld [vmem:[%s12 + $0x5c] sm:$0xf]
        %v7091 = vld [vmem:[%s12 + $0x60] sm:$0xff]
        %v7092 = vld [vmem:[%s12 + $0x68] sm:$0xf]
        %v7093 = vld [vmem:[%s12 + $0x6c] sm:$0xff]
        %v7094 = vld [vmem:[%s12 + $0x74] sm:$0xf]
        %v7095 = vld [vmem:[%s12 + $0x78] sm:$0xff]
        %v7096 = vld [vmem:[%s12 + $0x80] sm:$0xf]
        %v7097 = vld [vmem:[%s12 + $0x84] sm:$0xff]
        %v7098 = vld [vmem:[%s12 + $0x8c] sm:$0xf]
        %v7099 = vld [vmem:[%s12 + $0x90] sm:$0xff]
        %v7100 = vld [vmem:[%s12 + $0x98] sm:$0xf]
        %v7101 = vld [vmem:[%s12 + $0x9c] sm:$0xff]
        %v7102 = vld [vmem:[%s12 + $0xa4] sm:$0xf]
        %v7103 = vld [vmem:[%s12 + $0xa8] sm:$0xff]
        %v7104 = vld [vmem:[%s12 + $0xb0] sm:$0xf]
        %v7105 = vld [vmem:[%s12 + $0xb4] sm:$0xff]
        %v7106 = vld [vmem:[%s12 + $0xbc] sm:$0xf]
        %v7107 = vld [vmem:[%s12 + $0xc0] sm:$0xff]
        %v7108 = vld [vmem:[%s12 + $0xc8] sm:$0xf]
        %v7109 = vld [vmem:[%s12 + $0xcc] sm:$0xff]
        %v7110 = vld [vmem:[%s12 + $0xd4] sm:$0xf]
        %v7111 = vld [vmem:[%s12 + $0xd8] sm:$0xff]
        %v7112 = vld [vmem:[%s12 + $0xe0] sm:$0xf]
        %v7113 = vld [vmem:[%s12 + $0xe4] sm:$0xff]
        %v7114 = vld [vmem:[%s12 + $0xec] sm:$0xf]
        %v7115 = vld [vmem:[%s12 + $0xf0] sm:$0xff]
        %v7116 = vld [vmem:[%s12 + $0xf8] sm:$0xf]
        %v7117 = vld [vmem:[%s12 + $0xfc] sm:$0xff]
        %v7118 = vld [vmem:[%s12 + $0x104] sm:$0xf]
        %v7119 = vld [vmem:[%s12 + $0x108] sm:$0xff]
        %v7120 = vld [vmem:[%s12 + $0x110] sm:$0xf]
        %v7121 = vld [vmem:[%s12 + $0x114] sm:$0xff]
        %v7122 = vld [vmem:[%s12 + $0x11c] sm:$0xf]
        %v7123 = vld [vmem:[%s12 + $0x120] sm:$0xff]
        %v7124 = vld [vmem:[%s12 + $0x128] sm:$0xf]
        %v7125 = vld [vmem:[%s12 + $0x12c] sm:$0xff]
        %v7126 = vld [vmem:[%s12 + $0x134] sm:$0xf]
        %v7127 = vld [vmem:[%s12 + $0x138] sm:$0xff]
        %v7128 = vld [vmem:[%s12 + $0x140] sm:$0xf]
        %v7129 = vld [vmem:[%s12 + $0x144] sm:$0xff]
        %v7130 = vld [vmem:[%s12 + $0x14c] sm:$0xf]
        %v7131 = vld [vmem:[%s12 + $0x150] sm:$0xff]
        %v7132 = vld [vmem:[%s12 + $0x158] sm:$0xf]
        %v7133 = vld [vmem:[%s12 + $0x15c] sm:$0xff]
        %v7134 = vld [vmem:[%s12 + $0x164] sm:$0xf]
        %v7135 = vld [vmem:[%s12 + $0x168] sm:$0xff]
        %v7136 = vld [vmem:[%s12 + $0x170] sm:$0xf]
        %v7137 = vld [vmem:[%s12 + $0x174] sm:$0xff]
        %v7138 = vld [vmem:[%s12 + $0x17c] sm:$0xf]
        %v7139 = vld [vmem:[%s12 + $0x180] sm:$0xff]
        %v7140 = vld [vmem:[%s12 + $0x188] sm:$0xf]
        %v7141 = vld [vmem:[%s12 + $0x18c] sm:$0xff]
        %v7142 = vld [vmem:[%s12 + $0x194] sm:$0xf]
        %v7143 = vld [vmem:[%s12 + $0x198] sm:$0xff]
        %v7144 = vld [vmem:[%s12 + $0x1a0] sm:$0xf]
        %v7145 = vld [vmem:[%s12 + $0x1a4] sm:$0xff]
        %v7146 = vld [vmem:[%s12 + $0x1ac] sm:$0xf]
        %v7147 = vld [vmem:[%s12 + $0x1b0] sm:$0xff]
        %v7148 = vld [vmem:[%s12 + $0x1b8] sm:$0xf]
        %v7149 = vld [vmem:[%s12 + $0x1bc] sm:$0xff]
        %v7150 = vld [vmem:[%s12 + $0x1c4] sm:$0xf]
        %v7151 = vld [vmem:[%s12 + $0x1c8] sm:$0xff]
        %v7152 = vld [vmem:[%s12 + $0x1d0] sm:$0xf]
        %v7153 = vld [vmem:[%s12 + $0x1d4] sm:$0xff]
        %v7154 = vld [vmem:[%s12 + $0x1dc] sm:$0xf]
        %v7155 = vld [vmem:[%s12 + $0x1e0] sm:$0xff]
        %v7156 = vld [vmem:[%s12 + $0x1e8] sm:$0xf]
        %v7157 = vld [vmem:[%s12 + $0x1ec] sm:$0xff]
        %v7158 = vld [vmem:[%s12 + $0x1f4] sm:$0xf]
        %v7159 = vld [vmem:[%s12 + $0x1f8] sm:$0xff]
        %v7160 = vld [vmem:[%s12 + $0x200] sm:$0xf]
        %v7161 = vld [vmem:[%s12 + $0x204] sm:$0xff]
        %v7162 = vld [vmem:[%s12 + $0x20c] sm:$0xf]
        %v7163 = vld [vmem:[%s12 + $0x210] sm:$0xff]
        %v7164 = vld [vmem:[%s12 + $0x218] sm:$0xf]
        %v7165 = vld [vmem:[%s12 + $0x21c] sm:$0xff]
        %v7166 = vld [vmem:[%s12 + $0x224] sm:$0xf]
        %v7167 = vld [vmem:[%s12 + $0x228] sm:$0xff]
        %v7168 = vld [vmem:[%s12 + $0x230] sm:$0xf]
        %v7169 = vld [vmem:[%s12 + $0x234] sm:$0xff]
        %v7170 = vld [vmem:[%s12 + $0x23c] sm:$0xf]
        %v7171 = vld [vmem:[%s12 + $0x240] sm:$0xff]
        %v7172 = vld [vmem:[%s12 + $0x248] sm:$0xf]
        %v7173 = vld [vmem:[%s12 + $0x24c] sm:$0xff]
        %v7174 = vld [vmem:[%s12 + $0x254] sm:$0xf]
        %v7175 = vld [vmem:[%s12 + $0x258] sm:$0xff]
        %v7176 = vld [vmem:[%s12 + $0x260] sm:$0xf]
        %v7177 = vld [vmem:[%s12 + $0x264] sm:$0xff]
        %v7178 = vld [vmem:[%s12 + $0x26c] sm:$0xf]
        %v7179 = vld [vmem:[%s12 + $0x270] sm:$0xff]
        %v7180 = vld [vmem:[%s12 + $0x278] sm:$0xf]
        %v7181 = vld [vmem:[%s12 + $0x27c] sm:$0xff]
        %v7182 = vld [vmem:[%s12 + $0x284] sm:$0xf]
        %v7183 = vld [vmem:[%s12 + $0x288] sm:$0xff]
        %v7184 = vld [vmem:[%s12 + $0x290] sm:$0xf]
        %v7185 = vld [vmem:[%s12 + $0x294] sm:$0xff]
        %v7186 = vld [vmem:[%s12 + $0x29c] sm:$0xf]
        %v7187 = vld [vmem:[%s12 + $0x2a0] sm:$0xff]
        %v7188 = vld [vmem:[%s12 + $0x2a8] sm:$0xf]
        %v7189 = vld [vmem:[%s12 + $0x2ac] sm:$0xff]
        %v7190 = vld [vmem:[%s12 + $0x2b4] sm:$0xf]
        %v7191 = vld [vmem:[%s12 + $0x2b8] sm:$0xff]
        %v7192 = vld [vmem:[%s12 + $0x2c0] sm:$0xf]
        %v7193 = vld [vmem:[%s12 + $0x2c4] sm:$0xff]
        %v7194 = vld [vmem:[%s12 + $0x2cc] sm:$0xf]
        %v7195 = vld [vmem:[%s12 + $0x2d0] sm:$0xff]
        %v7196 = vld [vmem:[%s12 + $0x2d8] sm:$0xf]
        %v7197 = vld [vmem:[%s12 + $0x2dc] sm:$0xff]
        %v7198 = vld [vmem:[%s12 + $0x2e4] sm:$0xf]
        %v7199 = vld [vmem:[%s12 + $0x2e8] sm:$0xff]
        %v7200 = vld [vmem:[%s12 + $0x2f0] sm:$0xf]
        %v7201 = vld [vmem:[%s12 + $0x2f4] sm:$0xff]
        %v7202 = vld [vmem:[%s12 + $0x2fc] sm:$0xf]
        %v7203 = vld [vmem:[%s12 + $0x300] sm:$0xff]
        %v7204 = vld [vmem:[%s12 + $0x308] sm:$0xf]
        %v7205 = vld [vmem:[%s12 + $0x30c] sm:$0xff]
        %v7206 = vld [vmem:[%s12 + $0x314] sm:$0xf]
        %v7207 = vld [vmem:[%s12 + $0x318] sm:$0xff]
        %v7208 = vld [vmem:[%s12 + $0x320] sm:$0xf]
        %v7209 = vld [vmem:[%s12 + $0x324] sm:$0xff]
        %v7210 = vld [vmem:[%s12 + $0x32c] sm:$0xf]
        %v7211 = vld [vmem:[%s12 + $0x330] sm:$0xff]
        %v7212 = vld [vmem:[%s12 + $0x338] sm:$0xf]
        %v7213 = vld [vmem:[%s12 + $0x33c] sm:$0xff]
        %v7214 = vld [vmem:[%s12 + $0x344] sm:$0xf]
        %v7215 = vld [vmem:[%s12 + $0x348] sm:$0xff]
        %v7216 = vld [vmem:[%s12 + $0x350] sm:$0xf]
        %v7217 = vld [vmem:[%s12 + $0x354] sm:$0xff]
        %v7218 = vld [vmem:[%s12 + $0x35c] sm:$0xf]
        %v7219 = vld [vmem:[%s12 + $0x360] sm:$0xff]
        %v7220 = vld [vmem:[%s12 + $0x368] sm:$0xf]
        %v7221 = vld [vmem:[%s12 + $0x36c] sm:$0xff]
        %v7222 = vld [vmem:[%s12 + $0x374] sm:$0xf]
        %v7223 = vld [vmem:[%s12 + $0x378] sm:$0xff]
        %v7224 = vld [vmem:[%s12 + $0x380] sm:$0xf]
        %v7225 = vld [vmem:[%s12 + $0x384] sm:$0xff]
        %v7226 = vld [vmem:[%s12 + $0x38c] sm:$0xf]
        %v7227 = vld [vmem:[%s12 + $0x390] sm:$0xff]
        %v7228 = vld [vmem:[%s12 + $0x398] sm:$0xf]
        %v7229 = vld [vmem:[%s12 + $0x39c] sm:$0xff]
        %v7230 = vld [vmem:[%s12 + $0x3a4] sm:$0xf]
        %v7231 = vld [vmem:[%s12 + $0x3a8] sm:$0xff]
        %v7232 = vld [vmem:[%s12 + $0x3b0] sm:$0xf]
        %v7233 = vld [vmem:[%s12 + $0x3b4] sm:$0xff]
        %v7234 = vld [vmem:[%s12 + $0x3bc] sm:$0xf]
        %v7235 = vld [vmem:[%s12 + $0x3c0] sm:$0xff]
        %v7236 = vld [vmem:[%s12 + $0x3c8] sm:$0xf]
        %v7237 = vld [vmem:[%s12 + $0x3cc] sm:$0xff]
        %v7238 = vld [vmem:[%s12 + $0x3d4] sm:$0xf]
        %v7239 = vld [vmem:[%s12 + $0x3d8] sm:$0xff]
        %v7240 = vld [vmem:[%s12 + $0x3e0] sm:$0xf]
        %v7241 = vld [vmem:[%s12 + $0x3e4] sm:$0xff]
        %v7242 = vld [vmem:[%s12 + $0x3ec] sm:$0xf]
        %v7243 = vld [vmem:[%s12 + $0x3f0] sm:$0xff]
        %v7244 = vld [vmem:[%s12 + $0x3f8] sm:$0xf]
        %v7245 = vld [vmem:[%s12 + $0x3fc] sm:$0xff]
        %v7246 = vld [vmem:[%s12 + $0x404] sm:$0xf]
        %v7247 = vld [vmem:[%s12 + $0x408] sm:$0xff]
        %v7248 = vld [vmem:[%s12 + $0x410] sm:$0xf]
        %v7249 = vld [vmem:[%s12 + $0x414] sm:$0xff]
        %v7250 = vld [vmem:[%s12 + $0x41c] sm:$0xf]
        %v7251 = vld [vmem:[%s12 + $0x420] sm:$0xff]
        %v7252 = vld [vmem:[%s12 + $0x428] sm:$0xf]
        %v7253 = vld [vmem:[%s12 + $0x42c] sm:$0xff]
        %v7254 = vld [vmem:[%s12 + $0x434] sm:$0xf]
        %v7255 = vld [vmem:[%s12 + $0x438] sm:$0xff]
        %v7256 = vld [vmem:[%s12 + $0x440] sm:$0xf]
        %v7257 = vld [vmem:[%s12 + $0x444] sm:$0xff]
        %v7258 = vld [vmem:[%s12 + $0x44c] sm:$0xf]
        %v7259 = vld [vmem:[%s12 + $0x450] sm:$0xff]
        %v7260 = vld [vmem:[%s12 + $0x458] sm:$0xf]
        %v7261 = vld [vmem:[%s12 + $0x45c] sm:$0xff]
        %v7262 = vld [vmem:[%s12 + $0x464] sm:$0xf]
        %v7263 = vld [vmem:[%s12 + $0x468] sm:$0xff]
        %v7264 = vld [vmem:[%s12 + $0x470] sm:$0xf]
        %v7265 = vld [vmem:[%s12 + $0x474] sm:$0xff]
        %v7266 = vld [vmem:[%s12 + $0x47c] sm:$0xf]
        %v7459 = vunpack.c.l.b16 %v7075
        %v7460 = vunpack.c.h.b16 %v7075
        %v7461 = vunpack.c.l.b16 %v7076
        %v7462 = vunpack.c.l.b16 %v7077
        %v7463 = vunpack.c.h.b16 %v7077
        %v7464 = vunpack.c.l.b16 %v7078
        %v7465 = vunpack.c.l.b16 %v7079
        %v7466 = vunpack.c.h.b16 %v7079
        %v7467 = vunpack.c.l.b16 %v7080
        %v7468 = vunpack.c.l.b16 %v7081
        %v7469 = vunpack.c.h.b16 %v7081
        %v7470 = vunpack.c.l.b16 %v7082
        %v7471 = vunpack.c.l.b16 %v7083
        %v7472 = vunpack.c.h.b16 %v7083
        %v7473 = vunpack.c.l.b16 %v7084
        %v7474 = vunpack.c.l.b16 %v7085
        %v7475 = vunpack.c.h.b16 %v7085
        %v7476 = vunpack.c.l.b16 %v7086
        %v7477 = vunpack.c.l.b16 %v7087
        %v7478 = vunpack.c.h.b16 %v7087
        %v7479 = vunpack.c.l.b16 %v7088
        %v7480 = vunpack.c.l.b16 %v7089
        %v7481 = vunpack.c.h.b16 %v7089
        %v7482 = vunpack.c.l.b16 %v7090
        %v7483 = vunpack.c.l.b16 %v7091
        %v7484 = vunpack.c.h.b16 %v7091
        %v7485 = vunpack.c.l.b16 %v7092
        %v7486 = vunpack.c.l.b16 %v7093
        %v7487 = vunpack.c.h.b16 %v7093
        %v7488 = vunpack.c.l.b16 %v7094
        %v7489 = vunpack.c.l.b16 %v7095
        %v7490 = vunpack.c.h.b16 %v7095
        %v7491 = vunpack.c.l.b16 %v7096
        %v7492 = vunpack.c.l.b16 %v7097
        %v7493 = vunpack.c.h.b16 %v7097
        %v7494 = vunpack.c.l.b16 %v7098
        %v7495 = vunpack.c.l.b16 %v7099
        %v7496 = vunpack.c.h.b16 %v7099
        %v7497 = vunpack.c.l.b16 %v7100
        %v7498 = vunpack.c.l.b16 %v7101
        %v7499 = vunpack.c.h.b16 %v7101
        %v7500 = vunpack.c.l.b16 %v7102
        %v7501 = vunpack.c.l.b16 %v7103
        %v7502 = vunpack.c.h.b16 %v7103
        %v7503 = vunpack.c.l.b16 %v7104
        %v7504 = vunpack.c.l.b16 %v7105
        %v7505 = vunpack.c.h.b16 %v7105
        %v7506 = vunpack.c.l.b16 %v7106
        %v7507 = vunpack.c.l.b16 %v7107
        %v7508 = vunpack.c.h.b16 %v7107
        %v7509 = vunpack.c.l.b16 %v7108
        %v7510 = vunpack.c.l.b16 %v7109
        %v7511 = vunpack.c.h.b16 %v7109
        %v7512 = vunpack.c.l.b16 %v7110
        %v7513 = vunpack.c.l.b16 %v7111
        %v7514 = vunpack.c.h.b16 %v7111
        %v7515 = vunpack.c.l.b16 %v7112
        %v7516 = vunpack.c.l.b16 %v7113
        %v7517 = vunpack.c.h.b16 %v7113
        %v7518 = vunpack.c.l.b16 %v7114
        %v7519 = vunpack.c.l.b16 %v7115
        %v7520 = vunpack.c.h.b16 %v7115
        %v7521 = vunpack.c.l.b16 %v7116
        %v7522 = vunpack.c.l.b16 %v7117
        %v7523 = vunpack.c.h.b16 %v7117
        %v7524 = vunpack.c.l.b16 %v7118
        %v7525 = vunpack.c.l.b16 %v7119
        %v7526 = vunpack.c.h.b16 %v7119
        %v7527 = vunpack.c.l.b16 %v7120
        %v7528 = vunpack.c.l.b16 %v7121
        %v7529 = vunpack.c.h.b16 %v7121
        %v7530 = vunpack.c.l.b16 %v7122
        %v7531 = vunpack.c.l.b16 %v7123
        %v7532 = vunpack.c.h.b16 %v7123
        %v7533 = vunpack.c.l.b16 %v7124
        %v7534 = vunpack.c.l.b16 %v7125
        %v7535 = vunpack.c.h.b16 %v7125
        %v7536 = vunpack.c.l.b16 %v7126
        %v7537 = vunpack.c.l.b16 %v7127
        %v7538 = vunpack.c.h.b16 %v7127
        %v7539 = vunpack.c.l.b16 %v7128
        %v7540 = vunpack.c.l.b16 %v7129
        %v7541 = vunpack.c.h.b16 %v7129
        %v7542 = vunpack.c.l.b16 %v7130
        %v7543 = vunpack.c.l.b16 %v7131
        %v7544 = vunpack.c.h.b16 %v7131
        %v7545 = vunpack.c.l.b16 %v7132
        %v7546 = vunpack.c.l.b16 %v7133
        %v7547 = vunpack.c.h.b16 %v7133
        %v7548 = vunpack.c.l.b16 %v7134
        %v7549 = vunpack.c.l.b16 %v7135
        %v7550 = vunpack.c.h.b16 %v7135
        %v7551 = vunpack.c.l.b16 %v7136
        %v7552 = vunpack.c.l.b16 %v7137
        %v7553 = vunpack.c.h.b16 %v7137
        %v7554 = vunpack.c.l.b16 %v7138
        %v7555 = vunpack.c.l.b16 %v7139
        %v7556 = vunpack.c.h.b16 %v7139
        %v7557 = vunpack.c.l.b16 %v7140
        %v7558 = vunpack.c.l.b16 %v7141
        %v7559 = vunpack.c.h.b16 %v7141
        %v7560 = vunpack.c.l.b16 %v7142
        %v7561 = vunpack.c.l.b16 %v7143
        %v7562 = vunpack.c.h.b16 %v7143
        %v7563 = vunpack.c.l.b16 %v7144
        %v7564 = vunpack.c.l.b16 %v7145
        %v7565 = vunpack.c.h.b16 %v7145
        %v7566 = vunpack.c.l.b16 %v7146
        %v7567 = vunpack.c.l.b16 %v7147
        %v7568 = vunpack.c.h.b16 %v7147
        %v7569 = vunpack.c.l.b16 %v7148
        %v7570 = vunpack.c.l.b16 %v7149
        %v7571 = vunpack.c.h.b16 %v7149
        %v7572 = vunpack.c.l.b16 %v7150
        %v7573 = vunpack.c.l.b16 %v7151
        %v7574 = vunpack.c.h.b16 %v7151
        %v7575 = vunpack.c.l.b16 %v7152
        %v7576 = vunpack.c.l.b16 %v7153
        %v7577 = vunpack.c.h.b16 %v7153
        %v7578 = vunpack.c.l.b16 %v7154
        %v7579 = vunpack.c.l.b16 %v7155
        %v7580 = vunpack.c.h.b16 %v7155
        %v7581 = vunpack.c.l.b16 %v7156
        %v7582 = vunpack.c.l.b16 %v7157
        %v7583 = vunpack.c.h.b16 %v7157
        %v7584 = vunpack.c.l.b16 %v7158
        %v7585 = vunpack.c.l.b16 %v7159
        %v7586 = vunpack.c.h.b16 %v7159
        %v7587 = vunpack.c.l.b16 %v7160
        %v7588 = vunpack.c.l.b16 %v7161
        %v7589 = vunpack.c.h.b16 %v7161
        %v7590 = vunpack.c.l.b16 %v7162
        %v7591 = vunpack.c.l.b16 %v7163
        %v7592 = vunpack.c.h.b16 %v7163
        %v7593 = vunpack.c.l.b16 %v7164
        %v7594 = vunpack.c.l.b16 %v7165
        %v7595 = vunpack.c.h.b16 %v7165
        %v7596 = vunpack.c.l.b16 %v7166
        %v7597 = vunpack.c.l.b16 %v7167
        %v7598 = vunpack.c.h.b16 %v7167
        %v7599 = vunpack.c.l.b16 %v7168
        %v7600 = vunpack.c.l.b16 %v7169
        %v7601 = vunpack.c.h.b16 %v7169
        %v7602 = vunpack.c.l.b16 %v7170
        %v7603 = vunpack.c.l.b16 %v7171
        %v7604 = vunpack.c.h.b16 %v7171
        %v7605 = vunpack.c.l.b16 %v7172
        %v7606 = vunpack.c.l.b16 %v7173
        %v7607 = vunpack.c.h.b16 %v7173
        %v7608 = vunpack.c.l.b16 %v7174
        %v7609 = vunpack.c.l.b16 %v7175
        %v7610 = vunpack.c.h.b16 %v7175
        %v7611 = vunpack.c.l.b16 %v7176
        %v7612 = vunpack.c.l.b16 %v7177
        %v7613 = vunpack.c.h.b16 %v7177
        %v7614 = vunpack.c.l.b16 %v7178
        %v7615 = vunpack.c.l.b16 %v7179
        %v7616 = vunpack.c.h.b16 %v7179
        %v7617 = vunpack.c.l.b16 %v7180
        %v7618 = vunpack.c.l.b16 %v7181
        %v7619 = vunpack.c.h.b16 %v7181
        %v7620 = vunpack.c.l.b16 %v7182
        %v7621 = vunpack.c.l.b16 %v7183
        %v7622 = vunpack.c.h.b16 %v7183
        %v7623 = vunpack.c.l.b16 %v7184
        %v7624 = vunpack.c.l.b16 %v7185
        %v7625 = vunpack.c.h.b16 %v7185
        %v7626 = vunpack.c.l.b16 %v7186
        %v7627 = vunpack.c.l.b16 %v7187
        %v7628 = vunpack.c.h.b16 %v7187
        %v7629 = vunpack.c.l.b16 %v7188
        %v7630 = vunpack.c.l.b16 %v7189
        %v7631 = vunpack.c.h.b16 %v7189
        %v7632 = vunpack.c.l.b16 %v7190
        %v7633 = vunpack.c.l.b16 %v7191
        %v7634 = vunpack.c.h.b16 %v7191
        %v7635 = vunpack.c.l.b16 %v7192
        %v7636 = vunpack.c.l.b16 %v7193
        %v7637 = vunpack.c.h.b16 %v7193
        %v7638 = vunpack.c.l.b16 %v7194
        %v7639 = vunpack.c.l.b16 %v7195
        %v7640 = vunpack.c.h.b16 %v7195
        %v7641 = vunpack.c.l.b16 %v7196
        %v7642 = vunpack.c.l.b16 %v7197
        %v7643 = vunpack.c.h.b16 %v7197
        %v7644 = vunpack.c.l.b16 %v7198
        %v7645 = vunpack.c.l.b16 %v7199
        %v7646 = vunpack.c.h.b16 %v7199
        %v7647 = vunpack.c.l.b16 %v7200
        %v7648 = vunpack.c.l.b16 %v7201
        %v7649 = vunpack.c.h.b16 %v7201
        %v7650 = vunpack.c.l.b16 %v7202
        %v7651 = vunpack.c.l.b16 %v7203
        %v7652 = vunpack.c.h.b16 %v7203
        %v7653 = vunpack.c.l.b16 %v7204
        %v7654 = vunpack.c.l.b16 %v7205
        %v7655 = vunpack.c.h.b16 %v7205
        %v7656 = vunpack.c.l.b16 %v7206
        %v7657 = vunpack.c.l.b16 %v7207
        %v7658 = vunpack.c.h.b16 %v7207
        %v7659 = vunpack.c.l.b16 %v7208
        %v7660 = vunpack.c.l.b16 %v7209
        %v7661 = vunpack.c.h.b16 %v7209
        %v7662 = vunpack.c.l.b16 %v7210
        %v7663 = vunpack.c.l.b16 %v7211
        %v7664 = vunpack.c.h.b16 %v7211
        %v7665 = vunpack.c.l.b16 %v7212
        %v7666 = vunpack.c.l.b16 %v7213
        %v7667 = vunpack.c.h.b16 %v7213
        %v7668 = vunpack.c.l.b16 %v7214
        %v7669 = vunpack.c.l.b16 %v7215
        %v7670 = vunpack.c.h.b16 %v7215
        %v7671 = vunpack.c.l.b16 %v7216
        %v7672 = vunpack.c.l.b16 %v7217
        %v7673 = vunpack.c.h.b16 %v7217
        %v7674 = vunpack.c.l.b16 %v7218
        %v7675 = vunpack.c.l.b16 %v7219
        %v7676 = vunpack.c.h.b16 %v7219
        %v7677 = vunpack.c.l.b16 %v7220
        %v7678 = vunpack.c.l.b16 %v7221
        %v7679 = vunpack.c.h.b16 %v7221
        %v7680 = vunpack.c.l.b16 %v7222
        %v7681 = vunpack.c.l.b16 %v7223
        %v7682 = vunpack.c.h.b16 %v7223
        %v7683 = vunpack.c.l.b16 %v7224
        %v7684 = vunpack.c.l.b16 %v7225
        %v7685 = vunpack.c.h.b16 %v7225
        %v7686 = vunpack.c.l.b16 %v7226
        %v7687 = vunpack.c.l.b16 %v7227
        %v7688 = vunpack.c.h.b16 %v7227
        %v7689 = vunpack.c.l.b16 %v7228
        %v7690 = vunpack.c.l.b16 %v7229
        %v7691 = vunpack.c.h.b16 %v7229
        %v7692 = vunpack.c.l.b16 %v7230
        %v7693 = vunpack.c.l.b16 %v7231
        %v7694 = vunpack.c.h.b16 %v7231
        %v7695 = vunpack.c.l.b16 %v7232
        %v7696 = vunpack.c.l.b16 %v7233
        %v7697 = vunpack.c.h.b16 %v7233
        %v7698 = vunpack.c.l.b16 %v7234
        %v7699 = vunpack.c.l.b16 %v7235
        %v7700 = vunpack.c.h.b16 %v7235
        %v7701 = vunpack.c.l.b16 %v7236
        %v7702 = vunpack.c.l.b16 %v7237
        %v7703 = vunpack.c.h.b16 %v7237
        %v7704 = vunpack.c.l.b16 %v7238
        %v7705 = vunpack.c.l.b16 %v7239
        %v7706 = vunpack.c.h.b16 %v7239
        %v7707 = vunpack.c.l.b16 %v7240
        %v7708 = vunpack.c.l.b16 %v7241
        %v7709 = vunpack.c.h.b16 %v7241
        %v7710 = vunpack.c.l.b16 %v7242
        %v7711 = vunpack.c.l.b16 %v7243
        %v7712 = vunpack.c.h.b16 %v7243
        %v7713 = vunpack.c.l.b16 %v7244
        %v7714 = vunpack.c.l.b16 %v7245
        %v7715 = vunpack.c.h.b16 %v7245
        %v7716 = vunpack.c.l.b16 %v7246
        %v7717 = vunpack.c.l.b16 %v7247
        %v7718 = vunpack.c.h.b16 %v7247
        %v7719 = vunpack.c.l.b16 %v7248
        %v7720 = vunpack.c.l.b16 %v7249
        %v7721 = vunpack.c.h.b16 %v7249
        %v7722 = vunpack.c.l.b16 %v7250
        %v7723 = vunpack.c.l.b16 %v7251
        %v7724 = vunpack.c.h.b16 %v7251
        %v7725 = vunpack.c.l.b16 %v7252
        %v7726 = vunpack.c.l.b16 %v7253
        %v7727 = vunpack.c.h.b16 %v7253
        %v7728 = vunpack.c.l.b16 %v7254
        %v7729 = vunpack.c.l.b16 %v7255
        %v7730 = vunpack.c.h.b16 %v7255
        %v7731 = vunpack.c.l.b16 %v7256
        %v7732 = vunpack.c.l.b16 %v7257
        %v7733 = vunpack.c.h.b16 %v7257
        %v7734 = vunpack.c.l.b16 %v7258
        %v7735 = vunpack.c.l.b16 %v7259
        %v7736 = vunpack.c.h.b16 %v7259
        %v7737 = vunpack.c.l.b16 %v7260
        %v7738 = vunpack.c.l.b16 %v7261
        %v7739 = vunpack.c.h.b16 %v7261
        %v7740 = vunpack.c.l.b16 %v7262
        %v7741 = vunpack.c.l.b16 %v7263
        %v7742 = vunpack.c.h.b16 %v7263
        %v7743 = vunpack.c.l.b16 %v7264
        %v7744 = vunpack.c.l.b16 %v7265
        %v7745 = vunpack.c.h.b16 %v7265
        %v7746 = vunpack.c.l.b16 %v7266
        %v7747 = vpack.c.b16 %v7462, %v7459
        %v7748 = vpack.c.b16 %v7463, %v7460
        %v7749 = vpack.c.b16 %v7464, %v7461
        %v7750 = vpack.c.b16 %v7468, %v7465
        %v7751 = vpack.c.b16 %v7469, %v7466
        %v7752 = vpack.c.b16 %v7470, %v7467
        %v7753 = vpack.c.b16 %v7474, %v7471
        %v7754 = vpack.c.b16 %v7475, %v7472
        %v7755 = vpack.c.b16 %v7476, %v7473
        %v7756 = vpack.c.b16 %v7480, %v7477
        %v7757 = vpack.c.b16 %v7481, %v7478
        %v7758 = vpack.c.b16 %v7482, %v7479
        %v7759 = vpack.c.b16 %v7486, %v7483
        %v7760 = vpack.c.b16 %v7487, %v7484
        %v7761 = vpack.c.b16 %v7488, %v7485
        %v7762 = vpack.c.b16 %v7492, %v7489
        %v7763 = vpack.c.b16 %v7493, %v7490
        %v7764 = vpack.c.b16 %v7494, %v7491
        %v7765 = vpack.c.b16 %v7498, %v7495
        %v7766 = vpack.c.b16 %v7499, %v7496
        %v7767 = vpack.c.b16 %v7500, %v7497
        %v7768 = vpack.c.b16 %v7504, %v7501
        %v7769 = vpack.c.b16 %v7505, %v7502
        %v7770 = vpack.c.b16 %v7506, %v7503
        %v7771 = vpack.c.b16 %v7510, %v7507
        %v7772 = vpack.c.b16 %v7511, %v7508
        %v7773 = vpack.c.b16 %v7512, %v7509
        %v7774 = vpack.c.b16 %v7516, %v7513
        %v7775 = vpack.c.b16 %v7517, %v7514
        %v7776 = vpack.c.b16 %v7518, %v7515
        %v7777 = vpack.c.b16 %v7522, %v7519
        %v7778 = vpack.c.b16 %v7523, %v7520
        %v7779 = vpack.c.b16 %v7524, %v7521
        %v7780 = vpack.c.b16 %v7528, %v7525
        %v7781 = vpack.c.b16 %v7529, %v7526
        %v7782 = vpack.c.b16 %v7530, %v7527
        %v7783 = vpack.c.b16 %v7534, %v7531
        %v7784 = vpack.c.b16 %v7535, %v7532
        %v7785 = vpack.c.b16 %v7536, %v7533
        %v7786 = vpack.c.b16 %v7540, %v7537
        %v7787 = vpack.c.b16 %v7541, %v7538
        %v7788 = vpack.c.b16 %v7542, %v7539
        %v7789 = vpack.c.b16 %v7546, %v7543
        %v7790 = vpack.c.b16 %v7547, %v7544
        %v7791 = vpack.c.b16 %v7548, %v7545
        %v7792 = vpack.c.b16 %v7552, %v7549
        %v7793 = vpack.c.b16 %v7553, %v7550
        %v7794 = vpack.c.b16 %v7554, %v7551
        %v7795 = vpack.c.b16 %v7558, %v7555
        %v7796 = vpack.c.b16 %v7559, %v7556
        %v7797 = vpack.c.b16 %v7560, %v7557
        %v7798 = vpack.c.b16 %v7564, %v7561
        %v7799 = vpack.c.b16 %v7565, %v7562
        %v7800 = vpack.c.b16 %v7566, %v7563
        %v7801 = vpack.c.b16 %v7570, %v7567
        %v7802 = vpack.c.b16 %v7571, %v7568
        %v7803 = vpack.c.b16 %v7572, %v7569
        %v7804 = vpack.c.b16 %v7576, %v7573
        %v7805 = vpack.c.b16 %v7577, %v7574
        %v7806 = vpack.c.b16 %v7578, %v7575
        %v7807 = vpack.c.b16 %v7582, %v7579
        %v7808 = vpack.c.b16 %v7583, %v7580
        %v7809 = vpack.c.b16 %v7584, %v7581
        %v7810 = vpack.c.b16 %v7588, %v7585
        %v7811 = vpack.c.b16 %v7589, %v7586
        %v7812 = vpack.c.b16 %v7590, %v7587
        %v7813 = vpack.c.b16 %v7594, %v7591
        %v7814 = vpack.c.b16 %v7595, %v7592
        %v7815 = vpack.c.b16 %v7596, %v7593
        %v7816 = vpack.c.b16 %v7600, %v7597
        %v7817 = vpack.c.b16 %v7601, %v7598
        %v7818 = vpack.c.b16 %v7602, %v7599
        %v7819 = vpack.c.b16 %v7606, %v7603
        %v7820 = vpack.c.b16 %v7607, %v7604
        %v7821 = vpack.c.b16 %v7608, %v7605
        %v7822 = vpack.c.b16 %v7612, %v7609
        %v7823 = vpack.c.b16 %v7613, %v7610
        %v7824 = vpack.c.b16 %v7614, %v7611
        %v7825 = vpack.c.b16 %v7618, %v7615
        %v7826 = vpack.c.b16 %v7619, %v7616
        %v7827 = vpack.c.b16 %v7620, %v7617
        %v7828 = vpack.c.b16 %v7624, %v7621
        %v7829 = vpack.c.b16 %v7625, %v7622
        %v7830 = vpack.c.b16 %v7626, %v7623
        %v7831 = vpack.c.b16 %v7630, %v7627
        %v7832 = vpack.c.b16 %v7631, %v7628
        %v7833 = vpack.c.b16 %v7632, %v7629
        %v7834 = vpack.c.b16 %v7636, %v7633
        %v7835 = vpack.c.b16 %v7637, %v7634
        %v7836 = vpack.c.b16 %v7638, %v7635
        %v7837 = vpack.c.b16 %v7642, %v7639
        %v7838 = vpack.c.b16 %v7643, %v7640
        %v7839 = vpack.c.b16 %v7644, %v7641
        %v7840 = vpack.c.b16 %v7648, %v7645
        %v7841 = vpack.c.b16 %v7649, %v7646
        %v7842 = vpack.c.b16 %v7650, %v7647
        %v7843 = vpack.c.b16 %v7654, %v7651
        %v7844 = vpack.c.b16 %v7655, %v7652
        %v7845 = vpack.c.b16 %v7656, %v7653
        %v7846 = vpack.c.b16 %v7660, %v7657
        %v7847 = vpack.c.b16 %v7661, %v7658
        %v7848 = vpack.c.b16 %v7662, %v7659
        %v7849 = vpack.c.b16 %v7666, %v7663
        %v7850 = vpack.c.b16 %v7667, %v7664
        %v7851 = vpack.c.b16 %v7668, %v7665
        %v7852 = vpack.c.b16 %v7672, %v7669
        %v7853 = vpack.c.b16 %v7673, %v7670
        %v7854 = vpack.c.b16 %v7674, %v7671
        %v7855 = vpack.c.b16 %v7678, %v7675
        %v7856 = vpack.c.b16 %v7679, %v7676
        %v7857 = vpack.c.b16 %v7680, %v7677
        %v7858 = vpack.c.b16 %v7684, %v7681
        %v7859 = vpack.c.b16 %v7685, %v7682
        %v7860 = vpack.c.b16 %v7686, %v7683
        %v7861 = vpack.c.b16 %v7690, %v7687
        %v7862 = vpack.c.b16 %v7691, %v7688
        %v7863 = vpack.c.b16 %v7692, %v7689
        %v7864 = vpack.c.b16 %v7696, %v7693
        %v7865 = vpack.c.b16 %v7697, %v7694
        %v7866 = vpack.c.b16 %v7698, %v7695
        %v7867 = vpack.c.b16 %v7702, %v7699
        %v7868 = vpack.c.b16 %v7703, %v7700
        %v7869 = vpack.c.b16 %v7704, %v7701
        %v7870 = vpack.c.b16 %v7708, %v7705
        %v7871 = vpack.c.b16 %v7709, %v7706
        %v7872 = vpack.c.b16 %v7710, %v7707
        %v7873 = vpack.c.b16 %v7714, %v7711
        %v7874 = vpack.c.b16 %v7715, %v7712
        %v7875 = vpack.c.b16 %v7716, %v7713
        %v7876 = vpack.c.b16 %v7720, %v7717
        %v7877 = vpack.c.b16 %v7721, %v7718
        %v7878 = vpack.c.b16 %v7722, %v7719
        %v7879 = vpack.c.b16 %v7726, %v7723
        %v7880 = vpack.c.b16 %v7727, %v7724
        %v7881 = vpack.c.b16 %v7728, %v7725
        %v7882 = vpack.c.b16 %v7732, %v7729
        %v7883 = vpack.c.b16 %v7733, %v7730
        %v7884 = vpack.c.b16 %v7734, %v7731
        %v7885 = vpack.c.b16 %v7738, %v7735
        %v7886 = vpack.c.b16 %v7739, %v7736
        %v7887 = vpack.c.b16 %v7740, %v7737
        %v7888 = vpack.c.b16 %v7744, %v7741
        %v7889 = vpack.c.b16 %v7745, %v7742
        %v7890 = vpack.c.b16 %v7746, %v7743
        %8035 = vmatprep.subr.bf16.mxu0 %v7769
        %8036 = vmatpush1.bf16.msra.mxu0 %v7768
        %8037 = vmatprep.subr.bf16.mxu0 %v7766
        %8038 = vmatpush1.bf16.msra.mxu0 %v7765
        %8039 = vmatprep.subr.bf16.mxu0 %v7763
        %8040 = vmatpush1.bf16.msra.mxu0 %v7762
        %8041 = vmatprep.subr.bf16.mxu0 %v7760
        %8042 = vmatpush1.bf16.msra.mxu0 %v7759
        %8043 = vmatprep.subr.bf16.mxu0 %v7757
        %8044 = vmatpush1.bf16.msra.mxu0 %v7756
        %8045 = vmatprep.subr.bf16.mxu0 %v7754
        %8046 = vmatpush1.bf16.msra.mxu0 %v7753
        %8047 = vmatprep.subr.bf16.mxu0 %v7751
        %8048 = vmatpush1.bf16.msra.mxu0 %v7750
        %8049 = vmatprep.subr.bf16.mxu0 %v7748
        %8050 = vmatpush1.bf16.msra.mxu0 %v7747
        %8051 = vmatprep.subr.bf16.mxu0 %v7793
        %8052 = vmatpush2.bf16.msra.mxu0 %v7792
        %8053 = vmatprep.subr.bf16.mxu0 %v7790
        %8054 = vmatpush2.bf16.msra.mxu0 %v7789
        %8055 = vmatprep.subr.bf16.mxu0 %v7787
        %8056 = vmatpush2.bf16.msra.mxu0 %v7786
        %8057 = vmatprep.subr.bf16.mxu0 %v7784
        %8058 = vmatpush2.bf16.msra.mxu0 %v7783
        %8059 = vmatprep.subr.bf16.mxu0 %v7781
        %8060 = vmatpush2.bf16.msra.mxu0 %v7780
        %8061 = vmatprep.subr.bf16.mxu0 %v7778
        %8062 = vmatpush2.bf16.msra.mxu0 %v7777
        %8063 = vmatprep.subr.bf16.mxu0 %v7775
        %8064 = vmatpush2.bf16.msra.mxu0 %v7774
        %8065 = vmatprep.subr.bf16.mxu0 %v7772
        %8066 = vmatpush2.bf16.msra.mxu0 %v7771
        %8067 = vmatprep.mubr.bf16.mxu0 %v6928
        %8068 = vmatmul.mubr.bf16.gmra.mxu0 %v6927
        %v8069 = vpop.f32.mrf.mxu0
        %v8070 = vadd.f32 0.0, %v8069
        %v8071 = vpop.f32.mrf.mxu0
        %v8072 = vadd.f32 0.0, %v8071
        %v8073 = vpop.f32.mrf.mxu0
        %v8074 = vadd.f32 0.0, %v8073
        %v8075 = vpop.f32.mrf.mxu0
        %v8076 = vadd.f32 0.0, %v8075
        %8077 = vmatprep.mubr.bf16.mxu0 1065369472
        %8078 = vmatmul.mubr.bf16.gmra.mxu0 1065369472
        %v8079 = vpop.f32.mrf.mxu0
        %v8080 = vadd.f32 0.0, %v8079
        %v8081 = vpop.f32.mrf.mxu0
        %v8082 = vadd.f32 0.0, %v8081
        %v8083 = vpop.f32.mrf.mxu0
        %v8084 = vpop.f32.mrf.mxu0
        %8085 = vdwg.mxu0
        %8086 = vmatprep.subr.bf16.mxu0 %v7817
        %8087 = vmatpush1.bf16.msra.mxu0 %v7816
        %8088 = vmatprep.subr.bf16.mxu0 %v7814
        %8089 = vmatpush1.bf16.msra.mxu0 %v7813
        %8090 = vmatprep.subr.bf16.mxu0 %v7811
        %8091 = vmatpush1.bf16.msra.mxu0 %v7810
        %8092 = vmatprep.subr.bf16.mxu0 %v7808
        %8093 = vmatpush1.bf16.msra.mxu0 %v7807
        %8094 = vmatprep.subr.bf16.mxu0 %v7805
        %8095 = vmatpush1.bf16.msra.mxu0 %v7804
        %8096 = vmatprep.subr.bf16.mxu0 %v7802
        %8097 = vmatpush1.bf16.msra.mxu0 %v7801
        %8098 = vmatprep.subr.bf16.mxu0 %v7799
        %8099 = vmatpush1.bf16.msra.mxu0 %v7798
        %8100 = vmatprep.subr.bf16.mxu0 %v7796
        %8101 = vmatpush1.bf16.msra.mxu0 %v7795
        %8102 = vmatprep.subr.bf16.mxu0 %v7841
        %8103 = vmatpush2.bf16.msra.mxu0 %v7840
        %8104 = vmatprep.subr.bf16.mxu0 %v7838
        %8105 = vmatpush2.bf16.msra.mxu0 %v7837
        %8106 = vmatprep.subr.bf16.mxu0 %v7835
        %8107 = vmatpush2.bf16.msra.mxu0 %v7834
        %8108 = vmatprep.subr.bf16.mxu0 %v7832
        %8109 = vmatpush2.bf16.msra.mxu0 %v7831
        %8110 = vmatprep.subr.bf16.mxu0 %v7829
        %8111 = vmatpush2.bf16.msra.mxu0 %v7828
        %8112 = vmatprep.subr.bf16.mxu0 %v7826
        %8113 = vmatpush2.bf16.msra.mxu0 %v7825
        %8114 = vmatprep.subr.bf16.mxu0 %v7823
        %8115 = vmatpush2.bf16.msra.mxu0 %v7822
        %8116 = vmatprep.subr.bf16.mxu0 %v7820
        %8117 = vmatpush2.bf16.msra.mxu0 %v7819
        %8118 = vmatprep.mubr.bf16.mxu0 %v6930
        %8119 = vmatmul.mubr.bf16.gmra.mxu0 %v6929
        %v8120 = vpop.f32.mrf.mxu0
        %v8121 = vadd.f32 %v8070, %v8120
        %v8122 = vpop.f32.mrf.mxu0
        %v8123 = vadd.f32 %v8072, %v8122
        %v8124 = vpop.f32.mrf.mxu0
        %v8125 = vadd.f32 %v8074, %v8124
        %v8126 = vpop.f32.mrf.mxu0
        %v8127 = vadd.f32 %v8076, %v8126
        %8128 = vmatprep.mubr.bf16.mxu0 1065369472
        %8129 = vmatmul.mubr.bf16.gmra.mxu0 1065369472
        %v8130 = vpop.f32.mrf.mxu0
        %v8131 = vadd.f32 %v8080, %v8130
        %v8132 = vpop.f32.mrf.mxu0
        %v8133 = vadd.f32 %v8082, %v8132
        %v8134 = vpop.f32.mrf.mxu0
        %v8135 = vpop.f32.mrf.mxu0
        %8136 = vdwg.mxu0
        %8137 = vmatprep.subr.bf16.mxu0 %v7865
        %8138 = vmatpush1.bf16.msra.mxu0 %v7864
        %8139 = vmatprep.subr.bf16.mxu0 %v7862
        %8140 = vmatpush1.bf16.msra.mxu0 %v7861
        %8141 = vmatprep.subr.bf16.mxu0 %v7859
        %8142 = vmatpush1.bf16.msra.mxu0 %v7858
        %8143 = vmatprep.subr.bf16.mxu0 %v7856
        %8144 = vmatpush1.bf16.msra.mxu0 %v7855
        %8145 = vmatprep.subr.bf16.mxu0 %v7853
        %8146 = vmatpush1.bf16.msra.mxu0 %v7852
        %8147 = vmatprep.subr.bf16.mxu0 %v7850
        %8148 = vmatpush1.bf16.msra.mxu0 %v7849
        %8149 = vmatprep.subr.bf16.mxu0 %v7847
        %8150 = vmatpush1.bf16.msra.mxu0 %v7846
        %8151 = vmatprep.subr.bf16.mxu0 %v7844
        %8152 = vmatpush1.bf16.msra.mxu0 %v7843
        %8153 = vmatprep.subr.bf16.mxu0 %v7889
        %8154 = vmatpush2.bf16.msra.mxu0 %v7888
        %8155 = vmatprep.subr.bf16.mxu0 %v7886
        %8156 = vmatpush2.bf16.msra.mxu0 %v7885
        %8157 = vmatprep.subr.bf16.mxu0 %v7883
        %8158 = vmatpush2.bf16.msra.mxu0 %v7882
        %8159 = vmatprep.subr.bf16.mxu0 %v7880
        %8160 = vmatpush2.bf16.msra.mxu0 %v7879
        %8161 = vmatprep.subr.bf16.mxu0 %v7877
        %8162 = vmatpush2.bf16.msra.mxu0 %v7876
        %8163 = vmatprep.subr.bf16.mxu0 %v7874
        %8164 = vmatpush2.bf16.msra.mxu0 %v7873
        %8165 = vmatprep.subr.bf16.mxu0 %v7871
        %8166 = vmatpush2.bf16.msra.mxu0 %v7870
        %8167 = vmatprep.subr.bf16.mxu0 %v7868
        %8168 = vmatpush2.bf16.msra.mxu0 %v7867
        %8169 = vmatprep.mubr.bf16.mxu0 %v6932
        %8170 = vmatmul.mubr.bf16.gmra.mxu0 %v6931
        %v8171 = vpop.f32.mrf.mxu0
        %v8172 = vadd.f32 %v8121, %v8171
        %v8173 = vpop.f32.mrf.mxu0
        %v8174 = vadd.f32 %v8123, %v8173
        %v8175 = vpop.f32.mrf.mxu0
        %v8176 = vadd.f32 %v8125, %v8175
        %v8177 = vpop.f32.mrf.mxu0
        %v8178 = vadd.f32 %v8127, %v8177
        %8179 = vmatprep.mubr.bf16.mxu0 1065369472
        %8180 = vmatmul.mubr.bf16.gmra.mxu0 1065369472
        %v8181 = vpop.f32.mrf.mxu0
        %v8182 = vadd.f32 %v8131, %v8181
        %v8183 = vpop.f32.mrf.mxu0
        %v8184 = vadd.f32 %v8133, %v8183
        %v8185 = vpop.f32.mrf.mxu0
        %v8186 = vpop.f32.mrf.mxu0
        %8187 = vdwg.mxu0
        %8188 = vmatprep.subr.bf16.mxu0 0
        %8189 = vmatpush1.bf16.msra.mxu0 %v7770
        %8190 = vmatprep.subr.bf16.mxu0 0
        %8191 = vmatpush1.bf16.msra.mxu0 %v7767
        %8192 = vmatprep.subr.bf16.mxu0 0
        %8193 = vmatpush1.bf16.msra.mxu0 %v7764
        %8194 = vmatprep.subr.bf16.mxu0 0
        %8195 = vmatpush1.bf16.msra.mxu0 %v7761
        %8196 = vmatprep.subr.bf16.mxu0 0
        %8197 = vmatpush1.bf16.msra.mxu0 %v7758
        %8198 = vmatprep.subr.bf16.mxu0 0
        %8199 = vmatpush1.bf16.msra.mxu0 %v7755
        %8200 = vmatprep.subr.bf16.mxu0 0
        %8201 = vmatpush1.bf16.msra.mxu0 %v7752
        %8202 = vmatprep.subr.bf16.mxu0 0
        %8203 = vmatpush1.bf16.msra.mxu0 %v7749
        %8204 = vmatprep.subr.bf16.mxu0 0
        %8205 = vmatpush2.bf16.msra.mxu0 %v7794
        %8206 = vmatprep.subr.bf16.mxu0 0
        %8207 = vmatpush2.bf16.msra.mxu0 %v7791
        %8208 = vmatprep.subr.bf16.mxu0 0
        %8209 = vmatpush2.bf16.msra.mxu0 %v7788
        %8210 = vmatprep.subr.bf16.mxu0 0
        %8211 = vmatpush2.bf16.msra.mxu0 %v7785
        %8212 = vmatprep.subr.bf16.mxu0 0
        %8213 = vmatpush2.bf16.msra.mxu0 %v7782
        %8214 = vmatprep.subr.bf16.mxu0 0
        %8215 = vmatpush2.bf16.msra.mxu0 %v7779
        %8216 = vmatprep.subr.bf16.mxu0 0
        %8217 = vmatpush2.bf16.msra.mxu0 %v7776
        %8218 = vmatprep.subr.bf16.mxu0 0
        %8219 = vmatpush2.bf16.msra.mxu0 %v7773
        %8220 = vmatprep.mubr.bf16.mxu0 %v6928
        %8221 = vmatmul.mubr.bf16.gmra.mxu0 %v6927
        %v8222 = vpop.f32.mrf.mxu0
        %v8223 = vadd.f32 0.0, %v8222
        %v8224 = vpop.f32.mrf.mxu0
        %v8225 = vpop.f32.mrf.mxu0
        %v8226 = vadd.f32 0.0, %v8225
        %v8227 = vpop.f32.mrf.mxu0
        %8228 = vmatprep.mubr.bf16.mxu0 1065369472
        %8229 = vmatmul.mubr.bf16.gmra.mxu0 1065369472
        %v8230 = vpop.f32.mrf.mxu0
        %v8231 = vadd.f32 0.0, %v8230
        %v8232 = vpop.f32.mrf.mxu0
        %v8233 = vpop.f32.mrf.mxu0
        %v8234 = vpop.f32.mrf.mxu0
        %8235 = vdwg.mxu0
        %8236 = vmatprep.subr.bf16.mxu0 0
        %8237 = vmatpush1.bf16.msra.mxu0 %v7818
        %8238 = vmatprep.subr.bf16.mxu0 0
        %8239 = vmatpush1.bf16.msra.mxu0 %v7815
        %8240 = vmatprep.subr.bf16.mxu0 0
        %8241 = vmatpush1.bf16.msra.mxu0 %v7812
        %8242 = vmatprep.subr.bf16.mxu0 0
        %8243 = vmatpush1.bf16.msra.mxu0 %v7809
        %8244 = vmatprep.subr.bf16.mxu0 0
        %8245 = vmatpush1.bf16.msra.mxu0 %v7806
        %8246 = vmatprep.subr.bf16.mxu0 0
        %8247 = vmatpush1.bf16.msra.mxu0 %v7803
        %8248 = vmatprep.subr.bf16.mxu0 0
        %8249 = vmatpush1.bf16.msra.mxu0 %v7800
        %8250 = vmatprep.subr.bf16.mxu0 0
        %8251 = vmatpush1.bf16.msra.mxu0 %v7797
        %8252 = vmatprep.subr.bf16.mxu0 0
        %8253 = vmatpush2.bf16.msra.mxu0 %v7842
        %8254 = vmatprep.subr.bf16.mxu0 0
        %8255 = vmatpush2.bf16.msra.mxu0 %v7839
        %8256 = vmatprep.subr.bf16.mxu0 0
        %8257 = vmatpush2.bf16.msra.mxu0 %v7836
        %8258 = vmatprep.subr.bf16.mxu0 0
        %8259 = vmatpush2.bf16.msra.mxu0 %v7833
        %8260 = vmatprep.subr.bf16.mxu0 0
        %8261 = vmatpush2.bf16.msra.mxu0 %v7830
        %8262 = vmatprep.subr.bf16.mxu0 0
        %8263 = vmatpush2.bf16.msra.mxu0 %v7827
        %8264 = vmatprep.subr.bf16.mxu0 0
        %8265 = vmatpush2.bf16.msra.mxu0 %v7824
        %8266 = vmatprep.subr.bf16.mxu0 0
        %8267 = vmatpush2.bf16.msra.mxu0 %v7821
        %8268 = vmatprep.mubr.bf16.mxu0 %v6930
        %8269 = vmatmul.mubr.bf16.gmra.mxu0 %v6929
        %v8270 = vpop.f32.mrf.mxu0
        %v8271 = vadd.f32 %v8223, %v8270
        %v8272 = vpop.f32.mrf.mxu0
        %v8273 = vpop.f32.mrf.mxu0
        %v8274 = vadd.f32 %v8226, %v8273
        %v8275 = vpop.f32.mrf.mxu0
        %8276 = vmatprep.mubr.bf16.mxu0 1065369472
        %8277 = vmatmul.mubr.bf16.gmra.mxu0 1065369472
        %v8278 = vpop.f32.mrf.mxu0
        %v8279 = vadd.f32 %v8231, %v8278
        %v8280 = vpop.f32.mrf.mxu0
        %v8281 = vpop.f32.mrf.mxu0
        %v8282 = vpop.f32.mrf.mxu0
        %8283 = vdwg.mxu0
        %8284 = vmatprep.subr.bf16.mxu0 0
        %8285 = vmatpush1.bf16.msra.mxu0 %v7866
        %8286 = vmatprep.subr.bf16.mxu0 0
        %8287 = vmatpush1.bf16.msra.mxu0 %v7863
        %8288 = vmatprep.subr.bf16.mxu0 0
        %8289 = vmatpush1.bf16.msra.mxu0 %v7860
        %8290 = vmatprep.subr.bf16.mxu0 0
        %8291 = vmatpush1.bf16.msra.mxu0 %v7857
        %8292 = vmatprep.subr.bf16.mxu0 0
        %8293 = vmatpush1.bf16.msra.mxu0 %v7854
        %8294 = vmatprep.subr.bf16.mxu0 0
        %8295 = vmatpush1.bf16.msra.mxu0 %v7851
        %8296 = vmatprep.subr.bf16.mxu0 0
        %8297 = vmatpush1.bf16.msra.mxu0 %v7848
        %8298 = vmatprep.subr.bf16.mxu0 0
        %8299 = vmatpush1.bf16.msra.mxu0 %v7845
        %8300 = vmatprep.subr.bf16.mxu0 0
        %8301 = vmatpush2.bf16.msra.mxu0 %v7890
        %8302 = vmatprep.subr.bf16.mxu0 0
        %8303 = vmatpush2.bf16.msra.mxu0 %v7887
        %8304 = vmatprep.subr.bf16.mxu0 0
        %8305 = vmatpush2.bf16.msra.mxu0 %v7884
        %8306 = vmatprep.subr.bf16.mxu0 0
        %8307 = vmatpush2.bf16.msra.mxu0 %v7881
        %8308 = vmatprep.subr.bf16.mxu0 0
        %8309 = vmatpush2.bf16.msra.mxu0 %v7878
        %8310 = vmatprep.subr.bf16.mxu0 0
        %8311 = vmatpush2.bf16.msra.mxu0 %v7875
        %8312 = vmatprep.subr.bf16.mxu0 0
        %8313 = vmatpush2.bf16.msra.mxu0 %v7872
        %8314 = vmatprep.subr.bf16.mxu0 0
        %8315 = vmatpush2.bf16.msra.mxu0 %v7869
        %8316 = vmatprep.mubr.bf16.mxu0 %v6932
        %8317 = vmatmul.mubr.bf16.gmra.mxu0 %v6931
        %v8318 = vpop.f32.mrf.mxu0
        %v8319 = vadd.f32 %v8271, %v8318
        %v8320 = vpop.f32.mrf.mxu0
        %v8321 = vpop.f32.mrf.mxu0
        %v8322 = vadd.f32 %v8274, %v8321
        %v8323 = vpop.f32.mrf.mxu0
        %8324 = vmatprep.mubr.bf16.mxu0 1065369472
        %8325 = vmatmul.mubr.bf16.gmra.mxu0 1065369472
        %v8326 = vpop.f32.mrf.mxu0
        %v8327 = vadd.f32 %v8279, %v8326
        %v8328 = vpop.f32.mrf.mxu0
        %v8329 = vpop.f32.mrf.mxu0
        %v8330 = vpop.f32.mrf.mxu0
        %8331 = vdwg.mxu0
        %v8332 = vld [vmem:[%s9] sm:$0x3]
        %v8333 = vpack.c.bf16 %v8176, %v8172
        %v8334 = vpack.c.bf16 %v8178, %v8174
        %v8335 = vpack.c.bf16 %v8322, %v8319
        %v8336 = vpack.c.bf16 %v8182, %v8182
        %v8337 = vpack.c.bf16 %v8184, %v8184
        %v8338 = vpack.c.bf16 %v8327, %v8327
        %v8340 = vsel %vm2121, %v8332, 0
        %v8343 = vand.u32 %v8336, %v2126
        %v8346 = vand.u32 %v8337, %v2126
        %v8349 = vand.u32 %v8338, %v2126
        %8351 = vmatprep.subr.bf16.mxu0 0
        %8352 = vmatpush1.bf16.msra.mxu0 0
        %8353 = vmatprep.subr.bf16.mxu0 0
        %8354 = vmatpush1.bf16.msra.mxu0 0
        %8355 = vmatprep.subr.bf16.mxu0 0
        %8356 = vmatpush1.bf16.msra.mxu0 0
        %8357 = vmatprep.subr.bf16.mxu0 0
        %8358 = vmatpush1.bf16.msra.mxu0 0
        %8359 = vmatprep.subr.bf16.mxu0 0
        %8360 = vmatpush1.bf16.msra.mxu0 0
        %8361 = vmatprep.subr.bf16.mxu0 0
        %8362 = vmatpush1.bf16.msra.mxu0 0
        %8363 = vmatprep.subr.bf16.mxu0 %v8346
        %8364 = vmatpush1.bf16.msra.mxu0 %v8343
        %8365 = vmatprep.subr.bf16.mxu0 %v8334
        %8366 = vmatpush1.bf16.msra.mxu0 %v8333
        %8367 = vmatprep.subr.bf16.mxu0 0
        %8368 = vmatpush2.bf16.msra.mxu0 0
        %8369 = vmatprep.subr.bf16.mxu0 0
        %8370 = vmatpush2.bf16.msra.mxu0 0
        %8371 = vmatprep.subr.bf16.mxu0 0
        %8372 = vmatpush2.bf16.msra.mxu0 0
        %8373 = vmatprep.subr.bf16.mxu0 0
        %8374 = vmatpush2.bf16.msra.mxu0 0
        %8375 = vmatprep.subr.bf16.mxu0 0
        %8376 = vmatpush2.bf16.msra.mxu0 0
        %8377 = vmatprep.subr.bf16.mxu0 0
        %8378 = vmatpush2.bf16.msra.mxu0 0
        %8379 = vmatprep.subr.bf16.mxu0 0
        %8380 = vmatpush2.bf16.msra.mxu0 0
        %8381 = vmatprep.subr.bf16.mxu0 0
        %8382 = vmatpush2.bf16.msra.mxu0 0
        %8383 = vmatprep.mubr.bf16.mxu0 0
        %8384 = vmatmul.mubr.bf16.gmra.mxu0 %v8340
        %v8385 = vpop.f32.mrf.mxu0
        %v8386 = vadd.f32 0.0, %v8385
        %v8387 = vpop.f32.mrf.mxu0
        %v8388 = vadd.f32 0.0, %v8387
        %v8389 = vpop.f32.mrf.mxu0
        %v8390 = vpop.f32.mrf.mxu0
        %8391 = vdwg.mxu0
        %8392 = vmatprep.subr.bf16.mxu0 0
        %8393 = vmatpush1.bf16.msra.mxu0 0
        %8394 = vmatprep.subr.bf16.mxu0 0
        %8395 = vmatpush1.bf16.msra.mxu0 0
        %8396 = vmatprep.subr.bf16.mxu0 0
        %8397 = vmatpush1.bf16.msra.mxu0 0
        %8398 = vmatprep.subr.bf16.mxu0 0
        %8399 = vmatpush1.bf16.msra.mxu0 0
        %8400 = vmatprep.subr.bf16.mxu0 0
        %8401 = vmatpush1.bf16.msra.mxu0 0
        %8402 = vmatprep.subr.bf16.mxu0 0
        %8403 = vmatpush1.bf16.msra.mxu0 0
        %8404 = vmatprep.subr.bf16.mxu0 0
        %8405 = vmatpush1.bf16.msra.mxu0 %v8349
        %8406 = vmatprep.subr.bf16.mxu0 0
        %8407 = vmatpush1.bf16.msra.mxu0 %v8335
        %8408 = vmatprep.subr.bf16.mxu0 0
        %8409 = vmatpush2.bf16.msra.mxu0 0
        %8410 = vmatprep.subr.bf16.mxu0 0
        %8411 = vmatpush2.bf16.msra.mxu0 0
        %8412 = vmatprep.subr.bf16.mxu0 0
        %8413 = vmatpush2.bf16.msra.mxu0 0
        %8414 = vmatprep.subr.bf16.mxu0 0
        %8415 = vmatpush2.bf16.msra.mxu0 0
        %8416 = vmatprep.subr.bf16.mxu0 0
        %8417 = vmatpush2.bf16.msra.mxu0 0
        %8418 = vmatprep.subr.bf16.mxu0 0
        %8419 = vmatpush2.bf16.msra.mxu0 0
        %8420 = vmatprep.subr.bf16.mxu0 0
        %8421 = vmatpush2.bf16.msra.mxu0 0
        %8422 = vmatprep.subr.bf16.mxu0 0
        %8423 = vmatpush2.bf16.msra.mxu0 0
        %8424 = vmatprep.mubr.bf16.mxu0 0
        %8425 = vmatmul.mubr.bf16.gmra.mxu0 %v8340
        %v8426 = vpop.f32.mrf.mxu0
        %v8427 = vadd.f32 0.0, %v8426
        %v8428 = vpop.f32.mrf.mxu0
        %v8429 = vpop.f32.mrf.mxu0
        %v8430 = vpop.f32.mrf.mxu0
        %8431 = vdwg.mxu0
        %v8434 = vcombine.low %v8386, %v8388
        %8436 = vst [vmem:[%s549] sm:$0x77] %v8434
        %8437 = vst [vmem:[%s549 + $0x8] sm:$0x7] %v8427
        %p8438 = scmp.lt.s32.totalorder %s29, 1
        %s8439 = scalar_select %p8438, %s29, 1
        %s8440 = smul.addr %s8439, 6
        %s8441 = smul.addr %s8440, 4
        %s8442 = scalar_lea.vmem %s15, %s8441
        %p8443 = scmp.lt.s32.totalorder %s29, 1
        %s8444 = scalar_select %p8443, %s29, 1
        %s8445 = smul.addr %s8444, 3
        %s8446 = smul.addr %s8445, 4
        %s8447 = scalar_lea.vmem %s16, %s8446
        // Predicated region
        $region85: #{my_model_forward.1} parent=79 // pred_check
          %p8448 = pneg %p367
        $region86: #{my_model_forward.1} parent=79 // pred_check_branch
          %8450 = sbr.rel (%p8448) target = $region88
        $region87: #{my_model_forward.1} parent=79 // pred_region
          _
        $region88: #{my_model_forward.1} parent=79 // pred_fallthru
          _
        // Predicated region
        $region89: #{my_model_forward.1} parent=79 // pred_check
          %p8451 = pneg %p393
        $region90: #{my_model_forward.1} parent=79 // pred_check_branch
          %8453 = sbr.rel (%p8451) target = $region92
        $region91: #{my_model_forward.1} parent=79 // pred_region
          _
        $region92: #{my_model_forward.1} parent=79 // pred_fallthru
          _
      $region80: #{my_model_forward.1} parent=5 // pred_fallthru
        _
      %p8454 = scmp.le.s32.totalorder 2, %s24
      // Predicated region
      $region93: #{my_model_forward.1} parent=5 // pred_check
        %p8455 = pneg %p8454
      $region94: #{my_model_forward.1} parent=5 // pred_check_branch
        %8457 = sbr.rel (%p8455) target = $region96
      $region95: #{my_model_forward.1} parent=5 // pred_region
        %s8458 = ssub.s32 %s24, 2
        // Predicated region
        $region97: #{my_model_forward.1} parent=95 // pred_check
          %p8459 = pneg %p373
        $region98: #{my_model_forward.1} parent=95 // pred_check_branch
          %8461 = sbr.rel (%p8459) target = $region100
        $region99: #{my_model_forward.1} parent=95 // pred_region
          %p8462 = scmp.lt.s32.totalorder %s30, 1
          %s8463 = scalar_select %p8462, %s30, 1
          %s8464 = smul.addr %s8463, 6
          %s8465 = smul.addr %s8464, 4
          %s8466 = scalar_lea.vmem %s15, %s8465
        $region100: #{my_model_forward.1} parent=95 // pred_fallthru
          _
        // Predicated region
        $region101: #{my_model_forward.1} parent=95 // pred_check
          %p8467 = pneg %p399
        $region102: #{my_model_forward.1} parent=95 // pred_check_branch
          %8469 = sbr.rel (%p8467) target = $region104
        $region103: #{my_model_forward.1} parent=95 // pred_region
          %p8470 = scmp.lt.s32.totalorder %s30, 1
          %s8471 = scalar_select %p8470, %s30, 1
          %s8472 = smul.addr %s8471, 3
          %s8473 = smul.addr %s8472, 4
          %s8474 = scalar_lea.vmem %s16, %s8473
        $region104: #{my_model_forward.1} parent=95 // pred_fallthru
          _
      $region96: #{my_model_forward.1} parent=5 // pred_fallthru
        _
    $region6: #{my_model_forward.1} parent=1 // loop_footer
      %s28 = sadd.s32 1, %s24
    $region7: #{my_model_forward.1} parent=1 // loop_footer_branch
      %23 = sbr.rel target = $region3
    $region8: #{my_model_forward.1} parent=1 // loop_exit
      _
    %8475 = vsyncpa [#allocation3], 1
    %s8476 = scalar_lea.sflag [#allocation3], 1
    %8477 = vsyncpa %s8476, 1

</llo_original>
